<compile_context>
chip_gen: v5e
topology: v5e:2x2
jax: 0.10.0
libtpu: 0.0.40
codegen_flags: <defaults>
</compile_context>

<pallas_src>
import jax
import jax.numpy as jnp
from jax.experimental import pallas as pl
from jax.experimental.pallas import tpu as pltpu

NUM_DISTANCES = 2016   # numDistances
NUM_CLASSES = 3        # numClasses
HIDDEN_PAD = 2048      # hidden dim padded once (offline) so 128-lane tiles divide it
TN = 1024              # hidden-dim tile -> grid of 2 "parallel" steps


def shapenet_kernel(x_ref, w1_ref, b1_ref, w2_ref, o_ref):
    """One hidden-dim tile of the fused 2-layer MLP.

    x_ref : (B, 2016)  f32   full input (constant index_map)
    w1_ref: (2016, TN) bf16  columns [tile*TN, tile*TN+TN) of W1
    b1_ref: (1, TN)    f32
    w2_ref: (TN, 3)    f32   rows of W2 matching this hidden tile
    o_ref : (1, B, 3)  f32   partial logits for this tile
    """
    # Layer 1 (bf16 x bf16 on the MXU, f32 accumulation).
    h = jnp.dot(x_ref[...].astype(jnp.bfloat16), w1_ref[...],
                preferred_element_type=jnp.float32)
    h = jnp.maximum(h + b1_ref[...], 0.0)            # bias + ReLU
    # TODO(synk): nn.Dropout() treated as identity (eval/inference mode);
    # training-mode Bernoulli masking would need pltpu.prng_*.
    # Layer 2 partial: (B, TN) @ (TN, 3).  Padded hidden columns are zero
    # (zero bias, zero W2 rows) so they contribute nothing.
    o_ref[0] = jnp.dot(h, w2_ref[...], preferred_element_type=jnp.float32)


def prepare_params(w1_t, b1, w2_t, b2):
    """One-time (outside the jitted forward) weight layout:
    pad hidden dim 2016 -> 2048 with zeros and cast W1 to bf16."""
    pad = HIDDEN_PAD - NUM_DISTANCES
    w1_p = jnp.pad(w1_t, ((0, 0), (0, pad))).astype(jnp.bfloat16)   # (2016, 2048) bf16
    b1_p = jnp.pad(b1, (0, pad)).reshape(1, HIDDEN_PAD)             # (1, 2048)    f32
    w2_p = jnp.pad(w2_t, ((0, pad), (0, 0)))                        # (2048, 3)    f32
    return w1_p, b1_p, w2_p, b2


def shapenet_forward(x, w1_p, b1_p, w2_p, b2):
    """x: (B, 2016) f32 -> logits (B, 3) f32.  Params must come from prepare_params."""
    B, D = x.shape
    assert D == NUM_DISTANCES
    assert B % 8 == 0, "batch must be a multiple of 8 (sublane tiling)"
    n_tiles = HIDDEN_PAD // TN  # = 2

    partials = pl.pallas_call(
        shapenet_kernel,
        out_shape=jax.ShapeDtypeStruct((n_tiles, B, NUM_CLASSES), jnp.float32),
        grid_spec=pltpu.PrefetchScalarGridSpec(
            num_scalar_prefetch=0,
            grid=(n_tiles,),
            in_specs=[
                pl.BlockSpec((B, NUM_DISTANCES), lambda j: (0, 0)),        # x (resident)
                pl.BlockSpec((NUM_DISTANCES, TN), lambda j: (0, j)),       # W1 column tile
                pl.BlockSpec((1, TN), lambda j: (0, j)),                   # b1 tile
                pl.BlockSpec((TN, NUM_CLASSES), lambda j: (j, 0)),         # W2 row tile
            ],
            out_specs=pl.BlockSpec((1, B, NUM_CLASSES), lambda j: (j, 0, 0)),
        ),
        compiler_params=pltpu.CompilerParams(
            dimension_semantics=("parallel",),     # 2 TCs on v7x each take one tile
            vmem_limit_bytes=32 << 20,             # working set ~9 MB
        ),
    )(x, w1_p, b1_p, w2_p)

    # Tiny (n_tiles, B, 3) reduction + output bias outside the kernel.
    return jnp.sum(partials, axis=0) + b2


def init_params(key):
    """Deterministic init matching torch.nn.Linear's default U(-1/sqrt(in), 1/sqrt(in))."""
    k1, k2, k3, k4 = jax.random.split(key, 4)
    bound1 = 1.0 / (NUM_DISTANCES ** 0.5)
    w1_t = jax.random.uniform(k1, (NUM_DISTANCES, NUM_DISTANCES),
                              jnp.float32, -bound1, bound1)
    b1 = jax.random.uniform(k2, (NUM_DISTANCES,), jnp.float32, -bound1, bound1)
    bound2 = 1.0 / (NUM_DISTANCES ** 0.5)
    w2_t = jax.random.uniform(k3, (NUM_DISTANCES, NUM_CLASSES),
                              jnp.float32, -bound2, bound2)
    b2 = jax.random.uniform(k4, (NUM_CLASSES,), jnp.float32, -bound2, bound2)
    return w1_t, b1, w2_t, b2


def reference_forward(x, w1_t, b1, w2_t, b2):
    """Pure-JAX reference with the same numerics (bf16 layer-1 operands, f32 acc).
    Dropout == identity (eval mode)."""
    h = jnp.dot(x.astype(jnp.bfloat16), w1_t.astype(jnp.bfloat16),
                preferred_element_type=jnp.float32) + b1
    h = jnp.maximum(h, 0.0)
    return jnp.dot(h, w2_t, preferred_element_type=jnp.float32) + b2


if __name__ == "__main__":
    key = jax.random.PRNGKey(0)
    k_params, k_x = jax.random.split(key)
    w1_t, b1, w2_t, b2 = init_params(k_params)

    # One-time layout / dtype prep of the static weights (outside the forward).
    w1_p, b1_p, w2_p, b2_p = prepare_params(w1_t, b1, w2_t, b2)

    B = 8
    x = jax.random.normal(k_x, (B, NUM_DISTANCES), jnp.float32)

    fwd = jax.jit(shapenet_forward)
    y = fwd(x, w1_p, b1_p, w2_p, b2_p)
    y = jax.block_until_ready(y)

    y_ref = reference_forward(x, w1_t, b1, w2_t, b2)
    assert y.shape == (B, NUM_CLASSES)
    assert jnp.allclose(y, y_ref, atol=5e-3, rtol=5e-2), "mismatch vs reference"

    print("KERNEL_OK")
</pallas_src>

<mosaic_0001>
module attributes {stable_mosaic.version = 11 : i64} {
  func.func @shapenet_kernel(%arg0: i32, %arg1: memref<8x2016xf32, #tpu.memory_space<vmem>>, %arg2: memref<2016x1024xbf16, #tpu.memory_space<vmem>>, %arg3: memref<1x1024xf32, #tpu.memory_space<vmem>>, %arg4: memref<1024x3xf32, #tpu.memory_space<vmem>>, %arg5: memref<1x8x3xf32, #tpu.memory_space<vmem>>) attributes {dimension_semantics = [#tpu.dimension_semantics<parallel>], iteration_bounds = array<i64: 2>, scalar_prefetch = 0 : i64, scratch_operands = 0 : i64, tpu.core_type = #tpu.core_type<tc>, window_params = [{pipeline_mode = #tpu.pipeline_mode<synchronous>, transform_indices = @transform_0, window_bounds = array<i64: 8, 2016>}, {transform_indices = @transform_1, window_bounds = array<i64: 2016, 1024>}, {transform_indices = @transform_2, window_bounds = array<i64: 1, 1024>}, {transform_indices = @transform_3, window_bounds = array<i64: 1024, 3>}, {transform_indices = @transform_4, window_bounds = array<i64: 1, 8, 3>}]} {
    %c0 = arith.constant 0 : index
    %c0_0 = arith.constant 0 : index
    %0 = vector.load %arg1[%c0, %c0_0] : memref<8x2016xf32, #tpu.memory_space<vmem>>, vector<8x2016xf32>
    %1 = arith.truncf %0 : vector<8x2016xf32> to vector<8x2016xbf16>
    %c0_1 = arith.constant 0 : index
    %c0_2 = arith.constant 0 : index
    %2 = vector.load %arg2[%c0_1, %c0_2] : memref<2016x1024xbf16, #tpu.memory_space<vmem>>, vector<2016x1024xbf16>
    %cst = arith.constant dense<0.000000e+00> : vector<8x1024xf32>
    %3 = tpu.matmul %1, %2, %cst {dimension_numbers = #tpu.dot_dimension_numbers<[1], [0], [0], [1], [0, 0, 1, 1], [], []>} : vector<8x2016xbf16>, vector<2016x1024xbf16>, vector<8x1024xf32> -> vector<8x1024xf32>
    %c0_3 = arith.constant 0 : index
    %c0_4 = arith.constant 0 : index
    %4 = vector.load %arg3[%c0_3, %c0_4] : memref<1x1024xf32, #tpu.memory_space<vmem>>, vector<1x1024xf32>
    %5 = vector.broadcast %4 : vector<1x1024xf32> to vector<8x1024xf32>
    %6 = arith.addf %3, %5 : vector<8x1024xf32>
    %cst_5 = arith.constant 0.000000e+00 : f32
    %7 = vector.broadcast %cst_5 : f32 to vector<8x1024xf32>
    %8 = arith.maximumf %6, %7 : vector<8x1024xf32>
    %c0_6 = arith.constant 0 : index
    %c0_7 = arith.constant 0 : index
    %9 = vector.load %arg4[%c0_6, %c0_7] : memref<1024x3xf32, #tpu.memory_space<vmem>>, vector<1024x3xf32>
    %cst_8 = arith.constant dense<0.000000e+00> : vector<8x3xf32>
    %10 = tpu.matmul %8, %9, %cst_8 {dimension_numbers = #tpu.dot_dimension_numbers<[1], [0], [0], [1], [0, 0, 1, 1], [], []>} : vector<8x1024xf32>, vector<1024x3xf32>, vector<8x3xf32> -> vector<8x3xf32>
    %c0_9 = arith.constant 0 : index
    %c0_10 = arith.constant 0 : index
    %c0_11 = arith.constant 0 : index
    %11 = vector.load %arg5[%c0_9, %c0_10, %c0_11] : memref<1x8x3xf32, #tpu.memory_space<vmem>>, vector<1x8x3xf32>
    %12 = vector.shape_cast %11 : vector<1x8x3xf32> to vector<8x3xf32>
    %13 = vector.shape_cast %10 : vector<8x3xf32> to vector<1x8x3xf32>
    tpu.vector_store %arg5[%c0_9, %c0_10, %c0_11], %13 {strides = array<i32>} : memref<1x8x3xf32, #tpu.memory_space<vmem>>, vector<1x8x3xf32>,
    return
  }
  func.func @transform_0(%arg0: i32) -> (i32, i32) {
    %c0_i32 = arith.constant 0 : i32
    %c0_i32_0 = arith.constant 0 : i32
    %c0_i32_1 = arith.constant 0 : i32
    return %c0_i32, %c0_i32_0 : i32, i32
  }
  func.func @transform_1(%arg0: i32) -> (i32, i32) {
    %c0_i32 = arith.constant 0 : i32
    %c0_i32_0 = arith.constant 0 : i32
    return %c0_i32, %arg0 : i32, i32
  }
  func.func @transform_2(%arg0: i32) -> (i32, i32) {
    %c0_i32 = arith.constant 0 : i32
    %c0_i32_0 = arith.constant 0 : i32
    return %c0_i32, %arg0 : i32, i32
  }
  func.func @transform_3(%arg0: i32) -> (i32, i32) {
    %c0_i32 = arith.constant 0 : i32
    %c0_i32_0 = arith.constant 0 : i32
    return %arg0, %c0_i32 : i32, i32
  }
  func.func @transform_4(%arg0: i32) -> (i32, i32, i32) {
    %c0_i32 = arith.constant 0 : i32
    %c0_i32_0 = arith.constant 0 : i32
    %c0_i32_1 = arith.constant 0 : i32
    return %arg0, %c0_i32, %c0_i32_0 : i32, i32, i32
  }
}

</mosaic_0001>

<llo_original>
// kernel: shapenet_forward.1
$region0: #{shapenet_forward.1}
  #allocation0 [shape = 'u32[]', space=smem, size = 0x4, offset = 0x4, fixed_abs, tag = 'smem constant byte address 0x4 - core index']
  #allocation1 [shape = 'u32[72,128]{1,0:T(1,128)}', space=vmem, size = 0x9000, scoped, tag = 'internal scratch']
  %s0 = inlined_call_operand.hbm [shape: f32[8,2016], index: 0, kind: input, shape index: {}]
  %s1 = inlined_call_operand.hbm [shape: bf16[2016,2048], index: 1, kind: input, shape index: {}]
  %s2 = inlined_call_operand.hbm [shape: f32[1,2048], index: 2, kind: input, shape index: {}]
  %s3 = inlined_call_operand.vmem [shape: f32[2048,3], index: 3, kind: input, shape index: {}]
  %s4 = inlined_call_operand.vmem [shape: f32[2,8,3], index: 4, kind: output, shape index: {}]
  %s5 = sld [smem:[#allocation0]]
  $region61: #{shapenet_forward.1} parent=0
    _
  %s7 = ssub.s32 1, %s5
  %s8 = scalar_select 0, %s7, %s5
  $region1: #{shapenet_forward.1} parent=0
    #allocation2 [shape = 'u8[65536]{0}', space=vmem, size = 0x10000, scoped, tag = 'input window, operand 0, single buffered']
    #allocation3 [shape = 's32[2]{0}', space=sflag, size = 0x8, scoped, tag = 'scoped memory for shapenet_forward.1']
    #allocation4 [shape = 'u8[8257536]{0}', space=vmem, size = 0x7e0000, scoped, tag = 'input window, operand 1']
    #allocation5 [shape = 's32[2]{0}', space=sflag, size = 0x8, scoped, tag = 'scoped memory for shapenet_forward.1']
    #allocation6 [shape = 'u8[8192]{0}', space=vmem, size = 0x2000, scoped, tag = 'input window, operand 2']
    %9 = vsyncpa [#allocation3], 0
    %10 = vsyncpa [#allocation5], 0
    %s11 = scalar_lea.sflag [#allocation5], 1
    %12 = vsyncpa %s11, 0
    loop: start=0, step=1, limit=4
    $region2: #{shapenet_forward.1} parent=1 // loop_pre_header
      _
    $region3: #{shapenet_forward.1} parent=1 // loop_header
      %s14 = sphi 0, %s18
      %p15 = scmp.ge.s32.totalorder %s14, 4
      %s22 = sphi 0, %s22
      %s24 = sphi 0, %s22
      %s25 = sphi 0, %s24
      %s39 = sphi 0, %s25
      %s45 = sphi 0, %s47
      %s48 = sphi 0, %s45
      %s49 = sphi 0, %s48
      %s65 = sphi 0, %s49
      %s71 = sphi 0, %s73
      %s74 = sphi 0, %s71
      %s75 = sphi 0, %s74
      %s91 = sphi 0, %s75
      %s97 = sphi 0, %s99
      %s100 = sphi 0, %s97
      %s101 = sphi 0, %s100
      %s117 = sphi 0, %s101
      %s123 = sphi 0, %s125
      %s126 = sphi 0, %s123
      %s127 = sphi 0, %s126
      %s143 = sphi 0, %s127
    $region4: #{shapenet_forward.1} parent=1 // loop_header_branch
      %17 = sbr.rel (%p15) target = $region8
    $region5: #{shapenet_forward.1} parent=1 // loop_body
      %s19 = ssub.s32 %s14, 1
      %s20 = ssub.s32 %s14, 2
      %s21 = sadd.s32 %s14, 1
      %s23 = sadd.s32 %s22, 1
      %p26 = scmp.eq.s32.totalorder %s14, 1
      %p27 = scmp.ne.s32.totalorder %s22, %s24
      %p28 = scmp.eq.s32.totalorder %s14, 0
      %p29 = por %p27, %p28
      %p30 = scmp.ne.s32.totalorder %s22, %s24
      %p31 = scmp.eq.s32.totalorder %s19, 1
      %p32 = por %p30, %p31
      %p33 = scmp.ne.s32.totalorder %s24, %s25
      %p34 = scmp.eq.s32.totalorder %s19, 0
      %p35 = por %p33, %p34
      %p36 = scmp.ne.s32.totalorder %s24, %s25
      %p37 = scmp.eq.s32.totalorder %s20, 1
      %p38 = por %p36, %p37
      %p40 = scmp.ne.s32.totalorder %s25, %s39
      %p41 = scmp.eq.s32.totalorder %s20, 0
      %p42 = por %p40, %p41
      %s43 = ssub.s32 %s14, %s21
      %p44 = scmp.eq.s32.totalorder %s43, 0
      %s46 = sadd.s32 %s45, 1
      %s47 = scalar_select %p44, %s45, %s46
      %p50 = pneg %p44
      %p51 = scmp.eq.s32.totalorder %s14, 1
      %p52 = por %p50, %p51
      %p53 = scmp.ne.s32.totalorder %s45, %s48
      %p54 = scmp.eq.s32.totalorder %s14, 0
      %p55 = por %p53, %p54
      %p56 = scmp.ne.s32.totalorder %s45, %s48
      %p57 = scmp.eq.s32.totalorder %s19, 1
      %p58 = por %p56, %p57
      %p59 = scmp.ne.s32.totalorder %s48, %s49
      %p60 = scmp.eq.s32.totalorder %s19, 0
      %p61 = por %p59, %p60
      %p62 = scmp.ne.s32.totalorder %s48, %s49
      %p63 = scmp.eq.s32.totalorder %s20, 1
      %p64 = por %p62, %p63
      %p66 = scmp.ne.s32.totalorder %s49, %s65
      %p67 = scmp.eq.s32.totalorder %s20, 0
      %p68 = por %p66, %p67
      %s69 = ssub.s32 %s14, %s21
      %p70 = scmp.eq.s32.totalorder %s69, 0
      %s72 = sadd.s32 %s71, 1
      %s73 = scalar_select %p70, %s71, %s72
      %p76 = pneg %p70
      %p77 = scmp.eq.s32.totalorder %s14, 1
      %p78 = por %p76, %p77
      %p79 = scmp.ne.s32.totalorder %s71, %s74
      %p80 = scmp.eq.s32.totalorder %s14, 0
      %p81 = por %p79, %p80
      %p82 = scmp.ne.s32.totalorder %s71, %s74
      %p83 = scmp.eq.s32.totalorder %s19, 1
      %p84 = por %p82, %p83
      %p85 = scmp.ne.s32.totalorder %s74, %s75
      %p86 = scmp.eq.s32.totalorder %s19, 0
      %p87 = por %p85, %p86
      %p88 = scmp.ne.s32.totalorder %s74, %s75
      %p89 = scmp.eq.s32.totalorder %s20, 1
      %p90 = por %p88, %p89
      %p92 = scmp.ne.s32.totalorder %s75, %s91
      %p93 = scmp.eq.s32.totalorder %s20, 0
      %p94 = por %p92, %p93
      %s95 = ssub.s32 %s14, %s21
      %p96 = scmp.eq.s32.totalorder %s95, 0
      %s98 = sadd.s32 %s97, 1
      %s99 = scalar_select %p96, %s97, %s98
      %p102 = pneg %p96
      %p103 = scmp.eq.s32.totalorder %s14, 1
      %p104 = por %p102, %p103
      %p105 = scmp.ne.s32.totalorder %s97, %s100
      %p106 = scmp.eq.s32.totalorder %s14, 0
      %p107 = por %p105, %p106
      %p108 = scmp.ne.s32.totalorder %s97, %s100
      %p109 = scmp.eq.s32.totalorder %s19, 1
      %p110 = por %p108, %p109
      %p111 = scmp.ne.s32.totalorder %s100, %s101
      %p112 = scmp.eq.s32.totalorder %s19, 0
      %p113 = por %p111, %p112
      %p114 = scmp.ne.s32.totalorder %s100, %s101
      %p115 = scmp.eq.s32.totalorder %s20, 1
      %p116 = por %p114, %p115
      %p118 = scmp.ne.s32.totalorder %s101, %s117
      %p119 = scmp.eq.s32.totalorder %s20, 0
      %p120 = por %p118, %p119
      %s121 = ssub.s32 %s14, %s21
      %p122 = scmp.eq.s32.totalorder %s121, 0
      %s124 = sadd.s32 %s123, 1
      %s125 = scalar_select %p122, %s123, %s124
      %p128 = pneg %p122
      %p129 = scmp.eq.s32.totalorder %s14, 1
      %p130 = por %p128, %p129
      %p131 = scmp.ne.s32.totalorder %s123, %s126
      %p132 = scmp.eq.s32.totalorder %s14, 0
      %p133 = por %p131, %p132
      %p134 = scmp.ne.s32.totalorder %s123, %s126
      %p135 = scmp.eq.s32.totalorder %s19, 1
      %p136 = por %p134, %p135
      %p137 = scmp.ne.s32.totalorder %s126, %s127
      %p138 = scmp.eq.s32.totalorder %s19, 0
      %p139 = por %p137, %p138
      %p140 = scmp.ne.s32.totalorder %s126, %s127
      %p141 = scmp.eq.s32.totalorder %s20, 1
      %p142 = por %p140, %p141
      %p144 = scmp.ne.s32.totalorder %s127, %s143
      %p145 = scmp.eq.s32.totalorder %s20, 0
      %p146 = por %p144, %p145
      %p147 = scmp.le.s32.totalorder 1, %s14
      %p148 = scmp.lt.s32.totalorder %s14, 3
      %p149 = pnand %p147, %p148
      %p150 = pneg %p149
      // Predicated region
      $region9: #{shapenet_forward.1} parent=5 // pred_check
        _
      $region10: #{shapenet_forward.1} parent=5 // pred_check_branch
        %152 = sbr.rel (%p149) target = $region12
      $region11: #{shapenet_forward.1} parent=5 // pred_region
        %s153 = ssub.s32 %s14, 1
        // Predicated region
        $region13: #{shapenet_forward.1} parent=11 // pred_check
          %p154 = pneg %p35
        $region14: #{shapenet_forward.1} parent=11 // pred_check_branch
          %156 = sbr.rel (%p154) target = $region16
        $region15: #{shapenet_forward.1} parent=11 // pred_region
          %158 = vsyncadd [#allocation3], 0
          %s160 = sshll.u32 %s0, 4
          %s161 = int_to_ptr.hbm [resolvable:$true] %s160
          %s162 = sshll.u32 [#allocation2], 4
          %s163 = int_to_ptr.vmem [resolvable:$true] %s162
          %165 = dma.hbm_to_vmem [thread:$0]  %s161, 2048, %s163, [#allocation3]
        $region16: #{shapenet_forward.1} parent=11 // pred_fallthru
          _
      $region12: #{shapenet_forward.1} parent=5 // pred_fallthru
        _
      %p166 = scmp.lt.s32.totalorder %s14, 2
      // Predicated region
      $region17: #{shapenet_forward.1} parent=5 // pred_check
        %p167 = pneg %p166
      $region18: #{shapenet_forward.1} parent=5 // pred_check_branch
        %169 = sbr.rel (%p167) target = $region20
      $region19: #{shapenet_forward.1} parent=5 // pred_region
        // Predicated region
        $region21: #{shapenet_forward.1} parent=19 // pred_check
          %p170 = pneg %p55
        $region22: #{shapenet_forward.1} parent=19 // pred_check_branch
          %172 = sbr.rel (%p170) target = $region24
        $region23: #{shapenet_forward.1} parent=19 // pred_region
          %s173 = sand.u32 %s14, 1
          %s174 = scalar_lea.sflag [#allocation5], %s173
          %s175 = sand.u32 %s45, 1
          %s176 = smul.addr %s175, 8064
          %s177 = scalar_lea.vmem [#allocation4], %s176
          %s178 = smul.u32 8, %s14
          %180 = vsyncadd %s174, 0
          %s181 = smul.addr %s178, 4
          %s182 = scalar_lea.hbm %s1, %s181
          %s183 = sshll.u32 %s182, 4
          %s184 = int_to_ptr.hbm [resolvable:$true] %s183
          %s185 = sshll.u32 %s177, 4
          %s186 = int_to_ptr.vmem [resolvable:$true] %s185
          %191 = dma.hbm_to_vmem [thread:$0]  %s184, 129024, %s186, %s174, 1024, 512, 32
        $region24: #{shapenet_forward.1} parent=19 // pred_fallthru
          _
        // Predicated region
        $region25: #{shapenet_forward.1} parent=19 // pred_check
          %p192 = pneg %p81
        $region26: #{shapenet_forward.1} parent=19 // pred_check_branch
          %194 = sbr.rel (%p192) target = $region28
        $region27: #{shapenet_forward.1} parent=19 // pred_region
          %s195 = sand.u32 %s14, 1
          %s196 = scalar_lea.sflag [#allocation5], %s195
          %s197 = sand.u32 %s71, 1
          %s198 = smul.addr %s197, 8
          %s199 = scalar_lea.vmem [#allocation6], %s198
          %s200 = smul.u32 8, %s14
          %202 = vsyncadd %s196, 0
          %s203 = scalar_lea.hbm %s2, %s200
          %s205 = sshll.u32 %s203, 4
          %s206 = int_to_ptr.hbm [resolvable:$true] %s205
          %s207 = sshll.u32 %s199, 4
          %s208 = int_to_ptr.vmem [resolvable:$true] %s207
          %210 = dma.hbm_to_vmem [thread:$0]  %s206, 128, %s208, %s196
        $region28: #{shapenet_forward.1} parent=19 // pred_fallthru
          _
        // Predicated region
        $region29: #{shapenet_forward.1} parent=19 // pred_check
          %p211 = pneg %p107
        $region30: #{shapenet_forward.1} parent=19 // pred_check_branch
          %213 = sbr.rel (%p211) target = $region32
        $region31: #{shapenet_forward.1} parent=19 // pred_region
          %s214 = smul.u32 128, %s14
          %p215 = scmp.lt.s32.totalorder %s214, 255
          %s216 = scalar_select %p215, %s214, 255
          %s217 = smul.addr %s216, 8
          %s218 = scalar_lea.vmem %s3, %s217
          %s219 = smul.u32 128, %s14
        $region32: #{shapenet_forward.1} parent=19 // pred_fallthru
          _
      $region20: #{shapenet_forward.1} parent=5 // pred_fallthru
        _
      %p220 = scmp.le.s32.totalorder 1, %s14
      %p221 = scmp.lt.s32.totalorder %s14, 3
      %p222 = pnand %p220, %p221
      %p223 = pneg %p222
      // Predicated region
      $region33: #{shapenet_forward.1} parent=5 // pred_check
        _
      $region34: #{shapenet_forward.1} parent=5 // pred_check_branch
        %225 = sbr.rel (%p222) target = $region36
      $region35: #{shapenet_forward.1} parent=5 // pred_region
        %s226 = ssub.s32 %s14, 1
        // Predicated region
        $region37: #{shapenet_forward.1} parent=35 // pred_check
          %p227 = pneg %p35
        $region38: #{shapenet_forward.1} parent=35 // pred_check_branch
          %229 = sbr.rel (%p227) target = $region40
        $region39: #{shapenet_forward.1} parent=35 // pred_region
          %231 = dma.done [#allocation3], 2048
        $region40: #{shapenet_forward.1} parent=35 // pred_fallthru
          _
        %s232 = sand.u32 %s19, 1
        %s233 = scalar_lea.sflag [#allocation5], %s232
        %s234 = sand.u32 %s48, 1
        %s235 = smul.addr %s234, 8064
        %s236 = scalar_lea.vmem [#allocation4], %s235
        // Predicated region
        $region41: #{shapenet_forward.1} parent=35 // pred_check
          %p237 = pneg %p61
        $region42: #{shapenet_forward.1} parent=35 // pred_check_branch
          %239 = sbr.rel (%p237) target = $region44
        $region43: #{shapenet_forward.1} parent=35 // pred_region
          %241 = dma.done %s233, 129024
        $region44: #{shapenet_forward.1} parent=35 // pred_fallthru
          _
        %s242 = sand.u32 %s19, 1
        %s243 = scalar_lea.sflag [#allocation5], %s242
        %s244 = sand.u32 %s74, 1
        %s245 = smul.addr %s244, 8
        %s246 = scalar_lea.vmem [#allocation6], %s245
        // Predicated region
        $region45: #{shapenet_forward.1} parent=35 // pred_check
          %p247 = pneg %p87
        $region46: #{shapenet_forward.1} parent=35 // pred_check_branch
          %249 = sbr.rel (%p247) target = $region48
        $region47: #{shapenet_forward.1} parent=35 // pred_region
          %251 = dma.done %s243, 128
        $region48: #{shapenet_forward.1} parent=35 // pred_fallthru
          _
        %p252 = pneg %p35
        %p253 = pneg %p32
        %s254 = sand.u32 %s19, 1
        %s255 = scalar_lea.sflag [#allocation5], %s254
        %s256 = sand.u32 %s48, 1
        %s257 = smul.addr %s256, 8064
        %s258 = scalar_lea.vmem [#allocation4], %s257
        %p259 = pneg %p61
        %p260 = pneg %p58
        %s261 = sand.u32 %s19, 1
        %s262 = scalar_lea.sflag [#allocation5], %s261
        %s263 = sand.u32 %s74, 1
        %s264 = smul.addr %s263, 8
        %s265 = scalar_lea.vmem [#allocation6], %s264
        %p266 = pneg %p87
        %p267 = pneg %p84
        %s268 = smul.u32 128, %s19
        %p269 = scmp.lt.s32.totalorder %s268, 255
        %s270 = scalar_select %p269, %s268, 255
        %s271 = smul.addr %s270, 8
        %s272 = scalar_lea.vmem %s3, %s271
        %p273 = pneg %p113
        %p274 = pneg %p110
        %p275 = pneg %p139
        %p276 = pneg %p136
        %p277 = scmp.lt.s32.totalorder %s19, 1
        %s278 = scalar_select %p277, %s19, 1
        %s279 = smul.addr %s278, 8
        %s280 = scalar_lea.vmem %s4, %s279
        %s281 = smul.u32 8, %s19
        %s282 = smul.u32 8, %s19
        %s283 = smul.u32 128, %s19
        %p284 = scmp.lt.s32.totalorder %s283, 255
        %s285 = scalar_select %p284, %s283, 255
        %s286 = smul.addr %s285, 8
        %s287 = scalar_lea.vmem %s3, %s286
        %s288 = smul.u32 128, %s19
        %p289 = scmp.lt.s32.totalorder %s19, 1
        %s290 = scalar_select %p289, %s19, 1
        %s291 = smul.addr %s290, 8
        %s292 = scalar_lea.vmem %s4, %s291
        %v294 = vld [vmem:[#allocation2] sm:$0xff]
        %v295 = vld [vmem:[#allocation2 + $0x8] sm:$0xff]
        %v296 = vld [vmem:[#allocation2 + $0x10] sm:$0xff]
        %v297 = vld [vmem:[#allocation2 + $0x18] sm:$0xff]
        %v298 = vld [vmem:[#allocation2 + $0x20] sm:$0xff]
        %v299 = vld [vmem:[#allocation2 + $0x28] sm:$0xff]
        %v300 = vld [vmem:[#allocation2 + $0x30] sm:$0xff]
        %v301 = vld [vmem:[#allocation2 + $0x38] sm:$0xff]
        %v302 = vld [vmem:[#allocation2 + $0x40] sm:$0xff]
        %v303 = vld [vmem:[#allocation2 + $0x48] sm:$0xff]
        %v304 = vld [vmem:[#allocation2 + $0x50] sm:$0xff]
        %v305 = vld [vmem:[#allocation2 + $0x58] sm:$0xff]
        %v306 = vld [vmem:[#allocation2 + $0x60] sm:$0xff]
        %v307 = vld [vmem:[#allocation2 + $0x68] sm:$0xff]
        %v308 = vld [vmem:[#allocation2 + $0x70] sm:$0xff]
        %v309 = vld [vmem:[#allocation2 + $0x78] sm:$0xff]
        %v310 = vpack.c.bf16 %v294, %v294
        %v311 = vpack.c.bf16 %v295, %v295
        %v312 = vpack.c.bf16 %v296, %v296
        %v313 = vpack.c.bf16 %v297, %v297
        %v314 = vpack.c.bf16 %v298, %v298
        %v315 = vpack.c.bf16 %v299, %v299
        %v316 = vpack.c.bf16 %v300, %v300
        %v317 = vpack.c.bf16 %v301, %v301
        %v318 = vpack.c.bf16 %v302, %v302
        %v319 = vpack.c.bf16 %v303, %v303
        %v320 = vpack.c.bf16 %v304, %v304
        %v321 = vpack.c.bf16 %v305, %v305
        %v322 = vpack.c.bf16 %v306, %v306
        %v323 = vpack.c.bf16 %v307, %v307
        %v324 = vpack.c.bf16 %v308, %v308
        %v325 = vpack.c.bf16 %v309, %v309
        %v326 = vld [vmem:[%s236] sm:$0xff]
        %v327 = vld [vmem:[%s236 + $0x8] sm:$0xff]
        %v328 = vld [vmem:[%s236 + $0x10] sm:$0xff]
        %v329 = vld [vmem:[%s236 + $0x18] sm:$0xff]
        %v330 = vld [vmem:[%s236 + $0x20] sm:$0xff]
        %v331 = vld [vmem:[%s236 + $0x28] sm:$0xff]
        %v332 = vld [vmem:[%s236 + $0x30] sm:$0xff]
        %v333 = vld [vmem:[%s236 + $0x38] sm:$0xff]
        %v334 = vld [vmem:[%s236 + $0x40] sm:$0xff]
        %v335 = vld [vmem:[%s236 + $0x48] sm:$0xff]
        %v336 = vld [vmem:[%s236 + $0x50] sm:$0xff]
        %v337 = vld [vmem:[%s236 + $0x58] sm:$0xff]
        %v338 = vld [vmem:[%s236 + $0x60] sm:$0xff]
        %v339 = vld [vmem:[%s236 + $0x68] sm:$0xff]
        %v340 = vld [vmem:[%s236 + $0x70] sm:$0xff]
        %v341 = vld [vmem:[%s236 + $0x78] sm:$0xff]
        %v342 = vld [vmem:[%s236 + $0x80] sm:$0xff]
        %v343 = vld [vmem:[%s236 + $0x88] sm:$0xff]
        %v344 = vld [vmem:[%s236 + $0x90] sm:$0xff]
        %v345 = vld [vmem:[%s236 + $0x98] sm:$0xff]
        %v346 = vld [vmem:[%s236 + $0xa0] sm:$0xff]
        %v347 = vld [vmem:[%s236 + $0xa8] sm:$0xff]
        %v348 = vld [vmem:[%s236 + $0xb0] sm:$0xff]
        %v349 = vld [vmem:[%s236 + $0xb8] sm:$0xff]
        %v350 = vld [vmem:[%s236 + $0xc0] sm:$0xff]
        %v351 = vld [vmem:[%s236 + $0xc8] sm:$0xff]
        %v352 = vld [vmem:[%s236 + $0xd0] sm:$0xff]
        %v353 = vld [vmem:[%s236 + $0xd8] sm:$0xff]
        %v354 = vld [vmem:[%s236 + $0xe0] sm:$0xff]
        %v355 = vld [vmem:[%s236 + $0xe8] sm:$0xff]
        %v356 = vld [vmem:[%s236 + $0xf0] sm:$0xff]
        %v357 = vld [vmem:[%s236 + $0xf8] sm:$0xff]
        %v358 = vld [vmem:[%s236 + $0x100] sm:$0xff]
        %v359 = vld [vmem:[%s236 + $0x108] sm:$0xff]
        %v360 = vld [vmem:[%s236 + $0x110] sm:$0xff]
        %v361 = vld [vmem:[%s236 + $0x118] sm:$0xff]
        %v362 = vld [vmem:[%s236 + $0x120] sm:$0xff]
        %v363 = vld [vmem:[%s236 + $0x128] sm:$0xff]
        %v364 = vld [vmem:[%s236 + $0x130] sm:$0xff]
        %v365 = vld [vmem:[%s236 + $0x138] sm:$0xff]
        %v366 = vld [vmem:[%s236 + $0x140] sm:$0xff]
        %v367 = vld [vmem:[%s236 + $0x148] sm:$0xff]
        %v368 = vld [vmem:[%s236 + $0x150] sm:$0xff]
        %v369 = vld [vmem:[%s236 + $0x158] sm:$0xff]
        %v370 = vld [vmem:[%s236 + $0x160] sm:$0xff]
        %v371 = vld [vmem:[%s236 + $0x168] sm:$0xff]
        %v372 = vld [vmem:[%s236 + $0x170] sm:$0xff]
        %v373 = vld [vmem:[%s236 + $0x178] sm:$0xff]
        %v374 = vld [vmem:[%s236 + $0x180] sm:$0xff]
        %v375 = vld [vmem:[%s236 + $0x188] sm:$0xff]
        %v376 = vld [vmem:[%s236 + $0x190] sm:$0xff]
        %v377 = vld [vmem:[%s236 + $0x198] sm:$0xff]
        %v378 = vld [vmem:[%s236 + $0x1a0] sm:$0xff]
        %v379 = vld [vmem:[%s236 + $0x1a8] sm:$0xff]
        %v380 = vld [vmem:[%s236 + $0x1b0] sm:$0xff]
        %v381 = vld [vmem:[%s236 + $0x1b8] sm:$0xff]
        %v382 = vld [vmem:[%s236 + $0x1c0] sm:$0xff]
        %v383 = vld [vmem:[%s236 + $0x1c8] sm:$0xff]
        %v384 = vld [vmem:[%s236 + $0x1d0] sm:$0xff]
        %v385 = vld [vmem:[%s236 + $0x1d8] sm:$0xff]
        %v386 = vld [vmem:[%s236 + $0x1e0] sm:$0xff]
        %v387 = vld [vmem:[%s236 + $0x1e8] sm:$0xff]
        %v388 = vld [vmem:[%s236 + $0x1f0] sm:$0xff]
        %v389 = vld [vmem:[%s236 + $0x1f8] sm:$0xff]
        %v390 = vld [vmem:[%s236 + $0x200] sm:$0xff]
        %v391 = vld [vmem:[%s236 + $0x208] sm:$0xff]
        %v392 = vld [vmem:[%s236 + $0x210] sm:$0xff]
        %v393 = vld [vmem:[%s236 + $0x218] sm:$0xff]
        %v394 = vld [vmem:[%s236 + $0x220] sm:$0xff]
        %v395 = vld [vmem:[%s236 + $0x228] sm:$0xff]
        %v396 = vld [vmem:[%s236 + $0x230] sm:$0xff]
        %v397 = vld [vmem:[%s236 + $0x238] sm:$0xff]
        %v398 = vld [vmem:[%s236 + $0x240] sm:$0xff]
        %v399 = vld [vmem:[%s236 + $0x248] sm:$0xff]
        %v400 = vld [vmem:[%s236 + $0x250] sm:$0xff]
        %v401 = vld [vmem:[%s236 + $0x258] sm:$0xff]
        %v402 = vld [vmem:[%s236 + $0x260] sm:$0xff]
        %v403 = vld [vmem:[%s236 + $0x268] sm:$0xff]
        %v404 = vld [vmem:[%s236 + $0x270] sm:$0xff]
        %v405 = vld [vmem:[%s236 + $0x278] sm:$0xff]
        %v406 = vld [vmem:[%s236 + $0x280] sm:$0xff]
        %v407 = vld [vmem:[%s236 + $0x288] sm:$0xff]
        %v408 = vld [vmem:[%s236 + $0x290] sm:$0xff]
        %v409 = vld [vmem:[%s236 + $0x298] sm:$0xff]
        %v410 = vld [vmem:[%s236 + $0x2a0] sm:$0xff]
        %v411 = vld [vmem:[%s236 + $0x2a8] sm:$0xff]
        %v412 = vld [vmem:[%s236 + $0x2b0] sm:$0xff]
        %v413 = vld [vmem:[%s236 + $0x2b8] sm:$0xff]
        %v414 = vld [vmem:[%s236 + $0x2c0] sm:$0xff]
        %v415 = vld [vmem:[%s236 + $0x2c8] sm:$0xff]
        %v416 = vld [vmem:[%s236 + $0x2d0] sm:$0xff]
        %v417 = vld [vmem:[%s236 + $0x2d8] sm:$0xff]
        %v418 = vld [vmem:[%s236 + $0x2e0] sm:$0xff]
        %v419 = vld [vmem:[%s236 + $0x2e8] sm:$0xff]
        %v420 = vld [vmem:[%s236 + $0x2f0] sm:$0xff]
        %v421 = vld [vmem:[%s236 + $0x2f8] sm:$0xff]
        %v422 = vld [vmem:[%s236 + $0x300] sm:$0xff]
        %v423 = vld [vmem:[%s236 + $0x308] sm:$0xff]
        %v424 = vld [vmem:[%s236 + $0x310] sm:$0xff]
        %v425 = vld [vmem:[%s236 + $0x318] sm:$0xff]
        %v426 = vld [vmem:[%s236 + $0x320] sm:$0xff]
        %v427 = vld [vmem:[%s236 + $0x328] sm:$0xff]
        %v428 = vld [vmem:[%s236 + $0x330] sm:$0xff]
        %v429 = vld [vmem:[%s236 + $0x338] sm:$0xff]
        %v430 = vld [vmem:[%s236 + $0x340] sm:$0xff]
        %v431 = vld [vmem:[%s236 + $0x348] sm:$0xff]
        %v432 = vld [vmem:[%s236 + $0x350] sm:$0xff]
        %v433 = vld [vmem:[%s236 + $0x358] sm:$0xff]
        %v434 = vld [vmem:[%s236 + $0x360] sm:$0xff]
        %v435 = vld [vmem:[%s236 + $0x368] sm:$0xff]
        %v436 = vld [vmem:[%s236 + $0x370] sm:$0xff]
        %v437 = vld [vmem:[%s236 + $0x378] sm:$0xff]
        %v438 = vld [vmem:[%s236 + $0x380] sm:$0xff]
        %v439 = vld [vmem:[%s236 + $0x388] sm:$0xff]
        %v440 = vld [vmem:[%s236 + $0x390] sm:$0xff]
        %v441 = vld [vmem:[%s236 + $0x398] sm:$0xff]
        %v442 = vld [vmem:[%s236 + $0x3a0] sm:$0xff]
        %v443 = vld [vmem:[%s236 + $0x3a8] sm:$0xff]
        %v444 = vld [vmem:[%s236 + $0x3b0] sm:$0xff]
        %v445 = vld [vmem:[%s236 + $0x3b8] sm:$0xff]
        %v446 = vld [vmem:[%s236 + $0x3c0] sm:$0xff]
        %v447 = vld [vmem:[%s236 + $0x3c8] sm:$0xff]
        %v448 = vld [vmem:[%s236 + $0x3d0] sm:$0xff]
        %v449 = vld [vmem:[%s236 + $0x3d8] sm:$0xff]
        %v450 = vld [vmem:[%s236 + $0x3e0] sm:$0xff]
        %v451 = vld [vmem:[%s236 + $0x3e8] sm:$0xff]
        %v452 = vld [vmem:[%s236 + $0x3f0] sm:$0xff]
        %v453 = vld [vmem:[%s236 + $0x3f8] sm:$0xff]
        %v454 = vld [vmem:[%s236 + $0x400] sm:$0xff]
        %v455 = vld [vmem:[%s236 + $0x408] sm:$0xff]
        %v456 = vld [vmem:[%s236 + $0x410] sm:$0xff]
        %v457 = vld [vmem:[%s236 + $0x418] sm:$0xff]
        %v458 = vld [vmem:[%s236 + $0x420] sm:$0xff]
        %v459 = vld [vmem:[%s236 + $0x428] sm:$0xff]
        %v460 = vld [vmem:[%s236 + $0x430] sm:$0xff]
        %v461 = vld [vmem:[%s236 + $0x438] sm:$0xff]
        %v462 = vld [vmem:[%s236 + $0x440] sm:$0xff]
        %v463 = vld [vmem:[%s236 + $0x448] sm:$0xff]
        %v464 = vld [vmem:[%s236 + $0x450] sm:$0xff]
        %v465 = vld [vmem:[%s236 + $0x458] sm:$0xff]
        %v466 = vld [vmem:[%s236 + $0x460] sm:$0xff]
        %v467 = vld [vmem:[%s236 + $0x468] sm:$0xff]
        %v468 = vld [vmem:[%s236 + $0x470] sm:$0xff]
        %v469 = vld [vmem:[%s236 + $0x478] sm:$0xff]
        %v470 = vld [vmem:[%s236 + $0x480] sm:$0xff]
        %v471 = vld [vmem:[%s236 + $0x488] sm:$0xff]
        %v472 = vld [vmem:[%s236 + $0x490] sm:$0xff]
        %v473 = vld [vmem:[%s236 + $0x498] sm:$0xff]
        %v474 = vld [vmem:[%s236 + $0x4a0] sm:$0xff]
        %v475 = vld [vmem:[%s236 + $0x4a8] sm:$0xff]
        %v476 = vld [vmem:[%s236 + $0x4b0] sm:$0xff]
        %v477 = vld [vmem:[%s236 + $0x4b8] sm:$0xff]
        %v478 = vld [vmem:[%s236 + $0x4c0] sm:$0xff]
        %v479 = vld [vmem:[%s236 + $0x4c8] sm:$0xff]
        %v480 = vld [vmem:[%s236 + $0x4d0] sm:$0xff]
        %v481 = vld [vmem:[%s236 + $0x4d8] sm:$0xff]
        %v482 = vld [vmem:[%s236 + $0x4e0] sm:$0xff]
        %v483 = vld [vmem:[%s236 + $0x4e8] sm:$0xff]
        %v484 = vld [vmem:[%s236 + $0x4f0] sm:$0xff]
        %v485 = vld [vmem:[%s236 + $0x4f8] sm:$0xff]
        %v486 = vld [vmem:[%s236 + $0x500] sm:$0xff]
        %v487 = vld [vmem:[%s236 + $0x508] sm:$0xff]
        %v488 = vld [vmem:[%s236 + $0x510] sm:$0xff]
        %v489 = vld [vmem:[%s236 + $0x518] sm:$0xff]
        %v490 = vld [vmem:[%s236 + $0x520] sm:$0xff]
        %v491 = vld [vmem:[%s236 + $0x528] sm:$0xff]
        %v492 = vld [vmem:[%s236 + $0x530] sm:$0xff]
        %v493 = vld [vmem:[%s236 + $0x538] sm:$0xff]
        %v494 = vld [vmem:[%s236 + $0x540] sm:$0xff]
        %v495 = vld [vmem:[%s236 + $0x548] sm:$0xff]
        %v496 = vld [vmem:[%s236 + $0x550] sm:$0xff]
        %v497 = vld [vmem:[%s236 + $0x558] sm:$0xff]
        %v498 = vld [vmem:[%s236 + $0x560] sm:$0xff]
        %v499 = vld [vmem:[%s236 + $0x568] sm:$0xff]
        %v500 = vld [vmem:[%s236 + $0x570] sm:$0xff]
        %v501 = vld [vmem:[%s236 + $0x578] sm:$0xff]
        %v502 = vld [vmem:[%s236 + $0x580] sm:$0xff]
        %v503 = vld [vmem:[%s236 + $0x588] sm:$0xff]
        %v504 = vld [vmem:[%s236 + $0x590] sm:$0xff]
        %v505 = vld [vmem:[%s236 + $0x598] sm:$0xff]
        %v506 = vld [vmem:[%s236 + $0x5a0] sm:$0xff]
        %v507 = vld [vmem:[%s236 + $0x5a8] sm:$0xff]
        %v508 = vld [vmem:[%s236 + $0x5b0] sm:$0xff]
        %v509 = vld [vmem:[%s236 + $0x5b8] sm:$0xff]
        %v510 = vld [vmem:[%s236 + $0x5c0] sm:$0xff]
        %v511 = vld [vmem:[%s236 + $0x5c8] sm:$0xff]
        %v512 = vld [vmem:[%s236 + $0x5d0] sm:$0xff]
        %v513 = vld [vmem:[%s236 + $0x5d8] sm:$0xff]
        %v514 = vld [vmem:[%s236 + $0x5e0] sm:$0xff]
        %v515 = vld [vmem:[%s236 + $0x5e8] sm:$0xff]
        %v516 = vld [vmem:[%s236 + $0x5f0] sm:$0xff]
        %v517 = vld [vmem:[%s236 + $0x5f8] sm:$0xff]
        %v518 = vld [vmem:[%s236 + $0x600] sm:$0xff]
        %v519 = vld [vmem:[%s236 + $0x608] sm:$0xff]
        %v520 = vld [vmem:[%s236 + $0x610] sm:$0xff]
        %v521 = vld [vmem:[%s236 + $0x618] sm:$0xff]
        %v522 = vld [vmem:[%s236 + $0x620] sm:$0xff]
        %v523 = vld [vmem:[%s236 + $0x628] sm:$0xff]
        %v524 = vld [vmem:[%s236 + $0x630] sm:$0xff]
        %v525 = vld [vmem:[%s236 + $0x638] sm:$0xff]
        %v526 = vld [vmem:[%s236 + $0x640] sm:$0xff]
        %v527 = vld [vmem:[%s236 + $0x648] sm:$0xff]
        %v528 = vld [vmem:[%s236 + $0x650] sm:$0xff]
        %v529 = vld [vmem:[%s236 + $0x658] sm:$0xff]
        %v530 = vld [vmem:[%s236 + $0x660] sm:$0xff]
        %v531 = vld [vmem:[%s236 + $0x668] sm:$0xff]
        %v532 = vld [vmem:[%s236 + $0x670] sm:$0xff]
        %v533 = vld [vmem:[%s236 + $0x678] sm:$0xff]
        %v534 = vld [vmem:[%s236 + $0x680] sm:$0xff]
        %v535 = vld [vmem:[%s236 + $0x688] sm:$0xff]
        %v536 = vld [vmem:[%s236 + $0x690] sm:$0xff]
        %v537 = vld [vmem:[%s236 + $0x698] sm:$0xff]
        %v538 = vld [vmem:[%s236 + $0x6a0] sm:$0xff]
        %v539 = vld [vmem:[%s236 + $0x6a8] sm:$0xff]
        %v540 = vld [vmem:[%s236 + $0x6b0] sm:$0xff]
        %v541 = vld [vmem:[%s236 + $0x6b8] sm:$0xff]
        %v542 = vld [vmem:[%s236 + $0x6c0] sm:$0xff]
        %v543 = vld [vmem:[%s236 + $0x6c8] sm:$0xff]
        %v544 = vld [vmem:[%s236 + $0x6d0] sm:$0xff]
        %v545 = vld [vmem:[%s236 + $0x6d8] sm:$0xff]
        %v546 = vld [vmem:[%s236 + $0x6e0] sm:$0xff]
        %v547 = vld [vmem:[%s236 + $0x6e8] sm:$0xff]
        %v548 = vld [vmem:[%s236 + $0x6f0] sm:$0xff]
        %v549 = vld [vmem:[%s236 + $0x6f8] sm:$0xff]
        %v550 = vld [vmem:[%s236 + $0x700] sm:$0xff]
        %v551 = vld [vmem:[%s236 + $0x708] sm:$0xff]
        %v552 = vld [vmem:[%s236 + $0x710] sm:$0xff]
        %v553 = vld [vmem:[%s236 + $0x718] sm:$0xff]
        %v554 = vld [vmem:[%s236 + $0x720] sm:$0xff]
        %v555 = vld [vmem:[%s236 + $0x728] sm:$0xff]
        %v556 = vld [vmem:[%s236 + $0x730] sm:$0xff]
        %v557 = vld [vmem:[%s236 + $0x738] sm:$0xff]
        %v558 = vld [vmem:[%s236 + $0x740] sm:$0xff]
        %v559 = vld [vmem:[%s236 + $0x748] sm:$0xff]
        %v560 = vld [vmem:[%s236 + $0x750] sm:$0xff]
        %v561 = vld [vmem:[%s236 + $0x758] sm:$0xff]
        %v562 = vld [vmem:[%s236 + $0x760] sm:$0xff]
        %v563 = vld [vmem:[%s236 + $0x768] sm:$0xff]
        %v564 = vld [vmem:[%s236 + $0x770] sm:$0xff]
        %v565 = vld [vmem:[%s236 + $0x778] sm:$0xff]
        %v566 = vld [vmem:[%s236 + $0x780] sm:$0xff]
        %v567 = vld [vmem:[%s236 + $0x788] sm:$0xff]
        %v568 = vld [vmem:[%s236 + $0x790] sm:$0xff]
        %v569 = vld [vmem:[%s236 + $0x798] sm:$0xff]
        %v570 = vld [vmem:[%s236 + $0x7a0] sm:$0xff]
        %v571 = vld [vmem:[%s236 + $0x7a8] sm:$0xff]
        %v572 = vld [vmem:[%s236 + $0x7b0] sm:$0xff]
        %v573 = vld [vmem:[%s236 + $0x7b8] sm:$0xff]
        %v574 = vld [vmem:[%s236 + $0x7c0] sm:$0xff]
        %v575 = vld [vmem:[%s236 + $0x7c8] sm:$0xff]
        %v576 = vld [vmem:[%s236 + $0x7d0] sm:$0xff]
        %v577 = vld [vmem:[%s236 + $0x7d8] sm:$0xff]
        %v578 = vld [vmem:[%s236 + $0x7e0] sm:$0xff]
        %v579 = vld [vmem:[%s236 + $0x7e8] sm:$0xff]
        %v580 = vld [vmem:[%s236 + $0x7f0] sm:$0xff]
        %v581 = vld [vmem:[%s236 + $0x7f8] sm:$0xff]
        %v582 = vld [vmem:[%s236 + $0x800] sm:$0xff]
        %v583 = vld [vmem:[%s236 + $0x808] sm:$0xff]
        %v584 = vld [vmem:[%s236 + $0x810] sm:$0xff]
        %v585 = vld [vmem:[%s236 + $0x818] sm:$0xff]
        %v586 = vld [vmem:[%s236 + $0x820] sm:$0xff]
        %v587 = vld [vmem:[%s236 + $0x828] sm:$0xff]
        %v588 = vld [vmem:[%s236 + $0x830] sm:$0xff]
        %v589 = vld [vmem:[%s236 + $0x838] sm:$0xff]
        %v590 = vld [vmem:[%s236 + $0x840] sm:$0xff]
        %v591 = vld [vmem:[%s236 + $0x848] sm:$0xff]
        %v592 = vld [vmem:[%s236 + $0x850] sm:$0xff]
        %v593 = vld [vmem:[%s236 + $0x858] sm:$0xff]
        %v594 = vld [vmem:[%s236 + $0x860] sm:$0xff]
        %v595 = vld [vmem:[%s236 + $0x868] sm:$0xff]
        %v596 = vld [vmem:[%s236 + $0x870] sm:$0xff]
        %v597 = vld [vmem:[%s236 + $0x878] sm:$0xff]
        %v598 = vld [vmem:[%s236 + $0x880] sm:$0xff]
        %v599 = vld [vmem:[%s236 + $0x888] sm:$0xff]
        %v600 = vld [vmem:[%s236 + $0x890] sm:$0xff]
        %v601 = vld [vmem:[%s236 + $0x898] sm:$0xff]
        %v602 = vld [vmem:[%s236 + $0x8a0] sm:$0xff]
        %v603 = vld [vmem:[%s236 + $0x8a8] sm:$0xff]
        %v604 = vld [vmem:[%s236 + $0x8b0] sm:$0xff]
        %v605 = vld [vmem:[%s236 + $0x8b8] sm:$0xff]
        %v606 = vld [vmem:[%s236 + $0x8c0] sm:$0xff]
        %v607 = vld [vmem:[%s236 + $0x8c8] sm:$0xff]
        %v608 = vld [vmem:[%s236 + $0x8d0] sm:$0xff]
        %v609 = vld [vmem:[%s236 + $0x8d8] sm:$0xff]
        %v610 = vld [vmem:[%s236 + $0x8e0] sm:$0xff]
        %v611 = vld [vmem:[%s236 + $0x8e8] sm:$0xff]
        %v612 = vld [vmem:[%s236 + $0x8f0] sm:$0xff]
        %v613 = vld [vmem:[%s236 + $0x8f8] sm:$0xff]
        %v614 = vld [vmem:[%s236 + $0x900] sm:$0xff]
        %v615 = vld [vmem:[%s236 + $0x908] sm:$0xff]
        %v616 = vld [vmem:[%s236 + $0x910] sm:$0xff]
        %v617 = vld [vmem:[%s236 + $0x918] sm:$0xff]
        %v618 = vld [vmem:[%s236 + $0x920] sm:$0xff]
        %v619 = vld [vmem:[%s236 + $0x928] sm:$0xff]
        %v620 = vld [vmem:[%s236 + $0x930] sm:$0xff]
        %v621 = vld [vmem:[%s236 + $0x938] sm:$0xff]
        %v622 = vld [vmem:[%s236 + $0x940] sm:$0xff]
        %v623 = vld [vmem:[%s236 + $0x948] sm:$0xff]
        %v624 = vld [vmem:[%s236 + $0x950] sm:$0xff]
        %v625 = vld [vmem:[%s236 + $0x958] sm:$0xff]
        %v626 = vld [vmem:[%s236 + $0x960] sm:$0xff]
        %v627 = vld [vmem:[%s236 + $0x968] sm:$0xff]
        %v628 = vld [vmem:[%s236 + $0x970] sm:$0xff]
        %v629 = vld [vmem:[%s236 + $0x978] sm:$0xff]
        %v630 = vld [vmem:[%s236 + $0x980] sm:$0xff]
        %v631 = vld [vmem:[%s236 + $0x988] sm:$0xff]
        %v632 = vld [vmem:[%s236 + $0x990] sm:$0xff]
        %v633 = vld [vmem:[%s236 + $0x998] sm:$0xff]
        %v634 = vld [vmem:[%s236 + $0x9a0] sm:$0xff]
        %v635 = vld [vmem:[%s236 + $0x9a8] sm:$0xff]
        %v636 = vld [vmem:[%s236 + $0x9b0] sm:$0xff]
        %v637 = vld [vmem:[%s236 + $0x9b8] sm:$0xff]
        %v638 = vld [vmem:[%s236 + $0x9c0] sm:$0xff]
        %v639 = vld [vmem:[%s236 + $0x9c8] sm:$0xff]
        %v640 = vld [vmem:[%s236 + $0x9d0] sm:$0xff]
        %v641 = vld [vmem:[%s236 + $0x9d8] sm:$0xff]
        %v642 = vld [vmem:[%s236 + $0x9e0] sm:$0xff]
        %v643 = vld [vmem:[%s236 + $0x9e8] sm:$0xff]
        %v644 = vld [vmem:[%s236 + $0x9f0] sm:$0xff]
        %v645 = vld [vmem:[%s236 + $0x9f8] sm:$0xff]
        %v646 = vld [vmem:[%s236 + $0xa00] sm:$0xff]
        %v647 = vld [vmem:[%s236 + $0xa08] sm:$0xff]
        %v648 = vld [vmem:[%s236 + $0xa10] sm:$0xff]
        %v649 = vld [vmem:[%s236 + $0xa18] sm:$0xff]
        %v650 = vld [vmem:[%s236 + $0xa20] sm:$0xff]
        %v651 = vld [vmem:[%s236 + $0xa28] sm:$0xff]
        %v652 = vld [vmem:[%s236 + $0xa30] sm:$0xff]
        %v653 = vld [vmem:[%s236 + $0xa38] sm:$0xff]
        %v654 = vld [vmem:[%s236 + $0xa40] sm:$0xff]
        %v655 = vld [vmem:[%s236 + $0xa48] sm:$0xff]
        %v656 = vld [vmem:[%s236 + $0xa50] sm:$0xff]
        %v657 = vld [vmem:[%s236 + $0xa58] sm:$0xff]
        %v658 = vld [vmem:[%s236 + $0xa60] sm:$0xff]
        %v659 = vld [vmem:[%s236 + $0xa68] sm:$0xff]
        %v660 = vld [vmem:[%s236 + $0xa70] sm:$0xff]
        %v661 = vld [vmem:[%s236 + $0xa78] sm:$0xff]
        %v662 = vld [vmem:[%s236 + $0xa80] sm:$0xff]
        %v663 = vld [vmem:[%s236 + $0xa88] sm:$0xff]
        %v664 = vld [vmem:[%s236 + $0xa90] sm:$0xff]
        %v665 = vld [vmem:[%s236 + $0xa98] sm:$0xff]
        %v666 = vld [vmem:[%s236 + $0xaa0] sm:$0xff]
        %v667 = vld [vmem:[%s236 + $0xaa8] sm:$0xff]
        %v668 = vld [vmem:[%s236 + $0xab0] sm:$0xff]
        %v669 = vld [vmem:[%s236 + $0xab8] sm:$0xff]
        %v670 = vld [vmem:[%s236 + $0xac0] sm:$0xff]
        %v671 = vld [vmem:[%s236 + $0xac8] sm:$0xff]
        %v672 = vld [vmem:[%s236 + $0xad0] sm:$0xff]
        %v673 = vld [vmem:[%s236 + $0xad8] sm:$0xff]
        %v674 = vld [vmem:[%s236 + $0xae0] sm:$0xff]
        %v675 = vld [vmem:[%s236 + $0xae8] sm:$0xff]
        %v676 = vld [vmem:[%s236 + $0xaf0] sm:$0xff]
        %v677 = vld [vmem:[%s236 + $0xaf8] sm:$0xff]
        %v678 = vld [vmem:[%s236 + $0xb00] sm:$0xff]
        %v679 = vld [vmem:[%s236 + $0xb08] sm:$0xff]
        %v680 = vld [vmem:[%s236 + $0xb10] sm:$0xff]
        %v681 = vld [vmem:[%s236 + $0xb18] sm:$0xff]
        %v682 = vld [vmem:[%s236 + $0xb20] sm:$0xff]
        %v683 = vld [vmem:[%s236 + $0xb28] sm:$0xff]
        %v684 = vld [vmem:[%s236 + $0xb30] sm:$0xff]
        %v685 = vld [vmem:[%s236 + $0xb38] sm:$0xff]
        %v686 = vld [vmem:[%s236 + $0xb40] sm:$0xff]
        %v687 = vld [vmem:[%s236 + $0xb48] sm:$0xff]
        %v688 = vld [vmem:[%s236 + $0xb50] sm:$0xff]
        %v689 = vld [vmem:[%s236 + $0xb58] sm:$0xff]
        %v690 = vld [vmem:[%s236 + $0xb60] sm:$0xff]
        %v691 = vld [vmem:[%s236 + $0xb68] sm:$0xff]
        %v692 = vld [vmem:[%s236 + $0xb70] sm:$0xff]
        %v693 = vld [vmem:[%s236 + $0xb78] sm:$0xff]
        %v694 = vld [vmem:[%s236 + $0xb80] sm:$0xff]
        %v695 = vld [vmem:[%s236 + $0xb88] sm:$0xff]
        %v696 = vld [vmem:[%s236 + $0xb90] sm:$0xff]
        %v697 = vld [vmem:[%s236 + $0xb98] sm:$0xff]
        %v698 = vld [vmem:[%s236 + $0xba0] sm:$0xff]
        %v699 = vld [vmem:[%s236 + $0xba8] sm:$0xff]
        %v700 = vld [vmem:[%s236 + $0xbb0] sm:$0xff]
        %v701 = vld [vmem:[%s236 + $0xbb8] sm:$0xff]
        %v702 = vld [vmem:[%s236 + $0xbc0] sm:$0xff]
        %v703 = vld [vmem:[%s236 + $0xbc8] sm:$0xff]
        %v704 = vld [vmem:[%s236 + $0xbd0] sm:$0xff]
        %v705 = vld [vmem:[%s236 + $0xbd8] sm:$0xff]
        %v706 = vld [vmem:[%s236 + $0xbe0] sm:$0xff]
        %v707 = vld [vmem:[%s236 + $0xbe8] sm:$0xff]
        %v708 = vld [vmem:[%s236 + $0xbf0] sm:$0xff]
        %v709 = vld [vmem:[%s236 + $0xbf8] sm:$0xff]
        %v710 = vld [vmem:[%s236 + $0xc00] sm:$0xff]
        %v711 = vld [vmem:[%s236 + $0xc08] sm:$0xff]
        %v712 = vld [vmem:[%s236 + $0xc10] sm:$0xff]
        %v713 = vld [vmem:[%s236 + $0xc18] sm:$0xff]
        %v714 = vld [vmem:[%s236 + $0xc20] sm:$0xff]
        %v715 = vld [vmem:[%s236 + $0xc28] sm:$0xff]
        %v716 = vld [vmem:[%s236 + $0xc30] sm:$0xff]
        %v717 = vld [vmem:[%s236 + $0xc38] sm:$0xff]
        %v718 = vld [vmem:[%s236 + $0xc40] sm:$0xff]
        %v719 = vld [vmem:[%s236 + $0xc48] sm:$0xff]
        %v720 = vld [vmem:[%s236 + $0xc50] sm:$0xff]
        %v721 = vld [vmem:[%s236 + $0xc58] sm:$0xff]
        %v722 = vld [vmem:[%s236 + $0xc60] sm:$0xff]
        %v723 = vld [vmem:[%s236 + $0xc68] sm:$0xff]
        %v724 = vld [vmem:[%s236 + $0xc70] sm:$0xff]
        %v725 = vld [vmem:[%s236 + $0xc78] sm:$0xff]
        %v726 = vld [vmem:[%s236 + $0xc80] sm:$0xff]
        %v727 = vld [vmem:[%s236 + $0xc88] sm:$0xff]
        %v728 = vld [vmem:[%s236 + $0xc90] sm:$0xff]
        %v729 = vld [vmem:[%s236 + $0xc98] sm:$0xff]
        %v730 = vld [vmem:[%s236 + $0xca0] sm:$0xff]
        %v731 = vld [vmem:[%s236 + $0xca8] sm:$0xff]
        %v732 = vld [vmem:[%s236 + $0xcb0] sm:$0xff]
        %v733 = vld [vmem:[%s236 + $0xcb8] sm:$0xff]
        %v734 = vld [vmem:[%s236 + $0xcc0] sm:$0xff]
        %v735 = vld [vmem:[%s236 + $0xcc8] sm:$0xff]
        %v736 = vld [vmem:[%s236 + $0xcd0] sm:$0xff]
        %v737 = vld [vmem:[%s236 + $0xcd8] sm:$0xff]
        %v738 = vld [vmem:[%s236 + $0xce0] sm:$0xff]
        %v739 = vld [vmem:[%s236 + $0xce8] sm:$0xff]
        %v740 = vld [vmem:[%s236 + $0xcf0] sm:$0xff]
        %v741 = vld [vmem:[%s236 + $0xcf8] sm:$0xff]
        %v742 = vld [vmem:[%s236 + $0xd00] sm:$0xff]
        %v743 = vld [vmem:[%s236 + $0xd08] sm:$0xff]
        %v744 = vld [vmem:[%s236 + $0xd10] sm:$0xff]
        %v745 = vld [vmem:[%s236 + $0xd18] sm:$0xff]
        %v746 = vld [vmem:[%s236 + $0xd20] sm:$0xff]
        %v747 = vld [vmem:[%s236 + $0xd28] sm:$0xff]
        %v748 = vld [vmem:[%s236 + $0xd30] sm:$0xff]
        %v749 = vld [vmem:[%s236 + $0xd38] sm:$0xff]
        %v750 = vld [vmem:[%s236 + $0xd40] sm:$0xff]
        %v751 = vld [vmem:[%s236 + $0xd48] sm:$0xff]
        %v752 = vld [vmem:[%s236 + $0xd50] sm:$0xff]
        %v753 = vld [vmem:[%s236 + $0xd58] sm:$0xff]
        %v754 = vld [vmem:[%s236 + $0xd60] sm:$0xff]
        %v755 = vld [vmem:[%s236 + $0xd68] sm:$0xff]
        %v756 = vld [vmem:[%s236 + $0xd70] sm:$0xff]
        %v757 = vld [vmem:[%s236 + $0xd78] sm:$0xff]
        %v758 = vld [vmem:[%s236 + $0xd80] sm:$0xff]
        %v759 = vld [vmem:[%s236 + $0xd88] sm:$0xff]
        %v760 = vld [vmem:[%s236 + $0xd90] sm:$0xff]
        %v761 = vld [vmem:[%s236 + $0xd98] sm:$0xff]
        %v762 = vld [vmem:[%s236 + $0xda0] sm:$0xff]
        %v763 = vld [vmem:[%s236 + $0xda8] sm:$0xff]
        %v764 = vld [vmem:[%s236 + $0xdb0] sm:$0xff]
        %v765 = vld [vmem:[%s236 + $0xdb8] sm:$0xff]
        %v766 = vld [vmem:[%s236 + $0xdc0] sm:$0xff]
        %v767 = vld [vmem:[%s236 + $0xdc8] sm:$0xff]
        %v768 = vld [vmem:[%s236 + $0xdd0] sm:$0xff]
        %v769 = vld [vmem:[%s236 + $0xdd8] sm:$0xff]
        %v770 = vld [vmem:[%s236 + $0xde0] sm:$0xff]
        %v771 = vld [vmem:[%s236 + $0xde8] sm:$0xff]
        %v772 = vld [vmem:[%s236 + $0xdf0] sm:$0xff]
        %v773 = vld [vmem:[%s236 + $0xdf8] sm:$0xff]
        %v774 = vld [vmem:[%s236 + $0xe00] sm:$0xff]
        %v775 = vld [vmem:[%s236 + $0xe08] sm:$0xff]
        %v776 = vld [vmem:[%s236 + $0xe10] sm:$0xff]
        %v777 = vld [vmem:[%s236 + $0xe18] sm:$0xff]
        %v778 = vld [vmem:[%s236 + $0xe20] sm:$0xff]
        %v779 = vld [vmem:[%s236 + $0xe28] sm:$0xff]
        %v780 = vld [vmem:[%s236 + $0xe30] sm:$0xff]
        %v781 = vld [vmem:[%s236 + $0xe38] sm:$0xff]
        %v782 = vld [vmem:[%s236 + $0xe40] sm:$0xff]
        %v783 = vld [vmem:[%s236 + $0xe48] sm:$0xff]
        %v784 = vld [vmem:[%s236 + $0xe50] sm:$0xff]
        %v785 = vld [vmem:[%s236 + $0xe58] sm:$0xff]
        %v786 = vld [vmem:[%s236 + $0xe60] sm:$0xff]
        %v787 = vld [vmem:[%s236 + $0xe68] sm:$0xff]
        %v788 = vld [vmem:[%s236 + $0xe70] sm:$0xff]
        %v789 = vld [vmem:[%s236 + $0xe78] sm:$0xff]
        %v790 = vld [vmem:[%s236 + $0xe80] sm:$0xff]
        %v791 = vld [vmem:[%s236 + $0xe88] sm:$0xff]
        %v792 = vld [vmem:[%s236 + $0xe90] sm:$0xff]
        %v793 = vld [vmem:[%s236 + $0xe98] sm:$0xff]
        %v794 = vld [vmem:[%s236 + $0xea0] sm:$0xff]
        %v795 = vld [vmem:[%s236 + $0xea8] sm:$0xff]
        %v796 = vld [vmem:[%s236 + $0xeb0] sm:$0xff]
        %v797 = vld [vmem:[%s236 + $0xeb8] sm:$0xff]
        %v798 = vld [vmem:[%s236 + $0xec0] sm:$0xff]
        %v799 = vld [vmem:[%s236 + $0xec8] sm:$0xff]
        %v800 = vld [vmem:[%s236 + $0xed0] sm:$0xff]
        %v801 = vld [vmem:[%s236 + $0xed8] sm:$0xff]
        %v802 = vld [vmem:[%s236 + $0xee0] sm:$0xff]
        %v803 = vld [vmem:[%s236 + $0xee8] sm:$0xff]
        %v804 = vld [vmem:[%s236 + $0xef0] sm:$0xff]
        %v805 = vld [vmem:[%s236 + $0xef8] sm:$0xff]
        %v806 = vld [vmem:[%s236 + $0xf00] sm:$0xff]
        %v807 = vld [vmem:[%s236 + $0xf08] sm:$0xff]
        %v808 = vld [vmem:[%s236 + $0xf10] sm:$0xff]
        %v809 = vld [vmem:[%s236 + $0xf18] sm:$0xff]
        %v810 = vld [vmem:[%s236 + $0xf20] sm:$0xff]
        %v811 = vld [vmem:[%s236 + $0xf28] sm:$0xff]
        %v812 = vld [vmem:[%s236 + $0xf30] sm:$0xff]
        %v813 = vld [vmem:[%s236 + $0xf38] sm:$0xff]
        %v814 = vld [vmem:[%s236 + $0xf40] sm:$0xff]
        %v815 = vld [vmem:[%s236 + $0xf48] sm:$0xff]
        %v816 = vld [vmem:[%s236 + $0xf50] sm:$0xff]
        %v817 = vld [vmem:[%s236 + $0xf58] sm:$0xff]
        %v818 = vld [vmem:[%s236 + $0xf60] sm:$0xff]
        %v819 = vld [vmem:[%s236 + $0xf68] sm:$0xff]
        %v820 = vld [vmem:[%s236 + $0xf70] sm:$0xff]
        %v821 = vld [vmem:[%s236 + $0xf78] sm:$0xff]
        %v822 = vld [vmem:[%s236 + $0xf80] sm:$0xff]
        %v823 = vld [vmem:[%s236 + $0xf88] sm:$0xff]
        %v824 = vld [vmem:[%s236 + $0xf90] sm:$0xff]
        %v825 = vld [vmem:[%s236 + $0xf98] sm:$0xff]
        %v826 = vld [vmem:[%s236 + $0xfa0] sm:$0xff]
        %v827 = vld [vmem:[%s236 + $0xfa8] sm:$0xff]
        %v828 = vld [vmem:[%s236 + $0xfb0] sm:$0xff]
        %v829 = vld [vmem:[%s236 + $0xfb8] sm:$0xff]
        %v830 = vld [vmem:[%s236 + $0xfc0] sm:$0xff]
        %v831 = vld [vmem:[%s236 + $0xfc8] sm:$0xff]
        %v832 = vld [vmem:[%s236 + $0xfd0] sm:$0xff]
        %v833 = vld [vmem:[%s236 + $0xfd8] sm:$0xff]
        %v834 = vld [vmem:[%s236 + $0xfe0] sm:$0xff]
        %v835 = vld [vmem:[%s236 + $0xfe8] sm:$0xff]
        %v836 = vld [vmem:[%s236 + $0xff0] sm:$0xff]
        %v837 = vld [vmem:[%s236 + $0xff8] sm:$0xff]
        %v838 = vld [vmem:[%s236 + $0x1000] sm:$0xff]
        %v839 = vld [vmem:[%s236 + $0x1008] sm:$0xff]
        %v840 = vld [vmem:[%s236 + $0x1010] sm:$0xff]
        %v841 = vld [vmem:[%s236 + $0x1018] sm:$0xff]
        %v842 = vld [vmem:[%s236 + $0x1020] sm:$0xff]
        %v843 = vld [vmem:[%s236 + $0x1028] sm:$0xff]
        %v844 = vld [vmem:[%s236 + $0x1030] sm:$0xff]
        %v845 = vld [vmem:[%s236 + $0x1038] sm:$0xff]
        %v846 = vld [vmem:[%s236 + $0x1040] sm:$0xff]
        %v847 = vld [vmem:[%s236 + $0x1048] sm:$0xff]
        %v848 = vld [vmem:[%s236 + $0x1050] sm:$0xff]
        %v849 = vld [vmem:[%s236 + $0x1058] sm:$0xff]
        %v850 = vld [vmem:[%s236 + $0x1060] sm:$0xff]
        %v851 = vld [vmem:[%s236 + $0x1068] sm:$0xff]
        %v852 = vld [vmem:[%s236 + $0x1070] sm:$0xff]
        %v853 = vld [vmem:[%s236 + $0x1078] sm:$0xff]
        %v854 = vld [vmem:[%s236 + $0x1080] sm:$0xff]
        %v855 = vld [vmem:[%s236 + $0x1088] sm:$0xff]
        %v856 = vld [vmem:[%s236 + $0x1090] sm:$0xff]
        %v857 = vld [vmem:[%s236 + $0x1098] sm:$0xff]
        %v858 = vld [vmem:[%s236 + $0x10a0] sm:$0xff]
        %v859 = vld [vmem:[%s236 + $0x10a8] sm:$0xff]
        %v860 = vld [vmem:[%s236 + $0x10b0] sm:$0xff]
        %v861 = vld [vmem:[%s236 + $0x10b8] sm:$0xff]
        %v862 = vld [vmem:[%s236 + $0x10c0] sm:$0xff]
        %v863 = vld [vmem:[%s236 + $0x10c8] sm:$0xff]
        %v864 = vld [vmem:[%s236 + $0x10d0] sm:$0xff]
        %v865 = vld [vmem:[%s236 + $0x10d8] sm:$0xff]
        %v866 = vld [vmem:[%s236 + $0x10e0] sm:$0xff]
        %v867 = vld [vmem:[%s236 + $0x10e8] sm:$0xff]
        %v868 = vld [vmem:[%s236 + $0x10f0] sm:$0xff]
        %v869 = vld [vmem:[%s236 + $0x10f8] sm:$0xff]
        %v870 = vld [vmem:[%s236 + $0x1100] sm:$0xff]
        %v871 = vld [vmem:[%s236 + $0x1108] sm:$0xff]
        %v872 = vld [vmem:[%s236 + $0x1110] sm:$0xff]
        %v873 = vld [vmem:[%s236 + $0x1118] sm:$0xff]
        %v874 = vld [vmem:[%s236 + $0x1120] sm:$0xff]
        %v875 = vld [vmem:[%s236 + $0x1128] sm:$0xff]
        %v876 = vld [vmem:[%s236 + $0x1130] sm:$0xff]
        %v877 = vld [vmem:[%s236 + $0x1138] sm:$0xff]
        %v878 = vld [vmem:[%s236 + $0x1140] sm:$0xff]
        %v879 = vld [vmem:[%s236 + $0x1148] sm:$0xff]
        %v880 = vld [vmem:[%s236 + $0x1150] sm:$0xff]
        %v881 = vld [vmem:[%s236 + $0x1158] sm:$0xff]
        %v882 = vld [vmem:[%s236 + $0x1160] sm:$0xff]
        %v883 = vld [vmem:[%s236 + $0x1168] sm:$0xff]
        %v884 = vld [vmem:[%s236 + $0x1170] sm:$0xff]
        %v885 = vld [vmem:[%s236 + $0x1178] sm:$0xff]
        %v886 = vld [vmem:[%s236 + $0x1180] sm:$0xff]
        %v887 = vld [vmem:[%s236 + $0x1188] sm:$0xff]
        %v888 = vld [vmem:[%s236 + $0x1190] sm:$0xff]
        %v889 = vld [vmem:[%s236 + $0x1198] sm:$0xff]
        %v890 = vld [vmem:[%s236 + $0x11a0] sm:$0xff]
        %v891 = vld [vmem:[%s236 + $0x11a8] sm:$0xff]
        %v892 = vld [vmem:[%s236 + $0x11b0] sm:$0xff]
        %v893 = vld [vmem:[%s236 + $0x11b8] sm:$0xff]
        %v894 = vld [vmem:[%s236 + $0x11c0] sm:$0xff]
        %v895 = vld [vmem:[%s236 + $0x11c8] sm:$0xff]
        %v896 = vld [vmem:[%s236 + $0x11d0] sm:$0xff]
        %v897 = vld [vmem:[%s236 + $0x11d8] sm:$0xff]
        %v898 = vld [vmem:[%s236 + $0x11e0] sm:$0xff]
        %v899 = vld [vmem:[%s236 + $0x11e8] sm:$0xff]
        %v900 = vld [vmem:[%s236 + $0x11f0] sm:$0xff]
        %v901 = vld [vmem:[%s236 + $0x11f8] sm:$0xff]
        %v902 = vld [vmem:[%s236 + $0x1200] sm:$0xff]
        %v903 = vld [vmem:[%s236 + $0x1208] sm:$0xff]
        %v904 = vld [vmem:[%s236 + $0x1210] sm:$0xff]
        %v905 = vld [vmem:[%s236 + $0x1218] sm:$0xff]
        %v906 = vld [vmem:[%s236 + $0x1220] sm:$0xff]
        %v907 = vld [vmem:[%s236 + $0x1228] sm:$0xff]
        %v908 = vld [vmem:[%s236 + $0x1230] sm:$0xff]
        %v909 = vld [vmem:[%s236 + $0x1238] sm:$0xff]
        %v910 = vld [vmem:[%s236 + $0x1240] sm:$0xff]
        %v911 = vld [vmem:[%s236 + $0x1248] sm:$0xff]
        %v912 = vld [vmem:[%s236 + $0x1250] sm:$0xff]
        %v913 = vld [vmem:[%s236 + $0x1258] sm:$0xff]
        %v914 = vld [vmem:[%s236 + $0x1260] sm:$0xff]
        %v915 = vld [vmem:[%s236 + $0x1268] sm:$0xff]
        %v916 = vld [vmem:[%s236 + $0x1270] sm:$0xff]
        %v917 = vld [vmem:[%s236 + $0x1278] sm:$0xff]
        %v918 = vld [vmem:[%s236 + $0x1280] sm:$0xff]
        %v919 = vld [vmem:[%s236 + $0x1288] sm:$0xff]
        %v920 = vld [vmem:[%s236 + $0x1290] sm:$0xff]
        %v921 = vld [vmem:[%s236 + $0x1298] sm:$0xff]
        %v922 = vld [vmem:[%s236 + $0x12a0] sm:$0xff]
        %v923 = vld [vmem:[%s236 + $0x12a8] sm:$0xff]
        %v924 = vld [vmem:[%s236 + $0x12b0] sm:$0xff]
        %v925 = vld [vmem:[%s236 + $0x12b8] sm:$0xff]
        %v926 = vld [vmem:[%s236 + $0x12c0] sm:$0xff]
        %v927 = vld [vmem:[%s236 + $0x12c8] sm:$0xff]
        %v928 = vld [vmem:[%s236 + $0x12d0] sm:$0xff]
        %v929 = vld [vmem:[%s236 + $0x12d8] sm:$0xff]
        %v930 = vld [vmem:[%s236 + $0x12e0] sm:$0xff]
        %v931 = vld [vmem:[%s236 + $0x12e8] sm:$0xff]
        %v932 = vld [vmem:[%s236 + $0x12f0] sm:$0xff]
        %v933 = vld [vmem:[%s236 + $0x12f8] sm:$0xff]
        %v934 = vld [vmem:[%s236 + $0x1300] sm:$0xff]
        %v935 = vld [vmem:[%s236 + $0x1308] sm:$0xff]
        %v936 = vld [vmem:[%s236 + $0x1310] sm:$0xff]
        %v937 = vld [vmem:[%s236 + $0x1318] sm:$0xff]
        %v938 = vld [vmem:[%s236 + $0x1320] sm:$0xff]
        %v939 = vld [vmem:[%s236 + $0x1328] sm:$0xff]
        %v940 = vld [vmem:[%s236 + $0x1330] sm:$0xff]
        %v941 = vld [vmem:[%s236 + $0x1338] sm:$0xff]
        %v942 = vld [vmem:[%s236 + $0x1340] sm:$0xff]
        %v943 = vld [vmem:[%s236 + $0x1348] sm:$0xff]
        %v944 = vld [vmem:[%s236 + $0x1350] sm:$0xff]
        %v945 = vld [vmem:[%s236 + $0x1358] sm:$0xff]
        %v946 = vld [vmem:[%s236 + $0x1360] sm:$0xff]
        %v947 = vld [vmem:[%s236 + $0x1368] sm:$0xff]
        %v948 = vld [vmem:[%s236 + $0x1370] sm:$0xff]
        %v949 = vld [vmem:[%s236 + $0x1378] sm:$0xff]
        %v950 = vld [vmem:[%s236 + $0x1380] sm:$0xff]
        %v951 = vld [vmem:[%s236 + $0x1388] sm:$0xff]
        %v952 = vld [vmem:[%s236 + $0x1390] sm:$0xff]
        %v953 = vld [vmem:[%s236 + $0x1398] sm:$0xff]
        %v954 = vld [vmem:[%s236 + $0x13a0] sm:$0xff]
        %v955 = vld [vmem:[%s236 + $0x13a8] sm:$0xff]
        %v956 = vld [vmem:[%s236 + $0x13b0] sm:$0xff]
        %v957 = vld [vmem:[%s236 + $0x13b8] sm:$0xff]
        %v958 = vld [vmem:[%s236 + $0x13c0] sm:$0xff]
        %v959 = vld [vmem:[%s236 + $0x13c8] sm:$0xff]
        %v960 = vld [vmem:[%s236 + $0x13d0] sm:$0xff]
        %v961 = vld [vmem:[%s236 + $0x13d8] sm:$0xff]
        %v962 = vld [vmem:[%s236 + $0x13e0] sm:$0xff]
        %v963 = vld [vmem:[%s236 + $0x13e8] sm:$0xff]
        %v964 = vld [vmem:[%s236 + $0x13f0] sm:$0xff]
        %v965 = vld [vmem:[%s236 + $0x13f8] sm:$0xff]
        %v966 = vld [vmem:[%s236 + $0x1400] sm:$0xff]
        %v967 = vld [vmem:[%s236 + $0x1408] sm:$0xff]
        %v968 = vld [vmem:[%s236 + $0x1410] sm:$0xff]
        %v969 = vld [vmem:[%s236 + $0x1418] sm:$0xff]
        %v970 = vld [vmem:[%s236 + $0x1420] sm:$0xff]
        %v971 = vld [vmem:[%s236 + $0x1428] sm:$0xff]
        %v972 = vld [vmem:[%s236 + $0x1430] sm:$0xff]
        %v973 = vld [vmem:[%s236 + $0x1438] sm:$0xff]
        %v974 = vld [vmem:[%s236 + $0x1440] sm:$0xff]
        %v975 = vld [vmem:[%s236 + $0x1448] sm:$0xff]
        %v976 = vld [vmem:[%s236 + $0x1450] sm:$0xff]
        %v977 = vld [vmem:[%s236 + $0x1458] sm:$0xff]
        %v978 = vld [vmem:[%s236 + $0x1460] sm:$0xff]
        %v979 = vld [vmem:[%s236 + $0x1468] sm:$0xff]
        %v980 = vld [vmem:[%s236 + $0x1470] sm:$0xff]
        %v981 = vld [vmem:[%s236 + $0x1478] sm:$0xff]
        %v982 = vld [vmem:[%s236 + $0x1480] sm:$0xff]
        %v983 = vld [vmem:[%s236 + $0x1488] sm:$0xff]
        %v984 = vld [vmem:[%s236 + $0x1490] sm:$0xff]
        %v985 = vld [vmem:[%s236 + $0x1498] sm:$0xff]
        %v986 = vld [vmem:[%s236 + $0x14a0] sm:$0xff]
        %v987 = vld [vmem:[%s236 + $0x14a8] sm:$0xff]
        %v988 = vld [vmem:[%s236 + $0x14b0] sm:$0xff]
        %v989 = vld [vmem:[%s236 + $0x14b8] sm:$0xff]
        %v990 = vld [vmem:[%s236 + $0x14c0] sm:$0xff]
        %v991 = vld [vmem:[%s236 + $0x14c8] sm:$0xff]
        %v992 = vld [vmem:[%s236 + $0x14d0] sm:$0xff]
        %v993 = vld [vmem:[%s236 + $0x14d8] sm:$0xff]
        %v994 = vld [vmem:[%s236 + $0x14e0] sm:$0xff]
        %v995 = vld [vmem:[%s236 + $0x14e8] sm:$0xff]
        %v996 = vld [vmem:[%s236 + $0x14f0] sm:$0xff]
        %v997 = vld [vmem:[%s236 + $0x14f8] sm:$0xff]
        %v998 = vld [vmem:[%s236 + $0x1500] sm:$0xff]
        %v999 = vld [vmem:[%s236 + $0x1508] sm:$0xff]
        %v1000 = vld [vmem:[%s236 + $0x1510] sm:$0xff]
        %v1001 = vld [vmem:[%s236 + $0x1518] sm:$0xff]
        %v1002 = vld [vmem:[%s236 + $0x1520] sm:$0xff]
        %v1003 = vld [vmem:[%s236 + $0x1528] sm:$0xff]
        %v1004 = vld [vmem:[%s236 + $0x1530] sm:$0xff]
        %v1005 = vld [vmem:[%s236 + $0x1538] sm:$0xff]
        %v1006 = vld [vmem:[%s236 + $0x1540] sm:$0xff]
        %v1007 = vld [vmem:[%s236 + $0x1548] sm:$0xff]
        %v1008 = vld [vmem:[%s236 + $0x1550] sm:$0xff]
        %v1009 = vld [vmem:[%s236 + $0x1558] sm:$0xff]
        %v1010 = vld [vmem:[%s236 + $0x1560] sm:$0xff]
        %v1011 = vld [vmem:[%s236 + $0x1568] sm:$0xff]
        %v1012 = vld [vmem:[%s236 + $0x1570] sm:$0xff]
        %v1013 = vld [vmem:[%s236 + $0x1578] sm:$0xff]
        %v1014 = vld [vmem:[%s236 + $0x1580] sm:$0xff]
        %v1015 = vld [vmem:[%s236 + $0x1588] sm:$0xff]
        %v1016 = vld [vmem:[%s236 + $0x1590] sm:$0xff]
        %v1017 = vld [vmem:[%s236 + $0x1598] sm:$0xff]
        %v1018 = vld [vmem:[%s236 + $0x15a0] sm:$0xff]
        %v1019 = vld [vmem:[%s236 + $0x15a8] sm:$0xff]
        %v1020 = vld [vmem:[%s236 + $0x15b0] sm:$0xff]
        %v1021 = vld [vmem:[%s236 + $0x15b8] sm:$0xff]
        %v1022 = vld [vmem:[%s236 + $0x15c0] sm:$0xff]
        %v1023 = vld [vmem:[%s236 + $0x15c8] sm:$0xff]
        %v1024 = vld [vmem:[%s236 + $0x15d0] sm:$0xff]
        %v1025 = vld [vmem:[%s236 + $0x15d8] sm:$0xff]
        %v1026 = vld [vmem:[%s236 + $0x15e0] sm:$0xff]
        %v1027 = vld [vmem:[%s236 + $0x15e8] sm:$0xff]
        %v1028 = vld [vmem:[%s236 + $0x15f0] sm:$0xff]
        %v1029 = vld [vmem:[%s236 + $0x15f8] sm:$0xff]
        %v1030 = vld [vmem:[%s236 + $0x1600] sm:$0xff]
        %v1031 = vld [vmem:[%s236 + $0x1608] sm:$0xff]
        %v1032 = vld [vmem:[%s236 + $0x1610] sm:$0xff]
        %v1033 = vld [vmem:[%s236 + $0x1618] sm:$0xff]
        %v1034 = vld [vmem:[%s236 + $0x1620] sm:$0xff]
        %v1035 = vld [vmem:[%s236 + $0x1628] sm:$0xff]
        %v1036 = vld [vmem:[%s236 + $0x1630] sm:$0xff]
        %v1037 = vld [vmem:[%s236 + $0x1638] sm:$0xff]
        %v1038 = vld [vmem:[%s236 + $0x1640] sm:$0xff]
        %v1039 = vld [vmem:[%s236 + $0x1648] sm:$0xff]
        %v1040 = vld [vmem:[%s236 + $0x1650] sm:$0xff]
        %v1041 = vld [vmem:[%s236 + $0x1658] sm:$0xff]
        %v1042 = vld [vmem:[%s236 + $0x1660] sm:$0xff]
        %v1043 = vld [vmem:[%s236 + $0x1668] sm:$0xff]
        %v1044 = vld [vmem:[%s236 + $0x1670] sm:$0xff]
        %v1045 = vld [vmem:[%s236 + $0x1678] sm:$0xff]
        %v1046 = vld [vmem:[%s236 + $0x1680] sm:$0xff]
        %v1047 = vld [vmem:[%s236 + $0x1688] sm:$0xff]
        %v1048 = vld [vmem:[%s236 + $0x1690] sm:$0xff]
        %v1049 = vld [vmem:[%s236 + $0x1698] sm:$0xff]
        %v1050 = vld [vmem:[%s236 + $0x16a0] sm:$0xff]
        %v1051 = vld [vmem:[%s236 + $0x16a8] sm:$0xff]
        %v1052 = vld [vmem:[%s236 + $0x16b0] sm:$0xff]
        %v1053 = vld [vmem:[%s236 + $0x16b8] sm:$0xff]
        %v1054 = vld [vmem:[%s236 + $0x16c0] sm:$0xff]
        %v1055 = vld [vmem:[%s236 + $0x16c8] sm:$0xff]
        %v1056 = vld [vmem:[%s236 + $0x16d0] sm:$0xff]
        %v1057 = vld [vmem:[%s236 + $0x16d8] sm:$0xff]
        %v1058 = vld [vmem:[%s236 + $0x16e0] sm:$0xff]
        %v1059 = vld [vmem:[%s236 + $0x16e8] sm:$0xff]
        %v1060 = vld [vmem:[%s236 + $0x16f0] sm:$0xff]
        %v1061 = vld [vmem:[%s236 + $0x16f8] sm:$0xff]
        %v1062 = vld [vmem:[%s236 + $0x1700] sm:$0xff]
        %v1063 = vld [vmem:[%s236 + $0x1708] sm:$0xff]
        %v1064 = vld [vmem:[%s236 + $0x1710] sm:$0xff]
        %v1065 = vld [vmem:[%s236 + $0x1718] sm:$0xff]
        %v1066 = vld [vmem:[%s236 + $0x1720] sm:$0xff]
        %v1067 = vld [vmem:[%s236 + $0x1728] sm:$0xff]
        %v1068 = vld [vmem:[%s236 + $0x1730] sm:$0xff]
        %v1069 = vld [vmem:[%s236 + $0x1738] sm:$0xff]
        %v1070 = vld [vmem:[%s236 + $0x1740] sm:$0xff]
        %v1071 = vld [vmem:[%s236 + $0x1748] sm:$0xff]
        %v1072 = vld [vmem:[%s236 + $0x1750] sm:$0xff]
        %v1073 = vld [vmem:[%s236 + $0x1758] sm:$0xff]
        %v1074 = vld [vmem:[%s236 + $0x1760] sm:$0xff]
        %v1075 = vld [vmem:[%s236 + $0x1768] sm:$0xff]
        %v1076 = vld [vmem:[%s236 + $0x1770] sm:$0xff]
        %v1077 = vld [vmem:[%s236 + $0x1778] sm:$0xff]
        %v1078 = vld [vmem:[%s236 + $0x1780] sm:$0xff]
        %v1079 = vld [vmem:[%s236 + $0x1788] sm:$0xff]
        %v1080 = vld [vmem:[%s236 + $0x1790] sm:$0xff]
        %v1081 = vld [vmem:[%s236 + $0x1798] sm:$0xff]
        %v1082 = vld [vmem:[%s236 + $0x17a0] sm:$0xff]
        %v1083 = vld [vmem:[%s236 + $0x17a8] sm:$0xff]
        %v1084 = vld [vmem:[%s236 + $0x17b0] sm:$0xff]
        %v1085 = vld [vmem:[%s236 + $0x17b8] sm:$0xff]
        %v1086 = vld [vmem:[%s236 + $0x17c0] sm:$0xff]
        %v1087 = vld [vmem:[%s236 + $0x17c8] sm:$0xff]
        %v1088 = vld [vmem:[%s236 + $0x17d0] sm:$0xff]
        %v1089 = vld [vmem:[%s236 + $0x17d8] sm:$0xff]
        %v1090 = vld [vmem:[%s236 + $0x17e0] sm:$0xff]
        %v1091 = vld [vmem:[%s236 + $0x17e8] sm:$0xff]
        %v1092 = vld [vmem:[%s236 + $0x17f0] sm:$0xff]
        %v1093 = vld [vmem:[%s236 + $0x17f8] sm:$0xff]
        %v1094 = vld [vmem:[%s236 + $0x1800] sm:$0xff]
        %v1095 = vld [vmem:[%s236 + $0x1808] sm:$0xff]
        %v1096 = vld [vmem:[%s236 + $0x1810] sm:$0xff]
        %v1097 = vld [vmem:[%s236 + $0x1818] sm:$0xff]
        %v1098 = vld [vmem:[%s236 + $0x1820] sm:$0xff]
        %v1099 = vld [vmem:[%s236 + $0x1828] sm:$0xff]
        %v1100 = vld [vmem:[%s236 + $0x1830] sm:$0xff]
        %v1101 = vld [vmem:[%s236 + $0x1838] sm:$0xff]
        %v1102 = vld [vmem:[%s236 + $0x1840] sm:$0xff]
        %v1103 = vld [vmem:[%s236 + $0x1848] sm:$0xff]
        %v1104 = vld [vmem:[%s236 + $0x1850] sm:$0xff]
        %v1105 = vld [vmem:[%s236 + $0x1858] sm:$0xff]
        %v1106 = vld [vmem:[%s236 + $0x1860] sm:$0xff]
        %v1107 = vld [vmem:[%s236 + $0x1868] sm:$0xff]
        %v1108 = vld [vmem:[%s236 + $0x1870] sm:$0xff]
        %v1109 = vld [vmem:[%s236 + $0x1878] sm:$0xff]
        %v1110 = vld [vmem:[%s236 + $0x1880] sm:$0xff]
        %v1111 = vld [vmem:[%s236 + $0x1888] sm:$0xff]
        %v1112 = vld [vmem:[%s236 + $0x1890] sm:$0xff]
        %v1113 = vld [vmem:[%s236 + $0x1898] sm:$0xff]
        %v1114 = vld [vmem:[%s236 + $0x18a0] sm:$0xff]
        %v1115 = vld [vmem:[%s236 + $0x18a8] sm:$0xff]
        %v1116 = vld [vmem:[%s236 + $0x18b0] sm:$0xff]
        %v1117 = vld [vmem:[%s236 + $0x18b8] sm:$0xff]
        %v1118 = vld [vmem:[%s236 + $0x18c0] sm:$0xff]
        %v1119 = vld [vmem:[%s236 + $0x18c8] sm:$0xff]
        %v1120 = vld [vmem:[%s236 + $0x18d0] sm:$0xff]
        %v1121 = vld [vmem:[%s236 + $0x18d8] sm:$0xff]
        %v1122 = vld [vmem:[%s236 + $0x18e0] sm:$0xff]
        %v1123 = vld [vmem:[%s236 + $0x18e8] sm:$0xff]
        %v1124 = vld [vmem:[%s236 + $0x18f0] sm:$0xff]
        %v1125 = vld [vmem:[%s236 + $0x18f8] sm:$0xff]
        %v1126 = vld [vmem:[%s236 + $0x1900] sm:$0xff]
        %v1127 = vld [vmem:[%s236 + $0x1908] sm:$0xff]
        %v1128 = vld [vmem:[%s236 + $0x1910] sm:$0xff]
        %v1129 = vld [vmem:[%s236 + $0x1918] sm:$0xff]
        %v1130 = vld [vmem:[%s236 + $0x1920] sm:$0xff]
        %v1131 = vld [vmem:[%s236 + $0x1928] sm:$0xff]
        %v1132 = vld [vmem:[%s236 + $0x1930] sm:$0xff]
        %v1133 = vld [vmem:[%s236 + $0x1938] sm:$0xff]
        %v1134 = vld [vmem:[%s236 + $0x1940] sm:$0xff]
        %v1135 = vld [vmem:[%s236 + $0x1948] sm:$0xff]
        %v1136 = vld [vmem:[%s236 + $0x1950] sm:$0xff]
        %v1137 = vld [vmem:[%s236 + $0x1958] sm:$0xff]
        %v1138 = vld [vmem:[%s236 + $0x1960] sm:$0xff]
        %v1139 = vld [vmem:[%s236 + $0x1968] sm:$0xff]
        %v1140 = vld [vmem:[%s236 + $0x1970] sm:$0xff]
        %v1141 = vld [vmem:[%s236 + $0x1978] sm:$0xff]
        %v1142 = vld [vmem:[%s236 + $0x1980] sm:$0xff]
        %v1143 = vld [vmem:[%s236 + $0x1988] sm:$0xff]
        %v1144 = vld [vmem:[%s236 + $0x1990] sm:$0xff]
        %v1145 = vld [vmem:[%s236 + $0x1998] sm:$0xff]
        %v1146 = vld [vmem:[%s236 + $0x19a0] sm:$0xff]
        %v1147 = vld [vmem:[%s236 + $0x19a8] sm:$0xff]
        %v1148 = vld [vmem:[%s236 + $0x19b0] sm:$0xff]
        %v1149 = vld [vmem:[%s236 + $0x19b8] sm:$0xff]
        %v1150 = vld [vmem:[%s236 + $0x19c0] sm:$0xff]
        %v1151 = vld [vmem:[%s236 + $0x19c8] sm:$0xff]
        %v1152 = vld [vmem:[%s236 + $0x19d0] sm:$0xff]
        %v1153 = vld [vmem:[%s236 + $0x19d8] sm:$0xff]
        %v1154 = vld [vmem:[%s236 + $0x19e0] sm:$0xff]
        %v1155 = vld [vmem:[%s236 + $0x19e8] sm:$0xff]
        %v1156 = vld [vmem:[%s236 + $0x19f0] sm:$0xff]
        %v1157 = vld [vmem:[%s236 + $0x19f8] sm:$0xff]
        %v1158 = vld [vmem:[%s236 + $0x1a00] sm:$0xff]
        %v1159 = vld [vmem:[%s236 + $0x1a08] sm:$0xff]
        %v1160 = vld [vmem:[%s236 + $0x1a10] sm:$0xff]
        %v1161 = vld [vmem:[%s236 + $0x1a18] sm:$0xff]
        %v1162 = vld [vmem:[%s236 + $0x1a20] sm:$0xff]
        %v1163 = vld [vmem:[%s236 + $0x1a28] sm:$0xff]
        %v1164 = vld [vmem:[%s236 + $0x1a30] sm:$0xff]
        %v1165 = vld [vmem:[%s236 + $0x1a38] sm:$0xff]
        %v1166 = vld [vmem:[%s236 + $0x1a40] sm:$0xff]
        %v1167 = vld [vmem:[%s236 + $0x1a48] sm:$0xff]
        %v1168 = vld [vmem:[%s236 + $0x1a50] sm:$0xff]
        %v1169 = vld [vmem:[%s236 + $0x1a58] sm:$0xff]
        %v1170 = vld [vmem:[%s236 + $0x1a60] sm:$0xff]
        %v1171 = vld [vmem:[%s236 + $0x1a68] sm:$0xff]
        %v1172 = vld [vmem:[%s236 + $0x1a70] sm:$0xff]
        %v1173 = vld [vmem:[%s236 + $0x1a78] sm:$0xff]
        %v1174 = vld [vmem:[%s236 + $0x1a80] sm:$0xff]
        %v1175 = vld [vmem:[%s236 + $0x1a88] sm:$0xff]
        %v1176 = vld [vmem:[%s236 + $0x1a90] sm:$0xff]
        %v1177 = vld [vmem:[%s236 + $0x1a98] sm:$0xff]
        %v1178 = vld [vmem:[%s236 + $0x1aa0] sm:$0xff]
        %v1179 = vld [vmem:[%s236 + $0x1aa8] sm:$0xff]
        %v1180 = vld [vmem:[%s236 + $0x1ab0] sm:$0xff]
        %v1181 = vld [vmem:[%s236 + $0x1ab8] sm:$0xff]
        %v1182 = vld [vmem:[%s236 + $0x1ac0] sm:$0xff]
        %v1183 = vld [vmem:[%s236 + $0x1ac8] sm:$0xff]
        %v1184 = vld [vmem:[%s236 + $0x1ad0] sm:$0xff]
        %v1185 = vld [vmem:[%s236 + $0x1ad8] sm:$0xff]
        %v1186 = vld [vmem:[%s236 + $0x1ae0] sm:$0xff]
        %v1187 = vld [vmem:[%s236 + $0x1ae8] sm:$0xff]
        %v1188 = vld [vmem:[%s236 + $0x1af0] sm:$0xff]
        %v1189 = vld [vmem:[%s236 + $0x1af8] sm:$0xff]
        %v1190 = vld [vmem:[%s236 + $0x1b00] sm:$0xff]
        %v1191 = vld [vmem:[%s236 + $0x1b08] sm:$0xff]
        %v1192 = vld [vmem:[%s236 + $0x1b10] sm:$0xff]
        %v1193 = vld [vmem:[%s236 + $0x1b18] sm:$0xff]
        %v1194 = vld [vmem:[%s236 + $0x1b20] sm:$0xff]
        %v1195 = vld [vmem:[%s236 + $0x1b28] sm:$0xff]
        %v1196 = vld [vmem:[%s236 + $0x1b30] sm:$0xff]
        %v1197 = vld [vmem:[%s236 + $0x1b38] sm:$0xff]
        %v1198 = vld [vmem:[%s236 + $0x1b40] sm:$0xff]
        %v1199 = vld [vmem:[%s236 + $0x1b48] sm:$0xff]
        %v1200 = vld [vmem:[%s236 + $0x1b50] sm:$0xff]
        %v1201 = vld [vmem:[%s236 + $0x1b58] sm:$0xff]
        %v1202 = vld [vmem:[%s236 + $0x1b60] sm:$0xff]
        %v1203 = vld [vmem:[%s236 + $0x1b68] sm:$0xff]
        %v1204 = vld [vmem:[%s236 + $0x1b70] sm:$0xff]
        %v1205 = vld [vmem:[%s236 + $0x1b78] sm:$0xff]
        %v1206 = vld [vmem:[%s236 + $0x1b80] sm:$0xff]
        %v1207 = vld [vmem:[%s236 + $0x1b88] sm:$0xff]
        %v1208 = vld [vmem:[%s236 + $0x1b90] sm:$0xff]
        %v1209 = vld [vmem:[%s236 + $0x1b98] sm:$0xff]
        %v1210 = vld [vmem:[%s236 + $0x1ba0] sm:$0xff]
        %v1211 = vld [vmem:[%s236 + $0x1ba8] sm:$0xff]
        %v1212 = vld [vmem:[%s236 + $0x1bb0] sm:$0xff]
        %v1213 = vld [vmem:[%s236 + $0x1bb8] sm:$0xff]
        %v1214 = vld [vmem:[%s236 + $0x1bc0] sm:$0xff]
        %v1215 = vld [vmem:[%s236 + $0x1bc8] sm:$0xff]
        %v1216 = vld [vmem:[%s236 + $0x1bd0] sm:$0xff]
        %v1217 = vld [vmem:[%s236 + $0x1bd8] sm:$0xff]
        %v1218 = vld [vmem:[%s236 + $0x1be0] sm:$0xff]
        %v1219 = vld [vmem:[%s236 + $0x1be8] sm:$0xff]
        %v1220 = vld [vmem:[%s236 + $0x1bf0] sm:$0xff]
        %v1221 = vld [vmem:[%s236 + $0x1bf8] sm:$0xff]
        %v1222 = vld [vmem:[%s236 + $0x1c00] sm:$0xff]
        %v1223 = vld [vmem:[%s236 + $0x1c08] sm:$0xff]
        %v1224 = vld [vmem:[%s236 + $0x1c10] sm:$0xff]
        %v1225 = vld [vmem:[%s236 + $0x1c18] sm:$0xff]
        %v1226 = vld [vmem:[%s236 + $0x1c20] sm:$0xff]
        %v1227 = vld [vmem:[%s236 + $0x1c28] sm:$0xff]
        %v1228 = vld [vmem:[%s236 + $0x1c30] sm:$0xff]
        %v1229 = vld [vmem:[%s236 + $0x1c38] sm:$0xff]
        %v1230 = vld [vmem:[%s236 + $0x1c40] sm:$0xff]
        %v1231 = vld [vmem:[%s236 + $0x1c48] sm:$0xff]
        %v1232 = vld [vmem:[%s236 + $0x1c50] sm:$0xff]
        %v1233 = vld [vmem:[%s236 + $0x1c58] sm:$0xff]
        %v1234 = vld [vmem:[%s236 + $0x1c60] sm:$0xff]
        %v1235 = vld [vmem:[%s236 + $0x1c68] sm:$0xff]
        %v1236 = vld [vmem:[%s236 + $0x1c70] sm:$0xff]
        %v1237 = vld [vmem:[%s236 + $0x1c78] sm:$0xff]
        %v1238 = vld [vmem:[%s236 + $0x1c80] sm:$0xff]
        %v1239 = vld [vmem:[%s236 + $0x1c88] sm:$0xff]
        %v1240 = vld [vmem:[%s236 + $0x1c90] sm:$0xff]
        %v1241 = vld [vmem:[%s236 + $0x1c98] sm:$0xff]
        %v1242 = vld [vmem:[%s236 + $0x1ca0] sm:$0xff]
        %v1243 = vld [vmem:[%s236 + $0x1ca8] sm:$0xff]
        %v1244 = vld [vmem:[%s236 + $0x1cb0] sm:$0xff]
        %v1245 = vld [vmem:[%s236 + $0x1cb8] sm:$0xff]
        %v1246 = vld [vmem:[%s236 + $0x1cc0] sm:$0xff]
        %v1247 = vld [vmem:[%s236 + $0x1cc8] sm:$0xff]
        %v1248 = vld [vmem:[%s236 + $0x1cd0] sm:$0xff]
        %v1249 = vld [vmem:[%s236 + $0x1cd8] sm:$0xff]
        %v1250 = vld [vmem:[%s236 + $0x1ce0] sm:$0xff]
        %v1251 = vld [vmem:[%s236 + $0x1ce8] sm:$0xff]
        %v1252 = vld [vmem:[%s236 + $0x1cf0] sm:$0xff]
        %v1253 = vld [vmem:[%s236 + $0x1cf8] sm:$0xff]
        %v1254 = vld [vmem:[%s236 + $0x1d00] sm:$0xff]
        %v1255 = vld [vmem:[%s236 + $0x1d08] sm:$0xff]
        %v1256 = vld [vmem:[%s236 + $0x1d10] sm:$0xff]
        %v1257 = vld [vmem:[%s236 + $0x1d18] sm:$0xff]
        %v1258 = vld [vmem:[%s236 + $0x1d20] sm:$0xff]
        %v1259 = vld [vmem:[%s236 + $0x1d28] sm:$0xff]
        %v1260 = vld [vmem:[%s236 + $0x1d30] sm:$0xff]
        %v1261 = vld [vmem:[%s236 + $0x1d38] sm:$0xff]
        %v1262 = vld [vmem:[%s236 + $0x1d40] sm:$0xff]
        %v1263 = vld [vmem:[%s236 + $0x1d48] sm:$0xff]
        %v1264 = vld [vmem:[%s236 + $0x1d50] sm:$0xff]
        %v1265 = vld [vmem:[%s236 + $0x1d58] sm:$0xff]
        %v1266 = vld [vmem:[%s236 + $0x1d60] sm:$0xff]
        %v1267 = vld [vmem:[%s236 + $0x1d68] sm:$0xff]
        %v1268 = vld [vmem:[%s236 + $0x1d70] sm:$0xff]
        %v1269 = vld [vmem:[%s236 + $0x1d78] sm:$0xff]
        %v1270 = vld [vmem:[%s236 + $0x1d80] sm:$0xff]
        %v1271 = vld [vmem:[%s236 + $0x1d88] sm:$0xff]
        %v1272 = vld [vmem:[%s236 + $0x1d90] sm:$0xff]
        %v1273 = vld [vmem:[%s236 + $0x1d98] sm:$0xff]
        %v1274 = vld [vmem:[%s236 + $0x1da0] sm:$0xff]
        %v1275 = vld [vmem:[%s236 + $0x1da8] sm:$0xff]
        %v1276 = vld [vmem:[%s236 + $0x1db0] sm:$0xff]
        %v1277 = vld [vmem:[%s236 + $0x1db8] sm:$0xff]
        %v1278 = vld [vmem:[%s236 + $0x1dc0] sm:$0xff]
        %v1279 = vld [vmem:[%s236 + $0x1dc8] sm:$0xff]
        %v1280 = vld [vmem:[%s236 + $0x1dd0] sm:$0xff]
        %v1281 = vld [vmem:[%s236 + $0x1dd8] sm:$0xff]
        %v1282 = vld [vmem:[%s236 + $0x1de0] sm:$0xff]
        %v1283 = vld [vmem:[%s236 + $0x1de8] sm:$0xff]
        %v1284 = vld [vmem:[%s236 + $0x1df0] sm:$0xff]
        %v1285 = vld [vmem:[%s236 + $0x1df8] sm:$0xff]
        %v1286 = vld [vmem:[%s236 + $0x1e00] sm:$0xff]
        %v1287 = vld [vmem:[%s236 + $0x1e08] sm:$0xff]
        %v1288 = vld [vmem:[%s236 + $0x1e10] sm:$0xff]
        %v1289 = vld [vmem:[%s236 + $0x1e18] sm:$0xff]
        %v1290 = vld [vmem:[%s236 + $0x1e20] sm:$0xff]
        %v1291 = vld [vmem:[%s236 + $0x1e28] sm:$0xff]
        %v1292 = vld [vmem:[%s236 + $0x1e30] sm:$0xff]
        %v1293 = vld [vmem:[%s236 + $0x1e38] sm:$0xff]
        %v1294 = vld [vmem:[%s236 + $0x1e40] sm:$0xff]
        %v1295 = vld [vmem:[%s236 + $0x1e48] sm:$0xff]
        %v1296 = vld [vmem:[%s236 + $0x1e50] sm:$0xff]
        %v1297 = vld [vmem:[%s236 + $0x1e58] sm:$0xff]
        %v1298 = vld [vmem:[%s236 + $0x1e60] sm:$0xff]
        %v1299 = vld [vmem:[%s236 + $0x1e68] sm:$0xff]
        %v1300 = vld [vmem:[%s236 + $0x1e70] sm:$0xff]
        %v1301 = vld [vmem:[%s236 + $0x1e78] sm:$0xff]
        %v1302 = vld [vmem:[%s236 + $0x1e80] sm:$0xff]
        %v1303 = vld [vmem:[%s236 + $0x1e88] sm:$0xff]
        %v1304 = vld [vmem:[%s236 + $0x1e90] sm:$0xff]
        %v1305 = vld [vmem:[%s236 + $0x1e98] sm:$0xff]
        %v1306 = vld [vmem:[%s236 + $0x1ea0] sm:$0xff]
        %v1307 = vld [vmem:[%s236 + $0x1ea8] sm:$0xff]
        %v1308 = vld [vmem:[%s236 + $0x1eb0] sm:$0xff]
        %v1309 = vld [vmem:[%s236 + $0x1eb8] sm:$0xff]
        %v1310 = vld [vmem:[%s236 + $0x1ec0] sm:$0xff]
        %v1311 = vld [vmem:[%s236 + $0x1ec8] sm:$0xff]
        %v1312 = vld [vmem:[%s236 + $0x1ed0] sm:$0xff]
        %v1313 = vld [vmem:[%s236 + $0x1ed8] sm:$0xff]
        %v1314 = vld [vmem:[%s236 + $0x1ee0] sm:$0xff]
        %v1315 = vld [vmem:[%s236 + $0x1ee8] sm:$0xff]
        %v1316 = vld [vmem:[%s236 + $0x1ef0] sm:$0xff]
        %v1317 = vld [vmem:[%s236 + $0x1ef8] sm:$0xff]
        %v1318 = vld [vmem:[%s236 + $0x1f00] sm:$0xff]
        %v1319 = vld [vmem:[%s236 + $0x1f08] sm:$0xff]
        %v1320 = vld [vmem:[%s236 + $0x1f10] sm:$0xff]
        %v1321 = vld [vmem:[%s236 + $0x1f18] sm:$0xff]
        %v1322 = vld [vmem:[%s236 + $0x1f20] sm:$0xff]
        %v1323 = vld [vmem:[%s236 + $0x1f28] sm:$0xff]
        %v1324 = vld [vmem:[%s236 + $0x1f30] sm:$0xff]
        %v1325 = vld [vmem:[%s236 + $0x1f38] sm:$0xff]
        %v1326 = vld [vmem:[%s236 + $0x1f40] sm:$0xff]
        %v1327 = vld [vmem:[%s236 + $0x1f48] sm:$0xff]
        %v1328 = vld [vmem:[%s236 + $0x1f50] sm:$0xff]
        %v1329 = vld [vmem:[%s236 + $0x1f58] sm:$0xff]
        %v1330 = vld [vmem:[%s236 + $0x1f60] sm:$0xff]
        %v1331 = vld [vmem:[%s236 + $0x1f68] sm:$0xff]
        %v1332 = vld [vmem:[%s236 + $0x1f70] sm:$0xff]
        %v1333 = vld [vmem:[%s236 + $0x1f78] sm:$0xff]
        %v1334 = vld [vmem:[%s246] sm:$0xff]
        %v1336 = vperm.slane %v1334, 0
        %v1337 = vperm.slane %v1334, 1
        %v1338 = vperm.slane %v1334, 2
        %v1339 = vperm.slane %v1334, 3
        %v1340 = vperm.slane %v1334, 4
        %v1341 = vperm.slane %v1334, 5
        %v1342 = vperm.slane %v1334, 6
        %v1343 = vperm.slane %v1334, 7
        %v2360 = vunpack.c.l.b16 %v326
        %v2361 = vunpack.c.h.b16 %v326
        %v2362 = vunpack.c.l.b16 %v327
        %v2363 = vunpack.c.h.b16 %v327
        %v2364 = vunpack.c.l.b16 %v328
        %v2365 = vunpack.c.h.b16 %v328
        %v2366 = vunpack.c.l.b16 %v329
        %v2367 = vunpack.c.h.b16 %v329
        %v2368 = vunpack.c.l.b16 %v330
        %v2369 = vunpack.c.h.b16 %v330
        %v2370 = vunpack.c.l.b16 %v331
        %v2371 = vunpack.c.h.b16 %v331
        %v2372 = vunpack.c.l.b16 %v332
        %v2373 = vunpack.c.h.b16 %v332
        %v2374 = vunpack.c.l.b16 %v333
        %v2375 = vunpack.c.h.b16 %v333
        %v2376 = vunpack.c.l.b16 %v334
        %v2377 = vunpack.c.h.b16 %v334
        %v2378 = vunpack.c.l.b16 %v335
        %v2379 = vunpack.c.h.b16 %v335
        %v2380 = vunpack.c.l.b16 %v336
        %v2381 = vunpack.c.h.b16 %v336
        %v2382 = vunpack.c.l.b16 %v337
        %v2383 = vunpack.c.h.b16 %v337
        %v2384 = vunpack.c.l.b16 %v338
        %v2385 = vunpack.c.h.b16 %v338
        %v2386 = vunpack.c.l.b16 %v339
        %v2387 = vunpack.c.h.b16 %v339
        %v2388 = vunpack.c.l.b16 %v340
        %v2389 = vunpack.c.h.b16 %v340
        %v2390 = vunpack.c.l.b16 %v341
        %v2391 = vunpack.c.h.b16 %v341
        %v2392 = vunpack.c.l.b16 %v342
        %v2393 = vunpack.c.h.b16 %v342
        %v2394 = vunpack.c.l.b16 %v343
        %v2395 = vunpack.c.h.b16 %v343
        %v2396 = vunpack.c.l.b16 %v344
        %v2397 = vunpack.c.h.b16 %v344
        %v2398 = vunpack.c.l.b16 %v345
        %v2399 = vunpack.c.h.b16 %v345
        %v2400 = vunpack.c.l.b16 %v346
        %v2401 = vunpack.c.h.b16 %v346
        %v2402 = vunpack.c.l.b16 %v347
        %v2403 = vunpack.c.h.b16 %v347
        %v2404 = vunpack.c.l.b16 %v348
        %v2405 = vunpack.c.h.b16 %v348
        %v2406 = vunpack.c.l.b16 %v349
        %v2407 = vunpack.c.h.b16 %v349
        %v2408 = vunpack.c.l.b16 %v350
        %v2409 = vunpack.c.h.b16 %v350
        %v2410 = vunpack.c.l.b16 %v351
        %v2411 = vunpack.c.h.b16 %v351
        %v2412 = vunpack.c.l.b16 %v352
        %v2413 = vunpack.c.h.b16 %v352
        %v2414 = vunpack.c.l.b16 %v353
        %v2415 = vunpack.c.h.b16 %v353
        %v2416 = vunpack.c.l.b16 %v354
        %v2417 = vunpack.c.h.b16 %v354
        %v2418 = vunpack.c.l.b16 %v355
        %v2419 = vunpack.c.h.b16 %v355
        %v2420 = vunpack.c.l.b16 %v356
        %v2421 = vunpack.c.h.b16 %v356
        %v2422 = vunpack.c.l.b16 %v357
        %v2423 = vunpack.c.h.b16 %v357
        %v2424 = vunpack.c.l.b16 %v358
        %v2425 = vunpack.c.h.b16 %v358
        %v2426 = vunpack.c.l.b16 %v359
        %v2427 = vunpack.c.h.b16 %v359
        %v2428 = vunpack.c.l.b16 %v360
        %v2429 = vunpack.c.h.b16 %v360
        %v2430 = vunpack.c.l.b16 %v361
        %v2431 = vunpack.c.h.b16 %v361
        %v2432 = vunpack.c.l.b16 %v362
        %v2433 = vunpack.c.h.b16 %v362
        %v2434 = vunpack.c.l.b16 %v363
        %v2435 = vunpack.c.h.b16 %v363
        %v2436 = vunpack.c.l.b16 %v364
        %v2437 = vunpack.c.h.b16 %v364
        %v2438 = vunpack.c.l.b16 %v365
        %v2439 = vunpack.c.h.b16 %v365
        %v2440 = vunpack.c.l.b16 %v366
        %v2441 = vunpack.c.h.b16 %v366
        %v2442 = vunpack.c.l.b16 %v367
        %v2443 = vunpack.c.h.b16 %v367
        %v2444 = vunpack.c.l.b16 %v368
        %v2445 = vunpack.c.h.b16 %v368
        %v2446 = vunpack.c.l.b16 %v369
        %v2447 = vunpack.c.h.b16 %v369
        %v2448 = vunpack.c.l.b16 %v370
        %v2449 = vunpack.c.h.b16 %v370
        %v2450 = vunpack.c.l.b16 %v371
        %v2451 = vunpack.c.h.b16 %v371
        %v2452 = vunpack.c.l.b16 %v372
        %v2453 = vunpack.c.h.b16 %v372
        %v2454 = vunpack.c.l.b16 %v373
        %v2455 = vunpack.c.h.b16 %v373
        %v2456 = vunpack.c.l.b16 %v374
        %v2457 = vunpack.c.h.b16 %v374
        %v2458 = vunpack.c.l.b16 %v375
        %v2459 = vunpack.c.h.b16 %v375
        %v2460 = vunpack.c.l.b16 %v376
        %v2461 = vunpack.c.h.b16 %v376
        %v2462 = vunpack.c.l.b16 %v377
        %v2463 = vunpack.c.h.b16 %v377
        %v2464 = vunpack.c.l.b16 %v378
        %v2465 = vunpack.c.h.b16 %v378
        %v2466 = vunpack.c.l.b16 %v379
        %v2467 = vunpack.c.h.b16 %v379
        %v2468 = vunpack.c.l.b16 %v380
        %v2469 = vunpack.c.h.b16 %v380
        %v2470 = vunpack.c.l.b16 %v381
        %v2471 = vunpack.c.h.b16 %v381
        %v2472 = vunpack.c.l.b16 %v382
        %v2473 = vunpack.c.h.b16 %v382
        %v2474 = vunpack.c.l.b16 %v383
        %v2475 = vunpack.c.h.b16 %v383
        %v2476 = vunpack.c.l.b16 %v384
        %v2477 = vunpack.c.h.b16 %v384
        %v2478 = vunpack.c.l.b16 %v385
        %v2479 = vunpack.c.h.b16 %v385
        %v2480 = vunpack.c.l.b16 %v386
        %v2481 = vunpack.c.h.b16 %v386
        %v2482 = vunpack.c.l.b16 %v387
        %v2483 = vunpack.c.h.b16 %v387
        %v2484 = vunpack.c.l.b16 %v388
        %v2485 = vunpack.c.h.b16 %v388
        %v2486 = vunpack.c.l.b16 %v389
        %v2487 = vunpack.c.h.b16 %v389
        %v2488 = vunpack.c.l.b16 %v390
        %v2489 = vunpack.c.h.b16 %v390
        %v2490 = vunpack.c.l.b16 %v391
        %v2491 = vunpack.c.h.b16 %v391
        %v2492 = vunpack.c.l.b16 %v392
        %v2493 = vunpack.c.h.b16 %v392
        %v2494 = vunpack.c.l.b16 %v393
        %v2495 = vunpack.c.h.b16 %v393
        %v2496 = vunpack.c.l.b16 %v394
        %v2497 = vunpack.c.h.b16 %v394
        %v2498 = vunpack.c.l.b16 %v395
        %v2499 = vunpack.c.h.b16 %v395
        %v2500 = vunpack.c.l.b16 %v396
        %v2501 = vunpack.c.h.b16 %v396
        %v2502 = vunpack.c.l.b16 %v397
        %v2503 = vunpack.c.h.b16 %v397
        %v2504 = vunpack.c.l.b16 %v398
        %v2505 = vunpack.c.h.b16 %v398
        %v2506 = vunpack.c.l.b16 %v399
        %v2507 = vunpack.c.h.b16 %v399
        %v2508 = vunpack.c.l.b16 %v400
        %v2509 = vunpack.c.h.b16 %v400
        %v2510 = vunpack.c.l.b16 %v401
        %v2511 = vunpack.c.h.b16 %v401
        %v2512 = vunpack.c.l.b16 %v402
        %v2513 = vunpack.c.h.b16 %v402
        %v2514 = vunpack.c.l.b16 %v403
        %v2515 = vunpack.c.h.b16 %v403
        %v2516 = vunpack.c.l.b16 %v404
        %v2517 = vunpack.c.h.b16 %v404
        %v2518 = vunpack.c.l.b16 %v405
        %v2519 = vunpack.c.h.b16 %v405
        %v2520 = vunpack.c.l.b16 %v406
        %v2521 = vunpack.c.h.b16 %v406
        %v2522 = vunpack.c.l.b16 %v407
        %v2523 = vunpack.c.h.b16 %v407
        %v2524 = vunpack.c.l.b16 %v408
        %v2525 = vunpack.c.h.b16 %v408
        %v2526 = vunpack.c.l.b16 %v409
        %v2527 = vunpack.c.h.b16 %v409
        %v2528 = vunpack.c.l.b16 %v410
        %v2529 = vunpack.c.h.b16 %v410
        %v2530 = vunpack.c.l.b16 %v411
        %v2531 = vunpack.c.h.b16 %v411
        %v2532 = vunpack.c.l.b16 %v412
        %v2533 = vunpack.c.h.b16 %v412
        %v2534 = vunpack.c.l.b16 %v413
        %v2535 = vunpack.c.h.b16 %v413
        %v2536 = vunpack.c.l.b16 %v414
        %v2537 = vunpack.c.h.b16 %v414
        %v2538 = vunpack.c.l.b16 %v415
        %v2539 = vunpack.c.h.b16 %v415
        %v2540 = vunpack.c.l.b16 %v416
        %v2541 = vunpack.c.h.b16 %v416
        %v2542 = vunpack.c.l.b16 %v417
        %v2543 = vunpack.c.h.b16 %v417
        %v2544 = vunpack.c.l.b16 %v418
        %v2545 = vunpack.c.h.b16 %v418
        %v2546 = vunpack.c.l.b16 %v419
        %v2547 = vunpack.c.h.b16 %v419
        %v2548 = vunpack.c.l.b16 %v420
        %v2549 = vunpack.c.h.b16 %v420
        %v2550 = vunpack.c.l.b16 %v421
        %v2551 = vunpack.c.h.b16 %v421
        %v2552 = vunpack.c.l.b16 %v422
        %v2553 = vunpack.c.h.b16 %v422
        %v2554 = vunpack.c.l.b16 %v423
        %v2555 = vunpack.c.h.b16 %v423
        %v2556 = vunpack.c.l.b16 %v424
        %v2557 = vunpack.c.h.b16 %v424
        %v2558 = vunpack.c.l.b16 %v425
        %v2559 = vunpack.c.h.b16 %v425
        %v2560 = vunpack.c.l.b16 %v426
        %v2561 = vunpack.c.h.b16 %v426
        %v2562 = vunpack.c.l.b16 %v427
        %v2563 = vunpack.c.h.b16 %v427
        %v2564 = vunpack.c.l.b16 %v428
        %v2565 = vunpack.c.h.b16 %v428
        %v2566 = vunpack.c.l.b16 %v429
        %v2567 = vunpack.c.h.b16 %v429
        %v2568 = vunpack.c.l.b16 %v430
        %v2569 = vunpack.c.h.b16 %v430
        %v2570 = vunpack.c.l.b16 %v431
        %v2571 = vunpack.c.h.b16 %v431
        %v2572 = vunpack.c.l.b16 %v432
        %v2573 = vunpack.c.h.b16 %v432
        %v2574 = vunpack.c.l.b16 %v433
        %v2575 = vunpack.c.h.b16 %v433
        %v2576 = vunpack.c.l.b16 %v434
        %v2577 = vunpack.c.h.b16 %v434
        %v2578 = vunpack.c.l.b16 %v435
        %v2579 = vunpack.c.h.b16 %v435
        %v2580 = vunpack.c.l.b16 %v436
        %v2581 = vunpack.c.h.b16 %v436
        %v2582 = vunpack.c.l.b16 %v437
        %v2583 = vunpack.c.h.b16 %v437
        %v2584 = vunpack.c.l.b16 %v438
        %v2585 = vunpack.c.h.b16 %v438
        %v2586 = vunpack.c.l.b16 %v439
        %v2587 = vunpack.c.h.b16 %v439
        %v2588 = vunpack.c.l.b16 %v440
        %v2589 = vunpack.c.h.b16 %v440
        %v2590 = vunpack.c.l.b16 %v441
        %v2591 = vunpack.c.h.b16 %v441
        %v2592 = vunpack.c.l.b16 %v442
        %v2593 = vunpack.c.h.b16 %v442
        %v2594 = vunpack.c.l.b16 %v443
        %v2595 = vunpack.c.h.b16 %v443
        %v2596 = vunpack.c.l.b16 %v444
        %v2597 = vunpack.c.h.b16 %v444
        %v2598 = vunpack.c.l.b16 %v445
        %v2599 = vunpack.c.h.b16 %v445
        %v2600 = vunpack.c.l.b16 %v446
        %v2601 = vunpack.c.h.b16 %v446
        %v2602 = vunpack.c.l.b16 %v447
        %v2603 = vunpack.c.h.b16 %v447
        %v2604 = vunpack.c.l.b16 %v448
        %v2605 = vunpack.c.h.b16 %v448
        %v2606 = vunpack.c.l.b16 %v449
        %v2607 = vunpack.c.h.b16 %v449
        %v2608 = vunpack.c.l.b16 %v450
        %v2609 = vunpack.c.h.b16 %v450
        %v2610 = vunpack.c.l.b16 %v451
        %v2611 = vunpack.c.h.b16 %v451
        %v2612 = vunpack.c.l.b16 %v452
        %v2613 = vunpack.c.h.b16 %v452
        %v2614 = vunpack.c.l.b16 %v453
        %v2615 = vunpack.c.h.b16 %v453
        %v2616 = vunpack.c.l.b16 %v454
        %v2617 = vunpack.c.h.b16 %v454
        %v2618 = vunpack.c.l.b16 %v455
        %v2619 = vunpack.c.h.b16 %v455
        %v2620 = vunpack.c.l.b16 %v456
        %v2621 = vunpack.c.h.b16 %v456
        %v2622 = vunpack.c.l.b16 %v457
        %v2623 = vunpack.c.h.b16 %v457
        %v2624 = vunpack.c.l.b16 %v458
        %v2625 = vunpack.c.h.b16 %v458
        %v2626 = vunpack.c.l.b16 %v459
        %v2627 = vunpack.c.h.b16 %v459
        %v2628 = vunpack.c.l.b16 %v460
        %v2629 = vunpack.c.h.b16 %v460
        %v2630 = vunpack.c.l.b16 %v461
        %v2631 = vunpack.c.h.b16 %v461
        %v2632 = vunpack.c.l.b16 %v462
        %v2633 = vunpack.c.h.b16 %v462
        %v2634 = vunpack.c.l.b16 %v463
        %v2635 = vunpack.c.h.b16 %v463
        %v2636 = vunpack.c.l.b16 %v464
        %v2637 = vunpack.c.h.b16 %v464
        %v2638 = vunpack.c.l.b16 %v465
        %v2639 = vunpack.c.h.b16 %v465
        %v2640 = vunpack.c.l.b16 %v466
        %v2641 = vunpack.c.h.b16 %v466
        %v2642 = vunpack.c.l.b16 %v467
        %v2643 = vunpack.c.h.b16 %v467
        %v2644 = vunpack.c.l.b16 %v468
        %v2645 = vunpack.c.h.b16 %v468
        %v2646 = vunpack.c.l.b16 %v469
        %v2647 = vunpack.c.h.b16 %v469
        %v2648 = vunpack.c.l.b16 %v470
        %v2649 = vunpack.c.h.b16 %v470
        %v2650 = vunpack.c.l.b16 %v471
        %v2651 = vunpack.c.h.b16 %v471
        %v2652 = vunpack.c.l.b16 %v472
        %v2653 = vunpack.c.h.b16 %v472
        %v2654 = vunpack.c.l.b16 %v473
        %v2655 = vunpack.c.h.b16 %v473
        %v2656 = vunpack.c.l.b16 %v474
        %v2657 = vunpack.c.h.b16 %v474
        %v2658 = vunpack.c.l.b16 %v475
        %v2659 = vunpack.c.h.b16 %v475
        %v2660 = vunpack.c.l.b16 %v476
        %v2661 = vunpack.c.h.b16 %v476
        %v2662 = vunpack.c.l.b16 %v477
        %v2663 = vunpack.c.h.b16 %v477
        %v2664 = vunpack.c.l.b16 %v478
        %v2665 = vunpack.c.h.b16 %v478
        %v2666 = vunpack.c.l.b16 %v479
        %v2667 = vunpack.c.h.b16 %v479
        %v2668 = vunpack.c.l.b16 %v480
        %v2669 = vunpack.c.h.b16 %v480
        %v2670 = vunpack.c.l.b16 %v481
        %v2671 = vunpack.c.h.b16 %v481
        %v2672 = vunpack.c.l.b16 %v482
        %v2673 = vunpack.c.h.b16 %v482
        %v2674 = vunpack.c.l.b16 %v483
        %v2675 = vunpack.c.h.b16 %v483
        %v2676 = vunpack.c.l.b16 %v484
        %v2677 = vunpack.c.h.b16 %v484
        %v2678 = vunpack.c.l.b16 %v485
        %v2679 = vunpack.c.h.b16 %v485
        %v2680 = vunpack.c.l.b16 %v486
        %v2681 = vunpack.c.h.b16 %v486
        %v2682 = vunpack.c.l.b16 %v487
        %v2683 = vunpack.c.h.b16 %v487
        %v2684 = vunpack.c.l.b16 %v488
        %v2685 = vunpack.c.h.b16 %v488
        %v2686 = vunpack.c.l.b16 %v489
        %v2687 = vunpack.c.h.b16 %v489
        %v2688 = vunpack.c.l.b16 %v490
        %v2689 = vunpack.c.h.b16 %v490
        %v2690 = vunpack.c.l.b16 %v491
        %v2691 = vunpack.c.h.b16 %v491
        %v2692 = vunpack.c.l.b16 %v492
        %v2693 = vunpack.c.h.b16 %v492
        %v2694 = vunpack.c.l.b16 %v493
        %v2695 = vunpack.c.h.b16 %v493
        %v2696 = vunpack.c.l.b16 %v494
        %v2697 = vunpack.c.h.b16 %v494
        %v2698 = vunpack.c.l.b16 %v495
        %v2699 = vunpack.c.h.b16 %v495
        %v2700 = vunpack.c.l.b16 %v496
        %v2701 = vunpack.c.h.b16 %v496
        %v2702 = vunpack.c.l.b16 %v497
        %v2703 = vunpack.c.h.b16 %v497
        %v2704 = vunpack.c.l.b16 %v498
        %v2705 = vunpack.c.h.b16 %v498
        %v2706 = vunpack.c.l.b16 %v499
        %v2707 = vunpack.c.h.b16 %v499
        %v2708 = vunpack.c.l.b16 %v500
        %v2709 = vunpack.c.h.b16 %v500
        %v2710 = vunpack.c.l.b16 %v501
        %v2711 = vunpack.c.h.b16 %v501
        %v2712 = vunpack.c.l.b16 %v502
        %v2713 = vunpack.c.h.b16 %v502
        %v2714 = vunpack.c.l.b16 %v503
        %v2715 = vunpack.c.h.b16 %v503
        %v2716 = vunpack.c.l.b16 %v504
        %v2717 = vunpack.c.h.b16 %v504
        %v2718 = vunpack.c.l.b16 %v505
        %v2719 = vunpack.c.h.b16 %v505
        %v2720 = vunpack.c.l.b16 %v506
        %v2721 = vunpack.c.h.b16 %v506
        %v2722 = vunpack.c.l.b16 %v507
        %v2723 = vunpack.c.h.b16 %v507
        %v2724 = vunpack.c.l.b16 %v508
        %v2725 = vunpack.c.h.b16 %v508
        %v2726 = vunpack.c.l.b16 %v509
        %v2727 = vunpack.c.h.b16 %v509
        %v2728 = vunpack.c.l.b16 %v510
        %v2729 = vunpack.c.h.b16 %v510
        %v2730 = vunpack.c.l.b16 %v511
        %v2731 = vunpack.c.h.b16 %v511
        %v2732 = vunpack.c.l.b16 %v512
        %v2733 = vunpack.c.h.b16 %v512
        %v2734 = vunpack.c.l.b16 %v513
        %v2735 = vunpack.c.h.b16 %v513
        %v2736 = vunpack.c.l.b16 %v514
        %v2737 = vunpack.c.h.b16 %v514
        %v2738 = vunpack.c.l.b16 %v515
        %v2739 = vunpack.c.h.b16 %v515
        %v2740 = vunpack.c.l.b16 %v516
        %v2741 = vunpack.c.h.b16 %v516
        %v2742 = vunpack.c.l.b16 %v517
        %v2743 = vunpack.c.h.b16 %v517
        %v2744 = vunpack.c.l.b16 %v518
        %v2745 = vunpack.c.h.b16 %v518
        %v2746 = vunpack.c.l.b16 %v519
        %v2747 = vunpack.c.h.b16 %v519
        %v2748 = vunpack.c.l.b16 %v520
        %v2749 = vunpack.c.h.b16 %v520
        %v2750 = vunpack.c.l.b16 %v521
        %v2751 = vunpack.c.h.b16 %v521
        %v2752 = vunpack.c.l.b16 %v522
        %v2753 = vunpack.c.h.b16 %v522
        %v2754 = vunpack.c.l.b16 %v523
        %v2755 = vunpack.c.h.b16 %v523
        %v2756 = vunpack.c.l.b16 %v524
        %v2757 = vunpack.c.h.b16 %v524
        %v2758 = vunpack.c.l.b16 %v525
        %v2759 = vunpack.c.h.b16 %v525
        %v2760 = vunpack.c.l.b16 %v526
        %v2761 = vunpack.c.h.b16 %v526
        %v2762 = vunpack.c.l.b16 %v527
        %v2763 = vunpack.c.h.b16 %v527
        %v2764 = vunpack.c.l.b16 %v528
        %v2765 = vunpack.c.h.b16 %v528
        %v2766 = vunpack.c.l.b16 %v529
        %v2767 = vunpack.c.h.b16 %v529
        %v2768 = vunpack.c.l.b16 %v530
        %v2769 = vunpack.c.h.b16 %v530
        %v2770 = vunpack.c.l.b16 %v531
        %v2771 = vunpack.c.h.b16 %v531
        %v2772 = vunpack.c.l.b16 %v532
        %v2773 = vunpack.c.h.b16 %v532
        %v2774 = vunpack.c.l.b16 %v533
        %v2775 = vunpack.c.h.b16 %v533
        %v2776 = vunpack.c.l.b16 %v534
        %v2777 = vunpack.c.h.b16 %v534
        %v2778 = vunpack.c.l.b16 %v535
        %v2779 = vunpack.c.h.b16 %v535
        %v2780 = vunpack.c.l.b16 %v536
        %v2781 = vunpack.c.h.b16 %v536
        %v2782 = vunpack.c.l.b16 %v537
        %v2783 = vunpack.c.h.b16 %v537
        %v2784 = vunpack.c.l.b16 %v538
        %v2785 = vunpack.c.h.b16 %v538
        %v2786 = vunpack.c.l.b16 %v539
        %v2787 = vunpack.c.h.b16 %v539
        %v2788 = vunpack.c.l.b16 %v540
        %v2789 = vunpack.c.h.b16 %v540
        %v2790 = vunpack.c.l.b16 %v541
        %v2791 = vunpack.c.h.b16 %v541
        %v2792 = vunpack.c.l.b16 %v542
        %v2793 = vunpack.c.h.b16 %v542
        %v2794 = vunpack.c.l.b16 %v543
        %v2795 = vunpack.c.h.b16 %v543
        %v2796 = vunpack.c.l.b16 %v544
        %v2797 = vunpack.c.h.b16 %v544
        %v2798 = vunpack.c.l.b16 %v545
        %v2799 = vunpack.c.h.b16 %v545
        %v2800 = vunpack.c.l.b16 %v546
        %v2801 = vunpack.c.h.b16 %v546
        %v2802 = vunpack.c.l.b16 %v547
        %v2803 = vunpack.c.h.b16 %v547
        %v2804 = vunpack.c.l.b16 %v548
        %v2805 = vunpack.c.h.b16 %v548
        %v2806 = vunpack.c.l.b16 %v549
        %v2807 = vunpack.c.h.b16 %v549
        %v2808 = vunpack.c.l.b16 %v550
        %v2809 = vunpack.c.h.b16 %v550
        %v2810 = vunpack.c.l.b16 %v551
        %v2811 = vunpack.c.h.b16 %v551
        %v2812 = vunpack.c.l.b16 %v552
        %v2813 = vunpack.c.h.b16 %v552
        %v2814 = vunpack.c.l.b16 %v553
        %v2815 = vunpack.c.h.b16 %v553
        %v2816 = vunpack.c.l.b16 %v554
        %v2817 = vunpack.c.h.b16 %v554
        %v2818 = vunpack.c.l.b16 %v555
        %v2819 = vunpack.c.h.b16 %v555
        %v2820 = vunpack.c.l.b16 %v556
        %v2821 = vunpack.c.h.b16 %v556
        %v2822 = vunpack.c.l.b16 %v557
        %v2823 = vunpack.c.h.b16 %v557
        %v2824 = vunpack.c.l.b16 %v558
        %v2825 = vunpack.c.h.b16 %v558
        %v2826 = vunpack.c.l.b16 %v559
        %v2827 = vunpack.c.h.b16 %v559
        %v2828 = vunpack.c.l.b16 %v560
        %v2829 = vunpack.c.h.b16 %v560
        %v2830 = vunpack.c.l.b16 %v561
        %v2831 = vunpack.c.h.b16 %v561
        %v2832 = vunpack.c.l.b16 %v562
        %v2833 = vunpack.c.h.b16 %v562
        %v2834 = vunpack.c.l.b16 %v563
        %v2835 = vunpack.c.h.b16 %v563
        %v2836 = vunpack.c.l.b16 %v564
        %v2837 = vunpack.c.h.b16 %v564
        %v2838 = vunpack.c.l.b16 %v565
        %v2839 = vunpack.c.h.b16 %v565
        %v2840 = vunpack.c.l.b16 %v566
        %v2841 = vunpack.c.h.b16 %v566
        %v2842 = vunpack.c.l.b16 %v567
        %v2843 = vunpack.c.h.b16 %v567
        %v2844 = vunpack.c.l.b16 %v568
        %v2845 = vunpack.c.h.b16 %v568
        %v2846 = vunpack.c.l.b16 %v569
        %v2847 = vunpack.c.h.b16 %v569
        %v2848 = vunpack.c.l.b16 %v570
        %v2849 = vunpack.c.h.b16 %v570
        %v2850 = vunpack.c.l.b16 %v571
        %v2851 = vunpack.c.h.b16 %v571
        %v2852 = vunpack.c.l.b16 %v572
        %v2853 = vunpack.c.h.b16 %v572
        %v2854 = vunpack.c.l.b16 %v573
        %v2855 = vunpack.c.h.b16 %v573
        %v2856 = vunpack.c.l.b16 %v574
        %v2857 = vunpack.c.h.b16 %v574
        %v2858 = vunpack.c.l.b16 %v575
        %v2859 = vunpack.c.h.b16 %v575
        %v2860 = vunpack.c.l.b16 %v576
        %v2861 = vunpack.c.h.b16 %v576
        %v2862 = vunpack.c.l.b16 %v577
        %v2863 = vunpack.c.h.b16 %v577
        %v2864 = vunpack.c.l.b16 %v578
        %v2865 = vunpack.c.h.b16 %v578
        %v2866 = vunpack.c.l.b16 %v579
        %v2867 = vunpack.c.h.b16 %v579
        %v2868 = vunpack.c.l.b16 %v580
        %v2869 = vunpack.c.h.b16 %v580
        %v2870 = vunpack.c.l.b16 %v581
        %v2871 = vunpack.c.h.b16 %v581
        %v2872 = vunpack.c.l.b16 %v582
        %v2873 = vunpack.c.h.b16 %v582
        %v2874 = vunpack.c.l.b16 %v583
        %v2875 = vunpack.c.h.b16 %v583
        %v2876 = vunpack.c.l.b16 %v584
        %v2877 = vunpack.c.h.b16 %v584
        %v2878 = vunpack.c.l.b16 %v585
        %v2879 = vunpack.c.h.b16 %v585
        %v2880 = vunpack.c.l.b16 %v586
        %v2881 = vunpack.c.h.b16 %v586
        %v2882 = vunpack.c.l.b16 %v587
        %v2883 = vunpack.c.h.b16 %v587
        %v2884 = vunpack.c.l.b16 %v588
        %v2885 = vunpack.c.h.b16 %v588
        %v2886 = vunpack.c.l.b16 %v589
        %v2887 = vunpack.c.h.b16 %v589
        %v2888 = vunpack.c.l.b16 %v590
        %v2889 = vunpack.c.h.b16 %v590
        %v2890 = vunpack.c.l.b16 %v591
        %v2891 = vunpack.c.h.b16 %v591
        %v2892 = vunpack.c.l.b16 %v592
        %v2893 = vunpack.c.h.b16 %v592
        %v2894 = vunpack.c.l.b16 %v593
        %v2895 = vunpack.c.h.b16 %v593
        %v2896 = vunpack.c.l.b16 %v594
        %v2897 = vunpack.c.h.b16 %v594
        %v2898 = vunpack.c.l.b16 %v595
        %v2899 = vunpack.c.h.b16 %v595
        %v2900 = vunpack.c.l.b16 %v596
        %v2901 = vunpack.c.h.b16 %v596
        %v2902 = vunpack.c.l.b16 %v597
        %v2903 = vunpack.c.h.b16 %v597
        %v2904 = vunpack.c.l.b16 %v598
        %v2905 = vunpack.c.h.b16 %v598
        %v2906 = vunpack.c.l.b16 %v599
        %v2907 = vunpack.c.h.b16 %v599
        %v2908 = vunpack.c.l.b16 %v600
        %v2909 = vunpack.c.h.b16 %v600
        %v2910 = vunpack.c.l.b16 %v601
        %v2911 = vunpack.c.h.b16 %v601
        %v2912 = vunpack.c.l.b16 %v602
        %v2913 = vunpack.c.h.b16 %v602
        %v2914 = vunpack.c.l.b16 %v603
        %v2915 = vunpack.c.h.b16 %v603
        %v2916 = vunpack.c.l.b16 %v604
        %v2917 = vunpack.c.h.b16 %v604
        %v2918 = vunpack.c.l.b16 %v605
        %v2919 = vunpack.c.h.b16 %v605
        %v2920 = vunpack.c.l.b16 %v606
        %v2921 = vunpack.c.h.b16 %v606
        %v2922 = vunpack.c.l.b16 %v607
        %v2923 = vunpack.c.h.b16 %v607
        %v2924 = vunpack.c.l.b16 %v608
        %v2925 = vunpack.c.h.b16 %v608
        %v2926 = vunpack.c.l.b16 %v609
        %v2927 = vunpack.c.h.b16 %v609
        %v2928 = vunpack.c.l.b16 %v610
        %v2929 = vunpack.c.h.b16 %v610
        %v2930 = vunpack.c.l.b16 %v611
        %v2931 = vunpack.c.h.b16 %v611
        %v2932 = vunpack.c.l.b16 %v612
        %v2933 = vunpack.c.h.b16 %v612
        %v2934 = vunpack.c.l.b16 %v613
        %v2935 = vunpack.c.h.b16 %v613
        %v2936 = vunpack.c.l.b16 %v614
        %v2937 = vunpack.c.h.b16 %v614
        %v2938 = vunpack.c.l.b16 %v615
        %v2939 = vunpack.c.h.b16 %v615
        %v2940 = vunpack.c.l.b16 %v616
        %v2941 = vunpack.c.h.b16 %v616
        %v2942 = vunpack.c.l.b16 %v617
        %v2943 = vunpack.c.h.b16 %v617
        %v2944 = vunpack.c.l.b16 %v618
        %v2945 = vunpack.c.h.b16 %v618
        %v2946 = vunpack.c.l.b16 %v619
        %v2947 = vunpack.c.h.b16 %v619
        %v2948 = vunpack.c.l.b16 %v620
        %v2949 = vunpack.c.h.b16 %v620
        %v2950 = vunpack.c.l.b16 %v621
        %v2951 = vunpack.c.h.b16 %v621
        %v2952 = vunpack.c.l.b16 %v622
        %v2953 = vunpack.c.h.b16 %v622
        %v2954 = vunpack.c.l.b16 %v623
        %v2955 = vunpack.c.h.b16 %v623
        %v2956 = vunpack.c.l.b16 %v624
        %v2957 = vunpack.c.h.b16 %v624
        %v2958 = vunpack.c.l.b16 %v625
        %v2959 = vunpack.c.h.b16 %v625
        %v2960 = vunpack.c.l.b16 %v626
        %v2961 = vunpack.c.h.b16 %v626
        %v2962 = vunpack.c.l.b16 %v627
        %v2963 = vunpack.c.h.b16 %v627
        %v2964 = vunpack.c.l.b16 %v628
        %v2965 = vunpack.c.h.b16 %v628
        %v2966 = vunpack.c.l.b16 %v629
        %v2967 = vunpack.c.h.b16 %v629
        %v2968 = vunpack.c.l.b16 %v630
        %v2969 = vunpack.c.h.b16 %v630
        %v2970 = vunpack.c.l.b16 %v631
        %v2971 = vunpack.c.h.b16 %v631
        %v2972 = vunpack.c.l.b16 %v632
        %v2973 = vunpack.c.h.b16 %v632
        %v2974 = vunpack.c.l.b16 %v633
        %v2975 = vunpack.c.h.b16 %v633
        %v2976 = vunpack.c.l.b16 %v634
        %v2977 = vunpack.c.h.b16 %v634
        %v2978 = vunpack.c.l.b16 %v635
        %v2979 = vunpack.c.h.b16 %v635
        %v2980 = vunpack.c.l.b16 %v636
        %v2981 = vunpack.c.h.b16 %v636
        %v2982 = vunpack.c.l.b16 %v637
        %v2983 = vunpack.c.h.b16 %v637
        %v2984 = vunpack.c.l.b16 %v638
        %v2985 = vunpack.c.h.b16 %v638
        %v2986 = vunpack.c.l.b16 %v639
        %v2987 = vunpack.c.h.b16 %v639
        %v2988 = vunpack.c.l.b16 %v640
        %v2989 = vunpack.c.h.b16 %v640
        %v2990 = vunpack.c.l.b16 %v641
        %v2991 = vunpack.c.h.b16 %v641
        %v2992 = vunpack.c.l.b16 %v642
        %v2993 = vunpack.c.h.b16 %v642
        %v2994 = vunpack.c.l.b16 %v643
        %v2995 = vunpack.c.h.b16 %v643
        %v2996 = vunpack.c.l.b16 %v644
        %v2997 = vunpack.c.h.b16 %v644
        %v2998 = vunpack.c.l.b16 %v645
        %v2999 = vunpack.c.h.b16 %v645
        %v3000 = vunpack.c.l.b16 %v646
        %v3001 = vunpack.c.h.b16 %v646
        %v3002 = vunpack.c.l.b16 %v647
        %v3003 = vunpack.c.h.b16 %v647
        %v3004 = vunpack.c.l.b16 %v648
        %v3005 = vunpack.c.h.b16 %v648
        %v3006 = vunpack.c.l.b16 %v649
        %v3007 = vunpack.c.h.b16 %v649
        %v3008 = vunpack.c.l.b16 %v650
        %v3009 = vunpack.c.h.b16 %v650
        %v3010 = vunpack.c.l.b16 %v651
        %v3011 = vunpack.c.h.b16 %v651
        %v3012 = vunpack.c.l.b16 %v652
        %v3013 = vunpack.c.h.b16 %v652
        %v3014 = vunpack.c.l.b16 %v653
        %v3015 = vunpack.c.h.b16 %v653
        %v3016 = vunpack.c.l.b16 %v654
        %v3017 = vunpack.c.h.b16 %v654
        %v3018 = vunpack.c.l.b16 %v655
        %v3019 = vunpack.c.h.b16 %v655
        %v3020 = vunpack.c.l.b16 %v656
        %v3021 = vunpack.c.h.b16 %v656
        %v3022 = vunpack.c.l.b16 %v657
        %v3023 = vunpack.c.h.b16 %v657
        %v3024 = vunpack.c.l.b16 %v658
        %v3025 = vunpack.c.h.b16 %v658
        %v3026 = vunpack.c.l.b16 %v659
        %v3027 = vunpack.c.h.b16 %v659
        %v3028 = vunpack.c.l.b16 %v660
        %v3029 = vunpack.c.h.b16 %v660
        %v3030 = vunpack.c.l.b16 %v661
        %v3031 = vunpack.c.h.b16 %v661
        %v3032 = vunpack.c.l.b16 %v662
        %v3033 = vunpack.c.h.b16 %v662
        %v3034 = vunpack.c.l.b16 %v663
        %v3035 = vunpack.c.h.b16 %v663
        %v3036 = vunpack.c.l.b16 %v664
        %v3037 = vunpack.c.h.b16 %v664
        %v3038 = vunpack.c.l.b16 %v665
        %v3039 = vunpack.c.h.b16 %v665
        %v3040 = vunpack.c.l.b16 %v666
        %v3041 = vunpack.c.h.b16 %v666
        %v3042 = vunpack.c.l.b16 %v667
        %v3043 = vunpack.c.h.b16 %v667
        %v3044 = vunpack.c.l.b16 %v668
        %v3045 = vunpack.c.h.b16 %v668
        %v3046 = vunpack.c.l.b16 %v669
        %v3047 = vunpack.c.h.b16 %v669
        %v3048 = vunpack.c.l.b16 %v670
        %v3049 = vunpack.c.h.b16 %v670
        %v3050 = vunpack.c.l.b16 %v671
        %v3051 = vunpack.c.h.b16 %v671
        %v3052 = vunpack.c.l.b16 %v672
        %v3053 = vunpack.c.h.b16 %v672
        %v3054 = vunpack.c.l.b16 %v673
        %v3055 = vunpack.c.h.b16 %v673
        %v3056 = vunpack.c.l.b16 %v674
        %v3057 = vunpack.c.h.b16 %v674
        %v3058 = vunpack.c.l.b16 %v675
        %v3059 = vunpack.c.h.b16 %v675
        %v3060 = vunpack.c.l.b16 %v676
        %v3061 = vunpack.c.h.b16 %v676
        %v3062 = vunpack.c.l.b16 %v677
        %v3063 = vunpack.c.h.b16 %v677
        %v3064 = vunpack.c.l.b16 %v678
        %v3065 = vunpack.c.h.b16 %v678
        %v3066 = vunpack.c.l.b16 %v679
        %v3067 = vunpack.c.h.b16 %v679
        %v3068 = vunpack.c.l.b16 %v680
        %v3069 = vunpack.c.h.b16 %v680
        %v3070 = vunpack.c.l.b16 %v681
        %v3071 = vunpack.c.h.b16 %v681
        %v3072 = vunpack.c.l.b16 %v682
        %v3073 = vunpack.c.h.b16 %v682
        %v3074 = vunpack.c.l.b16 %v683
        %v3075 = vunpack.c.h.b16 %v683
        %v3076 = vunpack.c.l.b16 %v684
        %v3077 = vunpack.c.h.b16 %v684
        %v3078 = vunpack.c.l.b16 %v685
        %v3079 = vunpack.c.h.b16 %v685
        %v3080 = vunpack.c.l.b16 %v686
        %v3081 = vunpack.c.h.b16 %v686
        %v3082 = vunpack.c.l.b16 %v687
        %v3083 = vunpack.c.h.b16 %v687
        %v3084 = vunpack.c.l.b16 %v688
        %v3085 = vunpack.c.h.b16 %v688
        %v3086 = vunpack.c.l.b16 %v689
        %v3087 = vunpack.c.h.b16 %v689
        %v3088 = vunpack.c.l.b16 %v690
        %v3089 = vunpack.c.h.b16 %v690
        %v3090 = vunpack.c.l.b16 %v691
        %v3091 = vunpack.c.h.b16 %v691
        %v3092 = vunpack.c.l.b16 %v692
        %v3093 = vunpack.c.h.b16 %v692
        %v3094 = vunpack.c.l.b16 %v693
        %v3095 = vunpack.c.h.b16 %v693
        %v3096 = vunpack.c.l.b16 %v694
        %v3097 = vunpack.c.h.b16 %v694
        %v3098 = vunpack.c.l.b16 %v695
        %v3099 = vunpack.c.h.b16 %v695
        %v3100 = vunpack.c.l.b16 %v696
        %v3101 = vunpack.c.h.b16 %v696
        %v3102 = vunpack.c.l.b16 %v697
        %v3103 = vunpack.c.h.b16 %v697
        %v3104 = vunpack.c.l.b16 %v698
        %v3105 = vunpack.c.h.b16 %v698
        %v3106 = vunpack.c.l.b16 %v699
        %v3107 = vunpack.c.h.b16 %v699
        %v3108 = vunpack.c.l.b16 %v700
        %v3109 = vunpack.c.h.b16 %v700
        %v3110 = vunpack.c.l.b16 %v701
        %v3111 = vunpack.c.h.b16 %v701
        %v3112 = vunpack.c.l.b16 %v702
        %v3113 = vunpack.c.h.b16 %v702
        %v3114 = vunpack.c.l.b16 %v703
        %v3115 = vunpack.c.h.b16 %v703
        %v3116 = vunpack.c.l.b16 %v704
        %v3117 = vunpack.c.h.b16 %v704
        %v3118 = vunpack.c.l.b16 %v705
        %v3119 = vunpack.c.h.b16 %v705
        %v3120 = vunpack.c.l.b16 %v706
        %v3121 = vunpack.c.h.b16 %v706
        %v3122 = vunpack.c.l.b16 %v707
        %v3123 = vunpack.c.h.b16 %v707
        %v3124 = vunpack.c.l.b16 %v708
        %v3125 = vunpack.c.h.b16 %v708
        %v3126 = vunpack.c.l.b16 %v709
        %v3127 = vunpack.c.h.b16 %v709
        %v3128 = vunpack.c.l.b16 %v710
        %v3129 = vunpack.c.h.b16 %v710
        %v3130 = vunpack.c.l.b16 %v711
        %v3131 = vunpack.c.h.b16 %v711
        %v3132 = vunpack.c.l.b16 %v712
        %v3133 = vunpack.c.h.b16 %v712
        %v3134 = vunpack.c.l.b16 %v713
        %v3135 = vunpack.c.h.b16 %v713
        %v3136 = vunpack.c.l.b16 %v714
        %v3137 = vunpack.c.h.b16 %v714
        %v3138 = vunpack.c.l.b16 %v715
        %v3139 = vunpack.c.h.b16 %v715
        %v3140 = vunpack.c.l.b16 %v716
        %v3141 = vunpack.c.h.b16 %v716
        %v3142 = vunpack.c.l.b16 %v717
        %v3143 = vunpack.c.h.b16 %v717
        %v3144 = vunpack.c.l.b16 %v718
        %v3145 = vunpack.c.h.b16 %v718
        %v3146 = vunpack.c.l.b16 %v719
        %v3147 = vunpack.c.h.b16 %v719
        %v3148 = vunpack.c.l.b16 %v720
        %v3149 = vunpack.c.h.b16 %v720
        %v3150 = vunpack.c.l.b16 %v721
        %v3151 = vunpack.c.h.b16 %v721
        %v3152 = vunpack.c.l.b16 %v722
        %v3153 = vunpack.c.h.b16 %v722
        %v3154 = vunpack.c.l.b16 %v723
        %v3155 = vunpack.c.h.b16 %v723
        %v3156 = vunpack.c.l.b16 %v724
        %v3157 = vunpack.c.h.b16 %v724
        %v3158 = vunpack.c.l.b16 %v725
        %v3159 = vunpack.c.h.b16 %v725
        %v3160 = vunpack.c.l.b16 %v726
        %v3161 = vunpack.c.h.b16 %v726
        %v3162 = vunpack.c.l.b16 %v727
        %v3163 = vunpack.c.h.b16 %v727
        %v3164 = vunpack.c.l.b16 %v728
        %v3165 = vunpack.c.h.b16 %v728
        %v3166 = vunpack.c.l.b16 %v729
        %v3167 = vunpack.c.h.b16 %v729
        %v3168 = vunpack.c.l.b16 %v730
        %v3169 = vunpack.c.h.b16 %v730
        %v3170 = vunpack.c.l.b16 %v731
        %v3171 = vunpack.c.h.b16 %v731
        %v3172 = vunpack.c.l.b16 %v732
        %v3173 = vunpack.c.h.b16 %v732
        %v3174 = vunpack.c.l.b16 %v733
        %v3175 = vunpack.c.h.b16 %v733
        %v3176 = vunpack.c.l.b16 %v734
        %v3177 = vunpack.c.h.b16 %v734
        %v3178 = vunpack.c.l.b16 %v735
        %v3179 = vunpack.c.h.b16 %v735
        %v3180 = vunpack.c.l.b16 %v736
        %v3181 = vunpack.c.h.b16 %v736
        %v3182 = vunpack.c.l.b16 %v737
        %v3183 = vunpack.c.h.b16 %v737
        %v3184 = vunpack.c.l.b16 %v738
        %v3185 = vunpack.c.h.b16 %v738
        %v3186 = vunpack.c.l.b16 %v739
        %v3187 = vunpack.c.h.b16 %v739
        %v3188 = vunpack.c.l.b16 %v740
        %v3189 = vunpack.c.h.b16 %v740
        %v3190 = vunpack.c.l.b16 %v741
        %v3191 = vunpack.c.h.b16 %v741
        %v3192 = vunpack.c.l.b16 %v742
        %v3193 = vunpack.c.h.b16 %v742
        %v3194 = vunpack.c.l.b16 %v743
        %v3195 = vunpack.c.h.b16 %v743
        %v3196 = vunpack.c.l.b16 %v744
        %v3197 = vunpack.c.h.b16 %v744
        %v3198 = vunpack.c.l.b16 %v745
        %v3199 = vunpack.c.h.b16 %v745
        %v3200 = vunpack.c.l.b16 %v746
        %v3201 = vunpack.c.h.b16 %v746
        %v3202 = vunpack.c.l.b16 %v747
        %v3203 = vunpack.c.h.b16 %v747
        %v3204 = vunpack.c.l.b16 %v748
        %v3205 = vunpack.c.h.b16 %v748
        %v3206 = vunpack.c.l.b16 %v749
        %v3207 = vunpack.c.h.b16 %v749
        %v3208 = vunpack.c.l.b16 %v750
        %v3209 = vunpack.c.h.b16 %v750
        %v3210 = vunpack.c.l.b16 %v751
        %v3211 = vunpack.c.h.b16 %v751
        %v3212 = vunpack.c.l.b16 %v752
        %v3213 = vunpack.c.h.b16 %v752
        %v3214 = vunpack.c.l.b16 %v753
        %v3215 = vunpack.c.h.b16 %v753
        %v3216 = vunpack.c.l.b16 %v754
        %v3217 = vunpack.c.h.b16 %v754
        %v3218 = vunpack.c.l.b16 %v755
        %v3219 = vunpack.c.h.b16 %v755
        %v3220 = vunpack.c.l.b16 %v756
        %v3221 = vunpack.c.h.b16 %v756
        %v3222 = vunpack.c.l.b16 %v757
        %v3223 = vunpack.c.h.b16 %v757
        %v3224 = vunpack.c.l.b16 %v758
        %v3225 = vunpack.c.h.b16 %v758
        %v3226 = vunpack.c.l.b16 %v759
        %v3227 = vunpack.c.h.b16 %v759
        %v3228 = vunpack.c.l.b16 %v760
        %v3229 = vunpack.c.h.b16 %v760
        %v3230 = vunpack.c.l.b16 %v761
        %v3231 = vunpack.c.h.b16 %v761
        %v3232 = vunpack.c.l.b16 %v762
        %v3233 = vunpack.c.h.b16 %v762
        %v3234 = vunpack.c.l.b16 %v763
        %v3235 = vunpack.c.h.b16 %v763
        %v3236 = vunpack.c.l.b16 %v764
        %v3237 = vunpack.c.h.b16 %v764
        %v3238 = vunpack.c.l.b16 %v765
        %v3239 = vunpack.c.h.b16 %v765
        %v3240 = vunpack.c.l.b16 %v766
        %v3241 = vunpack.c.h.b16 %v766
        %v3242 = vunpack.c.l.b16 %v767
        %v3243 = vunpack.c.h.b16 %v767
        %v3244 = vunpack.c.l.b16 %v768
        %v3245 = vunpack.c.h.b16 %v768
        %v3246 = vunpack.c.l.b16 %v769
        %v3247 = vunpack.c.h.b16 %v769
        %v3248 = vunpack.c.l.b16 %v770
        %v3249 = vunpack.c.h.b16 %v770
        %v3250 = vunpack.c.l.b16 %v771
        %v3251 = vunpack.c.h.b16 %v771
        %v3252 = vunpack.c.l.b16 %v772
        %v3253 = vunpack.c.h.b16 %v772
        %v3254 = vunpack.c.l.b16 %v773
        %v3255 = vunpack.c.h.b16 %v773
        %v3256 = vunpack.c.l.b16 %v774
        %v3257 = vunpack.c.h.b16 %v774
        %v3258 = vunpack.c.l.b16 %v775
        %v3259 = vunpack.c.h.b16 %v775
        %v3260 = vunpack.c.l.b16 %v776
        %v3261 = vunpack.c.h.b16 %v776
        %v3262 = vunpack.c.l.b16 %v777
        %v3263 = vunpack.c.h.b16 %v777
        %v3264 = vunpack.c.l.b16 %v778
        %v3265 = vunpack.c.h.b16 %v778
        %v3266 = vunpack.c.l.b16 %v779
        %v3267 = vunpack.c.h.b16 %v779
        %v3268 = vunpack.c.l.b16 %v780
        %v3269 = vunpack.c.h.b16 %v780
        %v3270 = vunpack.c.l.b16 %v781
        %v3271 = vunpack.c.h.b16 %v781
        %v3272 = vunpack.c.l.b16 %v782
        %v3273 = vunpack.c.h.b16 %v782
        %v3274 = vunpack.c.l.b16 %v783
        %v3275 = vunpack.c.h.b16 %v783
        %v3276 = vunpack.c.l.b16 %v784
        %v3277 = vunpack.c.h.b16 %v784
        %v3278 = vunpack.c.l.b16 %v785
        %v3279 = vunpack.c.h.b16 %v785
        %v3280 = vunpack.c.l.b16 %v786
        %v3281 = vunpack.c.h.b16 %v786
        %v3282 = vunpack.c.l.b16 %v787
        %v3283 = vunpack.c.h.b16 %v787
        %v3284 = vunpack.c.l.b16 %v788
        %v3285 = vunpack.c.h.b16 %v788
        %v3286 = vunpack.c.l.b16 %v789
        %v3287 = vunpack.c.h.b16 %v789
        %v3288 = vunpack.c.l.b16 %v790
        %v3289 = vunpack.c.h.b16 %v790
        %v3290 = vunpack.c.l.b16 %v791
        %v3291 = vunpack.c.h.b16 %v791
        %v3292 = vunpack.c.l.b16 %v792
        %v3293 = vunpack.c.h.b16 %v792
        %v3294 = vunpack.c.l.b16 %v793
        %v3295 = vunpack.c.h.b16 %v793
        %v3296 = vunpack.c.l.b16 %v794
        %v3297 = vunpack.c.h.b16 %v794
        %v3298 = vunpack.c.l.b16 %v795
        %v3299 = vunpack.c.h.b16 %v795
        %v3300 = vunpack.c.l.b16 %v796
        %v3301 = vunpack.c.h.b16 %v796
        %v3302 = vunpack.c.l.b16 %v797
        %v3303 = vunpack.c.h.b16 %v797
        %v3304 = vunpack.c.l.b16 %v798
        %v3305 = vunpack.c.h.b16 %v798
        %v3306 = vunpack.c.l.b16 %v799
        %v3307 = vunpack.c.h.b16 %v799
        %v3308 = vunpack.c.l.b16 %v800
        %v3309 = vunpack.c.h.b16 %v800
        %v3310 = vunpack.c.l.b16 %v801
        %v3311 = vunpack.c.h.b16 %v801
        %v3312 = vunpack.c.l.b16 %v802
        %v3313 = vunpack.c.h.b16 %v802
        %v3314 = vunpack.c.l.b16 %v803
        %v3315 = vunpack.c.h.b16 %v803
        %v3316 = vunpack.c.l.b16 %v804
        %v3317 = vunpack.c.h.b16 %v804
        %v3318 = vunpack.c.l.b16 %v805
        %v3319 = vunpack.c.h.b16 %v805
        %v3320 = vunpack.c.l.b16 %v806
        %v3321 = vunpack.c.h.b16 %v806
        %v3322 = vunpack.c.l.b16 %v807
        %v3323 = vunpack.c.h.b16 %v807
        %v3324 = vunpack.c.l.b16 %v808
        %v3325 = vunpack.c.h.b16 %v808
        %v3326 = vunpack.c.l.b16 %v809
        %v3327 = vunpack.c.h.b16 %v809
        %v3328 = vunpack.c.l.b16 %v810
        %v3329 = vunpack.c.h.b16 %v810
        %v3330 = vunpack.c.l.b16 %v811
        %v3331 = vunpack.c.h.b16 %v811
        %v3332 = vunpack.c.l.b16 %v812
        %v3333 = vunpack.c.h.b16 %v812
        %v3334 = vunpack.c.l.b16 %v813
        %v3335 = vunpack.c.h.b16 %v813
        %v3336 = vunpack.c.l.b16 %v814
        %v3337 = vunpack.c.h.b16 %v814
        %v3338 = vunpack.c.l.b16 %v815
        %v3339 = vunpack.c.h.b16 %v815
        %v3340 = vunpack.c.l.b16 %v816
        %v3341 = vunpack.c.h.b16 %v816
        %v3342 = vunpack.c.l.b16 %v817
        %v3343 = vunpack.c.h.b16 %v817
        %v3344 = vunpack.c.l.b16 %v818
        %v3345 = vunpack.c.h.b16 %v818
        %v3346 = vunpack.c.l.b16 %v819
        %v3347 = vunpack.c.h.b16 %v819
        %v3348 = vunpack.c.l.b16 %v820
        %v3349 = vunpack.c.h.b16 %v820
        %v3350 = vunpack.c.l.b16 %v821
        %v3351 = vunpack.c.h.b16 %v821
        %v3352 = vunpack.c.l.b16 %v822
        %v3353 = vunpack.c.h.b16 %v822
        %v3354 = vunpack.c.l.b16 %v823
        %v3355 = vunpack.c.h.b16 %v823
        %v3356 = vunpack.c.l.b16 %v824
        %v3357 = vunpack.c.h.b16 %v824
        %v3358 = vunpack.c.l.b16 %v825
        %v3359 = vunpack.c.h.b16 %v825
        %v3360 = vunpack.c.l.b16 %v826
        %v3361 = vunpack.c.h.b16 %v826
        %v3362 = vunpack.c.l.b16 %v827
        %v3363 = vunpack.c.h.b16 %v827
        %v3364 = vunpack.c.l.b16 %v828
        %v3365 = vunpack.c.h.b16 %v828
        %v3366 = vunpack.c.l.b16 %v829
        %v3367 = vunpack.c.h.b16 %v829
        %v3368 = vunpack.c.l.b16 %v830
        %v3369 = vunpack.c.h.b16 %v830
        %v3370 = vunpack.c.l.b16 %v831
        %v3371 = vunpack.c.h.b16 %v831
        %v3372 = vunpack.c.l.b16 %v832
        %v3373 = vunpack.c.h.b16 %v832
        %v3374 = vunpack.c.l.b16 %v833
        %v3375 = vunpack.c.h.b16 %v833
        %v3376 = vunpack.c.l.b16 %v834
        %v3377 = vunpack.c.h.b16 %v834
        %v3378 = vunpack.c.l.b16 %v835
        %v3379 = vunpack.c.h.b16 %v835
        %v3380 = vunpack.c.l.b16 %v836
        %v3381 = vunpack.c.h.b16 %v836
        %v3382 = vunpack.c.l.b16 %v837
        %v3383 = vunpack.c.h.b16 %v837
        %v3384 = vunpack.c.l.b16 %v838
        %v3385 = vunpack.c.h.b16 %v838
        %v3386 = vunpack.c.l.b16 %v839
        %v3387 = vunpack.c.h.b16 %v839
        %v3388 = vunpack.c.l.b16 %v840
        %v3389 = vunpack.c.h.b16 %v840
        %v3390 = vunpack.c.l.b16 %v841
        %v3391 = vunpack.c.h.b16 %v841
        %v3392 = vunpack.c.l.b16 %v842
        %v3393 = vunpack.c.h.b16 %v842
        %v3394 = vunpack.c.l.b16 %v843
        %v3395 = vunpack.c.h.b16 %v843
        %v3396 = vunpack.c.l.b16 %v844
        %v3397 = vunpack.c.h.b16 %v844
        %v3398 = vunpack.c.l.b16 %v845
        %v3399 = vunpack.c.h.b16 %v845
        %v3400 = vunpack.c.l.b16 %v846
        %v3401 = vunpack.c.h.b16 %v846
        %v3402 = vunpack.c.l.b16 %v847
        %v3403 = vunpack.c.h.b16 %v847
        %v3404 = vunpack.c.l.b16 %v848
        %v3405 = vunpack.c.h.b16 %v848
        %v3406 = vunpack.c.l.b16 %v849
        %v3407 = vunpack.c.h.b16 %v849
        %v3408 = vunpack.c.l.b16 %v850
        %v3409 = vunpack.c.h.b16 %v850
        %v3410 = vunpack.c.l.b16 %v851
        %v3411 = vunpack.c.h.b16 %v851
        %v3412 = vunpack.c.l.b16 %v852
        %v3413 = vunpack.c.h.b16 %v852
        %v3414 = vunpack.c.l.b16 %v853
        %v3415 = vunpack.c.h.b16 %v853
        %v3416 = vunpack.c.l.b16 %v854
        %v3417 = vunpack.c.h.b16 %v854
        %v3418 = vunpack.c.l.b16 %v855
        %v3419 = vunpack.c.h.b16 %v855
        %v3420 = vunpack.c.l.b16 %v856
        %v3421 = vunpack.c.h.b16 %v856
        %v3422 = vunpack.c.l.b16 %v857
        %v3423 = vunpack.c.h.b16 %v857
        %v3424 = vunpack.c.l.b16 %v858
        %v3425 = vunpack.c.h.b16 %v858
        %v3426 = vunpack.c.l.b16 %v859
        %v3427 = vunpack.c.h.b16 %v859
        %v3428 = vunpack.c.l.b16 %v860
        %v3429 = vunpack.c.h.b16 %v860
        %v3430 = vunpack.c.l.b16 %v861
        %v3431 = vunpack.c.h.b16 %v861
        %v3432 = vunpack.c.l.b16 %v862
        %v3433 = vunpack.c.h.b16 %v862
        %v3434 = vunpack.c.l.b16 %v863
        %v3435 = vunpack.c.h.b16 %v863
        %v3436 = vunpack.c.l.b16 %v864
        %v3437 = vunpack.c.h.b16 %v864
        %v3438 = vunpack.c.l.b16 %v865
        %v3439 = vunpack.c.h.b16 %v865
        %v3440 = vunpack.c.l.b16 %v866
        %v3441 = vunpack.c.h.b16 %v866
        %v3442 = vunpack.c.l.b16 %v867
        %v3443 = vunpack.c.h.b16 %v867
        %v3444 = vunpack.c.l.b16 %v868
        %v3445 = vunpack.c.h.b16 %v868
        %v3446 = vunpack.c.l.b16 %v869
        %v3447 = vunpack.c.h.b16 %v869
        %v3448 = vunpack.c.l.b16 %v870
        %v3449 = vunpack.c.h.b16 %v870
        %v3450 = vunpack.c.l.b16 %v871
        %v3451 = vunpack.c.h.b16 %v871
        %v3452 = vunpack.c.l.b16 %v872
        %v3453 = vunpack.c.h.b16 %v872
        %v3454 = vunpack.c.l.b16 %v873
        %v3455 = vunpack.c.h.b16 %v873
        %v3456 = vunpack.c.l.b16 %v874
        %v3457 = vunpack.c.h.b16 %v874
        %v3458 = vunpack.c.l.b16 %v875
        %v3459 = vunpack.c.h.b16 %v875
        %v3460 = vunpack.c.l.b16 %v876
        %v3461 = vunpack.c.h.b16 %v876
        %v3462 = vunpack.c.l.b16 %v877
        %v3463 = vunpack.c.h.b16 %v877
        %v3464 = vunpack.c.l.b16 %v878
        %v3465 = vunpack.c.h.b16 %v878
        %v3466 = vunpack.c.l.b16 %v879
        %v3467 = vunpack.c.h.b16 %v879
        %v3468 = vunpack.c.l.b16 %v880
        %v3469 = vunpack.c.h.b16 %v880
        %v3470 = vunpack.c.l.b16 %v881
        %v3471 = vunpack.c.h.b16 %v881
        %v3472 = vunpack.c.l.b16 %v882
        %v3473 = vunpack.c.h.b16 %v882
        %v3474 = vunpack.c.l.b16 %v883
        %v3475 = vunpack.c.h.b16 %v883
        %v3476 = vunpack.c.l.b16 %v884
        %v3477 = vunpack.c.h.b16 %v884
        %v3478 = vunpack.c.l.b16 %v885
        %v3479 = vunpack.c.h.b16 %v885
        %v3480 = vunpack.c.l.b16 %v886
        %v3481 = vunpack.c.h.b16 %v886
        %v3482 = vunpack.c.l.b16 %v887
        %v3483 = vunpack.c.h.b16 %v887
        %v3484 = vunpack.c.l.b16 %v888
        %v3485 = vunpack.c.h.b16 %v888
        %v3486 = vunpack.c.l.b16 %v889
        %v3487 = vunpack.c.h.b16 %v889
        %v3488 = vunpack.c.l.b16 %v890
        %v3489 = vunpack.c.h.b16 %v890
        %v3490 = vunpack.c.l.b16 %v891
        %v3491 = vunpack.c.h.b16 %v891
        %v3492 = vunpack.c.l.b16 %v892
        %v3493 = vunpack.c.h.b16 %v892
        %v3494 = vunpack.c.l.b16 %v893
        %v3495 = vunpack.c.h.b16 %v893
        %v3496 = vunpack.c.l.b16 %v894
        %v3497 = vunpack.c.h.b16 %v894
        %v3498 = vunpack.c.l.b16 %v895
        %v3499 = vunpack.c.h.b16 %v895
        %v3500 = vunpack.c.l.b16 %v896
        %v3501 = vunpack.c.h.b16 %v896
        %v3502 = vunpack.c.l.b16 %v897
        %v3503 = vunpack.c.h.b16 %v897
        %v3504 = vunpack.c.l.b16 %v898
        %v3505 = vunpack.c.h.b16 %v898
        %v3506 = vunpack.c.l.b16 %v899
        %v3507 = vunpack.c.h.b16 %v899
        %v3508 = vunpack.c.l.b16 %v900
        %v3509 = vunpack.c.h.b16 %v900
        %v3510 = vunpack.c.l.b16 %v901
        %v3511 = vunpack.c.h.b16 %v901
        %v3512 = vunpack.c.l.b16 %v902
        %v3513 = vunpack.c.h.b16 %v902
        %v3514 = vunpack.c.l.b16 %v903
        %v3515 = vunpack.c.h.b16 %v903
        %v3516 = vunpack.c.l.b16 %v904
        %v3517 = vunpack.c.h.b16 %v904
        %v3518 = vunpack.c.l.b16 %v905
        %v3519 = vunpack.c.h.b16 %v905
        %v3520 = vunpack.c.l.b16 %v906
        %v3521 = vunpack.c.h.b16 %v906
        %v3522 = vunpack.c.l.b16 %v907
        %v3523 = vunpack.c.h.b16 %v907
        %v3524 = vunpack.c.l.b16 %v908
        %v3525 = vunpack.c.h.b16 %v908
        %v3526 = vunpack.c.l.b16 %v909
        %v3527 = vunpack.c.h.b16 %v909
        %v3528 = vunpack.c.l.b16 %v910
        %v3529 = vunpack.c.h.b16 %v910
        %v3530 = vunpack.c.l.b16 %v911
        %v3531 = vunpack.c.h.b16 %v911
        %v3532 = vunpack.c.l.b16 %v912
        %v3533 = vunpack.c.h.b16 %v912
        %v3534 = vunpack.c.l.b16 %v913
        %v3535 = vunpack.c.h.b16 %v913
        %v3536 = vunpack.c.l.b16 %v914
        %v3537 = vunpack.c.h.b16 %v914
        %v3538 = vunpack.c.l.b16 %v915
        %v3539 = vunpack.c.h.b16 %v915
        %v3540 = vunpack.c.l.b16 %v916
        %v3541 = vunpack.c.h.b16 %v916
        %v3542 = vunpack.c.l.b16 %v917
        %v3543 = vunpack.c.h.b16 %v917
        %v3544 = vunpack.c.l.b16 %v918
        %v3545 = vunpack.c.h.b16 %v918
        %v3546 = vunpack.c.l.b16 %v919
        %v3547 = vunpack.c.h.b16 %v919
        %v3548 = vunpack.c.l.b16 %v920
        %v3549 = vunpack.c.h.b16 %v920
        %v3550 = vunpack.c.l.b16 %v921
        %v3551 = vunpack.c.h.b16 %v921
        %v3552 = vunpack.c.l.b16 %v922
        %v3553 = vunpack.c.h.b16 %v922
        %v3554 = vunpack.c.l.b16 %v923
        %v3555 = vunpack.c.h.b16 %v923
        %v3556 = vunpack.c.l.b16 %v924
        %v3557 = vunpack.c.h.b16 %v924
        %v3558 = vunpack.c.l.b16 %v925
        %v3559 = vunpack.c.h.b16 %v925
        %v3560 = vunpack.c.l.b16 %v926
        %v3561 = vunpack.c.h.b16 %v926
        %v3562 = vunpack.c.l.b16 %v927
        %v3563 = vunpack.c.h.b16 %v927
        %v3564 = vunpack.c.l.b16 %v928
        %v3565 = vunpack.c.h.b16 %v928
        %v3566 = vunpack.c.l.b16 %v929
        %v3567 = vunpack.c.h.b16 %v929
        %v3568 = vunpack.c.l.b16 %v930
        %v3569 = vunpack.c.h.b16 %v930
        %v3570 = vunpack.c.l.b16 %v931
        %v3571 = vunpack.c.h.b16 %v931
        %v3572 = vunpack.c.l.b16 %v932
        %v3573 = vunpack.c.h.b16 %v932
        %v3574 = vunpack.c.l.b16 %v933
        %v3575 = vunpack.c.h.b16 %v933
        %v3576 = vunpack.c.l.b16 %v934
        %v3577 = vunpack.c.h.b16 %v934
        %v3578 = vunpack.c.l.b16 %v935
        %v3579 = vunpack.c.h.b16 %v935
        %v3580 = vunpack.c.l.b16 %v936
        %v3581 = vunpack.c.h.b16 %v936
        %v3582 = vunpack.c.l.b16 %v937
        %v3583 = vunpack.c.h.b16 %v937
        %v3584 = vunpack.c.l.b16 %v938
        %v3585 = vunpack.c.h.b16 %v938
        %v3586 = vunpack.c.l.b16 %v939
        %v3587 = vunpack.c.h.b16 %v939
        %v3588 = vunpack.c.l.b16 %v940
        %v3589 = vunpack.c.h.b16 %v940
        %v3590 = vunpack.c.l.b16 %v941
        %v3591 = vunpack.c.h.b16 %v941
        %v3592 = vunpack.c.l.b16 %v942
        %v3593 = vunpack.c.h.b16 %v942
        %v3594 = vunpack.c.l.b16 %v943
        %v3595 = vunpack.c.h.b16 %v943
        %v3596 = vunpack.c.l.b16 %v944
        %v3597 = vunpack.c.h.b16 %v944
        %v3598 = vunpack.c.l.b16 %v945
        %v3599 = vunpack.c.h.b16 %v945
        %v3600 = vunpack.c.l.b16 %v946
        %v3601 = vunpack.c.h.b16 %v946
        %v3602 = vunpack.c.l.b16 %v947
        %v3603 = vunpack.c.h.b16 %v947
        %v3604 = vunpack.c.l.b16 %v948
        %v3605 = vunpack.c.h.b16 %v948
        %v3606 = vunpack.c.l.b16 %v949
        %v3607 = vunpack.c.h.b16 %v949
        %v3608 = vunpack.c.l.b16 %v950
        %v3609 = vunpack.c.h.b16 %v950
        %v3610 = vunpack.c.l.b16 %v951
        %v3611 = vunpack.c.h.b16 %v951
        %v3612 = vunpack.c.l.b16 %v952
        %v3613 = vunpack.c.h.b16 %v952
        %v3614 = vunpack.c.l.b16 %v953
        %v3615 = vunpack.c.h.b16 %v953
        %v3616 = vunpack.c.l.b16 %v954
        %v3617 = vunpack.c.h.b16 %v954
        %v3618 = vunpack.c.l.b16 %v955
        %v3619 = vunpack.c.h.b16 %v955
        %v3620 = vunpack.c.l.b16 %v956
        %v3621 = vunpack.c.h.b16 %v956
        %v3622 = vunpack.c.l.b16 %v957
        %v3623 = vunpack.c.h.b16 %v957
        %v3624 = vunpack.c.l.b16 %v958
        %v3625 = vunpack.c.h.b16 %v958
        %v3626 = vunpack.c.l.b16 %v959
        %v3627 = vunpack.c.h.b16 %v959
        %v3628 = vunpack.c.l.b16 %v960
        %v3629 = vunpack.c.h.b16 %v960
        %v3630 = vunpack.c.l.b16 %v961
        %v3631 = vunpack.c.h.b16 %v961
        %v3632 = vunpack.c.l.b16 %v962
        %v3633 = vunpack.c.h.b16 %v962
        %v3634 = vunpack.c.l.b16 %v963
        %v3635 = vunpack.c.h.b16 %v963
        %v3636 = vunpack.c.l.b16 %v964
        %v3637 = vunpack.c.h.b16 %v964
        %v3638 = vunpack.c.l.b16 %v965
        %v3639 = vunpack.c.h.b16 %v965
        %v3640 = vunpack.c.l.b16 %v966
        %v3641 = vunpack.c.h.b16 %v966
        %v3642 = vunpack.c.l.b16 %v967
        %v3643 = vunpack.c.h.b16 %v967
        %v3644 = vunpack.c.l.b16 %v968
        %v3645 = vunpack.c.h.b16 %v968
        %v3646 = vunpack.c.l.b16 %v969
        %v3647 = vunpack.c.h.b16 %v969
        %v3648 = vunpack.c.l.b16 %v970
        %v3649 = vunpack.c.h.b16 %v970
        %v3650 = vunpack.c.l.b16 %v971
        %v3651 = vunpack.c.h.b16 %v971
        %v3652 = vunpack.c.l.b16 %v972
        %v3653 = vunpack.c.h.b16 %v972
        %v3654 = vunpack.c.l.b16 %v973
        %v3655 = vunpack.c.h.b16 %v973
        %v3656 = vunpack.c.l.b16 %v974
        %v3657 = vunpack.c.h.b16 %v974
        %v3658 = vunpack.c.l.b16 %v975
        %v3659 = vunpack.c.h.b16 %v975
        %v3660 = vunpack.c.l.b16 %v976
        %v3661 = vunpack.c.h.b16 %v976
        %v3662 = vunpack.c.l.b16 %v977
        %v3663 = vunpack.c.h.b16 %v977
        %v3664 = vunpack.c.l.b16 %v978
        %v3665 = vunpack.c.h.b16 %v978
        %v3666 = vunpack.c.l.b16 %v979
        %v3667 = vunpack.c.h.b16 %v979
        %v3668 = vunpack.c.l.b16 %v980
        %v3669 = vunpack.c.h.b16 %v980
        %v3670 = vunpack.c.l.b16 %v981
        %v3671 = vunpack.c.h.b16 %v981
        %v3672 = vunpack.c.l.b16 %v982
        %v3673 = vunpack.c.h.b16 %v982
        %v3674 = vunpack.c.l.b16 %v983
        %v3675 = vunpack.c.h.b16 %v983
        %v3676 = vunpack.c.l.b16 %v984
        %v3677 = vunpack.c.h.b16 %v984
        %v3678 = vunpack.c.l.b16 %v985
        %v3679 = vunpack.c.h.b16 %v985
        %v3680 = vunpack.c.l.b16 %v986
        %v3681 = vunpack.c.h.b16 %v986
        %v3682 = vunpack.c.l.b16 %v987
        %v3683 = vunpack.c.h.b16 %v987
        %v3684 = vunpack.c.l.b16 %v988
        %v3685 = vunpack.c.h.b16 %v988
        %v3686 = vunpack.c.l.b16 %v989
        %v3687 = vunpack.c.h.b16 %v989
        %v3688 = vunpack.c.l.b16 %v990
        %v3689 = vunpack.c.h.b16 %v990
        %v3690 = vunpack.c.l.b16 %v991
        %v3691 = vunpack.c.h.b16 %v991
        %v3692 = vunpack.c.l.b16 %v992
        %v3693 = vunpack.c.h.b16 %v992
        %v3694 = vunpack.c.l.b16 %v993
        %v3695 = vunpack.c.h.b16 %v993
        %v3696 = vunpack.c.l.b16 %v994
        %v3697 = vunpack.c.h.b16 %v994
        %v3698 = vunpack.c.l.b16 %v995
        %v3699 = vunpack.c.h.b16 %v995
        %v3700 = vunpack.c.l.b16 %v996
        %v3701 = vunpack.c.h.b16 %v996
        %v3702 = vunpack.c.l.b16 %v997
        %v3703 = vunpack.c.h.b16 %v997
        %v3704 = vunpack.c.l.b16 %v998
        %v3705 = vunpack.c.h.b16 %v998
        %v3706 = vunpack.c.l.b16 %v999
        %v3707 = vunpack.c.h.b16 %v999
        %v3708 = vunpack.c.l.b16 %v1000
        %v3709 = vunpack.c.h.b16 %v1000
        %v3710 = vunpack.c.l.b16 %v1001
        %v3711 = vunpack.c.h.b16 %v1001
        %v3712 = vunpack.c.l.b16 %v1002
        %v3713 = vunpack.c.h.b16 %v1002
        %v3714 = vunpack.c.l.b16 %v1003
        %v3715 = vunpack.c.h.b16 %v1003
        %v3716 = vunpack.c.l.b16 %v1004
        %v3717 = vunpack.c.h.b16 %v1004
        %v3718 = vunpack.c.l.b16 %v1005
        %v3719 = vunpack.c.h.b16 %v1005
        %v3720 = vunpack.c.l.b16 %v1006
        %v3721 = vunpack.c.h.b16 %v1006
        %v3722 = vunpack.c.l.b16 %v1007
        %v3723 = vunpack.c.h.b16 %v1007
        %v3724 = vunpack.c.l.b16 %v1008
        %v3725 = vunpack.c.h.b16 %v1008
        %v3726 = vunpack.c.l.b16 %v1009
        %v3727 = vunpack.c.h.b16 %v1009
        %v3728 = vunpack.c.l.b16 %v1010
        %v3729 = vunpack.c.h.b16 %v1010
        %v3730 = vunpack.c.l.b16 %v1011
        %v3731 = vunpack.c.h.b16 %v1011
        %v3732 = vunpack.c.l.b16 %v1012
        %v3733 = vunpack.c.h.b16 %v1012
        %v3734 = vunpack.c.l.b16 %v1013
        %v3735 = vunpack.c.h.b16 %v1013
        %v3736 = vunpack.c.l.b16 %v1014
        %v3737 = vunpack.c.h.b16 %v1014
        %v3738 = vunpack.c.l.b16 %v1015
        %v3739 = vunpack.c.h.b16 %v1015
        %v3740 = vunpack.c.l.b16 %v1016
        %v3741 = vunpack.c.h.b16 %v1016
        %v3742 = vunpack.c.l.b16 %v1017
        %v3743 = vunpack.c.h.b16 %v1017
        %v3744 = vunpack.c.l.b16 %v1018
        %v3745 = vunpack.c.h.b16 %v1018
        %v3746 = vunpack.c.l.b16 %v1019
        %v3747 = vunpack.c.h.b16 %v1019
        %v3748 = vunpack.c.l.b16 %v1020
        %v3749 = vunpack.c.h.b16 %v1020
        %v3750 = vunpack.c.l.b16 %v1021
        %v3751 = vunpack.c.h.b16 %v1021
        %v3752 = vunpack.c.l.b16 %v1022
        %v3753 = vunpack.c.h.b16 %v1022
        %v3754 = vunpack.c.l.b16 %v1023
        %v3755 = vunpack.c.h.b16 %v1023
        %v3756 = vunpack.c.l.b16 %v1024
        %v3757 = vunpack.c.h.b16 %v1024
        %v3758 = vunpack.c.l.b16 %v1025
        %v3759 = vunpack.c.h.b16 %v1025
        %v3760 = vunpack.c.l.b16 %v1026
        %v3761 = vunpack.c.h.b16 %v1026
        %v3762 = vunpack.c.l.b16 %v1027
        %v3763 = vunpack.c.h.b16 %v1027
        %v3764 = vunpack.c.l.b16 %v1028
        %v3765 = vunpack.c.h.b16 %v1028
        %v3766 = vunpack.c.l.b16 %v1029
        %v3767 = vunpack.c.h.b16 %v1029
        %v3768 = vunpack.c.l.b16 %v1030
        %v3769 = vunpack.c.h.b16 %v1030
        %v3770 = vunpack.c.l.b16 %v1031
        %v3771 = vunpack.c.h.b16 %v1031
        %v3772 = vunpack.c.l.b16 %v1032
        %v3773 = vunpack.c.h.b16 %v1032
        %v3774 = vunpack.c.l.b16 %v1033
        %v3775 = vunpack.c.h.b16 %v1033
        %v3776 = vunpack.c.l.b16 %v1034
        %v3777 = vunpack.c.h.b16 %v1034
        %v3778 = vunpack.c.l.b16 %v1035
        %v3779 = vunpack.c.h.b16 %v1035
        %v3780 = vunpack.c.l.b16 %v1036
        %v3781 = vunpack.c.h.b16 %v1036
        %v3782 = vunpack.c.l.b16 %v1037
        %v3783 = vunpack.c.h.b16 %v1037
        %v3784 = vunpack.c.l.b16 %v1038
        %v3785 = vunpack.c.h.b16 %v1038
        %v3786 = vunpack.c.l.b16 %v1039
        %v3787 = vunpack.c.h.b16 %v1039
        %v3788 = vunpack.c.l.b16 %v1040
        %v3789 = vunpack.c.h.b16 %v1040
        %v3790 = vunpack.c.l.b16 %v1041
        %v3791 = vunpack.c.h.b16 %v1041
        %v3792 = vunpack.c.l.b16 %v1042
        %v3793 = vunpack.c.h.b16 %v1042
        %v3794 = vunpack.c.l.b16 %v1043
        %v3795 = vunpack.c.h.b16 %v1043
        %v3796 = vunpack.c.l.b16 %v1044
        %v3797 = vunpack.c.h.b16 %v1044
        %v3798 = vunpack.c.l.b16 %v1045
        %v3799 = vunpack.c.h.b16 %v1045
        %v3800 = vunpack.c.l.b16 %v1046
        %v3801 = vunpack.c.h.b16 %v1046
        %v3802 = vunpack.c.l.b16 %v1047
        %v3803 = vunpack.c.h.b16 %v1047
        %v3804 = vunpack.c.l.b16 %v1048
        %v3805 = vunpack.c.h.b16 %v1048
        %v3806 = vunpack.c.l.b16 %v1049
        %v3807 = vunpack.c.h.b16 %v1049
        %v3808 = vunpack.c.l.b16 %v1050
        %v3809 = vunpack.c.h.b16 %v1050
        %v3810 = vunpack.c.l.b16 %v1051
        %v3811 = vunpack.c.h.b16 %v1051
        %v3812 = vunpack.c.l.b16 %v1052
        %v3813 = vunpack.c.h.b16 %v1052
        %v3814 = vunpack.c.l.b16 %v1053
        %v3815 = vunpack.c.h.b16 %v1053
        %v3816 = vunpack.c.l.b16 %v1054
        %v3817 = vunpack.c.h.b16 %v1054
        %v3818 = vunpack.c.l.b16 %v1055
        %v3819 = vunpack.c.h.b16 %v1055
        %v3820 = vunpack.c.l.b16 %v1056
        %v3821 = vunpack.c.h.b16 %v1056
        %v3822 = vunpack.c.l.b16 %v1057
        %v3823 = vunpack.c.h.b16 %v1057
        %v3824 = vunpack.c.l.b16 %v1058
        %v3825 = vunpack.c.h.b16 %v1058
        %v3826 = vunpack.c.l.b16 %v1059
        %v3827 = vunpack.c.h.b16 %v1059
        %v3828 = vunpack.c.l.b16 %v1060
        %v3829 = vunpack.c.h.b16 %v1060
        %v3830 = vunpack.c.l.b16 %v1061
        %v3831 = vunpack.c.h.b16 %v1061
        %v3832 = vunpack.c.l.b16 %v1062
        %v3833 = vunpack.c.h.b16 %v1062
        %v3834 = vunpack.c.l.b16 %v1063
        %v3835 = vunpack.c.h.b16 %v1063
        %v3836 = vunpack.c.l.b16 %v1064
        %v3837 = vunpack.c.h.b16 %v1064
        %v3838 = vunpack.c.l.b16 %v1065
        %v3839 = vunpack.c.h.b16 %v1065
        %v3840 = vunpack.c.l.b16 %v1066
        %v3841 = vunpack.c.h.b16 %v1066
        %v3842 = vunpack.c.l.b16 %v1067
        %v3843 = vunpack.c.h.b16 %v1067
        %v3844 = vunpack.c.l.b16 %v1068
        %v3845 = vunpack.c.h.b16 %v1068
        %v3846 = vunpack.c.l.b16 %v1069
        %v3847 = vunpack.c.h.b16 %v1069
        %v3848 = vunpack.c.l.b16 %v1070
        %v3849 = vunpack.c.h.b16 %v1070
        %v3850 = vunpack.c.l.b16 %v1071
        %v3851 = vunpack.c.h.b16 %v1071
        %v3852 = vunpack.c.l.b16 %v1072
        %v3853 = vunpack.c.h.b16 %v1072
        %v3854 = vunpack.c.l.b16 %v1073
        %v3855 = vunpack.c.h.b16 %v1073
        %v3856 = vunpack.c.l.b16 %v1074
        %v3857 = vunpack.c.h.b16 %v1074
        %v3858 = vunpack.c.l.b16 %v1075
        %v3859 = vunpack.c.h.b16 %v1075
        %v3860 = vunpack.c.l.b16 %v1076
        %v3861 = vunpack.c.h.b16 %v1076
        %v3862 = vunpack.c.l.b16 %v1077
        %v3863 = vunpack.c.h.b16 %v1077
        %v3864 = vunpack.c.l.b16 %v1078
        %v3865 = vunpack.c.h.b16 %v1078
        %v3866 = vunpack.c.l.b16 %v1079
        %v3867 = vunpack.c.h.b16 %v1079
        %v3868 = vunpack.c.l.b16 %v1080
        %v3869 = vunpack.c.h.b16 %v1080
        %v3870 = vunpack.c.l.b16 %v1081
        %v3871 = vunpack.c.h.b16 %v1081
        %v3872 = vunpack.c.l.b16 %v1082
        %v3873 = vunpack.c.h.b16 %v1082
        %v3874 = vunpack.c.l.b16 %v1083
        %v3875 = vunpack.c.h.b16 %v1083
        %v3876 = vunpack.c.l.b16 %v1084
        %v3877 = vunpack.c.h.b16 %v1084
        %v3878 = vunpack.c.l.b16 %v1085
        %v3879 = vunpack.c.h.b16 %v1085
        %v3880 = vunpack.c.l.b16 %v1086
        %v3881 = vunpack.c.h.b16 %v1086
        %v3882 = vunpack.c.l.b16 %v1087
        %v3883 = vunpack.c.h.b16 %v1087
        %v3884 = vunpack.c.l.b16 %v1088
        %v3885 = vunpack.c.h.b16 %v1088
        %v3886 = vunpack.c.l.b16 %v1089
        %v3887 = vunpack.c.h.b16 %v1089
        %v3888 = vunpack.c.l.b16 %v1090
        %v3889 = vunpack.c.h.b16 %v1090
        %v3890 = vunpack.c.l.b16 %v1091
        %v3891 = vunpack.c.h.b16 %v1091
        %v3892 = vunpack.c.l.b16 %v1092
        %v3893 = vunpack.c.h.b16 %v1092
        %v3894 = vunpack.c.l.b16 %v1093
        %v3895 = vunpack.c.h.b16 %v1093
        %v3896 = vunpack.c.l.b16 %v1094
        %v3897 = vunpack.c.h.b16 %v1094
        %v3898 = vunpack.c.l.b16 %v1095
        %v3899 = vunpack.c.h.b16 %v1095
        %v3900 = vunpack.c.l.b16 %v1096
        %v3901 = vunpack.c.h.b16 %v1096
        %v3902 = vunpack.c.l.b16 %v1097
        %v3903 = vunpack.c.h.b16 %v1097
        %v3904 = vunpack.c.l.b16 %v1098
        %v3905 = vunpack.c.h.b16 %v1098
        %v3906 = vunpack.c.l.b16 %v1099
        %v3907 = vunpack.c.h.b16 %v1099
        %v3908 = vunpack.c.l.b16 %v1100
        %v3909 = vunpack.c.h.b16 %v1100
        %v3910 = vunpack.c.l.b16 %v1101
        %v3911 = vunpack.c.h.b16 %v1101
        %v3912 = vunpack.c.l.b16 %v1102
        %v3913 = vunpack.c.h.b16 %v1102
        %v3914 = vunpack.c.l.b16 %v1103
        %v3915 = vunpack.c.h.b16 %v1103
        %v3916 = vunpack.c.l.b16 %v1104
        %v3917 = vunpack.c.h.b16 %v1104
        %v3918 = vunpack.c.l.b16 %v1105
        %v3919 = vunpack.c.h.b16 %v1105
        %v3920 = vunpack.c.l.b16 %v1106
        %v3921 = vunpack.c.h.b16 %v1106
        %v3922 = vunpack.c.l.b16 %v1107
        %v3923 = vunpack.c.h.b16 %v1107
        %v3924 = vunpack.c.l.b16 %v1108
        %v3925 = vunpack.c.h.b16 %v1108
        %v3926 = vunpack.c.l.b16 %v1109
        %v3927 = vunpack.c.h.b16 %v1109
        %v3928 = vunpack.c.l.b16 %v1110
        %v3929 = vunpack.c.h.b16 %v1110
        %v3930 = vunpack.c.l.b16 %v1111
        %v3931 = vunpack.c.h.b16 %v1111
        %v3932 = vunpack.c.l.b16 %v1112
        %v3933 = vunpack.c.h.b16 %v1112
        %v3934 = vunpack.c.l.b16 %v1113
        %v3935 = vunpack.c.h.b16 %v1113
        %v3936 = vunpack.c.l.b16 %v1114
        %v3937 = vunpack.c.h.b16 %v1114
        %v3938 = vunpack.c.l.b16 %v1115
        %v3939 = vunpack.c.h.b16 %v1115
        %v3940 = vunpack.c.l.b16 %v1116
        %v3941 = vunpack.c.h.b16 %v1116
        %v3942 = vunpack.c.l.b16 %v1117
        %v3943 = vunpack.c.h.b16 %v1117
        %v3944 = vunpack.c.l.b16 %v1118
        %v3945 = vunpack.c.h.b16 %v1118
        %v3946 = vunpack.c.l.b16 %v1119
        %v3947 = vunpack.c.h.b16 %v1119
        %v3948 = vunpack.c.l.b16 %v1120
        %v3949 = vunpack.c.h.b16 %v1120
        %v3950 = vunpack.c.l.b16 %v1121
        %v3951 = vunpack.c.h.b16 %v1121
        %v3952 = vunpack.c.l.b16 %v1122
        %v3953 = vunpack.c.h.b16 %v1122
        %v3954 = vunpack.c.l.b16 %v1123
        %v3955 = vunpack.c.h.b16 %v1123
        %v3956 = vunpack.c.l.b16 %v1124
        %v3957 = vunpack.c.h.b16 %v1124
        %v3958 = vunpack.c.l.b16 %v1125
        %v3959 = vunpack.c.h.b16 %v1125
        %v3960 = vunpack.c.l.b16 %v1126
        %v3961 = vunpack.c.h.b16 %v1126
        %v3962 = vunpack.c.l.b16 %v1127
        %v3963 = vunpack.c.h.b16 %v1127
        %v3964 = vunpack.c.l.b16 %v1128
        %v3965 = vunpack.c.h.b16 %v1128
        %v3966 = vunpack.c.l.b16 %v1129
        %v3967 = vunpack.c.h.b16 %v1129
        %v3968 = vunpack.c.l.b16 %v1130
        %v3969 = vunpack.c.h.b16 %v1130
        %v3970 = vunpack.c.l.b16 %v1131
        %v3971 = vunpack.c.h.b16 %v1131
        %v3972 = vunpack.c.l.b16 %v1132
        %v3973 = vunpack.c.h.b16 %v1132
        %v3974 = vunpack.c.l.b16 %v1133
        %v3975 = vunpack.c.h.b16 %v1133
        %v3976 = vunpack.c.l.b16 %v1134
        %v3977 = vunpack.c.h.b16 %v1134
        %v3978 = vunpack.c.l.b16 %v1135
        %v3979 = vunpack.c.h.b16 %v1135
        %v3980 = vunpack.c.l.b16 %v1136
        %v3981 = vunpack.c.h.b16 %v1136
        %v3982 = vunpack.c.l.b16 %v1137
        %v3983 = vunpack.c.h.b16 %v1137
        %v3984 = vunpack.c.l.b16 %v1138
        %v3985 = vunpack.c.h.b16 %v1138
        %v3986 = vunpack.c.l.b16 %v1139
        %v3987 = vunpack.c.h.b16 %v1139
        %v3988 = vunpack.c.l.b16 %v1140
        %v3989 = vunpack.c.h.b16 %v1140
        %v3990 = vunpack.c.l.b16 %v1141
        %v3991 = vunpack.c.h.b16 %v1141
        %v3992 = vunpack.c.l.b16 %v1142
        %v3993 = vunpack.c.h.b16 %v1142
        %v3994 = vunpack.c.l.b16 %v1143
        %v3995 = vunpack.c.h.b16 %v1143
        %v3996 = vunpack.c.l.b16 %v1144
        %v3997 = vunpack.c.h.b16 %v1144
        %v3998 = vunpack.c.l.b16 %v1145
        %v3999 = vunpack.c.h.b16 %v1145
        %v4000 = vunpack.c.l.b16 %v1146
        %v4001 = vunpack.c.h.b16 %v1146
        %v4002 = vunpack.c.l.b16 %v1147
        %v4003 = vunpack.c.h.b16 %v1147
        %v4004 = vunpack.c.l.b16 %v1148
        %v4005 = vunpack.c.h.b16 %v1148
        %v4006 = vunpack.c.l.b16 %v1149
        %v4007 = vunpack.c.h.b16 %v1149
        %v4008 = vunpack.c.l.b16 %v1150
        %v4009 = vunpack.c.h.b16 %v1150
        %v4010 = vunpack.c.l.b16 %v1151
        %v4011 = vunpack.c.h.b16 %v1151
        %v4012 = vunpack.c.l.b16 %v1152
        %v4013 = vunpack.c.h.b16 %v1152
        %v4014 = vunpack.c.l.b16 %v1153
        %v4015 = vunpack.c.h.b16 %v1153
        %v4016 = vunpack.c.l.b16 %v1154
        %v4017 = vunpack.c.h.b16 %v1154
        %v4018 = vunpack.c.l.b16 %v1155
        %v4019 = vunpack.c.h.b16 %v1155
        %v4020 = vunpack.c.l.b16 %v1156
        %v4021 = vunpack.c.h.b16 %v1156
        %v4022 = vunpack.c.l.b16 %v1157
        %v4023 = vunpack.c.h.b16 %v1157
        %v4024 = vunpack.c.l.b16 %v1158
        %v4025 = vunpack.c.h.b16 %v1158
        %v4026 = vunpack.c.l.b16 %v1159
        %v4027 = vunpack.c.h.b16 %v1159
        %v4028 = vunpack.c.l.b16 %v1160
        %v4029 = vunpack.c.h.b16 %v1160
        %v4030 = vunpack.c.l.b16 %v1161
        %v4031 = vunpack.c.h.b16 %v1161
        %v4032 = vunpack.c.l.b16 %v1162
        %v4033 = vunpack.c.h.b16 %v1162
        %v4034 = vunpack.c.l.b16 %v1163
        %v4035 = vunpack.c.h.b16 %v1163
        %v4036 = vunpack.c.l.b16 %v1164
        %v4037 = vunpack.c.h.b16 %v1164
        %v4038 = vunpack.c.l.b16 %v1165
        %v4039 = vunpack.c.h.b16 %v1165
        %v4040 = vunpack.c.l.b16 %v1166
        %v4041 = vunpack.c.h.b16 %v1166
        %v4042 = vunpack.c.l.b16 %v1167
        %v4043 = vunpack.c.h.b16 %v1167
        %v4044 = vunpack.c.l.b16 %v1168
        %v4045 = vunpack.c.h.b16 %v1168
        %v4046 = vunpack.c.l.b16 %v1169
        %v4047 = vunpack.c.h.b16 %v1169
        %v4048 = vunpack.c.l.b16 %v1170
        %v4049 = vunpack.c.h.b16 %v1170
        %v4050 = vunpack.c.l.b16 %v1171
        %v4051 = vunpack.c.h.b16 %v1171
        %v4052 = vunpack.c.l.b16 %v1172
        %v4053 = vunpack.c.h.b16 %v1172
        %v4054 = vunpack.c.l.b16 %v1173
        %v4055 = vunpack.c.h.b16 %v1173
        %v4056 = vunpack.c.l.b16 %v1174
        %v4057 = vunpack.c.h.b16 %v1174
        %v4058 = vunpack.c.l.b16 %v1175
        %v4059 = vunpack.c.h.b16 %v1175
        %v4060 = vunpack.c.l.b16 %v1176
        %v4061 = vunpack.c.h.b16 %v1176
        %v4062 = vunpack.c.l.b16 %v1177
        %v4063 = vunpack.c.h.b16 %v1177
        %v4064 = vunpack.c.l.b16 %v1178
        %v4065 = vunpack.c.h.b16 %v1178
        %v4066 = vunpack.c.l.b16 %v1179
        %v4067 = vunpack.c.h.b16 %v1179
        %v4068 = vunpack.c.l.b16 %v1180
        %v4069 = vunpack.c.h.b16 %v1180
        %v4070 = vunpack.c.l.b16 %v1181
        %v4071 = vunpack.c.h.b16 %v1181
        %v4072 = vunpack.c.l.b16 %v1182
        %v4073 = vunpack.c.h.b16 %v1182
        %v4074 = vunpack.c.l.b16 %v1183
        %v4075 = vunpack.c.h.b16 %v1183
        %v4076 = vunpack.c.l.b16 %v1184
        %v4077 = vunpack.c.h.b16 %v1184
        %v4078 = vunpack.c.l.b16 %v1185
        %v4079 = vunpack.c.h.b16 %v1185
        %v4080 = vunpack.c.l.b16 %v1186
        %v4081 = vunpack.c.h.b16 %v1186
        %v4082 = vunpack.c.l.b16 %v1187
        %v4083 = vunpack.c.h.b16 %v1187
        %v4084 = vunpack.c.l.b16 %v1188
        %v4085 = vunpack.c.h.b16 %v1188
        %v4086 = vunpack.c.l.b16 %v1189
        %v4087 = vunpack.c.h.b16 %v1189
        %v4088 = vunpack.c.l.b16 %v1190
        %v4089 = vunpack.c.h.b16 %v1190
        %v4090 = vunpack.c.l.b16 %v1191
        %v4091 = vunpack.c.h.b16 %v1191
        %v4092 = vunpack.c.l.b16 %v1192
        %v4093 = vunpack.c.h.b16 %v1192
        %v4094 = vunpack.c.l.b16 %v1193
        %v4095 = vunpack.c.h.b16 %v1193
        %v4096 = vunpack.c.l.b16 %v1194
        %v4097 = vunpack.c.h.b16 %v1194
        %v4098 = vunpack.c.l.b16 %v1195
        %v4099 = vunpack.c.h.b16 %v1195
        %v4100 = vunpack.c.l.b16 %v1196
        %v4101 = vunpack.c.h.b16 %v1196
        %v4102 = vunpack.c.l.b16 %v1197
        %v4103 = vunpack.c.h.b16 %v1197
        %v4104 = vunpack.c.l.b16 %v1198
        %v4105 = vunpack.c.h.b16 %v1198
        %v4106 = vunpack.c.l.b16 %v1199
        %v4107 = vunpack.c.h.b16 %v1199
        %v4108 = vunpack.c.l.b16 %v1200
        %v4109 = vunpack.c.h.b16 %v1200
        %v4110 = vunpack.c.l.b16 %v1201
        %v4111 = vunpack.c.h.b16 %v1201
        %v4112 = vunpack.c.l.b16 %v1202
        %v4113 = vunpack.c.h.b16 %v1202
        %v4114 = vunpack.c.l.b16 %v1203
        %v4115 = vunpack.c.h.b16 %v1203
        %v4116 = vunpack.c.l.b16 %v1204
        %v4117 = vunpack.c.h.b16 %v1204
        %v4118 = vunpack.c.l.b16 %v1205
        %v4119 = vunpack.c.h.b16 %v1205
        %v4120 = vunpack.c.l.b16 %v1206
        %v4121 = vunpack.c.h.b16 %v1206
        %v4122 = vunpack.c.l.b16 %v1207
        %v4123 = vunpack.c.h.b16 %v1207
        %v4124 = vunpack.c.l.b16 %v1208
        %v4125 = vunpack.c.h.b16 %v1208
        %v4126 = vunpack.c.l.b16 %v1209
        %v4127 = vunpack.c.h.b16 %v1209
        %v4128 = vunpack.c.l.b16 %v1210
        %v4129 = vunpack.c.h.b16 %v1210
        %v4130 = vunpack.c.l.b16 %v1211
        %v4131 = vunpack.c.h.b16 %v1211
        %v4132 = vunpack.c.l.b16 %v1212
        %v4133 = vunpack.c.h.b16 %v1212
        %v4134 = vunpack.c.l.b16 %v1213
        %v4135 = vunpack.c.h.b16 %v1213
        %v4136 = vunpack.c.l.b16 %v1214
        %v4137 = vunpack.c.h.b16 %v1214
        %v4138 = vunpack.c.l.b16 %v1215
        %v4139 = vunpack.c.h.b16 %v1215
        %v4140 = vunpack.c.l.b16 %v1216
        %v4141 = vunpack.c.h.b16 %v1216
        %v4142 = vunpack.c.l.b16 %v1217
        %v4143 = vunpack.c.h.b16 %v1217
        %v4144 = vunpack.c.l.b16 %v1218
        %v4145 = vunpack.c.h.b16 %v1218
        %v4146 = vunpack.c.l.b16 %v1219
        %v4147 = vunpack.c.h.b16 %v1219
        %v4148 = vunpack.c.l.b16 %v1220
        %v4149 = vunpack.c.h.b16 %v1220
        %v4150 = vunpack.c.l.b16 %v1221
        %v4151 = vunpack.c.h.b16 %v1221
        %v4152 = vunpack.c.l.b16 %v1222
        %v4153 = vunpack.c.h.b16 %v1222
        %v4154 = vunpack.c.l.b16 %v1223
        %v4155 = vunpack.c.h.b16 %v1223
        %v4156 = vunpack.c.l.b16 %v1224
        %v4157 = vunpack.c.h.b16 %v1224
        %v4158 = vunpack.c.l.b16 %v1225
        %v4159 = vunpack.c.h.b16 %v1225
        %v4160 = vunpack.c.l.b16 %v1226
        %v4161 = vunpack.c.h.b16 %v1226
        %v4162 = vunpack.c.l.b16 %v1227
        %v4163 = vunpack.c.h.b16 %v1227
        %v4164 = vunpack.c.l.b16 %v1228
        %v4165 = vunpack.c.h.b16 %v1228
        %v4166 = vunpack.c.l.b16 %v1229
        %v4167 = vunpack.c.h.b16 %v1229
        %v4168 = vunpack.c.l.b16 %v1230
        %v4169 = vunpack.c.h.b16 %v1230
        %v4170 = vunpack.c.l.b16 %v1231
        %v4171 = vunpack.c.h.b16 %v1231
        %v4172 = vunpack.c.l.b16 %v1232
        %v4173 = vunpack.c.h.b16 %v1232
        %v4174 = vunpack.c.l.b16 %v1233
        %v4175 = vunpack.c.h.b16 %v1233
        %v4176 = vunpack.c.l.b16 %v1234
        %v4177 = vunpack.c.h.b16 %v1234
        %v4178 = vunpack.c.l.b16 %v1235
        %v4179 = vunpack.c.h.b16 %v1235
        %v4180 = vunpack.c.l.b16 %v1236
        %v4181 = vunpack.c.h.b16 %v1236
        %v4182 = vunpack.c.l.b16 %v1237
        %v4183 = vunpack.c.h.b16 %v1237
        %v4184 = vunpack.c.l.b16 %v1238
        %v4185 = vunpack.c.h.b16 %v1238
        %v4186 = vunpack.c.l.b16 %v1239
        %v4187 = vunpack.c.h.b16 %v1239
        %v4188 = vunpack.c.l.b16 %v1240
        %v4189 = vunpack.c.h.b16 %v1240
        %v4190 = vunpack.c.l.b16 %v1241
        %v4191 = vunpack.c.h.b16 %v1241
        %v4192 = vunpack.c.l.b16 %v1242
        %v4193 = vunpack.c.h.b16 %v1242
        %v4194 = vunpack.c.l.b16 %v1243
        %v4195 = vunpack.c.h.b16 %v1243
        %v4196 = vunpack.c.l.b16 %v1244
        %v4197 = vunpack.c.h.b16 %v1244
        %v4198 = vunpack.c.l.b16 %v1245
        %v4199 = vunpack.c.h.b16 %v1245
        %v4200 = vunpack.c.l.b16 %v1246
        %v4201 = vunpack.c.h.b16 %v1246
        %v4202 = vunpack.c.l.b16 %v1247
        %v4203 = vunpack.c.h.b16 %v1247
        %v4204 = vunpack.c.l.b16 %v1248
        %v4205 = vunpack.c.h.b16 %v1248
        %v4206 = vunpack.c.l.b16 %v1249
        %v4207 = vunpack.c.h.b16 %v1249
        %v4208 = vunpack.c.l.b16 %v1250
        %v4209 = vunpack.c.h.b16 %v1250
        %v4210 = vunpack.c.l.b16 %v1251
        %v4211 = vunpack.c.h.b16 %v1251
        %v4212 = vunpack.c.l.b16 %v1252
        %v4213 = vunpack.c.h.b16 %v1252
        %v4214 = vunpack.c.l.b16 %v1253
        %v4215 = vunpack.c.h.b16 %v1253
        %v4216 = vunpack.c.l.b16 %v1254
        %v4217 = vunpack.c.h.b16 %v1254
        %v4218 = vunpack.c.l.b16 %v1255
        %v4219 = vunpack.c.h.b16 %v1255
        %v4220 = vunpack.c.l.b16 %v1256
        %v4221 = vunpack.c.h.b16 %v1256
        %v4222 = vunpack.c.l.b16 %v1257
        %v4223 = vunpack.c.h.b16 %v1257
        %v4224 = vunpack.c.l.b16 %v1258
        %v4225 = vunpack.c.h.b16 %v1258
        %v4226 = vunpack.c.l.b16 %v1259
        %v4227 = vunpack.c.h.b16 %v1259
        %v4228 = vunpack.c.l.b16 %v1260
        %v4229 = vunpack.c.h.b16 %v1260
        %v4230 = vunpack.c.l.b16 %v1261
        %v4231 = vunpack.c.h.b16 %v1261
        %v4232 = vunpack.c.l.b16 %v1262
        %v4233 = vunpack.c.h.b16 %v1262
        %v4234 = vunpack.c.l.b16 %v1263
        %v4235 = vunpack.c.h.b16 %v1263
        %v4236 = vunpack.c.l.b16 %v1264
        %v4237 = vunpack.c.h.b16 %v1264
        %v4238 = vunpack.c.l.b16 %v1265
        %v4239 = vunpack.c.h.b16 %v1265
        %v4240 = vunpack.c.l.b16 %v1266
        %v4241 = vunpack.c.h.b16 %v1266
        %v4242 = vunpack.c.l.b16 %v1267
        %v4243 = vunpack.c.h.b16 %v1267
        %v4244 = vunpack.c.l.b16 %v1268
        %v4245 = vunpack.c.h.b16 %v1268
        %v4246 = vunpack.c.l.b16 %v1269
        %v4247 = vunpack.c.h.b16 %v1269
        %v4248 = vunpack.c.l.b16 %v1270
        %v4249 = vunpack.c.h.b16 %v1270
        %v4250 = vunpack.c.l.b16 %v1271
        %v4251 = vunpack.c.h.b16 %v1271
        %v4252 = vunpack.c.l.b16 %v1272
        %v4253 = vunpack.c.h.b16 %v1272
        %v4254 = vunpack.c.l.b16 %v1273
        %v4255 = vunpack.c.h.b16 %v1273
        %v4256 = vunpack.c.l.b16 %v1274
        %v4257 = vunpack.c.h.b16 %v1274
        %v4258 = vunpack.c.l.b16 %v1275
        %v4259 = vunpack.c.h.b16 %v1275
        %v4260 = vunpack.c.l.b16 %v1276
        %v4261 = vunpack.c.h.b16 %v1276
        %v4262 = vunpack.c.l.b16 %v1277
        %v4263 = vunpack.c.h.b16 %v1277
        %v4264 = vunpack.c.l.b16 %v1278
        %v4265 = vunpack.c.h.b16 %v1278
        %v4266 = vunpack.c.l.b16 %v1279
        %v4267 = vunpack.c.h.b16 %v1279
        %v4268 = vunpack.c.l.b16 %v1280
        %v4269 = vunpack.c.h.b16 %v1280
        %v4270 = vunpack.c.l.b16 %v1281
        %v4271 = vunpack.c.h.b16 %v1281
        %v4272 = vunpack.c.l.b16 %v1282
        %v4273 = vunpack.c.h.b16 %v1282
        %v4274 = vunpack.c.l.b16 %v1283
        %v4275 = vunpack.c.h.b16 %v1283
        %v4276 = vunpack.c.l.b16 %v1284
        %v4277 = vunpack.c.h.b16 %v1284
        %v4278 = vunpack.c.l.b16 %v1285
        %v4279 = vunpack.c.h.b16 %v1285
        %v4280 = vunpack.c.l.b16 %v1286
        %v4281 = vunpack.c.h.b16 %v1286
        %v4282 = vunpack.c.l.b16 %v1287
        %v4283 = vunpack.c.h.b16 %v1287
        %v4284 = vunpack.c.l.b16 %v1288
        %v4285 = vunpack.c.h.b16 %v1288
        %v4286 = vunpack.c.l.b16 %v1289
        %v4287 = vunpack.c.h.b16 %v1289
        %v4288 = vunpack.c.l.b16 %v1290
        %v4289 = vunpack.c.h.b16 %v1290
        %v4290 = vunpack.c.l.b16 %v1291
        %v4291 = vunpack.c.h.b16 %v1291
        %v4292 = vunpack.c.l.b16 %v1292
        %v4293 = vunpack.c.h.b16 %v1292
        %v4294 = vunpack.c.l.b16 %v1293
        %v4295 = vunpack.c.h.b16 %v1293
        %v4296 = vunpack.c.l.b16 %v1294
        %v4297 = vunpack.c.h.b16 %v1294
        %v4298 = vunpack.c.l.b16 %v1295
        %v4299 = vunpack.c.h.b16 %v1295
        %v4300 = vunpack.c.l.b16 %v1296
        %v4301 = vunpack.c.h.b16 %v1296
        %v4302 = vunpack.c.l.b16 %v1297
        %v4303 = vunpack.c.h.b16 %v1297
        %v4304 = vunpack.c.l.b16 %v1298
        %v4305 = vunpack.c.h.b16 %v1298
        %v4306 = vunpack.c.l.b16 %v1299
        %v4307 = vunpack.c.h.b16 %v1299
        %v4308 = vunpack.c.l.b16 %v1300
        %v4309 = vunpack.c.h.b16 %v1300
        %v4310 = vunpack.c.l.b16 %v1301
        %v4311 = vunpack.c.h.b16 %v1301
        %v4312 = vunpack.c.l.b16 %v1302
        %v4313 = vunpack.c.h.b16 %v1302
        %v4314 = vunpack.c.l.b16 %v1303
        %v4315 = vunpack.c.h.b16 %v1303
        %v4316 = vunpack.c.l.b16 %v1304
        %v4317 = vunpack.c.h.b16 %v1304
        %v4318 = vunpack.c.l.b16 %v1305
        %v4319 = vunpack.c.h.b16 %v1305
        %v4320 = vunpack.c.l.b16 %v1306
        %v4321 = vunpack.c.h.b16 %v1306
        %v4322 = vunpack.c.l.b16 %v1307
        %v4323 = vunpack.c.h.b16 %v1307
        %v4324 = vunpack.c.l.b16 %v1308
        %v4325 = vunpack.c.h.b16 %v1308
        %v4326 = vunpack.c.l.b16 %v1309
        %v4327 = vunpack.c.h.b16 %v1309
        %v4328 = vunpack.c.l.b16 %v1310
        %v4329 = vunpack.c.h.b16 %v1310
        %v4330 = vunpack.c.l.b16 %v1311
        %v4331 = vunpack.c.h.b16 %v1311
        %v4332 = vunpack.c.l.b16 %v1312
        %v4333 = vunpack.c.h.b16 %v1312
        %v4334 = vunpack.c.l.b16 %v1313
        %v4335 = vunpack.c.h.b16 %v1313
        %v4336 = vunpack.c.l.b16 %v1314
        %v4337 = vunpack.c.h.b16 %v1314
        %v4338 = vunpack.c.l.b16 %v1315
        %v4339 = vunpack.c.h.b16 %v1315
        %v4340 = vunpack.c.l.b16 %v1316
        %v4341 = vunpack.c.h.b16 %v1316
        %v4342 = vunpack.c.l.b16 %v1317
        %v4343 = vunpack.c.h.b16 %v1317
        %v4344 = vunpack.c.l.b16 %v1318
        %v4345 = vunpack.c.h.b16 %v1318
        %v4346 = vunpack.c.l.b16 %v1319
        %v4347 = vunpack.c.h.b16 %v1319
        %v4348 = vunpack.c.l.b16 %v1320
        %v4349 = vunpack.c.h.b16 %v1320
        %v4350 = vunpack.c.l.b16 %v1321
        %v4351 = vunpack.c.h.b16 %v1321
        %v4352 = vunpack.c.l.b16 %v1322
        %v4353 = vunpack.c.h.b16 %v1322
        %v4354 = vunpack.c.l.b16 %v1323
        %v4355 = vunpack.c.h.b16 %v1323
        %v4356 = vunpack.c.l.b16 %v1324
        %v4357 = vunpack.c.h.b16 %v1324
        %v4358 = vunpack.c.l.b16 %v1325
        %v4359 = vunpack.c.h.b16 %v1325
        %v4360 = vunpack.c.l.b16 %v1326
        %v4361 = vunpack.c.h.b16 %v1326
        %v4362 = vunpack.c.l.b16 %v1327
        %v4363 = vunpack.c.h.b16 %v1327
        %v4364 = vunpack.c.l.b16 %v1328
        %v4365 = vunpack.c.h.b16 %v1328
        %v4366 = vunpack.c.l.b16 %v1329
        %v4367 = vunpack.c.h.b16 %v1329
        %v4368 = vunpack.c.l.b16 %v1330
        %v4369 = vunpack.c.h.b16 %v1330
        %v4370 = vunpack.c.l.b16 %v1331
        %v4371 = vunpack.c.h.b16 %v1331
        %v4372 = vunpack.c.l.b16 %v1332
        %v4373 = vunpack.c.h.b16 %v1332
        %v4374 = vunpack.c.l.b16 %v1333
        %v4375 = vunpack.c.h.b16 %v1333
        %v4376 = vpack.c.b16 %v2368, %v2360
        %v4377 = vpack.c.b16 %v2369, %v2361
        %v4378 = vpack.c.b16 %v2370, %v2362
        %v4379 = vpack.c.b16 %v2371, %v2363
        %v4380 = vpack.c.b16 %v2372, %v2364
        %v4381 = vpack.c.b16 %v2373, %v2365
        %v4382 = vpack.c.b16 %v2374, %v2366
        %v4383 = vpack.c.b16 %v2375, %v2367
        %v4384 = vpack.c.b16 %v2384, %v2376
        %v4385 = vpack.c.b16 %v2385, %v2377
        %v4386 = vpack.c.b16 %v2386, %v2378
        %v4387 = vpack.c.b16 %v2387, %v2379
        %v4388 = vpack.c.b16 %v2388, %v2380
        %v4389 = vpack.c.b16 %v2389, %v2381
        %v4390 = vpack.c.b16 %v2390, %v2382
        %v4391 = vpack.c.b16 %v2391, %v2383
        %v4392 = vpack.c.b16 %v2400, %v2392
        %v4393 = vpack.c.b16 %v2401, %v2393
        %v4394 = vpack.c.b16 %v2402, %v2394
        %v4395 = vpack.c.b16 %v2403, %v2395
        %v4396 = vpack.c.b16 %v2404, %v2396
        %v4397 = vpack.c.b16 %v2405, %v2397
        %v4398 = vpack.c.b16 %v2406, %v2398
        %v4399 = vpack.c.b16 %v2407, %v2399
        %v4400 = vpack.c.b16 %v2416, %v2408
        %v4401 = vpack.c.b16 %v2417, %v2409
        %v4402 = vpack.c.b16 %v2418, %v2410
        %v4403 = vpack.c.b16 %v2419, %v2411
        %v4404 = vpack.c.b16 %v2420, %v2412
        %v4405 = vpack.c.b16 %v2421, %v2413
        %v4406 = vpack.c.b16 %v2422, %v2414
        %v4407 = vpack.c.b16 %v2423, %v2415
        %v4408 = vpack.c.b16 %v2432, %v2424
        %v4409 = vpack.c.b16 %v2433, %v2425
        %v4410 = vpack.c.b16 %v2434, %v2426
        %v4411 = vpack.c.b16 %v2435, %v2427
        %v4412 = vpack.c.b16 %v2436, %v2428
        %v4413 = vpack.c.b16 %v2437, %v2429
        %v4414 = vpack.c.b16 %v2438, %v2430
        %v4415 = vpack.c.b16 %v2439, %v2431
        %v4416 = vpack.c.b16 %v2448, %v2440
        %v4417 = vpack.c.b16 %v2449, %v2441
        %v4418 = vpack.c.b16 %v2450, %v2442
        %v4419 = vpack.c.b16 %v2451, %v2443
        %v4420 = vpack.c.b16 %v2452, %v2444
        %v4421 = vpack.c.b16 %v2453, %v2445
        %v4422 = vpack.c.b16 %v2454, %v2446
        %v4423 = vpack.c.b16 %v2455, %v2447
        %v4424 = vpack.c.b16 %v2464, %v2456
        %v4425 = vpack.c.b16 %v2465, %v2457
        %v4426 = vpack.c.b16 %v2466, %v2458
        %v4427 = vpack.c.b16 %v2467, %v2459
        %v4428 = vpack.c.b16 %v2468, %v2460
        %v4429 = vpack.c.b16 %v2469, %v2461
        %v4430 = vpack.c.b16 %v2470, %v2462
        %v4431 = vpack.c.b16 %v2471, %v2463
        %v4432 = vpack.c.b16 %v2480, %v2472
        %v4433 = vpack.c.b16 %v2481, %v2473
        %v4434 = vpack.c.b16 %v2482, %v2474
        %v4435 = vpack.c.b16 %v2483, %v2475
        %v4436 = vpack.c.b16 %v2484, %v2476
        %v4437 = vpack.c.b16 %v2485, %v2477
        %v4438 = vpack.c.b16 %v2486, %v2478
        %v4439 = vpack.c.b16 %v2487, %v2479
        %v4440 = vpack.c.b16 %v2496, %v2488
        %v4441 = vpack.c.b16 %v2497, %v2489
        %v4442 = vpack.c.b16 %v2498, %v2490
        %v4443 = vpack.c.b16 %v2499, %v2491
        %v4444 = vpack.c.b16 %v2500, %v2492
        %v4445 = vpack.c.b16 %v2501, %v2493
        %v4446 = vpack.c.b16 %v2502, %v2494
        %v4447 = vpack.c.b16 %v2503, %v2495
        %v4448 = vpack.c.b16 %v2512, %v2504
        %v4449 = vpack.c.b16 %v2513, %v2505
        %v4450 = vpack.c.b16 %v2514, %v2506
        %v4451 = vpack.c.b16 %v2515, %v2507
        %v4452 = vpack.c.b16 %v2516, %v2508
        %v4453 = vpack.c.b16 %v2517, %v2509
        %v4454 = vpack.c.b16 %v2518, %v2510
        %v4455 = vpack.c.b16 %v2519, %v2511
        %v4456 = vpack.c.b16 %v2528, %v2520
        %v4457 = vpack.c.b16 %v2529, %v2521
        %v4458 = vpack.c.b16 %v2530, %v2522
        %v4459 = vpack.c.b16 %v2531, %v2523
        %v4460 = vpack.c.b16 %v2532, %v2524
        %v4461 = vpack.c.b16 %v2533, %v2525
        %v4462 = vpack.c.b16 %v2534, %v2526
        %v4463 = vpack.c.b16 %v2535, %v2527
        %v4464 = vpack.c.b16 %v2544, %v2536
        %v4465 = vpack.c.b16 %v2545, %v2537
        %v4466 = vpack.c.b16 %v2546, %v2538
        %v4467 = vpack.c.b16 %v2547, %v2539
        %v4468 = vpack.c.b16 %v2548, %v2540
        %v4469 = vpack.c.b16 %v2549, %v2541
        %v4470 = vpack.c.b16 %v2550, %v2542
        %v4471 = vpack.c.b16 %v2551, %v2543
        %v4472 = vpack.c.b16 %v2560, %v2552
        %v4473 = vpack.c.b16 %v2561, %v2553
        %v4474 = vpack.c.b16 %v2562, %v2554
        %v4475 = vpack.c.b16 %v2563, %v2555
        %v4476 = vpack.c.b16 %v2564, %v2556
        %v4477 = vpack.c.b16 %v2565, %v2557
        %v4478 = vpack.c.b16 %v2566, %v2558
        %v4479 = vpack.c.b16 %v2567, %v2559
        %v4480 = vpack.c.b16 %v2576, %v2568
        %v4481 = vpack.c.b16 %v2577, %v2569
        %v4482 = vpack.c.b16 %v2578, %v2570
        %v4483 = vpack.c.b16 %v2579, %v2571
        %v4484 = vpack.c.b16 %v2580, %v2572
        %v4485 = vpack.c.b16 %v2581, %v2573
        %v4486 = vpack.c.b16 %v2582, %v2574
        %v4487 = vpack.c.b16 %v2583, %v2575
        %v4488 = vpack.c.b16 %v2592, %v2584
        %v4489 = vpack.c.b16 %v2593, %v2585
        %v4490 = vpack.c.b16 %v2594, %v2586
        %v4491 = vpack.c.b16 %v2595, %v2587
        %v4492 = vpack.c.b16 %v2596, %v2588
        %v4493 = vpack.c.b16 %v2597, %v2589
        %v4494 = vpack.c.b16 %v2598, %v2590
        %v4495 = vpack.c.b16 %v2599, %v2591
        %v4496 = vpack.c.b16 %v2608, %v2600
        %v4497 = vpack.c.b16 %v2609, %v2601
        %v4498 = vpack.c.b16 %v2610, %v2602
        %v4499 = vpack.c.b16 %v2611, %v2603
        %v4500 = vpack.c.b16 %v2612, %v2604
        %v4501 = vpack.c.b16 %v2613, %v2605
        %v4502 = vpack.c.b16 %v2614, %v2606
        %v4503 = vpack.c.b16 %v2615, %v2607
        %v4504 = vpack.c.b16 %v2624, %v2616
        %v4505 = vpack.c.b16 %v2625, %v2617
        %v4506 = vpack.c.b16 %v2626, %v2618
        %v4507 = vpack.c.b16 %v2627, %v2619
        %v4508 = vpack.c.b16 %v2628, %v2620
        %v4509 = vpack.c.b16 %v2629, %v2621
        %v4510 = vpack.c.b16 %v2630, %v2622
        %v4511 = vpack.c.b16 %v2631, %v2623
        %v4512 = vpack.c.b16 %v2640, %v2632
        %v4513 = vpack.c.b16 %v2641, %v2633
        %v4514 = vpack.c.b16 %v2642, %v2634
        %v4515 = vpack.c.b16 %v2643, %v2635
        %v4516 = vpack.c.b16 %v2644, %v2636
        %v4517 = vpack.c.b16 %v2645, %v2637
        %v4518 = vpack.c.b16 %v2646, %v2638
        %v4519 = vpack.c.b16 %v2647, %v2639
        %v4520 = vpack.c.b16 %v2656, %v2648
        %v4521 = vpack.c.b16 %v2657, %v2649
        %v4522 = vpack.c.b16 %v2658, %v2650
        %v4523 = vpack.c.b16 %v2659, %v2651
        %v4524 = vpack.c.b16 %v2660, %v2652
        %v4525 = vpack.c.b16 %v2661, %v2653
        %v4526 = vpack.c.b16 %v2662, %v2654
        %v4527 = vpack.c.b16 %v2663, %v2655
        %v4528 = vpack.c.b16 %v2672, %v2664
        %v4529 = vpack.c.b16 %v2673, %v2665
        %v4530 = vpack.c.b16 %v2674, %v2666
        %v4531 = vpack.c.b16 %v2675, %v2667
        %v4532 = vpack.c.b16 %v2676, %v2668
        %v4533 = vpack.c.b16 %v2677, %v2669
        %v4534 = vpack.c.b16 %v2678, %v2670
        %v4535 = vpack.c.b16 %v2679, %v2671
        %v4536 = vpack.c.b16 %v2688, %v2680
        %v4537 = vpack.c.b16 %v2689, %v2681
        %v4538 = vpack.c.b16 %v2690, %v2682
        %v4539 = vpack.c.b16 %v2691, %v2683
        %v4540 = vpack.c.b16 %v2692, %v2684
        %v4541 = vpack.c.b16 %v2693, %v2685
        %v4542 = vpack.c.b16 %v2694, %v2686
        %v4543 = vpack.c.b16 %v2695, %v2687
        %v4544 = vpack.c.b16 %v2704, %v2696
        %v4545 = vpack.c.b16 %v2705, %v2697
        %v4546 = vpack.c.b16 %v2706, %v2698
        %v4547 = vpack.c.b16 %v2707, %v2699
        %v4548 = vpack.c.b16 %v2708, %v2700
        %v4549 = vpack.c.b16 %v2709, %v2701
        %v4550 = vpack.c.b16 %v2710, %v2702
        %v4551 = vpack.c.b16 %v2711, %v2703
        %v4552 = vpack.c.b16 %v2720, %v2712
        %v4553 = vpack.c.b16 %v2721, %v2713
        %v4554 = vpack.c.b16 %v2722, %v2714
        %v4555 = vpack.c.b16 %v2723, %v2715
        %v4556 = vpack.c.b16 %v2724, %v2716
        %v4557 = vpack.c.b16 %v2725, %v2717
        %v4558 = vpack.c.b16 %v2726, %v2718
        %v4559 = vpack.c.b16 %v2727, %v2719
        %v4560 = vpack.c.b16 %v2736, %v2728
        %v4561 = vpack.c.b16 %v2737, %v2729
        %v4562 = vpack.c.b16 %v2738, %v2730
        %v4563 = vpack.c.b16 %v2739, %v2731
        %v4564 = vpack.c.b16 %v2740, %v2732
        %v4565 = vpack.c.b16 %v2741, %v2733
        %v4566 = vpack.c.b16 %v2742, %v2734
        %v4567 = vpack.c.b16 %v2743, %v2735
        %v4568 = vpack.c.b16 %v2752, %v2744
        %v4569 = vpack.c.b16 %v2753, %v2745
        %v4570 = vpack.c.b16 %v2754, %v2746
        %v4571 = vpack.c.b16 %v2755, %v2747
        %v4572 = vpack.c.b16 %v2756, %v2748
        %v4573 = vpack.c.b16 %v2757, %v2749
        %v4574 = vpack.c.b16 %v2758, %v2750
        %v4575 = vpack.c.b16 %v2759, %v2751
        %v4576 = vpack.c.b16 %v2768, %v2760
        %v4577 = vpack.c.b16 %v2769, %v2761
        %v4578 = vpack.c.b16 %v2770, %v2762
        %v4579 = vpack.c.b16 %v2771, %v2763
        %v4580 = vpack.c.b16 %v2772, %v2764
        %v4581 = vpack.c.b16 %v2773, %v2765
        %v4582 = vpack.c.b16 %v2774, %v2766
        %v4583 = vpack.c.b16 %v2775, %v2767
        %v4584 = vpack.c.b16 %v2784, %v2776
        %v4585 = vpack.c.b16 %v2785, %v2777
        %v4586 = vpack.c.b16 %v2786, %v2778
        %v4587 = vpack.c.b16 %v2787, %v2779
        %v4588 = vpack.c.b16 %v2788, %v2780
        %v4589 = vpack.c.b16 %v2789, %v2781
        %v4590 = vpack.c.b16 %v2790, %v2782
        %v4591 = vpack.c.b16 %v2791, %v2783
        %v4592 = vpack.c.b16 %v2800, %v2792
        %v4593 = vpack.c.b16 %v2801, %v2793
        %v4594 = vpack.c.b16 %v2802, %v2794
        %v4595 = vpack.c.b16 %v2803, %v2795
        %v4596 = vpack.c.b16 %v2804, %v2796
        %v4597 = vpack.c.b16 %v2805, %v2797
        %v4598 = vpack.c.b16 %v2806, %v2798
        %v4599 = vpack.c.b16 %v2807, %v2799
        %v4600 = vpack.c.b16 %v2816, %v2808
        %v4601 = vpack.c.b16 %v2817, %v2809
        %v4602 = vpack.c.b16 %v2818, %v2810
        %v4603 = vpack.c.b16 %v2819, %v2811
        %v4604 = vpack.c.b16 %v2820, %v2812
        %v4605 = vpack.c.b16 %v2821, %v2813
        %v4606 = vpack.c.b16 %v2822, %v2814
        %v4607 = vpack.c.b16 %v2823, %v2815
        %v4608 = vpack.c.b16 %v2832, %v2824
        %v4609 = vpack.c.b16 %v2833, %v2825
        %v4610 = vpack.c.b16 %v2834, %v2826
        %v4611 = vpack.c.b16 %v2835, %v2827
        %v4612 = vpack.c.b16 %v2836, %v2828
        %v4613 = vpack.c.b16 %v2837, %v2829
        %v4614 = vpack.c.b16 %v2838, %v2830
        %v4615 = vpack.c.b16 %v2839, %v2831
        %v4616 = vpack.c.b16 %v2848, %v2840
        %v4617 = vpack.c.b16 %v2849, %v2841
        %v4618 = vpack.c.b16 %v2850, %v2842
        %v4619 = vpack.c.b16 %v2851, %v2843
        %v4620 = vpack.c.b16 %v2852, %v2844
        %v4621 = vpack.c.b16 %v2853, %v2845
        %v4622 = vpack.c.b16 %v2854, %v2846
        %v4623 = vpack.c.b16 %v2855, %v2847
        %v4624 = vpack.c.b16 %v2864, %v2856
        %v4625 = vpack.c.b16 %v2865, %v2857
        %v4626 = vpack.c.b16 %v2866, %v2858
        %v4627 = vpack.c.b16 %v2867, %v2859
        %v4628 = vpack.c.b16 %v2868, %v2860
        %v4629 = vpack.c.b16 %v2869, %v2861
        %v4630 = vpack.c.b16 %v2870, %v2862
        %v4631 = vpack.c.b16 %v2871, %v2863
        %v4632 = vpack.c.b16 %v2880, %v2872
        %v4633 = vpack.c.b16 %v2881, %v2873
        %v4634 = vpack.c.b16 %v2882, %v2874
        %v4635 = vpack.c.b16 %v2883, %v2875
        %v4636 = vpack.c.b16 %v2884, %v2876
        %v4637 = vpack.c.b16 %v2885, %v2877
        %v4638 = vpack.c.b16 %v2886, %v2878
        %v4639 = vpack.c.b16 %v2887, %v2879
        %v4640 = vpack.c.b16 %v2896, %v2888
        %v4641 = vpack.c.b16 %v2897, %v2889
        %v4642 = vpack.c.b16 %v2898, %v2890
        %v4643 = vpack.c.b16 %v2899, %v2891
        %v4644 = vpack.c.b16 %v2900, %v2892
        %v4645 = vpack.c.b16 %v2901, %v2893
        %v4646 = vpack.c.b16 %v2902, %v2894
        %v4647 = vpack.c.b16 %v2903, %v2895
        %v4648 = vpack.c.b16 %v2912, %v2904
        %v4649 = vpack.c.b16 %v2913, %v2905
        %v4650 = vpack.c.b16 %v2914, %v2906
        %v4651 = vpack.c.b16 %v2915, %v2907
        %v4652 = vpack.c.b16 %v2916, %v2908
        %v4653 = vpack.c.b16 %v2917, %v2909
        %v4654 = vpack.c.b16 %v2918, %v2910
        %v4655 = vpack.c.b16 %v2919, %v2911
        %v4656 = vpack.c.b16 %v2928, %v2920
        %v4657 = vpack.c.b16 %v2929, %v2921
        %v4658 = vpack.c.b16 %v2930, %v2922
        %v4659 = vpack.c.b16 %v2931, %v2923
        %v4660 = vpack.c.b16 %v2932, %v2924
        %v4661 = vpack.c.b16 %v2933, %v2925
        %v4662 = vpack.c.b16 %v2934, %v2926
        %v4663 = vpack.c.b16 %v2935, %v2927
        %v4664 = vpack.c.b16 %v2944, %v2936
        %v4665 = vpack.c.b16 %v2945, %v2937
        %v4666 = vpack.c.b16 %v2946, %v2938
        %v4667 = vpack.c.b16 %v2947, %v2939
        %v4668 = vpack.c.b16 %v2948, %v2940
        %v4669 = vpack.c.b16 %v2949, %v2941
        %v4670 = vpack.c.b16 %v2950, %v2942
        %v4671 = vpack.c.b16 %v2951, %v2943
        %v4672 = vpack.c.b16 %v2960, %v2952
        %v4673 = vpack.c.b16 %v2961, %v2953
        %v4674 = vpack.c.b16 %v2962, %v2954
        %v4675 = vpack.c.b16 %v2963, %v2955
        %v4676 = vpack.c.b16 %v2964, %v2956
        %v4677 = vpack.c.b16 %v2965, %v2957
        %v4678 = vpack.c.b16 %v2966, %v2958
        %v4679 = vpack.c.b16 %v2967, %v2959
        %v4680 = vpack.c.b16 %v2976, %v2968
        %v4681 = vpack.c.b16 %v2977, %v2969
        %v4682 = vpack.c.b16 %v2978, %v2970
        %v4683 = vpack.c.b16 %v2979, %v2971
        %v4684 = vpack.c.b16 %v2980, %v2972
        %v4685 = vpack.c.b16 %v2981, %v2973
        %v4686 = vpack.c.b16 %v2982, %v2974
        %v4687 = vpack.c.b16 %v2983, %v2975
        %v4688 = vpack.c.b16 %v2992, %v2984
        %v4689 = vpack.c.b16 %v2993, %v2985
        %v4690 = vpack.c.b16 %v2994, %v2986
        %v4691 = vpack.c.b16 %v2995, %v2987
        %v4692 = vpack.c.b16 %v2996, %v2988
        %v4693 = vpack.c.b16 %v2997, %v2989
        %v4694 = vpack.c.b16 %v2998, %v2990
        %v4695 = vpack.c.b16 %v2999, %v2991
        %v4696 = vpack.c.b16 %v3008, %v3000
        %v4697 = vpack.c.b16 %v3009, %v3001
        %v4698 = vpack.c.b16 %v3010, %v3002
        %v4699 = vpack.c.b16 %v3011, %v3003
        %v4700 = vpack.c.b16 %v3012, %v3004
        %v4701 = vpack.c.b16 %v3013, %v3005
        %v4702 = vpack.c.b16 %v3014, %v3006
        %v4703 = vpack.c.b16 %v3015, %v3007
        %v4704 = vpack.c.b16 %v3024, %v3016
        %v4705 = vpack.c.b16 %v3025, %v3017
        %v4706 = vpack.c.b16 %v3026, %v3018
        %v4707 = vpack.c.b16 %v3027, %v3019
        %v4708 = vpack.c.b16 %v3028, %v3020
        %v4709 = vpack.c.b16 %v3029, %v3021
        %v4710 = vpack.c.b16 %v3030, %v3022
        %v4711 = vpack.c.b16 %v3031, %v3023
        %v4712 = vpack.c.b16 %v3040, %v3032
        %v4713 = vpack.c.b16 %v3041, %v3033
        %v4714 = vpack.c.b16 %v3042, %v3034
        %v4715 = vpack.c.b16 %v3043, %v3035
        %v4716 = vpack.c.b16 %v3044, %v3036
        %v4717 = vpack.c.b16 %v3045, %v3037
        %v4718 = vpack.c.b16 %v3046, %v3038
        %v4719 = vpack.c.b16 %v3047, %v3039
        %v4720 = vpack.c.b16 %v3056, %v3048
        %v4721 = vpack.c.b16 %v3057, %v3049
        %v4722 = vpack.c.b16 %v3058, %v3050
        %v4723 = vpack.c.b16 %v3059, %v3051
        %v4724 = vpack.c.b16 %v3060, %v3052
        %v4725 = vpack.c.b16 %v3061, %v3053
        %v4726 = vpack.c.b16 %v3062, %v3054
        %v4727 = vpack.c.b16 %v3063, %v3055
        %v4728 = vpack.c.b16 %v3072, %v3064
        %v4729 = vpack.c.b16 %v3073, %v3065
        %v4730 = vpack.c.b16 %v3074, %v3066
        %v4731 = vpack.c.b16 %v3075, %v3067
        %v4732 = vpack.c.b16 %v3076, %v3068
        %v4733 = vpack.c.b16 %v3077, %v3069
        %v4734 = vpack.c.b16 %v3078, %v3070
        %v4735 = vpack.c.b16 %v3079, %v3071
        %v4736 = vpack.c.b16 %v3088, %v3080
        %v4737 = vpack.c.b16 %v3089, %v3081
        %v4738 = vpack.c.b16 %v3090, %v3082
        %v4739 = vpack.c.b16 %v3091, %v3083
        %v4740 = vpack.c.b16 %v3092, %v3084
        %v4741 = vpack.c.b16 %v3093, %v3085
        %v4742 = vpack.c.b16 %v3094, %v3086
        %v4743 = vpack.c.b16 %v3095, %v3087
        %v4744 = vpack.c.b16 %v3104, %v3096
        %v4745 = vpack.c.b16 %v3105, %v3097
        %v4746 = vpack.c.b16 %v3106, %v3098
        %v4747 = vpack.c.b16 %v3107, %v3099
        %v4748 = vpack.c.b16 %v3108, %v3100
        %v4749 = vpack.c.b16 %v3109, %v3101
        %v4750 = vpack.c.b16 %v3110, %v3102
        %v4751 = vpack.c.b16 %v3111, %v3103
        %v4752 = vpack.c.b16 %v3120, %v3112
        %v4753 = vpack.c.b16 %v3121, %v3113
        %v4754 = vpack.c.b16 %v3122, %v3114
        %v4755 = vpack.c.b16 %v3123, %v3115
        %v4756 = vpack.c.b16 %v3124, %v3116
        %v4757 = vpack.c.b16 %v3125, %v3117
        %v4758 = vpack.c.b16 %v3126, %v3118
        %v4759 = vpack.c.b16 %v3127, %v3119
        %v4760 = vpack.c.b16 %v3136, %v3128
        %v4761 = vpack.c.b16 %v3137, %v3129
        %v4762 = vpack.c.b16 %v3138, %v3130
        %v4763 = vpack.c.b16 %v3139, %v3131
        %v4764 = vpack.c.b16 %v3140, %v3132
        %v4765 = vpack.c.b16 %v3141, %v3133
        %v4766 = vpack.c.b16 %v3142, %v3134
        %v4767 = vpack.c.b16 %v3143, %v3135
        %v4768 = vpack.c.b16 %v3152, %v3144
        %v4769 = vpack.c.b16 %v3153, %v3145
        %v4770 = vpack.c.b16 %v3154, %v3146
        %v4771 = vpack.c.b16 %v3155, %v3147
        %v4772 = vpack.c.b16 %v3156, %v3148
        %v4773 = vpack.c.b16 %v3157, %v3149
        %v4774 = vpack.c.b16 %v3158, %v3150
        %v4775 = vpack.c.b16 %v3159, %v3151
        %v4776 = vpack.c.b16 %v3168, %v3160
        %v4777 = vpack.c.b16 %v3169, %v3161
        %v4778 = vpack.c.b16 %v3170, %v3162
        %v4779 = vpack.c.b16 %v3171, %v3163
        %v4780 = vpack.c.b16 %v3172, %v3164
        %v4781 = vpack.c.b16 %v3173, %v3165
        %v4782 = vpack.c.b16 %v3174, %v3166
        %v4783 = vpack.c.b16 %v3175, %v3167
        %v4784 = vpack.c.b16 %v3184, %v3176
        %v4785 = vpack.c.b16 %v3185, %v3177
        %v4786 = vpack.c.b16 %v3186, %v3178
        %v4787 = vpack.c.b16 %v3187, %v3179
        %v4788 = vpack.c.b16 %v3188, %v3180
        %v4789 = vpack.c.b16 %v3189, %v3181
        %v4790 = vpack.c.b16 %v3190, %v3182
        %v4791 = vpack.c.b16 %v3191, %v3183
        %v4792 = vpack.c.b16 %v3200, %v3192
        %v4793 = vpack.c.b16 %v3201, %v3193
        %v4794 = vpack.c.b16 %v3202, %v3194
        %v4795 = vpack.c.b16 %v3203, %v3195
        %v4796 = vpack.c.b16 %v3204, %v3196
        %v4797 = vpack.c.b16 %v3205, %v3197
        %v4798 = vpack.c.b16 %v3206, %v3198
        %v4799 = vpack.c.b16 %v3207, %v3199
        %v4800 = vpack.c.b16 %v3216, %v3208
        %v4801 = vpack.c.b16 %v3217, %v3209
        %v4802 = vpack.c.b16 %v3218, %v3210
        %v4803 = vpack.c.b16 %v3219, %v3211
        %v4804 = vpack.c.b16 %v3220, %v3212
        %v4805 = vpack.c.b16 %v3221, %v3213
        %v4806 = vpack.c.b16 %v3222, %v3214
        %v4807 = vpack.c.b16 %v3223, %v3215
        %v4808 = vpack.c.b16 %v3232, %v3224
        %v4809 = vpack.c.b16 %v3233, %v3225
        %v4810 = vpack.c.b16 %v3234, %v3226
        %v4811 = vpack.c.b16 %v3235, %v3227
        %v4812 = vpack.c.b16 %v3236, %v3228
        %v4813 = vpack.c.b16 %v3237, %v3229
        %v4814 = vpack.c.b16 %v3238, %v3230
        %v4815 = vpack.c.b16 %v3239, %v3231
        %v4816 = vpack.c.b16 %v3248, %v3240
        %v4817 = vpack.c.b16 %v3249, %v3241
        %v4818 = vpack.c.b16 %v3250, %v3242
        %v4819 = vpack.c.b16 %v3251, %v3243
        %v4820 = vpack.c.b16 %v3252, %v3244
        %v4821 = vpack.c.b16 %v3253, %v3245
        %v4822 = vpack.c.b16 %v3254, %v3246
        %v4823 = vpack.c.b16 %v3255, %v3247
        %v4824 = vpack.c.b16 %v3264, %v3256
        %v4825 = vpack.c.b16 %v3265, %v3257
        %v4826 = vpack.c.b16 %v3266, %v3258
        %v4827 = vpack.c.b16 %v3267, %v3259
        %v4828 = vpack.c.b16 %v3268, %v3260
        %v4829 = vpack.c.b16 %v3269, %v3261
        %v4830 = vpack.c.b16 %v3270, %v3262
        %v4831 = vpack.c.b16 %v3271, %v3263
        %v4832 = vpack.c.b16 %v3280, %v3272
        %v4833 = vpack.c.b16 %v3281, %v3273
        %v4834 = vpack.c.b16 %v3282, %v3274
        %v4835 = vpack.c.b16 %v3283, %v3275
        %v4836 = vpack.c.b16 %v3284, %v3276
        %v4837 = vpack.c.b16 %v3285, %v3277
        %v4838 = vpack.c.b16 %v3286, %v3278
        %v4839 = vpack.c.b16 %v3287, %v3279
        %v4840 = vpack.c.b16 %v3296, %v3288
        %v4841 = vpack.c.b16 %v3297, %v3289
        %v4842 = vpack.c.b16 %v3298, %v3290
        %v4843 = vpack.c.b16 %v3299, %v3291
        %v4844 = vpack.c.b16 %v3300, %v3292
        %v4845 = vpack.c.b16 %v3301, %v3293
        %v4846 = vpack.c.b16 %v3302, %v3294
        %v4847 = vpack.c.b16 %v3303, %v3295
        %v4848 = vpack.c.b16 %v3312, %v3304
        %v4849 = vpack.c.b16 %v3313, %v3305
        %v4850 = vpack.c.b16 %v3314, %v3306
        %v4851 = vpack.c.b16 %v3315, %v3307
        %v4852 = vpack.c.b16 %v3316, %v3308
        %v4853 = vpack.c.b16 %v3317, %v3309
        %v4854 = vpack.c.b16 %v3318, %v3310
        %v4855 = vpack.c.b16 %v3319, %v3311
        %v4856 = vpack.c.b16 %v3328, %v3320
        %v4857 = vpack.c.b16 %v3329, %v3321
        %v4858 = vpack.c.b16 %v3330, %v3322
        %v4859 = vpack.c.b16 %v3331, %v3323
        %v4860 = vpack.c.b16 %v3332, %v3324
        %v4861 = vpack.c.b16 %v3333, %v3325
        %v4862 = vpack.c.b16 %v3334, %v3326
        %v4863 = vpack.c.b16 %v3335, %v3327
        %v4864 = vpack.c.b16 %v3344, %v3336
        %v4865 = vpack.c.b16 %v3345, %v3337
        %v4866 = vpack.c.b16 %v3346, %v3338
        %v4867 = vpack.c.b16 %v3347, %v3339
        %v4868 = vpack.c.b16 %v3348, %v3340
        %v4869 = vpack.c.b16 %v3349, %v3341
        %v4870 = vpack.c.b16 %v3350, %v3342
        %v4871 = vpack.c.b16 %v3351, %v3343
        %v4872 = vpack.c.b16 %v3360, %v3352
        %v4873 = vpack.c.b16 %v3361, %v3353
        %v4874 = vpack.c.b16 %v3362, %v3354
        %v4875 = vpack.c.b16 %v3363, %v3355
        %v4876 = vpack.c.b16 %v3364, %v3356
        %v4877 = vpack.c.b16 %v3365, %v3357
        %v4878 = vpack.c.b16 %v3366, %v3358
        %v4879 = vpack.c.b16 %v3367, %v3359
        %v4880 = vpack.c.b16 %v3376, %v3368
        %v4881 = vpack.c.b16 %v3377, %v3369
        %v4882 = vpack.c.b16 %v3378, %v3370
        %v4883 = vpack.c.b16 %v3379, %v3371
        %v4884 = vpack.c.b16 %v3380, %v3372
        %v4885 = vpack.c.b16 %v3381, %v3373
        %v4886 = vpack.c.b16 %v3382, %v3374
        %v4887 = vpack.c.b16 %v3383, %v3375
        %v4888 = vpack.c.b16 %v3392, %v3384
        %v4889 = vpack.c.b16 %v3393, %v3385
        %v4890 = vpack.c.b16 %v3394, %v3386
        %v4891 = vpack.c.b16 %v3395, %v3387
        %v4892 = vpack.c.b16 %v3396, %v3388
        %v4893 = vpack.c.b16 %v3397, %v3389
        %v4894 = vpack.c.b16 %v3398, %v3390
        %v4895 = vpack.c.b16 %v3399, %v3391
        %v4896 = vpack.c.b16 %v3408, %v3400
        %v4897 = vpack.c.b16 %v3409, %v3401
        %v4898 = vpack.c.b16 %v3410, %v3402
        %v4899 = vpack.c.b16 %v3411, %v3403
        %v4900 = vpack.c.b16 %v3412, %v3404
        %v4901 = vpack.c.b16 %v3413, %v3405
        %v4902 = vpack.c.b16 %v3414, %v3406
        %v4903 = vpack.c.b16 %v3415, %v3407
        %v4904 = vpack.c.b16 %v3424, %v3416
        %v4905 = vpack.c.b16 %v3425, %v3417
        %v4906 = vpack.c.b16 %v3426, %v3418
        %v4907 = vpack.c.b16 %v3427, %v3419
        %v4908 = vpack.c.b16 %v3428, %v3420
        %v4909 = vpack.c.b16 %v3429, %v3421
        %v4910 = vpack.c.b16 %v3430, %v3422
        %v4911 = vpack.c.b16 %v3431, %v3423
        %v4912 = vpack.c.b16 %v3440, %v3432
        %v4913 = vpack.c.b16 %v3441, %v3433
        %v4914 = vpack.c.b16 %v3442, %v3434
        %v4915 = vpack.c.b16 %v3443, %v3435
        %v4916 = vpack.c.b16 %v3444, %v3436
        %v4917 = vpack.c.b16 %v3445, %v3437
        %v4918 = vpack.c.b16 %v3446, %v3438
        %v4919 = vpack.c.b16 %v3447, %v3439
        %v4920 = vpack.c.b16 %v3456, %v3448
        %v4921 = vpack.c.b16 %v3457, %v3449
        %v4922 = vpack.c.b16 %v3458, %v3450
        %v4923 = vpack.c.b16 %v3459, %v3451
        %v4924 = vpack.c.b16 %v3460, %v3452
        %v4925 = vpack.c.b16 %v3461, %v3453
        %v4926 = vpack.c.b16 %v3462, %v3454
        %v4927 = vpack.c.b16 %v3463, %v3455
        %v4928 = vpack.c.b16 %v3472, %v3464
        %v4929 = vpack.c.b16 %v3473, %v3465
        %v4930 = vpack.c.b16 %v3474, %v3466
        %v4931 = vpack.c.b16 %v3475, %v3467
        %v4932 = vpack.c.b16 %v3476, %v3468
        %v4933 = vpack.c.b16 %v3477, %v3469
        %v4934 = vpack.c.b16 %v3478, %v3470
        %v4935 = vpack.c.b16 %v3479, %v3471
        %v4936 = vpack.c.b16 %v3488, %v3480
        %v4937 = vpack.c.b16 %v3489, %v3481
        %v4938 = vpack.c.b16 %v3490, %v3482
        %v4939 = vpack.c.b16 %v3491, %v3483
        %v4940 = vpack.c.b16 %v3492, %v3484
        %v4941 = vpack.c.b16 %v3493, %v3485
        %v4942 = vpack.c.b16 %v3494, %v3486
        %v4943 = vpack.c.b16 %v3495, %v3487
        %v4944 = vpack.c.b16 %v3504, %v3496
        %v4945 = vpack.c.b16 %v3505, %v3497
        %v4946 = vpack.c.b16 %v3506, %v3498
        %v4947 = vpack.c.b16 %v3507, %v3499
        %v4948 = vpack.c.b16 %v3508, %v3500
        %v4949 = vpack.c.b16 %v3509, %v3501
        %v4950 = vpack.c.b16 %v3510, %v3502
        %v4951 = vpack.c.b16 %v3511, %v3503
        %v4952 = vpack.c.b16 %v3520, %v3512
        %v4953 = vpack.c.b16 %v3521, %v3513
        %v4954 = vpack.c.b16 %v3522, %v3514
        %v4955 = vpack.c.b16 %v3523, %v3515
        %v4956 = vpack.c.b16 %v3524, %v3516
        %v4957 = vpack.c.b16 %v3525, %v3517
        %v4958 = vpack.c.b16 %v3526, %v3518
        %v4959 = vpack.c.b16 %v3527, %v3519
        %v4960 = vpack.c.b16 %v3536, %v3528
        %v4961 = vpack.c.b16 %v3537, %v3529
        %v4962 = vpack.c.b16 %v3538, %v3530
        %v4963 = vpack.c.b16 %v3539, %v3531
        %v4964 = vpack.c.b16 %v3540, %v3532
        %v4965 = vpack.c.b16 %v3541, %v3533
        %v4966 = vpack.c.b16 %v3542, %v3534
        %v4967 = vpack.c.b16 %v3543, %v3535
        %v4968 = vpack.c.b16 %v3552, %v3544
        %v4969 = vpack.c.b16 %v3553, %v3545
        %v4970 = vpack.c.b16 %v3554, %v3546
        %v4971 = vpack.c.b16 %v3555, %v3547
        %v4972 = vpack.c.b16 %v3556, %v3548
        %v4973 = vpack.c.b16 %v3557, %v3549
        %v4974 = vpack.c.b16 %v3558, %v3550
        %v4975 = vpack.c.b16 %v3559, %v3551
        %v4976 = vpack.c.b16 %v3568, %v3560
        %v4977 = vpack.c.b16 %v3569, %v3561
        %v4978 = vpack.c.b16 %v3570, %v3562
        %v4979 = vpack.c.b16 %v3571, %v3563
        %v4980 = vpack.c.b16 %v3572, %v3564
        %v4981 = vpack.c.b16 %v3573, %v3565
        %v4982 = vpack.c.b16 %v3574, %v3566
        %v4983 = vpack.c.b16 %v3575, %v3567
        %v4984 = vpack.c.b16 %v3584, %v3576
        %v4985 = vpack.c.b16 %v3585, %v3577
        %v4986 = vpack.c.b16 %v3586, %v3578
        %v4987 = vpack.c.b16 %v3587, %v3579
        %v4988 = vpack.c.b16 %v3588, %v3580
        %v4989 = vpack.c.b16 %v3589, %v3581
        %v4990 = vpack.c.b16 %v3590, %v3582
        %v4991 = vpack.c.b16 %v3591, %v3583
        %v4992 = vpack.c.b16 %v3600, %v3592
        %v4993 = vpack.c.b16 %v3601, %v3593
        %v4994 = vpack.c.b16 %v3602, %v3594
        %v4995 = vpack.c.b16 %v3603, %v3595
        %v4996 = vpack.c.b16 %v3604, %v3596
        %v4997 = vpack.c.b16 %v3605, %v3597
        %v4998 = vpack.c.b16 %v3606, %v3598
        %v4999 = vpack.c.b16 %v3607, %v3599
        %v5000 = vpack.c.b16 %v3616, %v3608
        %v5001 = vpack.c.b16 %v3617, %v3609
        %v5002 = vpack.c.b16 %v3618, %v3610
        %v5003 = vpack.c.b16 %v3619, %v3611
        %v5004 = vpack.c.b16 %v3620, %v3612
        %v5005 = vpack.c.b16 %v3621, %v3613
        %v5006 = vpack.c.b16 %v3622, %v3614
        %v5007 = vpack.c.b16 %v3623, %v3615
        %v5008 = vpack.c.b16 %v3632, %v3624
        %v5009 = vpack.c.b16 %v3633, %v3625
        %v5010 = vpack.c.b16 %v3634, %v3626
        %v5011 = vpack.c.b16 %v3635, %v3627
        %v5012 = vpack.c.b16 %v3636, %v3628
        %v5013 = vpack.c.b16 %v3637, %v3629
        %v5014 = vpack.c.b16 %v3638, %v3630
        %v5015 = vpack.c.b16 %v3639, %v3631
        %v5016 = vpack.c.b16 %v3648, %v3640
        %v5017 = vpack.c.b16 %v3649, %v3641
        %v5018 = vpack.c.b16 %v3650, %v3642
        %v5019 = vpack.c.b16 %v3651, %v3643
        %v5020 = vpack.c.b16 %v3652, %v3644
        %v5021 = vpack.c.b16 %v3653, %v3645
        %v5022 = vpack.c.b16 %v3654, %v3646
        %v5023 = vpack.c.b16 %v3655, %v3647
        %v5024 = vpack.c.b16 %v3664, %v3656
        %v5025 = vpack.c.b16 %v3665, %v3657
        %v5026 = vpack.c.b16 %v3666, %v3658
        %v5027 = vpack.c.b16 %v3667, %v3659
        %v5028 = vpack.c.b16 %v3668, %v3660
        %v5029 = vpack.c.b16 %v3669, %v3661
        %v5030 = vpack.c.b16 %v3670, %v3662
        %v5031 = vpack.c.b16 %v3671, %v3663
        %v5032 = vpack.c.b16 %v3680, %v3672
        %v5033 = vpack.c.b16 %v3681, %v3673
        %v5034 = vpack.c.b16 %v3682, %v3674
        %v5035 = vpack.c.b16 %v3683, %v3675
        %v5036 = vpack.c.b16 %v3684, %v3676
        %v5037 = vpack.c.b16 %v3685, %v3677
        %v5038 = vpack.c.b16 %v3686, %v3678
        %v5039 = vpack.c.b16 %v3687, %v3679
        %v5040 = vpack.c.b16 %v3696, %v3688
        %v5041 = vpack.c.b16 %v3697, %v3689
        %v5042 = vpack.c.b16 %v3698, %v3690
        %v5043 = vpack.c.b16 %v3699, %v3691
        %v5044 = vpack.c.b16 %v3700, %v3692
        %v5045 = vpack.c.b16 %v3701, %v3693
        %v5046 = vpack.c.b16 %v3702, %v3694
        %v5047 = vpack.c.b16 %v3703, %v3695
        %v5048 = vpack.c.b16 %v3712, %v3704
        %v5049 = vpack.c.b16 %v3713, %v3705
        %v5050 = vpack.c.b16 %v3714, %v3706
        %v5051 = vpack.c.b16 %v3715, %v3707
        %v5052 = vpack.c.b16 %v3716, %v3708
        %v5053 = vpack.c.b16 %v3717, %v3709
        %v5054 = vpack.c.b16 %v3718, %v3710
        %v5055 = vpack.c.b16 %v3719, %v3711
        %v5056 = vpack.c.b16 %v3728, %v3720
        %v5057 = vpack.c.b16 %v3729, %v3721
        %v5058 = vpack.c.b16 %v3730, %v3722
        %v5059 = vpack.c.b16 %v3731, %v3723
        %v5060 = vpack.c.b16 %v3732, %v3724
        %v5061 = vpack.c.b16 %v3733, %v3725
        %v5062 = vpack.c.b16 %v3734, %v3726
        %v5063 = vpack.c.b16 %v3735, %v3727
        %v5064 = vpack.c.b16 %v3744, %v3736
        %v5065 = vpack.c.b16 %v3745, %v3737
        %v5066 = vpack.c.b16 %v3746, %v3738
        %v5067 = vpack.c.b16 %v3747, %v3739
        %v5068 = vpack.c.b16 %v3748, %v3740
        %v5069 = vpack.c.b16 %v3749, %v3741
        %v5070 = vpack.c.b16 %v3750, %v3742
        %v5071 = vpack.c.b16 %v3751, %v3743
        %v5072 = vpack.c.b16 %v3760, %v3752
        %v5073 = vpack.c.b16 %v3761, %v3753
        %v5074 = vpack.c.b16 %v3762, %v3754
        %v5075 = vpack.c.b16 %v3763, %v3755
        %v5076 = vpack.c.b16 %v3764, %v3756
        %v5077 = vpack.c.b16 %v3765, %v3757
        %v5078 = vpack.c.b16 %v3766, %v3758
        %v5079 = vpack.c.b16 %v3767, %v3759
        %v5080 = vpack.c.b16 %v3776, %v3768
        %v5081 = vpack.c.b16 %v3777, %v3769
        %v5082 = vpack.c.b16 %v3778, %v3770
        %v5083 = vpack.c.b16 %v3779, %v3771
        %v5084 = vpack.c.b16 %v3780, %v3772
        %v5085 = vpack.c.b16 %v3781, %v3773
        %v5086 = vpack.c.b16 %v3782, %v3774
        %v5087 = vpack.c.b16 %v3783, %v3775
        %v5088 = vpack.c.b16 %v3792, %v3784
        %v5089 = vpack.c.b16 %v3793, %v3785
        %v5090 = vpack.c.b16 %v3794, %v3786
        %v5091 = vpack.c.b16 %v3795, %v3787
        %v5092 = vpack.c.b16 %v3796, %v3788
        %v5093 = vpack.c.b16 %v3797, %v3789
        %v5094 = vpack.c.b16 %v3798, %v3790
        %v5095 = vpack.c.b16 %v3799, %v3791
        %v5096 = vpack.c.b16 %v3808, %v3800
        %v5097 = vpack.c.b16 %v3809, %v3801
        %v5098 = vpack.c.b16 %v3810, %v3802
        %v5099 = vpack.c.b16 %v3811, %v3803
        %v5100 = vpack.c.b16 %v3812, %v3804
        %v5101 = vpack.c.b16 %v3813, %v3805
        %v5102 = vpack.c.b16 %v3814, %v3806
        %v5103 = vpack.c.b16 %v3815, %v3807
        %v5104 = vpack.c.b16 %v3824, %v3816
        %v5105 = vpack.c.b16 %v3825, %v3817
        %v5106 = vpack.c.b16 %v3826, %v3818
        %v5107 = vpack.c.b16 %v3827, %v3819
        %v5108 = vpack.c.b16 %v3828, %v3820
        %v5109 = vpack.c.b16 %v3829, %v3821
        %v5110 = vpack.c.b16 %v3830, %v3822
        %v5111 = vpack.c.b16 %v3831, %v3823
        %v5112 = vpack.c.b16 %v3840, %v3832
        %v5113 = vpack.c.b16 %v3841, %v3833
        %v5114 = vpack.c.b16 %v3842, %v3834
        %v5115 = vpack.c.b16 %v3843, %v3835
        %v5116 = vpack.c.b16 %v3844, %v3836
        %v5117 = vpack.c.b16 %v3845, %v3837
        %v5118 = vpack.c.b16 %v3846, %v3838
        %v5119 = vpack.c.b16 %v3847, %v3839
        %v5120 = vpack.c.b16 %v3856, %v3848
        %v5121 = vpack.c.b16 %v3857, %v3849
        %v5122 = vpack.c.b16 %v3858, %v3850
        %v5123 = vpack.c.b16 %v3859, %v3851
        %v5124 = vpack.c.b16 %v3860, %v3852
        %v5125 = vpack.c.b16 %v3861, %v3853
        %v5126 = vpack.c.b16 %v3862, %v3854
        %v5127 = vpack.c.b16 %v3863, %v3855
        %v5128 = vpack.c.b16 %v3872, %v3864
        %v5129 = vpack.c.b16 %v3873, %v3865
        %v5130 = vpack.c.b16 %v3874, %v3866
        %v5131 = vpack.c.b16 %v3875, %v3867
        %v5132 = vpack.c.b16 %v3876, %v3868
        %v5133 = vpack.c.b16 %v3877, %v3869
        %v5134 = vpack.c.b16 %v3878, %v3870
        %v5135 = vpack.c.b16 %v3879, %v3871
        %v5136 = vpack.c.b16 %v3888, %v3880
        %v5137 = vpack.c.b16 %v3889, %v3881
        %v5138 = vpack.c.b16 %v3890, %v3882
        %v5139 = vpack.c.b16 %v3891, %v3883
        %v5140 = vpack.c.b16 %v3892, %v3884
        %v5141 = vpack.c.b16 %v3893, %v3885
        %v5142 = vpack.c.b16 %v3894, %v3886
        %v5143 = vpack.c.b16 %v3895, %v3887
        %v5144 = vpack.c.b16 %v3904, %v3896
        %v5145 = vpack.c.b16 %v3905, %v3897
        %v5146 = vpack.c.b16 %v3906, %v3898
        %v5147 = vpack.c.b16 %v3907, %v3899
        %v5148 = vpack.c.b16 %v3908, %v3900
        %v5149 = vpack.c.b16 %v3909, %v3901
        %v5150 = vpack.c.b16 %v3910, %v3902
        %v5151 = vpack.c.b16 %v3911, %v3903
        %v5152 = vpack.c.b16 %v3920, %v3912
        %v5153 = vpack.c.b16 %v3921, %v3913
        %v5154 = vpack.c.b16 %v3922, %v3914
        %v5155 = vpack.c.b16 %v3923, %v3915
        %v5156 = vpack.c.b16 %v3924, %v3916
        %v5157 = vpack.c.b16 %v3925, %v3917
        %v5158 = vpack.c.b16 %v3926, %v3918
        %v5159 = vpack.c.b16 %v3927, %v3919
        %v5160 = vpack.c.b16 %v3936, %v3928
        %v5161 = vpack.c.b16 %v3937, %v3929
        %v5162 = vpack.c.b16 %v3938, %v3930
        %v5163 = vpack.c.b16 %v3939, %v3931
        %v5164 = vpack.c.b16 %v3940, %v3932
        %v5165 = vpack.c.b16 %v3941, %v3933
        %v5166 = vpack.c.b16 %v3942, %v3934
        %v5167 = vpack.c.b16 %v3943, %v3935
        %v5168 = vpack.c.b16 %v3952, %v3944
        %v5169 = vpack.c.b16 %v3953, %v3945
        %v5170 = vpack.c.b16 %v3954, %v3946
        %v5171 = vpack.c.b16 %v3955, %v3947
        %v5172 = vpack.c.b16 %v3956, %v3948
        %v5173 = vpack.c.b16 %v3957, %v3949
        %v5174 = vpack.c.b16 %v3958, %v3950
        %v5175 = vpack.c.b16 %v3959, %v3951
        %v5176 = vpack.c.b16 %v3968, %v3960
        %v5177 = vpack.c.b16 %v3969, %v3961
        %v5178 = vpack.c.b16 %v3970, %v3962
        %v5179 = vpack.c.b16 %v3971, %v3963
        %v5180 = vpack.c.b16 %v3972, %v3964
        %v5181 = vpack.c.b16 %v3973, %v3965
        %v5182 = vpack.c.b16 %v3974, %v3966
        %v5183 = vpack.c.b16 %v3975, %v3967
        %v5184 = vpack.c.b16 %v3984, %v3976
        %v5185 = vpack.c.b16 %v3985, %v3977
        %v5186 = vpack.c.b16 %v3986, %v3978
        %v5187 = vpack.c.b16 %v3987, %v3979
        %v5188 = vpack.c.b16 %v3988, %v3980
        %v5189 = vpack.c.b16 %v3989, %v3981
        %v5190 = vpack.c.b16 %v3990, %v3982
        %v5191 = vpack.c.b16 %v3991, %v3983
        %v5192 = vpack.c.b16 %v4000, %v3992
        %v5193 = vpack.c.b16 %v4001, %v3993
        %v5194 = vpack.c.b16 %v4002, %v3994
        %v5195 = vpack.c.b16 %v4003, %v3995
        %v5196 = vpack.c.b16 %v4004, %v3996
        %v5197 = vpack.c.b16 %v4005, %v3997
        %v5198 = vpack.c.b16 %v4006, %v3998
        %v5199 = vpack.c.b16 %v4007, %v3999
        %v5200 = vpack.c.b16 %v4016, %v4008
        %v5201 = vpack.c.b16 %v4017, %v4009
        %v5202 = vpack.c.b16 %v4018, %v4010
        %v5203 = vpack.c.b16 %v4019, %v4011
        %v5204 = vpack.c.b16 %v4020, %v4012
        %v5205 = vpack.c.b16 %v4021, %v4013
        %v5206 = vpack.c.b16 %v4022, %v4014
        %v5207 = vpack.c.b16 %v4023, %v4015
        %v5208 = vpack.c.b16 %v4032, %v4024
        %v5209 = vpack.c.b16 %v4033, %v4025
        %v5210 = vpack.c.b16 %v4034, %v4026
        %v5211 = vpack.c.b16 %v4035, %v4027
        %v5212 = vpack.c.b16 %v4036, %v4028
        %v5213 = vpack.c.b16 %v4037, %v4029
        %v5214 = vpack.c.b16 %v4038, %v4030
        %v5215 = vpack.c.b16 %v4039, %v4031
        %v5216 = vpack.c.b16 %v4048, %v4040
        %v5217 = vpack.c.b16 %v4049, %v4041
        %v5218 = vpack.c.b16 %v4050, %v4042
        %v5219 = vpack.c.b16 %v4051, %v4043
        %v5220 = vpack.c.b16 %v4052, %v4044
        %v5221 = vpack.c.b16 %v4053, %v4045
        %v5222 = vpack.c.b16 %v4054, %v4046
        %v5223 = vpack.c.b16 %v4055, %v4047
        %v5224 = vpack.c.b16 %v4064, %v4056
        %v5225 = vpack.c.b16 %v4065, %v4057
        %v5226 = vpack.c.b16 %v4066, %v4058
        %v5227 = vpack.c.b16 %v4067, %v4059
        %v5228 = vpack.c.b16 %v4068, %v4060
        %v5229 = vpack.c.b16 %v4069, %v4061
        %v5230 = vpack.c.b16 %v4070, %v4062
        %v5231 = vpack.c.b16 %v4071, %v4063
        %v5232 = vpack.c.b16 %v4080, %v4072
        %v5233 = vpack.c.b16 %v4081, %v4073
        %v5234 = vpack.c.b16 %v4082, %v4074
        %v5235 = vpack.c.b16 %v4083, %v4075
        %v5236 = vpack.c.b16 %v4084, %v4076
        %v5237 = vpack.c.b16 %v4085, %v4077
        %v5238 = vpack.c.b16 %v4086, %v4078
        %v5239 = vpack.c.b16 %v4087, %v4079
        %v5240 = vpack.c.b16 %v4096, %v4088
        %v5241 = vpack.c.b16 %v4097, %v4089
        %v5242 = vpack.c.b16 %v4098, %v4090
        %v5243 = vpack.c.b16 %v4099, %v4091
        %v5244 = vpack.c.b16 %v4100, %v4092
        %v5245 = vpack.c.b16 %v4101, %v4093
        %v5246 = vpack.c.b16 %v4102, %v4094
        %v5247 = vpack.c.b16 %v4103, %v4095
        %v5248 = vpack.c.b16 %v4112, %v4104
        %v5249 = vpack.c.b16 %v4113, %v4105
        %v5250 = vpack.c.b16 %v4114, %v4106
        %v5251 = vpack.c.b16 %v4115, %v4107
        %v5252 = vpack.c.b16 %v4116, %v4108
        %v5253 = vpack.c.b16 %v4117, %v4109
        %v5254 = vpack.c.b16 %v4118, %v4110
        %v5255 = vpack.c.b16 %v4119, %v4111
        %v5256 = vpack.c.b16 %v4128, %v4120
        %v5257 = vpack.c.b16 %v4129, %v4121
        %v5258 = vpack.c.b16 %v4130, %v4122
        %v5259 = vpack.c.b16 %v4131, %v4123
        %v5260 = vpack.c.b16 %v4132, %v4124
        %v5261 = vpack.c.b16 %v4133, %v4125
        %v5262 = vpack.c.b16 %v4134, %v4126
        %v5263 = vpack.c.b16 %v4135, %v4127
        %v5264 = vpack.c.b16 %v4144, %v4136
        %v5265 = vpack.c.b16 %v4145, %v4137
        %v5266 = vpack.c.b16 %v4146, %v4138
        %v5267 = vpack.c.b16 %v4147, %v4139
        %v5268 = vpack.c.b16 %v4148, %v4140
        %v5269 = vpack.c.b16 %v4149, %v4141
        %v5270 = vpack.c.b16 %v4150, %v4142
        %v5271 = vpack.c.b16 %v4151, %v4143
        %v5272 = vpack.c.b16 %v4160, %v4152
        %v5273 = vpack.c.b16 %v4161, %v4153
        %v5274 = vpack.c.b16 %v4162, %v4154
        %v5275 = vpack.c.b16 %v4163, %v4155
        %v5276 = vpack.c.b16 %v4164, %v4156
        %v5277 = vpack.c.b16 %v4165, %v4157
        %v5278 = vpack.c.b16 %v4166, %v4158
        %v5279 = vpack.c.b16 %v4167, %v4159
        %v5280 = vpack.c.b16 %v4176, %v4168
        %v5281 = vpack.c.b16 %v4177, %v4169
        %v5282 = vpack.c.b16 %v4178, %v4170
        %v5283 = vpack.c.b16 %v4179, %v4171
        %v5284 = vpack.c.b16 %v4180, %v4172
        %v5285 = vpack.c.b16 %v4181, %v4173
        %v5286 = vpack.c.b16 %v4182, %v4174
        %v5287 = vpack.c.b16 %v4183, %v4175
        %v5288 = vpack.c.b16 %v4192, %v4184
        %v5289 = vpack.c.b16 %v4193, %v4185
        %v5290 = vpack.c.b16 %v4194, %v4186
        %v5291 = vpack.c.b16 %v4195, %v4187
        %v5292 = vpack.c.b16 %v4196, %v4188
        %v5293 = vpack.c.b16 %v4197, %v4189
        %v5294 = vpack.c.b16 %v4198, %v4190
        %v5295 = vpack.c.b16 %v4199, %v4191
        %v5296 = vpack.c.b16 %v4208, %v4200
        %v5297 = vpack.c.b16 %v4209, %v4201
        %v5298 = vpack.c.b16 %v4210, %v4202
        %v5299 = vpack.c.b16 %v4211, %v4203
        %v5300 = vpack.c.b16 %v4212, %v4204
        %v5301 = vpack.c.b16 %v4213, %v4205
        %v5302 = vpack.c.b16 %v4214, %v4206
        %v5303 = vpack.c.b16 %v4215, %v4207
        %v5304 = vpack.c.b16 %v4224, %v4216
        %v5305 = vpack.c.b16 %v4225, %v4217
        %v5306 = vpack.c.b16 %v4226, %v4218
        %v5307 = vpack.c.b16 %v4227, %v4219
        %v5308 = vpack.c.b16 %v4228, %v4220
        %v5309 = vpack.c.b16 %v4229, %v4221
        %v5310 = vpack.c.b16 %v4230, %v4222
        %v5311 = vpack.c.b16 %v4231, %v4223
        %v5312 = vpack.c.b16 %v4240, %v4232
        %v5313 = vpack.c.b16 %v4241, %v4233
        %v5314 = vpack.c.b16 %v4242, %v4234
        %v5315 = vpack.c.b16 %v4243, %v4235
        %v5316 = vpack.c.b16 %v4244, %v4236
        %v5317 = vpack.c.b16 %v4245, %v4237
        %v5318 = vpack.c.b16 %v4246, %v4238
        %v5319 = vpack.c.b16 %v4247, %v4239
        %v5320 = vpack.c.b16 %v4256, %v4248
        %v5321 = vpack.c.b16 %v4257, %v4249
        %v5322 = vpack.c.b16 %v4258, %v4250
        %v5323 = vpack.c.b16 %v4259, %v4251
        %v5324 = vpack.c.b16 %v4260, %v4252
        %v5325 = vpack.c.b16 %v4261, %v4253
        %v5326 = vpack.c.b16 %v4262, %v4254
        %v5327 = vpack.c.b16 %v4263, %v4255
        %v5328 = vpack.c.b16 %v4272, %v4264
        %v5329 = vpack.c.b16 %v4273, %v4265
        %v5330 = vpack.c.b16 %v4274, %v4266
        %v5331 = vpack.c.b16 %v4275, %v4267
        %v5332 = vpack.c.b16 %v4276, %v4268
        %v5333 = vpack.c.b16 %v4277, %v4269
        %v5334 = vpack.c.b16 %v4278, %v4270
        %v5335 = vpack.c.b16 %v4279, %v4271
        %v5336 = vpack.c.b16 %v4288, %v4280
        %v5337 = vpack.c.b16 %v4289, %v4281
        %v5338 = vpack.c.b16 %v4290, %v4282
        %v5339 = vpack.c.b16 %v4291, %v4283
        %v5340 = vpack.c.b16 %v4292, %v4284
        %v5341 = vpack.c.b16 %v4293, %v4285
        %v5342 = vpack.c.b16 %v4294, %v4286
        %v5343 = vpack.c.b16 %v4295, %v4287
        %v5344 = vpack.c.b16 %v4304, %v4296
        %v5345 = vpack.c.b16 %v4305, %v4297
        %v5346 = vpack.c.b16 %v4306, %v4298
        %v5347 = vpack.c.b16 %v4307, %v4299
        %v5348 = vpack.c.b16 %v4308, %v4300
        %v5349 = vpack.c.b16 %v4309, %v4301
        %v5350 = vpack.c.b16 %v4310, %v4302
        %v5351 = vpack.c.b16 %v4311, %v4303
        %v5352 = vpack.c.b16 %v4320, %v4312
        %v5353 = vpack.c.b16 %v4321, %v4313
        %v5354 = vpack.c.b16 %v4322, %v4314
        %v5355 = vpack.c.b16 %v4323, %v4315
        %v5356 = vpack.c.b16 %v4324, %v4316
        %v5357 = vpack.c.b16 %v4325, %v4317
        %v5358 = vpack.c.b16 %v4326, %v4318
        %v5359 = vpack.c.b16 %v4327, %v4319
        %v5360 = vpack.c.b16 %v4336, %v4328
        %v5361 = vpack.c.b16 %v4337, %v4329
        %v5362 = vpack.c.b16 %v4338, %v4330
        %v5363 = vpack.c.b16 %v4339, %v4331
        %v5364 = vpack.c.b16 %v4340, %v4332
        %v5365 = vpack.c.b16 %v4341, %v4333
        %v5366 = vpack.c.b16 %v4342, %v4334
        %v5367 = vpack.c.b16 %v4343, %v4335
        %v5368 = vpack.c.b16 %v4352, %v4344
        %v5369 = vpack.c.b16 %v4353, %v4345
        %v5370 = vpack.c.b16 %v4354, %v4346
        %v5371 = vpack.c.b16 %v4355, %v4347
        %v5372 = vpack.c.b16 %v4356, %v4348
        %v5373 = vpack.c.b16 %v4357, %v4349
        %v5374 = vpack.c.b16 %v4358, %v4350
        %v5375 = vpack.c.b16 %v4359, %v4351
        %v5376 = vpack.c.b16 %v4368, %v4360
        %v5377 = vpack.c.b16 %v4369, %v4361
        %v5378 = vpack.c.b16 %v4370, %v4362
        %v5379 = vpack.c.b16 %v4371, %v4363
        %v5380 = vpack.c.b16 %v4372, %v4364
        %v5381 = vpack.c.b16 %v4373, %v4365
        %v5382 = vpack.c.b16 %v4374, %v4366
        %v5383 = vpack.c.b16 %v4375, %v4367
        %vm6392 = vcmask 785408
        %v6394 = vsel %vm6392, %v325, 0
        %6396 = vmatpush.bf16.msra.mxu0 %v4432
        %6397 = vmatpush.bf16.msra.mxu0 %v4424
        %6398 = vmatpush.bf16.msra.mxu0 %v4416
        %6399 = vmatpush.bf16.msra.mxu0 %v4408
        %6400 = vmatpush.bf16.msra.mxu0 %v4400
        %6401 = vmatpush.bf16.msra.mxu0 %v4392
        %6402 = vmatpush.bf16.msra.mxu0 %v4384
        %6403 = vmatpush.bf16.msra.mxu0 %v4376
        %6404 = vmatmul.bf16.gmra.mxu0 %v310
        %v6405 = vpop.f32.mrf.mxu0
        %v6406 = vadd.f32 %v1336, %v6405
        %v6407 = vpop.f32.mrf.mxu0
        %6408 = vdwg.mxu0
        %6409 = vmatpush.bf16.msra.mxu0 %v4496
        %6410 = vmatpush.bf16.msra.mxu0 %v4488
        %6411 = vmatpush.bf16.msra.mxu0 %v4480
        %6412 = vmatpush.bf16.msra.mxu0 %v4472
        %6413 = vmatpush.bf16.msra.mxu0 %v4464
        %6414 = vmatpush.bf16.msra.mxu0 %v4456
        %6415 = vmatpush.bf16.msra.mxu0 %v4448
        %6416 = vmatpush.bf16.msra.mxu0 %v4440
        %6417 = vmatmul.bf16.gmra.mxu0 %v311
        %v6418 = vpop.f32.mrf.mxu0
        %v6419 = vadd.f32 %v6406, %v6418
        %v6420 = vpop.f32.mrf.mxu0
        %6421 = vdwg.mxu0
        %6422 = vmatpush.bf16.msra.mxu0 %v4560
        %6423 = vmatpush.bf16.msra.mxu0 %v4552
        %6424 = vmatpush.bf16.msra.mxu0 %v4544
        %6425 = vmatpush.bf16.msra.mxu0 %v4536
        %6426 = vmatpush.bf16.msra.mxu0 %v4528
        %6427 = vmatpush.bf16.msra.mxu0 %v4520
        %6428 = vmatpush.bf16.msra.mxu0 %v4512
        %6429 = vmatpush.bf16.msra.mxu0 %v4504
        %6430 = vmatmul.bf16.gmra.mxu0 %v312
        %v6431 = vpop.f32.mrf.mxu0
        %v6432 = vadd.f32 %v6419, %v6431
        %v6433 = vpop.f32.mrf.mxu0
        %6434 = vdwg.mxu0
        %6435 = vmatpush.bf16.msra.mxu0 %v4624
        %6436 = vmatpush.bf16.msra.mxu0 %v4616
        %6437 = vmatpush.bf16.msra.mxu0 %v4608
        %6438 = vmatpush.bf16.msra.mxu0 %v4600
        %6439 = vmatpush.bf16.msra.mxu0 %v4592
        %6440 = vmatpush.bf16.msra.mxu0 %v4584
        %6441 = vmatpush.bf16.msra.mxu0 %v4576
        %6442 = vmatpush.bf16.msra.mxu0 %v4568
        %6443 = vmatmul.bf16.gmra.mxu0 %v313
        %v6444 = vpop.f32.mrf.mxu0
        %v6445 = vadd.f32 %v6432, %v6444
        %v6446 = vpop.f32.mrf.mxu0
        %6447 = vdwg.mxu0
        %6448 = vmatpush.bf16.msra.mxu0 %v4688
        %6449 = vmatpush.bf16.msra.mxu0 %v4680
        %6450 = vmatpush.bf16.msra.mxu0 %v4672
        %6451 = vmatpush.bf16.msra.mxu0 %v4664
        %6452 = vmatpush.bf16.msra.mxu0 %v4656
        %6453 = vmatpush.bf16.msra.mxu0 %v4648
        %6454 = vmatpush.bf16.msra.mxu0 %v4640
        %6455 = vmatpush.bf16.msra.mxu0 %v4632
        %6456 = vmatmul.bf16.gmra.mxu0 %v314
        %v6457 = vpop.f32.mrf.mxu0
        %v6458 = vadd.f32 %v6445, %v6457
        %v6459 = vpop.f32.mrf.mxu0
        %6460 = vdwg.mxu0
        %6461 = vmatpush.bf16.msra.mxu0 %v4752
        %6462 = vmatpush.bf16.msra.mxu0 %v4744
        %6463 = vmatpush.bf16.msra.mxu0 %v4736
        %6464 = vmatpush.bf16.msra.mxu0 %v4728
        %6465 = vmatpush.bf16.msra.mxu0 %v4720
        %6466 = vmatpush.bf16.msra.mxu0 %v4712
        %6467 = vmatpush.bf16.msra.mxu0 %v4704
        %6468 = vmatpush.bf16.msra.mxu0 %v4696
        %6469 = vmatmul.bf16.gmra.mxu0 %v315
        %v6470 = vpop.f32.mrf.mxu0
        %v6471 = vadd.f32 %v6458, %v6470
        %v6472 = vpop.f32.mrf.mxu0
        %6473 = vdwg.mxu0
        %6474 = vmatpush.bf16.msra.mxu0 %v4816
        %6475 = vmatpush.bf16.msra.mxu0 %v4808
        %6476 = vmatpush.bf16.msra.mxu0 %v4800
        %6477 = vmatpush.bf16.msra.mxu0 %v4792
        %6478 = vmatpush.bf16.msra.mxu0 %v4784
        %6479 = vmatpush.bf16.msra.mxu0 %v4776
        %6480 = vmatpush.bf16.msra.mxu0 %v4768
        %6481 = vmatpush.bf16.msra.mxu0 %v4760
        %6482 = vmatmul.bf16.gmra.mxu0 %v316
        %v6483 = vpop.f32.mrf.mxu0
        %v6484 = vadd.f32 %v6471, %v6483
        %v6485 = vpop.f32.mrf.mxu0
        %6486 = vdwg.mxu0
        %6487 = vmatpush.bf16.msra.mxu0 %v4880
        %6488 = vmatpush.bf16.msra.mxu0 %v4872
        %6489 = vmatpush.bf16.msra.mxu0 %v4864
        %6490 = vmatpush.bf16.msra.mxu0 %v4856
        %6491 = vmatpush.bf16.msra.mxu0 %v4848
        %6492 = vmatpush.bf16.msra.mxu0 %v4840
        %6493 = vmatpush.bf16.msra.mxu0 %v4832
        %6494 = vmatpush.bf16.msra.mxu0 %v4824
        %6495 = vmatmul.bf16.gmra.mxu0 %v317
        %v6496 = vpop.f32.mrf.mxu0
        %v6497 = vadd.f32 %v6484, %v6496
        %v6498 = vpop.f32.mrf.mxu0
        %6499 = vdwg.mxu0
        %6500 = vmatpush.bf16.msra.mxu0 %v4944
        %6501 = vmatpush.bf16.msra.mxu0 %v4936
        %6502 = vmatpush.bf16.msra.mxu0 %v4928
        %6503 = vmatpush.bf16.msra.mxu0 %v4920
        %6504 = vmatpush.bf16.msra.mxu0 %v4912
        %6505 = vmatpush.bf16.msra.mxu0 %v4904
        %6506 = vmatpush.bf16.msra.mxu0 %v4896
        %6507 = vmatpush.bf16.msra.mxu0 %v4888
        %6508 = vmatmul.bf16.gmra.mxu0 %v318
        %v6509 = vpop.f32.mrf.mxu0
        %v6510 = vadd.f32 %v6497, %v6509
        %v6511 = vpop.f32.mrf.mxu0
        %6512 = vdwg.mxu0
        %6513 = vmatpush.bf16.msra.mxu0 %v5008
        %6514 = vmatpush.bf16.msra.mxu0 %v5000
        %6515 = vmatpush.bf16.msra.mxu0 %v4992
        %6516 = vmatpush.bf16.msra.mxu0 %v4984
        %6517 = vmatpush.bf16.msra.mxu0 %v4976
        %6518 = vmatpush.bf16.msra.mxu0 %v4968
        %6519 = vmatpush.bf16.msra.mxu0 %v4960
        %6520 = vmatpush.bf16.msra.mxu0 %v4952
        %6521 = vmatmul.bf16.gmra.mxu0 %v319
        %v6522 = vpop.f32.mrf.mxu0
        %v6523 = vadd.f32 %v6510, %v6522
        %v6524 = vpop.f32.mrf.mxu0
        %6525 = vdwg.mxu0
        %6526 = vmatpush.bf16.msra.mxu0 %v5072
        %6527 = vmatpush.bf16.msra.mxu0 %v5064
        %6528 = vmatpush.bf16.msra.mxu0 %v5056
        %6529 = vmatpush.bf16.msra.mxu0 %v5048
        %6530 = vmatpush.bf16.msra.mxu0 %v5040
        %6531 = vmatpush.bf16.msra.mxu0 %v5032
        %6532 = vmatpush.bf16.msra.mxu0 %v5024
        %6533 = vmatpush.bf16.msra.mxu0 %v5016
        %6534 = vmatmul.bf16.gmra.mxu0 %v320
        %v6535 = vpop.f32.mrf.mxu0
        %v6536 = vadd.f32 %v6523, %v6535
        %v6537 = vpop.f32.mrf.mxu0
        %6538 = vdwg.mxu0
        %6539 = vmatpush.bf16.msra.mxu0 %v5136
        %6540 = vmatpush.bf16.msra.mxu0 %v5128
        %6541 = vmatpush.bf16.msra.mxu0 %v5120
        %6542 = vmatpush.bf16.msra.mxu0 %v5112
        %6543 = vmatpush.bf16.msra.mxu0 %v5104
        %6544 = vmatpush.bf16.msra.mxu0 %v5096
        %6545 = vmatpush.bf16.msra.mxu0 %v5088
        %6546 = vmatpush.bf16.msra.mxu0 %v5080
        %6547 = vmatmul.bf16.gmra.mxu0 %v321
        %v6548 = vpop.f32.mrf.mxu0
        %v6549 = vadd.f32 %v6536, %v6548
        %v6550 = vpop.f32.mrf.mxu0
        %6551 = vdwg.mxu0
        %6552 = vmatpush.bf16.msra.mxu0 %v5200
        %6553 = vmatpush.bf16.msra.mxu0 %v5192
        %6554 = vmatpush.bf16.msra.mxu0 %v5184
        %6555 = vmatpush.bf16.msra.mxu0 %v5176
        %6556 = vmatpush.bf16.msra.mxu0 %v5168
        %6557 = vmatpush.bf16.msra.mxu0 %v5160
        %6558 = vmatpush.bf16.msra.mxu0 %v5152
        %6559 = vmatpush.bf16.msra.mxu0 %v5144
        %6560 = vmatmul.bf16.gmra.mxu0 %v322
        %v6561 = vpop.f32.mrf.mxu0
        %v6562 = vadd.f32 %v6549, %v6561
        %v6563 = vpop.f32.mrf.mxu0
        %6564 = vdwg.mxu0
        %6565 = vmatpush.bf16.msra.mxu0 %v5264
        %6566 = vmatpush.bf16.msra.mxu0 %v5256
        %6567 = vmatpush.bf16.msra.mxu0 %v5248
        %6568 = vmatpush.bf16.msra.mxu0 %v5240
        %6569 = vmatpush.bf16.msra.mxu0 %v5232
        %6570 = vmatpush.bf16.msra.mxu0 %v5224
        %6571 = vmatpush.bf16.msra.mxu0 %v5216
        %6572 = vmatpush.bf16.msra.mxu0 %v5208
        %6573 = vmatmul.bf16.gmra.mxu0 %v323
        %v6574 = vpop.f32.mrf.mxu0
        %v6575 = vadd.f32 %v6562, %v6574
        %v6576 = vpop.f32.mrf.mxu0
        %6577 = vdwg.mxu0
        %6578 = vmatpush.bf16.msra.mxu0 %v5328
        %6579 = vmatpush.bf16.msra.mxu0 %v5320
        %6580 = vmatpush.bf16.msra.mxu0 %v5312
        %6581 = vmatpush.bf16.msra.mxu0 %v5304
        %6582 = vmatpush.bf16.msra.mxu0 %v5296
        %6583 = vmatpush.bf16.msra.mxu0 %v5288
        %6584 = vmatpush.bf16.msra.mxu0 %v5280
        %6585 = vmatpush.bf16.msra.mxu0 %v5272
        %6586 = vmatmul.bf16.gmra.mxu0 %v324
        %v6587 = vpop.f32.mrf.mxu0
        %v6588 = vadd.f32 %v6575, %v6587
        %v6589 = vpop.f32.mrf.mxu0
        %6590 = vdwg.mxu0
        %6591 = vmatpush.bf16.msra.mxu0 0
        %6592 = vmatpush.bf16.msra.mxu0 0
        %6593 = vmatpush.bf16.msra.mxu0 %v5376
        %6594 = vmatpush.bf16.msra.mxu0 %v5368
        %6595 = vmatpush.bf16.msra.mxu0 %v5360
        %6596 = vmatpush.bf16.msra.mxu0 %v5352
        %6597 = vmatpush.bf16.msra.mxu0 %v5344
        %6598 = vmatpush.bf16.msra.mxu0 %v5336
        %6599 = vmatmul.bf16.gmra.mxu0 %v6394
        %v6600 = vpop.f32.mrf.mxu0
        %v6601 = vadd.f32 %v6588, %v6600
        %v6602 = vpop.f32.mrf.mxu0
        %6603 = vdwg.mxu0
        %6604 = vmatpush.bf16.msra.mxu0 %v4433
        %6605 = vmatpush.bf16.msra.mxu0 %v4425
        %6606 = vmatpush.bf16.msra.mxu0 %v4417
        %6607 = vmatpush.bf16.msra.mxu0 %v4409
        %6608 = vmatpush.bf16.msra.mxu0 %v4401
        %6609 = vmatpush.bf16.msra.mxu0 %v4393
        %6610 = vmatpush.bf16.msra.mxu0 %v4385
        %6611 = vmatpush.bf16.msra.mxu0 %v4377
        %6612 = vmatmul.bf16.gmra.mxu0 %v310
        %v6613 = vpop.f32.mrf.mxu0
        %v6614 = vadd.f32 %v1337, %v6613
        %v6615 = vpop.f32.mrf.mxu0
        %6616 = vdwg.mxu0
        %6617 = vmatpush.bf16.msra.mxu0 %v4497
        %6618 = vmatpush.bf16.msra.mxu0 %v4489
        %6619 = vmatpush.bf16.msra.mxu0 %v4481
        %6620 = vmatpush.bf16.msra.mxu0 %v4473
        %6621 = vmatpush.bf16.msra.mxu0 %v4465
        %6622 = vmatpush.bf16.msra.mxu0 %v4457
        %6623 = vmatpush.bf16.msra.mxu0 %v4449
        %6624 = vmatpush.bf16.msra.mxu0 %v4441
        %6625 = vmatmul.bf16.gmra.mxu0 %v311
        %v6626 = vpop.f32.mrf.mxu0
        %v6627 = vadd.f32 %v6614, %v6626
        %v6628 = vpop.f32.mrf.mxu0
        %6629 = vdwg.mxu0
        %6630 = vmatpush.bf16.msra.mxu0 %v4561
        %6631 = vmatpush.bf16.msra.mxu0 %v4553
        %6632 = vmatpush.bf16.msra.mxu0 %v4545
        %6633 = vmatpush.bf16.msra.mxu0 %v4537
        %6634 = vmatpush.bf16.msra.mxu0 %v4529
        %6635 = vmatpush.bf16.msra.mxu0 %v4521
        %6636 = vmatpush.bf16.msra.mxu0 %v4513
        %6637 = vmatpush.bf16.msra.mxu0 %v4505
        %6638 = vmatmul.bf16.gmra.mxu0 %v312
        %v6639 = vpop.f32.mrf.mxu0
        %v6640 = vadd.f32 %v6627, %v6639
        %v6641 = vpop.f32.mrf.mxu0
        %6642 = vdwg.mxu0
        %6643 = vmatpush.bf16.msra.mxu0 %v4625
        %6644 = vmatpush.bf16.msra.mxu0 %v4617
        %6645 = vmatpush.bf16.msra.mxu0 %v4609
        %6646 = vmatpush.bf16.msra.mxu0 %v4601
        %6647 = vmatpush.bf16.msra.mxu0 %v4593
        %6648 = vmatpush.bf16.msra.mxu0 %v4585
        %6649 = vmatpush.bf16.msra.mxu0 %v4577
        %6650 = vmatpush.bf16.msra.mxu0 %v4569
        %6651 = vmatmul.bf16.gmra.mxu0 %v313
        %v6652 = vpop.f32.mrf.mxu0
        %v6653 = vadd.f32 %v6640, %v6652
        %v6654 = vpop.f32.mrf.mxu0
        %6655 = vdwg.mxu0
        %6656 = vmatpush.bf16.msra.mxu0 %v4689
        %6657 = vmatpush.bf16.msra.mxu0 %v4681
        %6658 = vmatpush.bf16.msra.mxu0 %v4673
        %6659 = vmatpush.bf16.msra.mxu0 %v4665
        %6660 = vmatpush.bf16.msra.mxu0 %v4657
        %6661 = vmatpush.bf16.msra.mxu0 %v4649
        %6662 = vmatpush.bf16.msra.mxu0 %v4641
        %6663 = vmatpush.bf16.msra.mxu0 %v4633
        %6664 = vmatmul.bf16.gmra.mxu0 %v314
        %v6665 = vpop.f32.mrf.mxu0
        %v6666 = vadd.f32 %v6653, %v6665
        %v6667 = vpop.f32.mrf.mxu0
        %6668 = vdwg.mxu0
        %6669 = vmatpush.bf16.msra.mxu0 %v4753
        %6670 = vmatpush.bf16.msra.mxu0 %v4745
        %6671 = vmatpush.bf16.msra.mxu0 %v4737
        %6672 = vmatpush.bf16.msra.mxu0 %v4729
        %6673 = vmatpush.bf16.msra.mxu0 %v4721
        %6674 = vmatpush.bf16.msra.mxu0 %v4713
        %6675 = vmatpush.bf16.msra.mxu0 %v4705
        %6676 = vmatpush.bf16.msra.mxu0 %v4697
        %6677 = vmatmul.bf16.gmra.mxu0 %v315
        %v6678 = vpop.f32.mrf.mxu0
        %v6679 = vadd.f32 %v6666, %v6678
        %v6680 = vpop.f32.mrf.mxu0
        %6681 = vdwg.mxu0
        %6682 = vmatpush.bf16.msra.mxu0 %v4817
        %6683 = vmatpush.bf16.msra.mxu0 %v4809
        %6684 = vmatpush.bf16.msra.mxu0 %v4801
        %6685 = vmatpush.bf16.msra.mxu0 %v4793
        %6686 = vmatpush.bf16.msra.mxu0 %v4785
        %6687 = vmatpush.bf16.msra.mxu0 %v4777
        %6688 = vmatpush.bf16.msra.mxu0 %v4769
        %6689 = vmatpush.bf16.msra.mxu0 %v4761
        %6690 = vmatmul.bf16.gmra.mxu0 %v316
        %v6691 = vpop.f32.mrf.mxu0
        %v6692 = vadd.f32 %v6679, %v6691
        %v6693 = vpop.f32.mrf.mxu0
        %6694 = vdwg.mxu0
        %6695 = vmatpush.bf16.msra.mxu0 %v4881
        %6696 = vmatpush.bf16.msra.mxu0 %v4873
        %6697 = vmatpush.bf16.msra.mxu0 %v4865
        %6698 = vmatpush.bf16.msra.mxu0 %v4857
        %6699 = vmatpush.bf16.msra.mxu0 %v4849
        %6700 = vmatpush.bf16.msra.mxu0 %v4841
        %6701 = vmatpush.bf16.msra.mxu0 %v4833
        %6702 = vmatpush.bf16.msra.mxu0 %v4825
        %6703 = vmatmul.bf16.gmra.mxu0 %v317
        %v6704 = vpop.f32.mrf.mxu0
        %v6705 = vadd.f32 %v6692, %v6704
        %v6706 = vpop.f32.mrf.mxu0
        %6707 = vdwg.mxu0
        %6708 = vmatpush.bf16.msra.mxu0 %v4945
        %6709 = vmatpush.bf16.msra.mxu0 %v4937
        %6710 = vmatpush.bf16.msra.mxu0 %v4929
        %6711 = vmatpush.bf16.msra.mxu0 %v4921
        %6712 = vmatpush.bf16.msra.mxu0 %v4913
        %6713 = vmatpush.bf16.msra.mxu0 %v4905
        %6714 = vmatpush.bf16.msra.mxu0 %v4897
        %6715 = vmatpush.bf16.msra.mxu0 %v4889
        %6716 = vmatmul.bf16.gmra.mxu0 %v318
        %v6717 = vpop.f32.mrf.mxu0
        %v6718 = vadd.f32 %v6705, %v6717
        %v6719 = vpop.f32.mrf.mxu0
        %6720 = vdwg.mxu0
        %6721 = vmatpush.bf16.msra.mxu0 %v5009
        %6722 = vmatpush.bf16.msra.mxu0 %v5001
        %6723 = vmatpush.bf16.msra.mxu0 %v4993
        %6724 = vmatpush.bf16.msra.mxu0 %v4985
        %6725 = vmatpush.bf16.msra.mxu0 %v4977
        %6726 = vmatpush.bf16.msra.mxu0 %v4969
        %6727 = vmatpush.bf16.msra.mxu0 %v4961
        %6728 = vmatpush.bf16.msra.mxu0 %v4953
        %6729 = vmatmul.bf16.gmra.mxu0 %v319
        %v6730 = vpop.f32.mrf.mxu0
        %v6731 = vadd.f32 %v6718, %v6730
        %v6732 = vpop.f32.mrf.mxu0
        %6733 = vdwg.mxu0
        %6734 = vmatpush.bf16.msra.mxu0 %v5073
        %6735 = vmatpush.bf16.msra.mxu0 %v5065
        %6736 = vmatpush.bf16.msra.mxu0 %v5057
        %6737 = vmatpush.bf16.msra.mxu0 %v5049
        %6738 = vmatpush.bf16.msra.mxu0 %v5041
        %6739 = vmatpush.bf16.msra.mxu0 %v5033
        %6740 = vmatpush.bf16.msra.mxu0 %v5025
        %6741 = vmatpush.bf16.msra.mxu0 %v5017
        %6742 = vmatmul.bf16.gmra.mxu0 %v320
        %v6743 = vpop.f32.mrf.mxu0
        %v6744 = vadd.f32 %v6731, %v6743
        %v6745 = vpop.f32.mrf.mxu0
        %6746 = vdwg.mxu0
        %6747 = vmatpush.bf16.msra.mxu0 %v5137
        %6748 = vmatpush.bf16.msra.mxu0 %v5129
        %6749 = vmatpush.bf16.msra.mxu0 %v5121
        %6750 = vmatpush.bf16.msra.mxu0 %v5113
        %6751 = vmatpush.bf16.msra.mxu0 %v5105
        %6752 = vmatpush.bf16.msra.mxu0 %v5097
        %6753 = vmatpush.bf16.msra.mxu0 %v5089
        %6754 = vmatpush.bf16.msra.mxu0 %v5081
        %6755 = vmatmul.bf16.gmra.mxu0 %v321
        %v6756 = vpop.f32.mrf.mxu0
        %v6757 = vadd.f32 %v6744, %v6756
        %v6758 = vpop.f32.mrf.mxu0
        %6759 = vdwg.mxu0
        %6760 = vmatpush.bf16.msra.mxu0 %v5201
        %6761 = vmatpush.bf16.msra.mxu0 %v5193
        %6762 = vmatpush.bf16.msra.mxu0 %v5185
        %6763 = vmatpush.bf16.msra.mxu0 %v5177
        %6764 = vmatpush.bf16.msra.mxu0 %v5169
        %6765 = vmatpush.bf16.msra.mxu0 %v5161
        %6766 = vmatpush.bf16.msra.mxu0 %v5153
        %6767 = vmatpush.bf16.msra.mxu0 %v5145
        %6768 = vmatmul.bf16.gmra.mxu0 %v322
        %v6769 = vpop.f32.mrf.mxu0
        %v6770 = vadd.f32 %v6757, %v6769
        %v6771 = vpop.f32.mrf.mxu0
        %6772 = vdwg.mxu0
        %6773 = vmatpush.bf16.msra.mxu0 %v5265
        %6774 = vmatpush.bf16.msra.mxu0 %v5257
        %6775 = vmatpush.bf16.msra.mxu0 %v5249
        %6776 = vmatpush.bf16.msra.mxu0 %v5241
        %6777 = vmatpush.bf16.msra.mxu0 %v5233
        %6778 = vmatpush.bf16.msra.mxu0 %v5225
        %6779 = vmatpush.bf16.msra.mxu0 %v5217
        %6780 = vmatpush.bf16.msra.mxu0 %v5209
        %6781 = vmatmul.bf16.gmra.mxu0 %v323
        %v6782 = vpop.f32.mrf.mxu0
        %v6783 = vadd.f32 %v6770, %v6782
        %v6784 = vpop.f32.mrf.mxu0
        %6785 = vdwg.mxu0
        %6786 = vmatpush.bf16.msra.mxu0 %v5329
        %6787 = vmatpush.bf16.msra.mxu0 %v5321
        %6788 = vmatpush.bf16.msra.mxu0 %v5313
        %6789 = vmatpush.bf16.msra.mxu0 %v5305
        %6790 = vmatpush.bf16.msra.mxu0 %v5297
        %6791 = vmatpush.bf16.msra.mxu0 %v5289
        %6792 = vmatpush.bf16.msra.mxu0 %v5281
        %6793 = vmatpush.bf16.msra.mxu0 %v5273
        %6794 = vmatmul.bf16.gmra.mxu0 %v324
        %v6795 = vpop.f32.mrf.mxu0
        %v6796 = vadd.f32 %v6783, %v6795
        %v6797 = vpop.f32.mrf.mxu0
        %6798 = vdwg.mxu0
        %6799 = vmatpush.bf16.msra.mxu0 0
        %6800 = vmatpush.bf16.msra.mxu0 0
        %6801 = vmatpush.bf16.msra.mxu0 %v5377
        %6802 = vmatpush.bf16.msra.mxu0 %v5369
        %6803 = vmatpush.bf16.msra.mxu0 %v5361
        %6804 = vmatpush.bf16.msra.mxu0 %v5353
        %6805 = vmatpush.bf16.msra.mxu0 %v5345
        %6806 = vmatpush.bf16.msra.mxu0 %v5337
        %6807 = vmatmul.bf16.gmra.mxu0 %v6394
        %v6808 = vpop.f32.mrf.mxu0
        %v6809 = vadd.f32 %v6796, %v6808
        %v6810 = vpop.f32.mrf.mxu0
        %6811 = vdwg.mxu0
        %6812 = vmatpush.bf16.msra.mxu0 %v4434
        %6813 = vmatpush.bf16.msra.mxu0 %v4426
        %6814 = vmatpush.bf16.msra.mxu0 %v4418
        %6815 = vmatpush.bf16.msra.mxu0 %v4410
        %6816 = vmatpush.bf16.msra.mxu0 %v4402
        %6817 = vmatpush.bf16.msra.mxu0 %v4394
        %6818 = vmatpush.bf16.msra.mxu0 %v4386
        %6819 = vmatpush.bf16.msra.mxu0 %v4378
        %6820 = vmatmul.bf16.gmra.mxu0 %v310
        %v6821 = vpop.f32.mrf.mxu0
        %v6822 = vadd.f32 %v1338, %v6821
        %v6823 = vpop.f32.mrf.mxu0
        %6824 = vdwg.mxu0
        %6825 = vmatpush.bf16.msra.mxu0 %v4498
        %6826 = vmatpush.bf16.msra.mxu0 %v4490
        %6827 = vmatpush.bf16.msra.mxu0 %v4482
        %6828 = vmatpush.bf16.msra.mxu0 %v4474
        %6829 = vmatpush.bf16.msra.mxu0 %v4466
        %6830 = vmatpush.bf16.msra.mxu0 %v4458
        %6831 = vmatpush.bf16.msra.mxu0 %v4450
        %6832 = vmatpush.bf16.msra.mxu0 %v4442
        %6833 = vmatmul.bf16.gmra.mxu0 %v311
        %v6834 = vpop.f32.mrf.mxu0
        %v6835 = vadd.f32 %v6822, %v6834
        %v6836 = vpop.f32.mrf.mxu0
        %6837 = vdwg.mxu0
        %6838 = vmatpush.bf16.msra.mxu0 %v4562
        %6839 = vmatpush.bf16.msra.mxu0 %v4554
        %6840 = vmatpush.bf16.msra.mxu0 %v4546
        %6841 = vmatpush.bf16.msra.mxu0 %v4538
        %6842 = vmatpush.bf16.msra.mxu0 %v4530
        %6843 = vmatpush.bf16.msra.mxu0 %v4522
        %6844 = vmatpush.bf16.msra.mxu0 %v4514
        %6845 = vmatpush.bf16.msra.mxu0 %v4506
        %6846 = vmatmul.bf16.gmra.mxu0 %v312
        %v6847 = vpop.f32.mrf.mxu0
        %v6848 = vadd.f32 %v6835, %v6847
        %v6849 = vpop.f32.mrf.mxu0
        %6850 = vdwg.mxu0
        %6851 = vmatpush.bf16.msra.mxu0 %v4626
        %6852 = vmatpush.bf16.msra.mxu0 %v4618
        %6853 = vmatpush.bf16.msra.mxu0 %v4610
        %6854 = vmatpush.bf16.msra.mxu0 %v4602
        %6855 = vmatpush.bf16.msra.mxu0 %v4594
        %6856 = vmatpush.bf16.msra.mxu0 %v4586
        %6857 = vmatpush.bf16.msra.mxu0 %v4578
        %6858 = vmatpush.bf16.msra.mxu0 %v4570
        %6859 = vmatmul.bf16.gmra.mxu0 %v313
        %v6860 = vpop.f32.mrf.mxu0
        %v6861 = vadd.f32 %v6848, %v6860
        %v6862 = vpop.f32.mrf.mxu0
        %6863 = vdwg.mxu0
        %6864 = vmatpush.bf16.msra.mxu0 %v4690
        %6865 = vmatpush.bf16.msra.mxu0 %v4682
        %6866 = vmatpush.bf16.msra.mxu0 %v4674
        %6867 = vmatpush.bf16.msra.mxu0 %v4666
        %6868 = vmatpush.bf16.msra.mxu0 %v4658
        %6869 = vmatpush.bf16.msra.mxu0 %v4650
        %6870 = vmatpush.bf16.msra.mxu0 %v4642
        %6871 = vmatpush.bf16.msra.mxu0 %v4634
        %6872 = vmatmul.bf16.gmra.mxu0 %v314
        %v6873 = vpop.f32.mrf.mxu0
        %v6874 = vadd.f32 %v6861, %v6873
        %v6875 = vpop.f32.mrf.mxu0
        %6876 = vdwg.mxu0
        %6877 = vmatpush.bf16.msra.mxu0 %v4754
        %6878 = vmatpush.bf16.msra.mxu0 %v4746
        %6879 = vmatpush.bf16.msra.mxu0 %v4738
        %6880 = vmatpush.bf16.msra.mxu0 %v4730
        %6881 = vmatpush.bf16.msra.mxu0 %v4722
        %6882 = vmatpush.bf16.msra.mxu0 %v4714
        %6883 = vmatpush.bf16.msra.mxu0 %v4706
        %6884 = vmatpush.bf16.msra.mxu0 %v4698
        %6885 = vmatmul.bf16.gmra.mxu0 %v315
        %v6886 = vpop.f32.mrf.mxu0
        %v6887 = vadd.f32 %v6874, %v6886
        %v6888 = vpop.f32.mrf.mxu0
        %6889 = vdwg.mxu0
        %6890 = vmatpush.bf16.msra.mxu0 %v4818
        %6891 = vmatpush.bf16.msra.mxu0 %v4810
        %6892 = vmatpush.bf16.msra.mxu0 %v4802
        %6893 = vmatpush.bf16.msra.mxu0 %v4794
        %6894 = vmatpush.bf16.msra.mxu0 %v4786
        %6895 = vmatpush.bf16.msra.mxu0 %v4778
        %6896 = vmatpush.bf16.msra.mxu0 %v4770
        %6897 = vmatpush.bf16.msra.mxu0 %v4762
        %6898 = vmatmul.bf16.gmra.mxu0 %v316
        %v6899 = vpop.f32.mrf.mxu0
        %v6900 = vadd.f32 %v6887, %v6899
        %v6901 = vpop.f32.mrf.mxu0
        %6902 = vdwg.mxu0
        %6903 = vmatpush.bf16.msra.mxu0 %v4882
        %6904 = vmatpush.bf16.msra.mxu0 %v4874
        %6905 = vmatpush.bf16.msra.mxu0 %v4866
        %6906 = vmatpush.bf16.msra.mxu0 %v4858
        %6907 = vmatpush.bf16.msra.mxu0 %v4850
        %6908 = vmatpush.bf16.msra.mxu0 %v4842
        %6909 = vmatpush.bf16.msra.mxu0 %v4834
        %6910 = vmatpush.bf16.msra.mxu0 %v4826
        %6911 = vmatmul.bf16.gmra.mxu0 %v317
        %v6912 = vpop.f32.mrf.mxu0
        %v6913 = vadd.f32 %v6900, %v6912
        %v6914 = vpop.f32.mrf.mxu0
        %6915 = vdwg.mxu0
        %6916 = vmatpush.bf16.msra.mxu0 %v4946
        %6917 = vmatpush.bf16.msra.mxu0 %v4938
        %6918 = vmatpush.bf16.msra.mxu0 %v4930
        %6919 = vmatpush.bf16.msra.mxu0 %v4922
        %6920 = vmatpush.bf16.msra.mxu0 %v4914
        %6921 = vmatpush.bf16.msra.mxu0 %v4906
        %6922 = vmatpush.bf16.msra.mxu0 %v4898
        %6923 = vmatpush.bf16.msra.mxu0 %v4890
        %6924 = vmatmul.bf16.gmra.mxu0 %v318
        %v6925 = vpop.f32.mrf.mxu0
        %v6926 = vadd.f32 %v6913, %v6925
        %v6927 = vpop.f32.mrf.mxu0
        %6928 = vdwg.mxu0
        %6929 = vmatpush.bf16.msra.mxu0 %v5010
        %6930 = vmatpush.bf16.msra.mxu0 %v5002
        %6931 = vmatpush.bf16.msra.mxu0 %v4994
        %6932 = vmatpush.bf16.msra.mxu0 %v4986
        %6933 = vmatpush.bf16.msra.mxu0 %v4978
        %6934 = vmatpush.bf16.msra.mxu0 %v4970
        %6935 = vmatpush.bf16.msra.mxu0 %v4962
        %6936 = vmatpush.bf16.msra.mxu0 %v4954
        %6937 = vmatmul.bf16.gmra.mxu0 %v319
        %v6938 = vpop.f32.mrf.mxu0
        %v6939 = vadd.f32 %v6926, %v6938
        %v6940 = vpop.f32.mrf.mxu0
        %6941 = vdwg.mxu0
        %6942 = vmatpush.bf16.msra.mxu0 %v5074
        %6943 = vmatpush.bf16.msra.mxu0 %v5066
        %6944 = vmatpush.bf16.msra.mxu0 %v5058
        %6945 = vmatpush.bf16.msra.mxu0 %v5050
        %6946 = vmatpush.bf16.msra.mxu0 %v5042
        %6947 = vmatpush.bf16.msra.mxu0 %v5034
        %6948 = vmatpush.bf16.msra.mxu0 %v5026
        %6949 = vmatpush.bf16.msra.mxu0 %v5018
        %6950 = vmatmul.bf16.gmra.mxu0 %v320
        %v6951 = vpop.f32.mrf.mxu0
        %v6952 = vadd.f32 %v6939, %v6951
        %v6953 = vpop.f32.mrf.mxu0
        %6954 = vdwg.mxu0
        %6955 = vmatpush.bf16.msra.mxu0 %v5138
        %6956 = vmatpush.bf16.msra.mxu0 %v5130
        %6957 = vmatpush.bf16.msra.mxu0 %v5122
        %6958 = vmatpush.bf16.msra.mxu0 %v5114
        %6959 = vmatpush.bf16.msra.mxu0 %v5106
        %6960 = vmatpush.bf16.msra.mxu0 %v5098
        %6961 = vmatpush.bf16.msra.mxu0 %v5090
        %6962 = vmatpush.bf16.msra.mxu0 %v5082
        %6963 = vmatmul.bf16.gmra.mxu0 %v321
        %v6964 = vpop.f32.mrf.mxu0
        %v6965 = vadd.f32 %v6952, %v6964
        %v6966 = vpop.f32.mrf.mxu0
        %6967 = vdwg.mxu0
        %6968 = vmatpush.bf16.msra.mxu0 %v5202
        %6969 = vmatpush.bf16.msra.mxu0 %v5194
        %6970 = vmatpush.bf16.msra.mxu0 %v5186
        %6971 = vmatpush.bf16.msra.mxu0 %v5178
        %6972 = vmatpush.bf16.msra.mxu0 %v5170
        %6973 = vmatpush.bf16.msra.mxu0 %v5162
        %6974 = vmatpush.bf16.msra.mxu0 %v5154
        %6975 = vmatpush.bf16.msra.mxu0 %v5146
        %6976 = vmatmul.bf16.gmra.mxu0 %v322
        %v6977 = vpop.f32.mrf.mxu0
        %v6978 = vadd.f32 %v6965, %v6977
        %v6979 = vpop.f32.mrf.mxu0
        %6980 = vdwg.mxu0
        %6981 = vmatpush.bf16.msra.mxu0 %v5266
        %6982 = vmatpush.bf16.msra.mxu0 %v5258
        %6983 = vmatpush.bf16.msra.mxu0 %v5250
        %6984 = vmatpush.bf16.msra.mxu0 %v5242
        %6985 = vmatpush.bf16.msra.mxu0 %v5234
        %6986 = vmatpush.bf16.msra.mxu0 %v5226
        %6987 = vmatpush.bf16.msra.mxu0 %v5218
        %6988 = vmatpush.bf16.msra.mxu0 %v5210
        %6989 = vmatmul.bf16.gmra.mxu0 %v323
        %v6990 = vpop.f32.mrf.mxu0
        %v6991 = vadd.f32 %v6978, %v6990
        %v6992 = vpop.f32.mrf.mxu0
        %6993 = vdwg.mxu0
        %6994 = vmatpush.bf16.msra.mxu0 %v5330
        %6995 = vmatpush.bf16.msra.mxu0 %v5322
        %6996 = vmatpush.bf16.msra.mxu0 %v5314
        %6997 = vmatpush.bf16.msra.mxu0 %v5306
        %6998 = vmatpush.bf16.msra.mxu0 %v5298
        %6999 = vmatpush.bf16.msra.mxu0 %v5290
        %7000 = vmatpush.bf16.msra.mxu0 %v5282
        %7001 = vmatpush.bf16.msra.mxu0 %v5274
        %7002 = vmatmul.bf16.gmra.mxu0 %v324
        %v7003 = vpop.f32.mrf.mxu0
        %v7004 = vadd.f32 %v6991, %v7003
        %v7005 = vpop.f32.mrf.mxu0
        %7006 = vdwg.mxu0
        %7007 = vmatpush.bf16.msra.mxu0 0
        %7008 = vmatpush.bf16.msra.mxu0 0
        %7009 = vmatpush.bf16.msra.mxu0 %v5378
        %7010 = vmatpush.bf16.msra.mxu0 %v5370
        %7011 = vmatpush.bf16.msra.mxu0 %v5362
        %7012 = vmatpush.bf16.msra.mxu0 %v5354
        %7013 = vmatpush.bf16.msra.mxu0 %v5346
        %7014 = vmatpush.bf16.msra.mxu0 %v5338
        %7015 = vmatmul.bf16.gmra.mxu0 %v6394
        %v7016 = vpop.f32.mrf.mxu0
        %v7017 = vadd.f32 %v7004, %v7016
        %v7018 = vpop.f32.mrf.mxu0
        %7019 = vdwg.mxu0
        %7020 = vmatpush.bf16.msra.mxu0 %v4435
        %7021 = vmatpush.bf16.msra.mxu0 %v4427
        %7022 = vmatpush.bf16.msra.mxu0 %v4419
        %7023 = vmatpush.bf16.msra.mxu0 %v4411
        %7024 = vmatpush.bf16.msra.mxu0 %v4403
        %7025 = vmatpush.bf16.msra.mxu0 %v4395
        %7026 = vmatpush.bf16.msra.mxu0 %v4387
        %7027 = vmatpush.bf16.msra.mxu0 %v4379
        %7028 = vmatmul.bf16.gmra.mxu0 %v310
        %v7029 = vpop.f32.mrf.mxu0
        %v7030 = vadd.f32 %v1339, %v7029
        %v7031 = vpop.f32.mrf.mxu0
        %7032 = vdwg.mxu0
        %7033 = vmatpush.bf16.msra.mxu0 %v4499
        %7034 = vmatpush.bf16.msra.mxu0 %v4491
        %7035 = vmatpush.bf16.msra.mxu0 %v4483
        %7036 = vmatpush.bf16.msra.mxu0 %v4475
        %7037 = vmatpush.bf16.msra.mxu0 %v4467
        %7038 = vmatpush.bf16.msra.mxu0 %v4459
        %7039 = vmatpush.bf16.msra.mxu0 %v4451
        %7040 = vmatpush.bf16.msra.mxu0 %v4443
        %7041 = vmatmul.bf16.gmra.mxu0 %v311
        %v7042 = vpop.f32.mrf.mxu0
        %v7043 = vadd.f32 %v7030, %v7042
        %v7044 = vpop.f32.mrf.mxu0
        %7045 = vdwg.mxu0
        %7046 = vmatpush.bf16.msra.mxu0 %v4563
        %7047 = vmatpush.bf16.msra.mxu0 %v4555
        %7048 = vmatpush.bf16.msra.mxu0 %v4547
        %7049 = vmatpush.bf16.msra.mxu0 %v4539
        %7050 = vmatpush.bf16.msra.mxu0 %v4531
        %7051 = vmatpush.bf16.msra.mxu0 %v4523
        %7052 = vmatpush.bf16.msra.mxu0 %v4515
        %7053 = vmatpush.bf16.msra.mxu0 %v4507
        %7054 = vmatmul.bf16.gmra.mxu0 %v312
        %v7055 = vpop.f32.mrf.mxu0
        %v7056 = vadd.f32 %v7043, %v7055
        %v7057 = vpop.f32.mrf.mxu0
        %7058 = vdwg.mxu0
        %7059 = vmatpush.bf16.msra.mxu0 %v4627
        %7060 = vmatpush.bf16.msra.mxu0 %v4619
        %7061 = vmatpush.bf16.msra.mxu0 %v4611
        %7062 = vmatpush.bf16.msra.mxu0 %v4603
        %7063 = vmatpush.bf16.msra.mxu0 %v4595
        %7064 = vmatpush.bf16.msra.mxu0 %v4587
        %7065 = vmatpush.bf16.msra.mxu0 %v4579
        %7066 = vmatpush.bf16.msra.mxu0 %v4571
        %7067 = vmatmul.bf16.gmra.mxu0 %v313
        %v7068 = vpop.f32.mrf.mxu0
        %v7069 = vadd.f32 %v7056, %v7068
        %v7070 = vpop.f32.mrf.mxu0
        %7071 = vdwg.mxu0
        %7072 = vmatpush.bf16.msra.mxu0 %v4691
        %7073 = vmatpush.bf16.msra.mxu0 %v4683
        %7074 = vmatpush.bf16.msra.mxu0 %v4675
        %7075 = vmatpush.bf16.msra.mxu0 %v4667
        %7076 = vmatpush.bf16.msra.mxu0 %v4659
        %7077 = vmatpush.bf16.msra.mxu0 %v4651
        %7078 = vmatpush.bf16.msra.mxu0 %v4643
        %7079 = vmatpush.bf16.msra.mxu0 %v4635
        %7080 = vmatmul.bf16.gmra.mxu0 %v314
        %v7081 = vpop.f32.mrf.mxu0
        %v7082 = vadd.f32 %v7069, %v7081
        %v7083 = vpop.f32.mrf.mxu0
        %7084 = vdwg.mxu0
        %7085 = vmatpush.bf16.msra.mxu0 %v4755
        %7086 = vmatpush.bf16.msra.mxu0 %v4747
        %7087 = vmatpush.bf16.msra.mxu0 %v4739
        %7088 = vmatpush.bf16.msra.mxu0 %v4731
        %7089 = vmatpush.bf16.msra.mxu0 %v4723
        %7090 = vmatpush.bf16.msra.mxu0 %v4715
        %7091 = vmatpush.bf16.msra.mxu0 %v4707
        %7092 = vmatpush.bf16.msra.mxu0 %v4699
        %7093 = vmatmul.bf16.gmra.mxu0 %v315
        %v7094 = vpop.f32.mrf.mxu0
        %v7095 = vadd.f32 %v7082, %v7094
        %v7096 = vpop.f32.mrf.mxu0
        %7097 = vdwg.mxu0
        %7098 = vmatpush.bf16.msra.mxu0 %v4819
        %7099 = vmatpush.bf16.msra.mxu0 %v4811
        %7100 = vmatpush.bf16.msra.mxu0 %v4803
        %7101 = vmatpush.bf16.msra.mxu0 %v4795
        %7102 = vmatpush.bf16.msra.mxu0 %v4787
        %7103 = vmatpush.bf16.msra.mxu0 %v4779
        %7104 = vmatpush.bf16.msra.mxu0 %v4771
        %7105 = vmatpush.bf16.msra.mxu0 %v4763
        %7106 = vmatmul.bf16.gmra.mxu0 %v316
        %v7107 = vpop.f32.mrf.mxu0
        %v7108 = vadd.f32 %v7095, %v7107
        %v7109 = vpop.f32.mrf.mxu0
        %7110 = vdwg.mxu0
        %7111 = vmatpush.bf16.msra.mxu0 %v4883
        %7112 = vmatpush.bf16.msra.mxu0 %v4875
        %7113 = vmatpush.bf16.msra.mxu0 %v4867
        %7114 = vmatpush.bf16.msra.mxu0 %v4859
        %7115 = vmatpush.bf16.msra.mxu0 %v4851
        %7116 = vmatpush.bf16.msra.mxu0 %v4843
        %7117 = vmatpush.bf16.msra.mxu0 %v4835
        %7118 = vmatpush.bf16.msra.mxu0 %v4827
        %7119 = vmatmul.bf16.gmra.mxu0 %v317
        %v7120 = vpop.f32.mrf.mxu0
        %v7121 = vadd.f32 %v7108, %v7120
        %v7122 = vpop.f32.mrf.mxu0
        %7123 = vdwg.mxu0
        %7124 = vmatpush.bf16.msra.mxu0 %v4947
        %7125 = vmatpush.bf16.msra.mxu0 %v4939
        %7126 = vmatpush.bf16.msra.mxu0 %v4931
        %7127 = vmatpush.bf16.msra.mxu0 %v4923
        %7128 = vmatpush.bf16.msra.mxu0 %v4915
        %7129 = vmatpush.bf16.msra.mxu0 %v4907
        %7130 = vmatpush.bf16.msra.mxu0 %v4899
        %7131 = vmatpush.bf16.msra.mxu0 %v4891
        %7132 = vmatmul.bf16.gmra.mxu0 %v318
        %v7133 = vpop.f32.mrf.mxu0
        %v7134 = vadd.f32 %v7121, %v7133
        %v7135 = vpop.f32.mrf.mxu0
        %7136 = vdwg.mxu0
        %7137 = vmatpush.bf16.msra.mxu0 %v5011
        %7138 = vmatpush.bf16.msra.mxu0 %v5003
        %7139 = vmatpush.bf16.msra.mxu0 %v4995
        %7140 = vmatpush.bf16.msra.mxu0 %v4987
        %7141 = vmatpush.bf16.msra.mxu0 %v4979
        %7142 = vmatpush.bf16.msra.mxu0 %v4971
        %7143 = vmatpush.bf16.msra.mxu0 %v4963
        %7144 = vmatpush.bf16.msra.mxu0 %v4955
        %7145 = vmatmul.bf16.gmra.mxu0 %v319
        %v7146 = vpop.f32.mrf.mxu0
        %v7147 = vadd.f32 %v7134, %v7146
        %v7148 = vpop.f32.mrf.mxu0
        %7149 = vdwg.mxu0
        %7150 = vmatpush.bf16.msra.mxu0 %v5075
        %7151 = vmatpush.bf16.msra.mxu0 %v5067
        %7152 = vmatpush.bf16.msra.mxu0 %v5059
        %7153 = vmatpush.bf16.msra.mxu0 %v5051
        %7154 = vmatpush.bf16.msra.mxu0 %v5043
        %7155 = vmatpush.bf16.msra.mxu0 %v5035
        %7156 = vmatpush.bf16.msra.mxu0 %v5027
        %7157 = vmatpush.bf16.msra.mxu0 %v5019
        %7158 = vmatmul.bf16.gmra.mxu0 %v320
        %v7159 = vpop.f32.mrf.mxu0
        %v7160 = vadd.f32 %v7147, %v7159
        %v7161 = vpop.f32.mrf.mxu0
        %7162 = vdwg.mxu0
        %7163 = vmatpush.bf16.msra.mxu0 %v5139
        %7164 = vmatpush.bf16.msra.mxu0 %v5131
        %7165 = vmatpush.bf16.msra.mxu0 %v5123
        %7166 = vmatpush.bf16.msra.mxu0 %v5115
        %7167 = vmatpush.bf16.msra.mxu0 %v5107
        %7168 = vmatpush.bf16.msra.mxu0 %v5099
        %7169 = vmatpush.bf16.msra.mxu0 %v5091
        %7170 = vmatpush.bf16.msra.mxu0 %v5083
        %7171 = vmatmul.bf16.gmra.mxu0 %v321
        %v7172 = vpop.f32.mrf.mxu0
        %v7173 = vadd.f32 %v7160, %v7172
        %v7174 = vpop.f32.mrf.mxu0
        %7175 = vdwg.mxu0
        %7176 = vmatpush.bf16.msra.mxu0 %v5203
        %7177 = vmatpush.bf16.msra.mxu0 %v5195
        %7178 = vmatpush.bf16.msra.mxu0 %v5187
        %7179 = vmatpush.bf16.msra.mxu0 %v5179
        %7180 = vmatpush.bf16.msra.mxu0 %v5171
        %7181 = vmatpush.bf16.msra.mxu0 %v5163
        %7182 = vmatpush.bf16.msra.mxu0 %v5155
        %7183 = vmatpush.bf16.msra.mxu0 %v5147
        %7184 = vmatmul.bf16.gmra.mxu0 %v322
        %v7185 = vpop.f32.mrf.mxu0
        %v7186 = vadd.f32 %v7173, %v7185
        %v7187 = vpop.f32.mrf.mxu0
        %7188 = vdwg.mxu0
        %7189 = vmatpush.bf16.msra.mxu0 %v5267
        %7190 = vmatpush.bf16.msra.mxu0 %v5259
        %7191 = vmatpush.bf16.msra.mxu0 %v5251
        %7192 = vmatpush.bf16.msra.mxu0 %v5243
        %7193 = vmatpush.bf16.msra.mxu0 %v5235
        %7194 = vmatpush.bf16.msra.mxu0 %v5227
        %7195 = vmatpush.bf16.msra.mxu0 %v5219
        %7196 = vmatpush.bf16.msra.mxu0 %v5211
        %7197 = vmatmul.bf16.gmra.mxu0 %v323
        %v7198 = vpop.f32.mrf.mxu0
        %v7199 = vadd.f32 %v7186, %v7198
        %v7200 = vpop.f32.mrf.mxu0
        %7201 = vdwg.mxu0
        %7202 = vmatpush.bf16.msra.mxu0 %v5331
        %7203 = vmatpush.bf16.msra.mxu0 %v5323
        %7204 = vmatpush.bf16.msra.mxu0 %v5315
        %7205 = vmatpush.bf16.msra.mxu0 %v5307
        %7206 = vmatpush.bf16.msra.mxu0 %v5299
        %7207 = vmatpush.bf16.msra.mxu0 %v5291
        %7208 = vmatpush.bf16.msra.mxu0 %v5283
        %7209 = vmatpush.bf16.msra.mxu0 %v5275
        %7210 = vmatmul.bf16.gmra.mxu0 %v324
        %v7211 = vpop.f32.mrf.mxu0
        %v7212 = vadd.f32 %v7199, %v7211
        %v7213 = vpop.f32.mrf.mxu0
        %7214 = vdwg.mxu0
        %7215 = vmatpush.bf16.msra.mxu0 0
        %7216 = vmatpush.bf16.msra.mxu0 0
        %7217 = vmatpush.bf16.msra.mxu0 %v5379
        %7218 = vmatpush.bf16.msra.mxu0 %v5371
        %7219 = vmatpush.bf16.msra.mxu0 %v5363
        %7220 = vmatpush.bf16.msra.mxu0 %v5355
        %7221 = vmatpush.bf16.msra.mxu0 %v5347
        %7222 = vmatpush.bf16.msra.mxu0 %v5339
        %7223 = vmatmul.bf16.gmra.mxu0 %v6394
        %v7224 = vpop.f32.mrf.mxu0
        %v7225 = vadd.f32 %v7212, %v7224
        %v7226 = vpop.f32.mrf.mxu0
        %7227 = vdwg.mxu0
        %7228 = vmatpush.bf16.msra.mxu0 %v4436
        %7229 = vmatpush.bf16.msra.mxu0 %v4428
        %7230 = vmatpush.bf16.msra.mxu0 %v4420
        %7231 = vmatpush.bf16.msra.mxu0 %v4412
        %7232 = vmatpush.bf16.msra.mxu0 %v4404
        %7233 = vmatpush.bf16.msra.mxu0 %v4396
        %7234 = vmatpush.bf16.msra.mxu0 %v4388
        %7235 = vmatpush.bf16.msra.mxu0 %v4380
        %7236 = vmatmul.bf16.gmra.mxu0 %v310
        %v7237 = vpop.f32.mrf.mxu0
        %v7238 = vadd.f32 %v1340, %v7237
        %v7239 = vpop.f32.mrf.mxu0
        %7240 = vdwg.mxu0
        %7241 = vmatpush.bf16.msra.mxu0 %v4500
        %7242 = vmatpush.bf16.msra.mxu0 %v4492
        %7243 = vmatpush.bf16.msra.mxu0 %v4484
        %7244 = vmatpush.bf16.msra.mxu0 %v4476
        %7245 = vmatpush.bf16.msra.mxu0 %v4468
        %7246 = vmatpush.bf16.msra.mxu0 %v4460
        %7247 = vmatpush.bf16.msra.mxu0 %v4452
        %7248 = vmatpush.bf16.msra.mxu0 %v4444
        %7249 = vmatmul.bf16.gmra.mxu0 %v311
        %v7250 = vpop.f32.mrf.mxu0
        %v7251 = vadd.f32 %v7238, %v7250
        %v7252 = vpop.f32.mrf.mxu0
        %7253 = vdwg.mxu0
        %7254 = vmatpush.bf16.msra.mxu0 %v4564
        %7255 = vmatpush.bf16.msra.mxu0 %v4556
        %7256 = vmatpush.bf16.msra.mxu0 %v4548
        %7257 = vmatpush.bf16.msra.mxu0 %v4540
        %7258 = vmatpush.bf16.msra.mxu0 %v4532
        %7259 = vmatpush.bf16.msra.mxu0 %v4524
        %7260 = vmatpush.bf16.msra.mxu0 %v4516
        %7261 = vmatpush.bf16.msra.mxu0 %v4508
        %7262 = vmatmul.bf16.gmra.mxu0 %v312
        %v7263 = vpop.f32.mrf.mxu0
        %v7264 = vadd.f32 %v7251, %v7263
        %v7265 = vpop.f32.mrf.mxu0
        %7266 = vdwg.mxu0
        %7267 = vmatpush.bf16.msra.mxu0 %v4628
        %7268 = vmatpush.bf16.msra.mxu0 %v4620
        %7269 = vmatpush.bf16.msra.mxu0 %v4612
        %7270 = vmatpush.bf16.msra.mxu0 %v4604
        %7271 = vmatpush.bf16.msra.mxu0 %v4596
        %7272 = vmatpush.bf16.msra.mxu0 %v4588
        %7273 = vmatpush.bf16.msra.mxu0 %v4580
        %7274 = vmatpush.bf16.msra.mxu0 %v4572
        %7275 = vmatmul.bf16.gmra.mxu0 %v313
        %v7276 = vpop.f32.mrf.mxu0
        %v7277 = vadd.f32 %v7264, %v7276
        %v7278 = vpop.f32.mrf.mxu0
        %7279 = vdwg.mxu0
        %7280 = vmatpush.bf16.msra.mxu0 %v4692
        %7281 = vmatpush.bf16.msra.mxu0 %v4684
        %7282 = vmatpush.bf16.msra.mxu0 %v4676
        %7283 = vmatpush.bf16.msra.mxu0 %v4668
        %7284 = vmatpush.bf16.msra.mxu0 %v4660
        %7285 = vmatpush.bf16.msra.mxu0 %v4652
        %7286 = vmatpush.bf16.msra.mxu0 %v4644
        %7287 = vmatpush.bf16.msra.mxu0 %v4636
        %7288 = vmatmul.bf16.gmra.mxu0 %v314
        %v7289 = vpop.f32.mrf.mxu0
        %v7290 = vadd.f32 %v7277, %v7289
        %v7291 = vpop.f32.mrf.mxu0
        %7292 = vdwg.mxu0
        %7293 = vmatpush.bf16.msra.mxu0 %v4756
        %7294 = vmatpush.bf16.msra.mxu0 %v4748
        %7295 = vmatpush.bf16.msra.mxu0 %v4740
        %7296 = vmatpush.bf16.msra.mxu0 %v4732
        %7297 = vmatpush.bf16.msra.mxu0 %v4724
        %7298 = vmatpush.bf16.msra.mxu0 %v4716
        %7299 = vmatpush.bf16.msra.mxu0 %v4708
        %7300 = vmatpush.bf16.msra.mxu0 %v4700
        %7301 = vmatmul.bf16.gmra.mxu0 %v315
        %v7302 = vpop.f32.mrf.mxu0
        %v7303 = vadd.f32 %v7290, %v7302
        %v7304 = vpop.f32.mrf.mxu0
        %7305 = vdwg.mxu0
        %7306 = vmatpush.bf16.msra.mxu0 %v4820
        %7307 = vmatpush.bf16.msra.mxu0 %v4812
        %7308 = vmatpush.bf16.msra.mxu0 %v4804
        %7309 = vmatpush.bf16.msra.mxu0 %v4796
        %7310 = vmatpush.bf16.msra.mxu0 %v4788
        %7311 = vmatpush.bf16.msra.mxu0 %v4780
        %7312 = vmatpush.bf16.msra.mxu0 %v4772
        %7313 = vmatpush.bf16.msra.mxu0 %v4764
        %7314 = vmatmul.bf16.gmra.mxu0 %v316
        %v7315 = vpop.f32.mrf.mxu0
        %v7316 = vadd.f32 %v7303, %v7315
        %v7317 = vpop.f32.mrf.mxu0
        %7318 = vdwg.mxu0
        %7319 = vmatpush.bf16.msra.mxu0 %v4884
        %7320 = vmatpush.bf16.msra.mxu0 %v4876
        %7321 = vmatpush.bf16.msra.mxu0 %v4868
        %7322 = vmatpush.bf16.msra.mxu0 %v4860
        %7323 = vmatpush.bf16.msra.mxu0 %v4852
        %7324 = vmatpush.bf16.msra.mxu0 %v4844
        %7325 = vmatpush.bf16.msra.mxu0 %v4836
        %7326 = vmatpush.bf16.msra.mxu0 %v4828
        %7327 = vmatmul.bf16.gmra.mxu0 %v317
        %v7328 = vpop.f32.mrf.mxu0
        %v7329 = vadd.f32 %v7316, %v7328
        %v7330 = vpop.f32.mrf.mxu0
        %7331 = vdwg.mxu0
        %7332 = vmatpush.bf16.msra.mxu0 %v4948
        %7333 = vmatpush.bf16.msra.mxu0 %v4940
        %7334 = vmatpush.bf16.msra.mxu0 %v4932
        %7335 = vmatpush.bf16.msra.mxu0 %v4924
        %7336 = vmatpush.bf16.msra.mxu0 %v4916
        %7337 = vmatpush.bf16.msra.mxu0 %v4908
        %7338 = vmatpush.bf16.msra.mxu0 %v4900
        %7339 = vmatpush.bf16.msra.mxu0 %v4892
        %7340 = vmatmul.bf16.gmra.mxu0 %v318
        %v7341 = vpop.f32.mrf.mxu0
        %v7342 = vadd.f32 %v7329, %v7341
        %v7343 = vpop.f32.mrf.mxu0
        %7344 = vdwg.mxu0
        %7345 = vmatpush.bf16.msra.mxu0 %v5012
        %7346 = vmatpush.bf16.msra.mxu0 %v5004
        %7347 = vmatpush.bf16.msra.mxu0 %v4996
        %7348 = vmatpush.bf16.msra.mxu0 %v4988
        %7349 = vmatpush.bf16.msra.mxu0 %v4980
        %7350 = vmatpush.bf16.msra.mxu0 %v4972
        %7351 = vmatpush.bf16.msra.mxu0 %v4964
        %7352 = vmatpush.bf16.msra.mxu0 %v4956
        %7353 = vmatmul.bf16.gmra.mxu0 %v319
        %v7354 = vpop.f32.mrf.mxu0
        %v7355 = vadd.f32 %v7342, %v7354
        %v7356 = vpop.f32.mrf.mxu0
        %7357 = vdwg.mxu0
        %7358 = vmatpush.bf16.msra.mxu0 %v5076
        %7359 = vmatpush.bf16.msra.mxu0 %v5068
        %7360 = vmatpush.bf16.msra.mxu0 %v5060
        %7361 = vmatpush.bf16.msra.mxu0 %v5052
        %7362 = vmatpush.bf16.msra.mxu0 %v5044
        %7363 = vmatpush.bf16.msra.mxu0 %v5036
        %7364 = vmatpush.bf16.msra.mxu0 %v5028
        %7365 = vmatpush.bf16.msra.mxu0 %v5020
        %7366 = vmatmul.bf16.gmra.mxu0 %v320
        %v7367 = vpop.f32.mrf.mxu0
        %v7368 = vadd.f32 %v7355, %v7367
        %v7369 = vpop.f32.mrf.mxu0
        %7370 = vdwg.mxu0
        %7371 = vmatpush.bf16.msra.mxu0 %v5140
        %7372 = vmatpush.bf16.msra.mxu0 %v5132
        %7373 = vmatpush.bf16.msra.mxu0 %v5124
        %7374 = vmatpush.bf16.msra.mxu0 %v5116
        %7375 = vmatpush.bf16.msra.mxu0 %v5108
        %7376 = vmatpush.bf16.msra.mxu0 %v5100
        %7377 = vmatpush.bf16.msra.mxu0 %v5092
        %7378 = vmatpush.bf16.msra.mxu0 %v5084
        %7379 = vmatmul.bf16.gmra.mxu0 %v321
        %v7380 = vpop.f32.mrf.mxu0
        %v7381 = vadd.f32 %v7368, %v7380
        %v7382 = vpop.f32.mrf.mxu0
        %7383 = vdwg.mxu0
        %7384 = vmatpush.bf16.msra.mxu0 %v5204
        %7385 = vmatpush.bf16.msra.mxu0 %v5196
        %7386 = vmatpush.bf16.msra.mxu0 %v5188
        %7387 = vmatpush.bf16.msra.mxu0 %v5180
        %7388 = vmatpush.bf16.msra.mxu0 %v5172
        %7389 = vmatpush.bf16.msra.mxu0 %v5164
        %7390 = vmatpush.bf16.msra.mxu0 %v5156
        %7391 = vmatpush.bf16.msra.mxu0 %v5148
        %7392 = vmatmul.bf16.gmra.mxu0 %v322
        %v7393 = vpop.f32.mrf.mxu0
        %v7394 = vadd.f32 %v7381, %v7393
        %v7395 = vpop.f32.mrf.mxu0
        %7396 = vdwg.mxu0
        %7397 = vmatpush.bf16.msra.mxu0 %v5268
        %7398 = vmatpush.bf16.msra.mxu0 %v5260
        %7399 = vmatpush.bf16.msra.mxu0 %v5252
        %7400 = vmatpush.bf16.msra.mxu0 %v5244
        %7401 = vmatpush.bf16.msra.mxu0 %v5236
        %7402 = vmatpush.bf16.msra.mxu0 %v5228
        %7403 = vmatpush.bf16.msra.mxu0 %v5220
        %7404 = vmatpush.bf16.msra.mxu0 %v5212
        %7405 = vmatmul.bf16.gmra.mxu0 %v323
        %v7406 = vpop.f32.mrf.mxu0
        %v7407 = vadd.f32 %v7394, %v7406
        %v7408 = vpop.f32.mrf.mxu0
        %7409 = vdwg.mxu0
        %7410 = vmatpush.bf16.msra.mxu0 %v5332
        %7411 = vmatpush.bf16.msra.mxu0 %v5324
        %7412 = vmatpush.bf16.msra.mxu0 %v5316
        %7413 = vmatpush.bf16.msra.mxu0 %v5308
        %7414 = vmatpush.bf16.msra.mxu0 %v5300
        %7415 = vmatpush.bf16.msra.mxu0 %v5292
        %7416 = vmatpush.bf16.msra.mxu0 %v5284
        %7417 = vmatpush.bf16.msra.mxu0 %v5276
        %7418 = vmatmul.bf16.gmra.mxu0 %v324
        %v7419 = vpop.f32.mrf.mxu0
        %v7420 = vadd.f32 %v7407, %v7419
        %v7421 = vpop.f32.mrf.mxu0
        %7422 = vdwg.mxu0
        %7423 = vmatpush.bf16.msra.mxu0 0
        %7424 = vmatpush.bf16.msra.mxu0 0
        %7425 = vmatpush.bf16.msra.mxu0 %v5380
        %7426 = vmatpush.bf16.msra.mxu0 %v5372
        %7427 = vmatpush.bf16.msra.mxu0 %v5364
        %7428 = vmatpush.bf16.msra.mxu0 %v5356
        %7429 = vmatpush.bf16.msra.mxu0 %v5348
        %7430 = vmatpush.bf16.msra.mxu0 %v5340
        %7431 = vmatmul.bf16.gmra.mxu0 %v6394
        %v7432 = vpop.f32.mrf.mxu0
        %v7433 = vadd.f32 %v7420, %v7432
        %v7434 = vpop.f32.mrf.mxu0
        %7435 = vdwg.mxu0
        %7436 = vmatpush.bf16.msra.mxu0 %v4437
        %7437 = vmatpush.bf16.msra.mxu0 %v4429
        %7438 = vmatpush.bf16.msra.mxu0 %v4421
        %7439 = vmatpush.bf16.msra.mxu0 %v4413
        %7440 = vmatpush.bf16.msra.mxu0 %v4405
        %7441 = vmatpush.bf16.msra.mxu0 %v4397
        %7442 = vmatpush.bf16.msra.mxu0 %v4389
        %7443 = vmatpush.bf16.msra.mxu0 %v4381
        %7444 = vmatmul.bf16.gmra.mxu0 %v310
        %v7445 = vpop.f32.mrf.mxu0
        %v7446 = vadd.f32 %v1341, %v7445
        %v7447 = vpop.f32.mrf.mxu0
        %7448 = vdwg.mxu0
        %7449 = vmatpush.bf16.msra.mxu0 %v4501
        %7450 = vmatpush.bf16.msra.mxu0 %v4493
        %7451 = vmatpush.bf16.msra.mxu0 %v4485
        %7452 = vmatpush.bf16.msra.mxu0 %v4477
        %7453 = vmatpush.bf16.msra.mxu0 %v4469
        %7454 = vmatpush.bf16.msra.mxu0 %v4461
        %7455 = vmatpush.bf16.msra.mxu0 %v4453
        %7456 = vmatpush.bf16.msra.mxu0 %v4445
        %7457 = vmatmul.bf16.gmra.mxu0 %v311
        %v7458 = vpop.f32.mrf.mxu0
        %v7459 = vadd.f32 %v7446, %v7458
        %v7460 = vpop.f32.mrf.mxu0
        %7461 = vdwg.mxu0
        %7462 = vmatpush.bf16.msra.mxu0 %v4565
        %7463 = vmatpush.bf16.msra.mxu0 %v4557
        %7464 = vmatpush.bf16.msra.mxu0 %v4549
        %7465 = vmatpush.bf16.msra.mxu0 %v4541
        %7466 = vmatpush.bf16.msra.mxu0 %v4533
        %7467 = vmatpush.bf16.msra.mxu0 %v4525
        %7468 = vmatpush.bf16.msra.mxu0 %v4517
        %7469 = vmatpush.bf16.msra.mxu0 %v4509
        %7470 = vmatmul.bf16.gmra.mxu0 %v312
        %v7471 = vpop.f32.mrf.mxu0
        %v7472 = vadd.f32 %v7459, %v7471
        %v7473 = vpop.f32.mrf.mxu0
        %7474 = vdwg.mxu0
        %7475 = vmatpush.bf16.msra.mxu0 %v4629
        %7476 = vmatpush.bf16.msra.mxu0 %v4621
        %7477 = vmatpush.bf16.msra.mxu0 %v4613
        %7478 = vmatpush.bf16.msra.mxu0 %v4605
        %7479 = vmatpush.bf16.msra.mxu0 %v4597
        %7480 = vmatpush.bf16.msra.mxu0 %v4589
        %7481 = vmatpush.bf16.msra.mxu0 %v4581
        %7482 = vmatpush.bf16.msra.mxu0 %v4573
        %7483 = vmatmul.bf16.gmra.mxu0 %v313
        %v7484 = vpop.f32.mrf.mxu0
        %v7485 = vadd.f32 %v7472, %v7484
        %v7486 = vpop.f32.mrf.mxu0
        %7487 = vdwg.mxu0
        %7488 = vmatpush.bf16.msra.mxu0 %v4693
        %7489 = vmatpush.bf16.msra.mxu0 %v4685
        %7490 = vmatpush.bf16.msra.mxu0 %v4677
        %7491 = vmatpush.bf16.msra.mxu0 %v4669
        %7492 = vmatpush.bf16.msra.mxu0 %v4661
        %7493 = vmatpush.bf16.msra.mxu0 %v4653
        %7494 = vmatpush.bf16.msra.mxu0 %v4645
        %7495 = vmatpush.bf16.msra.mxu0 %v4637
        %7496 = vmatmul.bf16.gmra.mxu0 %v314
        %v7497 = vpop.f32.mrf.mxu0
        %v7498 = vadd.f32 %v7485, %v7497
        %v7499 = vpop.f32.mrf.mxu0
        %7500 = vdwg.mxu0
        %7501 = vmatpush.bf16.msra.mxu0 %v4757
        %7502 = vmatpush.bf16.msra.mxu0 %v4749
        %7503 = vmatpush.bf16.msra.mxu0 %v4741
        %7504 = vmatpush.bf16.msra.mxu0 %v4733
        %7505 = vmatpush.bf16.msra.mxu0 %v4725
        %7506 = vmatpush.bf16.msra.mxu0 %v4717
        %7507 = vmatpush.bf16.msra.mxu0 %v4709
        %7508 = vmatpush.bf16.msra.mxu0 %v4701
        %7509 = vmatmul.bf16.gmra.mxu0 %v315
        %v7510 = vpop.f32.mrf.mxu0
        %v7511 = vadd.f32 %v7498, %v7510
        %v7512 = vpop.f32.mrf.mxu0
        %7513 = vdwg.mxu0
        %7514 = vmatpush.bf16.msra.mxu0 %v4821
        %7515 = vmatpush.bf16.msra.mxu0 %v4813
        %7516 = vmatpush.bf16.msra.mxu0 %v4805
        %7517 = vmatpush.bf16.msra.mxu0 %v4797
        %7518 = vmatpush.bf16.msra.mxu0 %v4789
        %7519 = vmatpush.bf16.msra.mxu0 %v4781
        %7520 = vmatpush.bf16.msra.mxu0 %v4773
        %7521 = vmatpush.bf16.msra.mxu0 %v4765
        %7522 = vmatmul.bf16.gmra.mxu0 %v316
        %v7523 = vpop.f32.mrf.mxu0
        %v7524 = vadd.f32 %v7511, %v7523
        %v7525 = vpop.f32.mrf.mxu0
        %7526 = vdwg.mxu0
        %7527 = vmatpush.bf16.msra.mxu0 %v4885
        %7528 = vmatpush.bf16.msra.mxu0 %v4877
        %7529 = vmatpush.bf16.msra.mxu0 %v4869
        %7530 = vmatpush.bf16.msra.mxu0 %v4861
        %7531 = vmatpush.bf16.msra.mxu0 %v4853
        %7532 = vmatpush.bf16.msra.mxu0 %v4845
        %7533 = vmatpush.bf16.msra.mxu0 %v4837
        %7534 = vmatpush.bf16.msra.mxu0 %v4829
        %7535 = vmatmul.bf16.gmra.mxu0 %v317
        %v7536 = vpop.f32.mrf.mxu0
        %v7537 = vadd.f32 %v7524, %v7536
        %v7538 = vpop.f32.mrf.mxu0
        %7539 = vdwg.mxu0
        %7540 = vmatpush.bf16.msra.mxu0 %v4949
        %7541 = vmatpush.bf16.msra.mxu0 %v4941
        %7542 = vmatpush.bf16.msra.mxu0 %v4933
        %7543 = vmatpush.bf16.msra.mxu0 %v4925
        %7544 = vmatpush.bf16.msra.mxu0 %v4917
        %7545 = vmatpush.bf16.msra.mxu0 %v4909
        %7546 = vmatpush.bf16.msra.mxu0 %v4901
        %7547 = vmatpush.bf16.msra.mxu0 %v4893
        %7548 = vmatmul.bf16.gmra.mxu0 %v318
        %v7549 = vpop.f32.mrf.mxu0
        %v7550 = vadd.f32 %v7537, %v7549
        %v7551 = vpop.f32.mrf.mxu0
        %7552 = vdwg.mxu0
        %7553 = vmatpush.bf16.msra.mxu0 %v5013
        %7554 = vmatpush.bf16.msra.mxu0 %v5005
        %7555 = vmatpush.bf16.msra.mxu0 %v4997
        %7556 = vmatpush.bf16.msra.mxu0 %v4989
        %7557 = vmatpush.bf16.msra.mxu0 %v4981
        %7558 = vmatpush.bf16.msra.mxu0 %v4973
        %7559 = vmatpush.bf16.msra.mxu0 %v4965
        %7560 = vmatpush.bf16.msra.mxu0 %v4957
        %7561 = vmatmul.bf16.gmra.mxu0 %v319
        %v7562 = vpop.f32.mrf.mxu0
        %v7563 = vadd.f32 %v7550, %v7562
        %v7564 = vpop.f32.mrf.mxu0
        %7565 = vdwg.mxu0
        %7566 = vmatpush.bf16.msra.mxu0 %v5077
        %7567 = vmatpush.bf16.msra.mxu0 %v5069
        %7568 = vmatpush.bf16.msra.mxu0 %v5061
        %7569 = vmatpush.bf16.msra.mxu0 %v5053
        %7570 = vmatpush.bf16.msra.mxu0 %v5045
        %7571 = vmatpush.bf16.msra.mxu0 %v5037
        %7572 = vmatpush.bf16.msra.mxu0 %v5029
        %7573 = vmatpush.bf16.msra.mxu0 %v5021
        %7574 = vmatmul.bf16.gmra.mxu0 %v320
        %v7575 = vpop.f32.mrf.mxu0
        %v7576 = vadd.f32 %v7563, %v7575
        %v7577 = vpop.f32.mrf.mxu0
        %7578 = vdwg.mxu0
        %7579 = vmatpush.bf16.msra.mxu0 %v5141
        %7580 = vmatpush.bf16.msra.mxu0 %v5133
        %7581 = vmatpush.bf16.msra.mxu0 %v5125
        %7582 = vmatpush.bf16.msra.mxu0 %v5117
        %7583 = vmatpush.bf16.msra.mxu0 %v5109
        %7584 = vmatpush.bf16.msra.mxu0 %v5101
        %7585 = vmatpush.bf16.msra.mxu0 %v5093
        %7586 = vmatpush.bf16.msra.mxu0 %v5085
        %7587 = vmatmul.bf16.gmra.mxu0 %v321
        %v7588 = vpop.f32.mrf.mxu0
        %v7589 = vadd.f32 %v7576, %v7588
        %v7590 = vpop.f32.mrf.mxu0
        %7591 = vdwg.mxu0
        %7592 = vmatpush.bf16.msra.mxu0 %v5205
        %7593 = vmatpush.bf16.msra.mxu0 %v5197
        %7594 = vmatpush.bf16.msra.mxu0 %v5189
        %7595 = vmatpush.bf16.msra.mxu0 %v5181
        %7596 = vmatpush.bf16.msra.mxu0 %v5173
        %7597 = vmatpush.bf16.msra.mxu0 %v5165
        %7598 = vmatpush.bf16.msra.mxu0 %v5157
        %7599 = vmatpush.bf16.msra.mxu0 %v5149
        %7600 = vmatmul.bf16.gmra.mxu0 %v322
        %v7601 = vpop.f32.mrf.mxu0
        %v7602 = vadd.f32 %v7589, %v7601
        %v7603 = vpop.f32.mrf.mxu0
        %7604 = vdwg.mxu0
        %7605 = vmatpush.bf16.msra.mxu0 %v5269
        %7606 = vmatpush.bf16.msra.mxu0 %v5261
        %7607 = vmatpush.bf16.msra.mxu0 %v5253
        %7608 = vmatpush.bf16.msra.mxu0 %v5245
        %7609 = vmatpush.bf16.msra.mxu0 %v5237
        %7610 = vmatpush.bf16.msra.mxu0 %v5229
        %7611 = vmatpush.bf16.msra.mxu0 %v5221
        %7612 = vmatpush.bf16.msra.mxu0 %v5213
        %7613 = vmatmul.bf16.gmra.mxu0 %v323
        %v7614 = vpop.f32.mrf.mxu0
        %v7615 = vadd.f32 %v7602, %v7614
        %v7616 = vpop.f32.mrf.mxu0
        %7617 = vdwg.mxu0
        %7618 = vmatpush.bf16.msra.mxu0 %v5333
        %7619 = vmatpush.bf16.msra.mxu0 %v5325
        %7620 = vmatpush.bf16.msra.mxu0 %v5317
        %7621 = vmatpush.bf16.msra.mxu0 %v5309
        %7622 = vmatpush.bf16.msra.mxu0 %v5301
        %7623 = vmatpush.bf16.msra.mxu0 %v5293
        %7624 = vmatpush.bf16.msra.mxu0 %v5285
        %7625 = vmatpush.bf16.msra.mxu0 %v5277
        %7626 = vmatmul.bf16.gmra.mxu0 %v324
        %v7627 = vpop.f32.mrf.mxu0
        %v7628 = vadd.f32 %v7615, %v7627
        %v7629 = vpop.f32.mrf.mxu0
        %7630 = vdwg.mxu0
        %7631 = vmatpush.bf16.msra.mxu0 0
        %7632 = vmatpush.bf16.msra.mxu0 0
        %7633 = vmatpush.bf16.msra.mxu0 %v5381
        %7634 = vmatpush.bf16.msra.mxu0 %v5373
        %7635 = vmatpush.bf16.msra.mxu0 %v5365
        %7636 = vmatpush.bf16.msra.mxu0 %v5357
        %7637 = vmatpush.bf16.msra.mxu0 %v5349
        %7638 = vmatpush.bf16.msra.mxu0 %v5341
        %7639 = vmatmul.bf16.gmra.mxu0 %v6394
        %v7640 = vpop.f32.mrf.mxu0
        %v7641 = vadd.f32 %v7628, %v7640
        %v7642 = vpop.f32.mrf.mxu0
        %7643 = vdwg.mxu0
        %7644 = vmatpush.bf16.msra.mxu0 %v4438
        %7645 = vmatpush.bf16.msra.mxu0 %v4430
        %7646 = vmatpush.bf16.msra.mxu0 %v4422
        %7647 = vmatpush.bf16.msra.mxu0 %v4414
        %7648 = vmatpush.bf16.msra.mxu0 %v4406
        %7649 = vmatpush.bf16.msra.mxu0 %v4398
        %7650 = vmatpush.bf16.msra.mxu0 %v4390
        %7651 = vmatpush.bf16.msra.mxu0 %v4382
        %7652 = vmatmul.bf16.gmra.mxu0 %v310
        %v7653 = vpop.f32.mrf.mxu0
        %v7654 = vadd.f32 %v1342, %v7653
        %v7655 = vpop.f32.mrf.mxu0
        %7656 = vdwg.mxu0
        %7657 = vmatpush.bf16.msra.mxu0 %v4502
        %7658 = vmatpush.bf16.msra.mxu0 %v4494
        %7659 = vmatpush.bf16.msra.mxu0 %v4486
        %7660 = vmatpush.bf16.msra.mxu0 %v4478
        %7661 = vmatpush.bf16.msra.mxu0 %v4470
        %7662 = vmatpush.bf16.msra.mxu0 %v4462
        %7663 = vmatpush.bf16.msra.mxu0 %v4454
        %7664 = vmatpush.bf16.msra.mxu0 %v4446
        %7665 = vmatmul.bf16.gmra.mxu0 %v311
        %v7666 = vpop.f32.mrf.mxu0
        %v7667 = vadd.f32 %v7654, %v7666
        %v7668 = vpop.f32.mrf.mxu0
        %7669 = vdwg.mxu0
        %7670 = vmatpush.bf16.msra.mxu0 %v4566
        %7671 = vmatpush.bf16.msra.mxu0 %v4558
        %7672 = vmatpush.bf16.msra.mxu0 %v4550
        %7673 = vmatpush.bf16.msra.mxu0 %v4542
        %7674 = vmatpush.bf16.msra.mxu0 %v4534
        %7675 = vmatpush.bf16.msra.mxu0 %v4526
        %7676 = vmatpush.bf16.msra.mxu0 %v4518
        %7677 = vmatpush.bf16.msra.mxu0 %v4510
        %7678 = vmatmul.bf16.gmra.mxu0 %v312
        %v7679 = vpop.f32.mrf.mxu0
        %v7680 = vadd.f32 %v7667, %v7679
        %v7681 = vpop.f32.mrf.mxu0
        %7682 = vdwg.mxu0
        %7683 = vmatpush.bf16.msra.mxu0 %v4630
        %7684 = vmatpush.bf16.msra.mxu0 %v4622
        %7685 = vmatpush.bf16.msra.mxu0 %v4614
        %7686 = vmatpush.bf16.msra.mxu0 %v4606
        %7687 = vmatpush.bf16.msra.mxu0 %v4598
        %7688 = vmatpush.bf16.msra.mxu0 %v4590
        %7689 = vmatpush.bf16.msra.mxu0 %v4582
        %7690 = vmatpush.bf16.msra.mxu0 %v4574
        %7691 = vmatmul.bf16.gmra.mxu0 %v313
        %v7692 = vpop.f32.mrf.mxu0
        %v7693 = vadd.f32 %v7680, %v7692
        %v7694 = vpop.f32.mrf.mxu0
        %7695 = vdwg.mxu0
        %7696 = vmatpush.bf16.msra.mxu0 %v4694
        %7697 = vmatpush.bf16.msra.mxu0 %v4686
        %7698 = vmatpush.bf16.msra.mxu0 %v4678
        %7699 = vmatpush.bf16.msra.mxu0 %v4670
        %7700 = vmatpush.bf16.msra.mxu0 %v4662
        %7701 = vmatpush.bf16.msra.mxu0 %v4654
        %7702 = vmatpush.bf16.msra.mxu0 %v4646
        %7703 = vmatpush.bf16.msra.mxu0 %v4638
        %7704 = vmatmul.bf16.gmra.mxu0 %v314
        %v7705 = vpop.f32.mrf.mxu0
        %v7706 = vadd.f32 %v7693, %v7705
        %v7707 = vpop.f32.mrf.mxu0
        %7708 = vdwg.mxu0
        %7709 = vmatpush.bf16.msra.mxu0 %v4758
        %7710 = vmatpush.bf16.msra.mxu0 %v4750
        %7711 = vmatpush.bf16.msra.mxu0 %v4742
        %7712 = vmatpush.bf16.msra.mxu0 %v4734
        %7713 = vmatpush.bf16.msra.mxu0 %v4726
        %7714 = vmatpush.bf16.msra.mxu0 %v4718
        %7715 = vmatpush.bf16.msra.mxu0 %v4710
        %7716 = vmatpush.bf16.msra.mxu0 %v4702
        %7717 = vmatmul.bf16.gmra.mxu0 %v315
        %v7718 = vpop.f32.mrf.mxu0
        %v7719 = vadd.f32 %v7706, %v7718
        %v7720 = vpop.f32.mrf.mxu0
        %7721 = vdwg.mxu0
        %7722 = vmatpush.bf16.msra.mxu0 %v4822
        %7723 = vmatpush.bf16.msra.mxu0 %v4814
        %7724 = vmatpush.bf16.msra.mxu0 %v4806
        %7725 = vmatpush.bf16.msra.mxu0 %v4798
        %7726 = vmatpush.bf16.msra.mxu0 %v4790
        %7727 = vmatpush.bf16.msra.mxu0 %v4782
        %7728 = vmatpush.bf16.msra.mxu0 %v4774
        %7729 = vmatpush.bf16.msra.mxu0 %v4766
        %7730 = vmatmul.bf16.gmra.mxu0 %v316
        %v7731 = vpop.f32.mrf.mxu0
        %v7732 = vadd.f32 %v7719, %v7731
        %v7733 = vpop.f32.mrf.mxu0
        %7734 = vdwg.mxu0
        %7735 = vmatpush.bf16.msra.mxu0 %v4886
        %7736 = vmatpush.bf16.msra.mxu0 %v4878
        %7737 = vmatpush.bf16.msra.mxu0 %v4870
        %7738 = vmatpush.bf16.msra.mxu0 %v4862
        %7739 = vmatpush.bf16.msra.mxu0 %v4854
        %7740 = vmatpush.bf16.msra.mxu0 %v4846
        %7741 = vmatpush.bf16.msra.mxu0 %v4838
        %7742 = vmatpush.bf16.msra.mxu0 %v4830
        %7743 = vmatmul.bf16.gmra.mxu0 %v317
        %v7744 = vpop.f32.mrf.mxu0
        %v7745 = vadd.f32 %v7732, %v7744
        %v7746 = vpop.f32.mrf.mxu0
        %7747 = vdwg.mxu0
        %7748 = vmatpush.bf16.msra.mxu0 %v4950
        %7749 = vmatpush.bf16.msra.mxu0 %v4942
        %7750 = vmatpush.bf16.msra.mxu0 %v4934
        %7751 = vmatpush.bf16.msra.mxu0 %v4926
        %7752 = vmatpush.bf16.msra.mxu0 %v4918
        %7753 = vmatpush.bf16.msra.mxu0 %v4910
        %7754 = vmatpush.bf16.msra.mxu0 %v4902
        %7755 = vmatpush.bf16.msra.mxu0 %v4894
        %7756 = vmatmul.bf16.gmra.mxu0 %v318
        %v7757 = vpop.f32.mrf.mxu0
        %v7758 = vadd.f32 %v7745, %v7757
        %v7759 = vpop.f32.mrf.mxu0
        %7760 = vdwg.mxu0
        %7761 = vmatpush.bf16.msra.mxu0 %v5014
        %7762 = vmatpush.bf16.msra.mxu0 %v5006
        %7763 = vmatpush.bf16.msra.mxu0 %v4998
        %7764 = vmatpush.bf16.msra.mxu0 %v4990
        %7765 = vmatpush.bf16.msra.mxu0 %v4982
        %7766 = vmatpush.bf16.msra.mxu0 %v4974
        %7767 = vmatpush.bf16.msra.mxu0 %v4966
        %7768 = vmatpush.bf16.msra.mxu0 %v4958
        %7769 = vmatmul.bf16.gmra.mxu0 %v319
        %v7770 = vpop.f32.mrf.mxu0
        %v7771 = vadd.f32 %v7758, %v7770
        %v7772 = vpop.f32.mrf.mxu0
        %7773 = vdwg.mxu0
        %7774 = vmatpush.bf16.msra.mxu0 %v5078
        %7775 = vmatpush.bf16.msra.mxu0 %v5070
        %7776 = vmatpush.bf16.msra.mxu0 %v5062
        %7777 = vmatpush.bf16.msra.mxu0 %v5054
        %7778 = vmatpush.bf16.msra.mxu0 %v5046
        %7779 = vmatpush.bf16.msra.mxu0 %v5038
        %7780 = vmatpush.bf16.msra.mxu0 %v5030
        %7781 = vmatpush.bf16.msra.mxu0 %v5022
        %7782 = vmatmul.bf16.gmra.mxu0 %v320
        %v7783 = vpop.f32.mrf.mxu0
        %v7784 = vadd.f32 %v7771, %v7783
        %v7785 = vpop.f32.mrf.mxu0
        %7786 = vdwg.mxu0
        %7787 = vmatpush.bf16.msra.mxu0 %v5142
        %7788 = vmatpush.bf16.msra.mxu0 %v5134
        %7789 = vmatpush.bf16.msra.mxu0 %v5126
        %7790 = vmatpush.bf16.msra.mxu0 %v5118
        %7791 = vmatpush.bf16.msra.mxu0 %v5110
        %7792 = vmatpush.bf16.msra.mxu0 %v5102
        %7793 = vmatpush.bf16.msra.mxu0 %v5094
        %7794 = vmatpush.bf16.msra.mxu0 %v5086
        %7795 = vmatmul.bf16.gmra.mxu0 %v321
        %v7796 = vpop.f32.mrf.mxu0
        %v7797 = vadd.f32 %v7784, %v7796
        %v7798 = vpop.f32.mrf.mxu0
        %7799 = vdwg.mxu0
        %7800 = vmatpush.bf16.msra.mxu0 %v5206
        %7801 = vmatpush.bf16.msra.mxu0 %v5198
        %7802 = vmatpush.bf16.msra.mxu0 %v5190
        %7803 = vmatpush.bf16.msra.mxu0 %v5182
        %7804 = vmatpush.bf16.msra.mxu0 %v5174
        %7805 = vmatpush.bf16.msra.mxu0 %v5166
        %7806 = vmatpush.bf16.msra.mxu0 %v5158
        %7807 = vmatpush.bf16.msra.mxu0 %v5150
        %7808 = vmatmul.bf16.gmra.mxu0 %v322
        %v7809 = vpop.f32.mrf.mxu0
        %v7810 = vadd.f32 %v7797, %v7809
        %v7811 = vpop.f32.mrf.mxu0
        %7812 = vdwg.mxu0
        %7813 = vmatpush.bf16.msra.mxu0 %v5270
        %7814 = vmatpush.bf16.msra.mxu0 %v5262
        %7815 = vmatpush.bf16.msra.mxu0 %v5254
        %7816 = vmatpush.bf16.msra.mxu0 %v5246
        %7817 = vmatpush.bf16.msra.mxu0 %v5238
        %7818 = vmatpush.bf16.msra.mxu0 %v5230
        %7819 = vmatpush.bf16.msra.mxu0 %v5222
        %7820 = vmatpush.bf16.msra.mxu0 %v5214
        %7821 = vmatmul.bf16.gmra.mxu0 %v323
        %v7822 = vpop.f32.mrf.mxu0
        %v7823 = vadd.f32 %v7810, %v7822
        %v7824 = vpop.f32.mrf.mxu0
        %7825 = vdwg.mxu0
        %7826 = vmatpush.bf16.msra.mxu0 %v5334
        %7827 = vmatpush.bf16.msra.mxu0 %v5326
        %7828 = vmatpush.bf16.msra.mxu0 %v5318
        %7829 = vmatpush.bf16.msra.mxu0 %v5310
        %7830 = vmatpush.bf16.msra.mxu0 %v5302
        %7831 = vmatpush.bf16.msra.mxu0 %v5294
        %7832 = vmatpush.bf16.msra.mxu0 %v5286
        %7833 = vmatpush.bf16.msra.mxu0 %v5278
        %7834 = vmatmul.bf16.gmra.mxu0 %v324
        %v7835 = vpop.f32.mrf.mxu0
        %v7836 = vadd.f32 %v7823, %v7835
        %v7837 = vpop.f32.mrf.mxu0
        %7838 = vdwg.mxu0
        %7839 = vmatpush.bf16.msra.mxu0 0
        %7840 = vmatpush.bf16.msra.mxu0 0
        %7841 = vmatpush.bf16.msra.mxu0 %v5382
        %7842 = vmatpush.bf16.msra.mxu0 %v5374
        %7843 = vmatpush.bf16.msra.mxu0 %v5366
        %7844 = vmatpush.bf16.msra.mxu0 %v5358
        %7845 = vmatpush.bf16.msra.mxu0 %v5350
        %7846 = vmatpush.bf16.msra.mxu0 %v5342
        %7847 = vmatmul.bf16.gmra.mxu0 %v6394
        %v7848 = vpop.f32.mrf.mxu0
        %v7849 = vadd.f32 %v7836, %v7848
        %v7850 = vpop.f32.mrf.mxu0
        %7851 = vdwg.mxu0
        %7852 = vmatpush.bf16.msra.mxu0 %v4439
        %7853 = vmatpush.bf16.msra.mxu0 %v4431
        %7854 = vmatpush.bf16.msra.mxu0 %v4423
        %7855 = vmatpush.bf16.msra.mxu0 %v4415
        %7856 = vmatpush.bf16.msra.mxu0 %v4407
        %7857 = vmatpush.bf16.msra.mxu0 %v4399
        %7858 = vmatpush.bf16.msra.mxu0 %v4391
        %7859 = vmatpush.bf16.msra.mxu0 %v4383
        %7860 = vmatmul.bf16.gmra.mxu0 %v310
        %v7861 = vpop.f32.mrf.mxu0
        %v7862 = vadd.f32 %v1343, %v7861
        %v7863 = vpop.f32.mrf.mxu0
        %7864 = vdwg.mxu0
        %7865 = vmatpush.bf16.msra.mxu0 %v4503
        %7866 = vmatpush.bf16.msra.mxu0 %v4495
        %7867 = vmatpush.bf16.msra.mxu0 %v4487
        %7868 = vmatpush.bf16.msra.mxu0 %v4479
        %7869 = vmatpush.bf16.msra.mxu0 %v4471
        %7870 = vmatpush.bf16.msra.mxu0 %v4463
        %7871 = vmatpush.bf16.msra.mxu0 %v4455
        %7872 = vmatpush.bf16.msra.mxu0 %v4447
        %7873 = vmatmul.bf16.gmra.mxu0 %v311
        %v7874 = vpop.f32.mrf.mxu0
        %v7875 = vadd.f32 %v7862, %v7874
        %v7876 = vpop.f32.mrf.mxu0
        %7877 = vdwg.mxu0
        %7878 = vmatpush.bf16.msra.mxu0 %v4567
        %7879 = vmatpush.bf16.msra.mxu0 %v4559
        %7880 = vmatpush.bf16.msra.mxu0 %v4551
        %7881 = vmatpush.bf16.msra.mxu0 %v4543
        %7882 = vmatpush.bf16.msra.mxu0 %v4535
        %7883 = vmatpush.bf16.msra.mxu0 %v4527
        %7884 = vmatpush.bf16.msra.mxu0 %v4519
        %7885 = vmatpush.bf16.msra.mxu0 %v4511
        %7886 = vmatmul.bf16.gmra.mxu0 %v312
        %v7887 = vpop.f32.mrf.mxu0
        %v7888 = vadd.f32 %v7875, %v7887
        %v7889 = vpop.f32.mrf.mxu0
        %7890 = vdwg.mxu0
        %7891 = vmatpush.bf16.msra.mxu0 %v4631
        %7892 = vmatpush.bf16.msra.mxu0 %v4623
        %7893 = vmatpush.bf16.msra.mxu0 %v4615
        %7894 = vmatpush.bf16.msra.mxu0 %v4607
        %7895 = vmatpush.bf16.msra.mxu0 %v4599
        %7896 = vmatpush.bf16.msra.mxu0 %v4591
        %7897 = vmatpush.bf16.msra.mxu0 %v4583
        %7898 = vmatpush.bf16.msra.mxu0 %v4575
        %7899 = vmatmul.bf16.gmra.mxu0 %v313
        %v7900 = vpop.f32.mrf.mxu0
        %v7901 = vadd.f32 %v7888, %v7900
        %v7902 = vpop.f32.mrf.mxu0
        %7903 = vdwg.mxu0
        %7904 = vmatpush.bf16.msra.mxu0 %v4695
        %7905 = vmatpush.bf16.msra.mxu0 %v4687
        %7906 = vmatpush.bf16.msra.mxu0 %v4679
        %7907 = vmatpush.bf16.msra.mxu0 %v4671
        %7908 = vmatpush.bf16.msra.mxu0 %v4663
        %7909 = vmatpush.bf16.msra.mxu0 %v4655
        %7910 = vmatpush.bf16.msra.mxu0 %v4647
        %7911 = vmatpush.bf16.msra.mxu0 %v4639
        %7912 = vmatmul.bf16.gmra.mxu0 %v314
        %v7913 = vpop.f32.mrf.mxu0
        %v7914 = vadd.f32 %v7901, %v7913
        %v7915 = vpop.f32.mrf.mxu0
        %7916 = vdwg.mxu0
        %7917 = vmatpush.bf16.msra.mxu0 %v4759
        %7918 = vmatpush.bf16.msra.mxu0 %v4751
        %7919 = vmatpush.bf16.msra.mxu0 %v4743
        %7920 = vmatpush.bf16.msra.mxu0 %v4735
        %7921 = vmatpush.bf16.msra.mxu0 %v4727
        %7922 = vmatpush.bf16.msra.mxu0 %v4719
        %7923 = vmatpush.bf16.msra.mxu0 %v4711
        %7924 = vmatpush.bf16.msra.mxu0 %v4703
        %7925 = vmatmul.bf16.gmra.mxu0 %v315
        %v7926 = vpop.f32.mrf.mxu0
        %v7927 = vadd.f32 %v7914, %v7926
        %v7928 = vpop.f32.mrf.mxu0
        %7929 = vdwg.mxu0
        %7930 = vmatpush.bf16.msra.mxu0 %v4823
        %7931 = vmatpush.bf16.msra.mxu0 %v4815
        %7932 = vmatpush.bf16.msra.mxu0 %v4807
        %7933 = vmatpush.bf16.msra.mxu0 %v4799
        %7934 = vmatpush.bf16.msra.mxu0 %v4791
        %7935 = vmatpush.bf16.msra.mxu0 %v4783
        %7936 = vmatpush.bf16.msra.mxu0 %v4775
        %7937 = vmatpush.bf16.msra.mxu0 %v4767
        %7938 = vmatmul.bf16.gmra.mxu0 %v316
        %v7939 = vpop.f32.mrf.mxu0
        %v7940 = vadd.f32 %v7927, %v7939
        %v7941 = vpop.f32.mrf.mxu0
        %7942 = vdwg.mxu0
        %7943 = vmatpush.bf16.msra.mxu0 %v4887
        %7944 = vmatpush.bf16.msra.mxu0 %v4879
        %7945 = vmatpush.bf16.msra.mxu0 %v4871
        %7946 = vmatpush.bf16.msra.mxu0 %v4863
        %7947 = vmatpush.bf16.msra.mxu0 %v4855
        %7948 = vmatpush.bf16.msra.mxu0 %v4847
        %7949 = vmatpush.bf16.msra.mxu0 %v4839
        %7950 = vmatpush.bf16.msra.mxu0 %v4831
        %7951 = vmatmul.bf16.gmra.mxu0 %v317
        %v7952 = vpop.f32.mrf.mxu0
        %v7953 = vadd.f32 %v7940, %v7952
        %v7954 = vpop.f32.mrf.mxu0
        %7955 = vdwg.mxu0
        %7956 = vmatpush.bf16.msra.mxu0 %v4951
        %7957 = vmatpush.bf16.msra.mxu0 %v4943
        %7958 = vmatpush.bf16.msra.mxu0 %v4935
        %7959 = vmatpush.bf16.msra.mxu0 %v4927
        %7960 = vmatpush.bf16.msra.mxu0 %v4919
        %7961 = vmatpush.bf16.msra.mxu0 %v4911
        %7962 = vmatpush.bf16.msra.mxu0 %v4903
        %7963 = vmatpush.bf16.msra.mxu0 %v4895
        %7964 = vmatmul.bf16.gmra.mxu0 %v318
        %v7965 = vpop.f32.mrf.mxu0
        %v7966 = vadd.f32 %v7953, %v7965
        %v7967 = vpop.f32.mrf.mxu0
        %7968 = vdwg.mxu0
        %7969 = vmatpush.bf16.msra.mxu0 %v5015
        %7970 = vmatpush.bf16.msra.mxu0 %v5007
        %7971 = vmatpush.bf16.msra.mxu0 %v4999
        %7972 = vmatpush.bf16.msra.mxu0 %v4991
        %7973 = vmatpush.bf16.msra.mxu0 %v4983
        %7974 = vmatpush.bf16.msra.mxu0 %v4975
        %7975 = vmatpush.bf16.msra.mxu0 %v4967
        %7976 = vmatpush.bf16.msra.mxu0 %v4959
        %7977 = vmatmul.bf16.gmra.mxu0 %v319
        %v7978 = vpop.f32.mrf.mxu0
        %v7979 = vadd.f32 %v7966, %v7978
        %v7980 = vpop.f32.mrf.mxu0
        %7981 = vdwg.mxu0
        %7982 = vmatpush.bf16.msra.mxu0 %v5079
        %7983 = vmatpush.bf16.msra.mxu0 %v5071
        %7984 = vmatpush.bf16.msra.mxu0 %v5063
        %7985 = vmatpush.bf16.msra.mxu0 %v5055
        %7986 = vmatpush.bf16.msra.mxu0 %v5047
        %7987 = vmatpush.bf16.msra.mxu0 %v5039
        %7988 = vmatpush.bf16.msra.mxu0 %v5031
        %7989 = vmatpush.bf16.msra.mxu0 %v5023
        %7990 = vmatmul.bf16.gmra.mxu0 %v320
        %v7991 = vpop.f32.mrf.mxu0
        %v7992 = vadd.f32 %v7979, %v7991
        %v7993 = vpop.f32.mrf.mxu0
        %7994 = vdwg.mxu0
        %7995 = vmatpush.bf16.msra.mxu0 %v5143
        %7996 = vmatpush.bf16.msra.mxu0 %v5135
        %7997 = vmatpush.bf16.msra.mxu0 %v5127
        %7998 = vmatpush.bf16.msra.mxu0 %v5119
        %7999 = vmatpush.bf16.msra.mxu0 %v5111
        %8000 = vmatpush.bf16.msra.mxu0 %v5103
        %8001 = vmatpush.bf16.msra.mxu0 %v5095
        %8002 = vmatpush.bf16.msra.mxu0 %v5087
        %8003 = vmatmul.bf16.gmra.mxu0 %v321
        %v8004 = vpop.f32.mrf.mxu0
        %v8005 = vadd.f32 %v7992, %v8004
        %v8006 = vpop.f32.mrf.mxu0
        %8007 = vdwg.mxu0
        %8008 = vmatpush.bf16.msra.mxu0 %v5207
        %8009 = vmatpush.bf16.msra.mxu0 %v5199
        %8010 = vmatpush.bf16.msra.mxu0 %v5191
        %8011 = vmatpush.bf16.msra.mxu0 %v5183
        %8012 = vmatpush.bf16.msra.mxu0 %v5175
        %8013 = vmatpush.bf16.msra.mxu0 %v5167
        %8014 = vmatpush.bf16.msra.mxu0 %v5159
        %8015 = vmatpush.bf16.msra.mxu0 %v5151
        %8016 = vmatmul.bf16.gmra.mxu0 %v322
        %v8017 = vpop.f32.mrf.mxu0
        %v8018 = vadd.f32 %v8005, %v8017
        %v8019 = vpop.f32.mrf.mxu0
        %8020 = vdwg.mxu0
        %8021 = vmatpush.bf16.msra.mxu0 %v5271
        %8022 = vmatpush.bf16.msra.mxu0 %v5263
        %8023 = vmatpush.bf16.msra.mxu0 %v5255
        %8024 = vmatpush.bf16.msra.mxu0 %v5247
        %8025 = vmatpush.bf16.msra.mxu0 %v5239
        %8026 = vmatpush.bf16.msra.mxu0 %v5231
        %8027 = vmatpush.bf16.msra.mxu0 %v5223
        %8028 = vmatpush.bf16.msra.mxu0 %v5215
        %8029 = vmatmul.bf16.gmra.mxu0 %v323
        %v8030 = vpop.f32.mrf.mxu0
        %v8031 = vadd.f32 %v8018, %v8030
        %v8032 = vpop.f32.mrf.mxu0
        %8033 = vdwg.mxu0
        %8034 = vmatpush.bf16.msra.mxu0 %v5335
        %8035 = vmatpush.bf16.msra.mxu0 %v5327
        %8036 = vmatpush.bf16.msra.mxu0 %v5319
        %8037 = vmatpush.bf16.msra.mxu0 %v5311
        %8038 = vmatpush.bf16.msra.mxu0 %v5303
        %8039 = vmatpush.bf16.msra.mxu0 %v5295
        %8040 = vmatpush.bf16.msra.mxu0 %v5287
        %8041 = vmatpush.bf16.msra.mxu0 %v5279
        %8042 = vmatmul.bf16.gmra.mxu0 %v324
        %v8043 = vpop.f32.mrf.mxu0
        %v8044 = vadd.f32 %v8031, %v8043
        %v8045 = vpop.f32.mrf.mxu0
        %8046 = vdwg.mxu0
        %8047 = vmatpush.bf16.msra.mxu0 0
        %8048 = vmatpush.bf16.msra.mxu0 0
        %8049 = vmatpush.bf16.msra.mxu0 %v5383
        %8050 = vmatpush.bf16.msra.mxu0 %v5375
        %8051 = vmatpush.bf16.msra.mxu0 %v5367
        %8052 = vmatpush.bf16.msra.mxu0 %v5359
        %8053 = vmatpush.bf16.msra.mxu0 %v5351
        %8054 = vmatpush.bf16.msra.mxu0 %v5343
        %8055 = vmatmul.bf16.gmra.mxu0 %v6394
        %v8056 = vpop.f32.mrf.mxu0
        %v8057 = vadd.f32 %v8044, %v8056
        %v8058 = vpop.f32.mrf.mxu0
        %8059 = vdwg.mxu0
        %v8060 = vmax.f32 %v6601, 0.0
        %v8061 = vmax.f32 %v6809, 0.0
        %v8062 = vmax.f32 %v7017, 0.0
        %v8063 = vmax.f32 %v7225, 0.0
        %v8064 = vmax.f32 %v7433, 0.0
        %v8065 = vmax.f32 %v7641, 0.0
        %v8066 = vmax.f32 %v7849, 0.0
        %v8067 = vmax.f32 %v8057, 0.0
        %v8068 = vld [vmem:[%s287] sm:$0xff]
        %v8069 = vld [vmem:[%s287 + $0x8] sm:$0xff]
        %v8070 = vld [vmem:[%s287 + $0x10] sm:$0xff]
        %v8071 = vld [vmem:[%s287 + $0x18] sm:$0xff]
        %v8072 = vld [vmem:[%s287 + $0x20] sm:$0xff]
        %v8073 = vld [vmem:[%s287 + $0x28] sm:$0xff]
        %v8074 = vld [vmem:[%s287 + $0x30] sm:$0xff]
        %v8075 = vld [vmem:[%s287 + $0x38] sm:$0xff]
        %v8076 = vld [vmem:[%s287 + $0x40] sm:$0xff]
        %v8077 = vld [vmem:[%s287 + $0x48] sm:$0xff]
        %v8078 = vld [vmem:[%s287 + $0x50] sm:$0xff]
        %v8079 = vld [vmem:[%s287 + $0x58] sm:$0xff]
        %v8080 = vld [vmem:[%s287 + $0x60] sm:$0xff]
        %v8081 = vld [vmem:[%s287 + $0x68] sm:$0xff]
        %v8082 = vld [vmem:[%s287 + $0x70] sm:$0xff]
        %v8083 = vld [vmem:[%s287 + $0x78] sm:$0xff]
        %v8084 = vld [vmem:[%s287 + $0x80] sm:$0xff]
        %v8085 = vld [vmem:[%s287 + $0x88] sm:$0xff]
        %v8086 = vld [vmem:[%s287 + $0x90] sm:$0xff]
        %v8087 = vld [vmem:[%s287 + $0x98] sm:$0xff]
        %v8088 = vld [vmem:[%s287 + $0xa0] sm:$0xff]
        %v8089 = vld [vmem:[%s287 + $0xa8] sm:$0xff]
        %v8090 = vld [vmem:[%s287 + $0xb0] sm:$0xff]
        %v8091 = vld [vmem:[%s287 + $0xb8] sm:$0xff]
        %v8092 = vld [vmem:[%s287 + $0xc0] sm:$0xff]
        %v8093 = vld [vmem:[%s287 + $0xc8] sm:$0xff]
        %v8094 = vld [vmem:[%s287 + $0xd0] sm:$0xff]
        %v8095 = vld [vmem:[%s287 + $0xd8] sm:$0xff]
        %v8096 = vld [vmem:[%s287 + $0xe0] sm:$0xff]
        %v8097 = vld [vmem:[%s287 + $0xe8] sm:$0xff]
        %v8098 = vld [vmem:[%s287 + $0xf0] sm:$0xff]
        %v8099 = vld [vmem:[%s287 + $0xf8] sm:$0xff]
        %v8100 = vld [vmem:[%s287 + $0x100] sm:$0xff]
        %v8101 = vld [vmem:[%s287 + $0x108] sm:$0xff]
        %v8102 = vld [vmem:[%s287 + $0x110] sm:$0xff]
        %v8103 = vld [vmem:[%s287 + $0x118] sm:$0xff]
        %v8104 = vld [vmem:[%s287 + $0x120] sm:$0xff]
        %v8105 = vld [vmem:[%s287 + $0x128] sm:$0xff]
        %v8106 = vld [vmem:[%s287 + $0x130] sm:$0xff]
        %v8107 = vld [vmem:[%s287 + $0x138] sm:$0xff]
        %v8108 = vld [vmem:[%s287 + $0x140] sm:$0xff]
        %v8109 = vld [vmem:[%s287 + $0x148] sm:$0xff]
        %v8110 = vld [vmem:[%s287 + $0x150] sm:$0xff]
        %v8111 = vld [vmem:[%s287 + $0x158] sm:$0xff]
        %v8112 = vld [vmem:[%s287 + $0x160] sm:$0xff]
        %v8113 = vld [vmem:[%s287 + $0x168] sm:$0xff]
        %v8114 = vld [vmem:[%s287 + $0x170] sm:$0xff]
        %v8115 = vld [vmem:[%s287 + $0x178] sm:$0xff]
        %v8116 = vld [vmem:[%s287 + $0x180] sm:$0xff]
        %v8117 = vld [vmem:[%s287 + $0x188] sm:$0xff]
        %v8118 = vld [vmem:[%s287 + $0x190] sm:$0xff]
        %v8119 = vld [vmem:[%s287 + $0x198] sm:$0xff]
        %v8120 = vld [vmem:[%s287 + $0x1a0] sm:$0xff]
        %v8121 = vld [vmem:[%s287 + $0x1a8] sm:$0xff]
        %v8122 = vld [vmem:[%s287 + $0x1b0] sm:$0xff]
        %v8123 = vld [vmem:[%s287 + $0x1b8] sm:$0xff]
        %v8124 = vld [vmem:[%s287 + $0x1c0] sm:$0xff]
        %v8125 = vld [vmem:[%s287 + $0x1c8] sm:$0xff]
        %v8126 = vld [vmem:[%s287 + $0x1d0] sm:$0xff]
        %v8127 = vld [vmem:[%s287 + $0x1d8] sm:$0xff]
        %v8128 = vld [vmem:[%s287 + $0x1e0] sm:$0xff]
        %v8129 = vld [vmem:[%s287 + $0x1e8] sm:$0xff]
        %v8130 = vld [vmem:[%s287 + $0x1f0] sm:$0xff]
        %v8131 = vld [vmem:[%s287 + $0x1f8] sm:$0xff]
        %v8132 = vld [vmem:[%s287 + $0x200] sm:$0xff]
        %v8133 = vld [vmem:[%s287 + $0x208] sm:$0xff]
        %v8134 = vld [vmem:[%s287 + $0x210] sm:$0xff]
        %v8135 = vld [vmem:[%s287 + $0x218] sm:$0xff]
        %v8136 = vld [vmem:[%s287 + $0x220] sm:$0xff]
        %v8137 = vld [vmem:[%s287 + $0x228] sm:$0xff]
        %v8138 = vld [vmem:[%s287 + $0x230] sm:$0xff]
        %v8139 = vld [vmem:[%s287 + $0x238] sm:$0xff]
        %v8140 = vld [vmem:[%s287 + $0x240] sm:$0xff]
        %v8141 = vld [vmem:[%s287 + $0x248] sm:$0xff]
        %v8142 = vld [vmem:[%s287 + $0x250] sm:$0xff]
        %v8143 = vld [vmem:[%s287 + $0x258] sm:$0xff]
        %v8144 = vld [vmem:[%s287 + $0x260] sm:$0xff]
        %v8145 = vld [vmem:[%s287 + $0x268] sm:$0xff]
        %v8146 = vld [vmem:[%s287 + $0x270] sm:$0xff]
        %v8147 = vld [vmem:[%s287 + $0x278] sm:$0xff]
        %v8148 = vld [vmem:[%s287 + $0x280] sm:$0xff]
        %v8149 = vld [vmem:[%s287 + $0x288] sm:$0xff]
        %v8150 = vld [vmem:[%s287 + $0x290] sm:$0xff]
        %v8151 = vld [vmem:[%s287 + $0x298] sm:$0xff]
        %v8152 = vld [vmem:[%s287 + $0x2a0] sm:$0xff]
        %v8153 = vld [vmem:[%s287 + $0x2a8] sm:$0xff]
        %v8154 = vld [vmem:[%s287 + $0x2b0] sm:$0xff]
        %v8155 = vld [vmem:[%s287 + $0x2b8] sm:$0xff]
        %v8156 = vld [vmem:[%s287 + $0x2c0] sm:$0xff]
        %v8157 = vld [vmem:[%s287 + $0x2c8] sm:$0xff]
        %v8158 = vld [vmem:[%s287 + $0x2d0] sm:$0xff]
        %v8159 = vld [vmem:[%s287 + $0x2d8] sm:$0xff]
        %v8160 = vld [vmem:[%s287 + $0x2e0] sm:$0xff]
        %v8161 = vld [vmem:[%s287 + $0x2e8] sm:$0xff]
        %v8162 = vld [vmem:[%s287 + $0x2f0] sm:$0xff]
        %v8163 = vld [vmem:[%s287 + $0x2f8] sm:$0xff]
        %v8164 = vld [vmem:[%s287 + $0x300] sm:$0xff]
        %v8165 = vld [vmem:[%s287 + $0x308] sm:$0xff]
        %v8166 = vld [vmem:[%s287 + $0x310] sm:$0xff]
        %v8167 = vld [vmem:[%s287 + $0x318] sm:$0xff]
        %v8168 = vld [vmem:[%s287 + $0x320] sm:$0xff]
        %v8169 = vld [vmem:[%s287 + $0x328] sm:$0xff]
        %v8170 = vld [vmem:[%s287 + $0x330] sm:$0xff]
        %v8171 = vld [vmem:[%s287 + $0x338] sm:$0xff]
        %v8172 = vld [vmem:[%s287 + $0x340] sm:$0xff]
        %v8173 = vld [vmem:[%s287 + $0x348] sm:$0xff]
        %v8174 = vld [vmem:[%s287 + $0x350] sm:$0xff]
        %v8175 = vld [vmem:[%s287 + $0x358] sm:$0xff]
        %v8176 = vld [vmem:[%s287 + $0x360] sm:$0xff]
        %v8177 = vld [vmem:[%s287 + $0x368] sm:$0xff]
        %v8178 = vld [vmem:[%s287 + $0x370] sm:$0xff]
        %v8179 = vld [vmem:[%s287 + $0x378] sm:$0xff]
        %v8180 = vld [vmem:[%s287 + $0x380] sm:$0xff]
        %v8181 = vld [vmem:[%s287 + $0x388] sm:$0xff]
        %v8182 = vld [vmem:[%s287 + $0x390] sm:$0xff]
        %v8183 = vld [vmem:[%s287 + $0x398] sm:$0xff]
        %v8184 = vld [vmem:[%s287 + $0x3a0] sm:$0xff]
        %v8185 = vld [vmem:[%s287 + $0x3a8] sm:$0xff]
        %v8186 = vld [vmem:[%s287 + $0x3b0] sm:$0xff]
        %v8187 = vld [vmem:[%s287 + $0x3b8] sm:$0xff]
        %v8188 = vld [vmem:[%s287 + $0x3c0] sm:$0xff]
        %v8189 = vld [vmem:[%s287 + $0x3c8] sm:$0xff]
        %v8190 = vld [vmem:[%s287 + $0x3d0] sm:$0xff]
        %v8191 = vld [vmem:[%s287 + $0x3d8] sm:$0xff]
        %v8192 = vld [vmem:[%s287 + $0x3e0] sm:$0xff]
        %v8193 = vld [vmem:[%s287 + $0x3e8] sm:$0xff]
        %v8194 = vld [vmem:[%s287 + $0x3f0] sm:$0xff]
        %v8195 = vld [vmem:[%s287 + $0x3f8] sm:$0xff]
        %8196 = vmatpush.msra.mxu0 %v8083
        %8197 = vmatpush.msra.mxu0 %v8082
        %8198 = vmatpush.msra.mxu0 %v8081
        %8199 = vmatpush.msra.mxu0 %v8080
        %8200 = vmatpush.msra.mxu0 %v8079
        %8201 = vmatpush.msra.mxu0 %v8078
        %8202 = vmatpush.msra.mxu0 %v8077
        %8203 = vmatpush.msra.mxu0 %v8076
        %8204 = vmatpush.msra.mxu0 %v8075
        %8205 = vmatpush.msra.mxu0 %v8074
        %8206 = vmatpush.msra.mxu0 %v8073
        %8207 = vmatpush.msra.mxu0 %v8072
        %8208 = vmatpush.msra.mxu0 %v8071
        %8209 = vmatpush.msra.mxu0 %v8070
        %8210 = vmatpush.msra.mxu0 %v8069
        %8211 = vmatpush.msra.mxu0 %v8068
        %8212 = vmatmul.f32.gmra.mxu0 %v8060
        %v8213 = vpop.f32.mrf.mxu0
        %v8214 = vadd.f32 0.0, %v8213
        %8215 = vdwg.mxu0
        %8216 = vmatpush.msra.mxu0 %v8099
        %8217 = vmatpush.msra.mxu0 %v8098
        %8218 = vmatpush.msra.mxu0 %v8097
        %8219 = vmatpush.msra.mxu0 %v8096
        %8220 = vmatpush.msra.mxu0 %v8095
        %8221 = vmatpush.msra.mxu0 %v8094
        %8222 = vmatpush.msra.mxu0 %v8093
        %8223 = vmatpush.msra.mxu0 %v8092
        %8224 = vmatpush.msra.mxu0 %v8091
        %8225 = vmatpush.msra.mxu0 %v8090
        %8226 = vmatpush.msra.mxu0 %v8089
        %8227 = vmatpush.msra.mxu0 %v8088
        %8228 = vmatpush.msra.mxu0 %v8087
        %8229 = vmatpush.msra.mxu0 %v8086
        %8230 = vmatpush.msra.mxu0 %v8085
        %8231 = vmatpush.msra.mxu0 %v8084
        %8232 = vmatmul.f32.gmra.mxu0 %v8061
        %v8233 = vpop.f32.mrf.mxu0
        %v8234 = vadd.f32 %v8214, %v8233
        %8235 = vdwg.mxu0
        %8236 = vmatpush.msra.mxu0 %v8115
        %8237 = vmatpush.msra.mxu0 %v8114
        %8238 = vmatpush.msra.mxu0 %v8113
        %8239 = vmatpush.msra.mxu0 %v8112
        %8240 = vmatpush.msra.mxu0 %v8111
        %8241 = vmatpush.msra.mxu0 %v8110
        %8242 = vmatpush.msra.mxu0 %v8109
        %8243 = vmatpush.msra.mxu0 %v8108
        %8244 = vmatpush.msra.mxu0 %v8107
        %8245 = vmatpush.msra.mxu0 %v8106
        %8246 = vmatpush.msra.mxu0 %v8105
        %8247 = vmatpush.msra.mxu0 %v8104
        %8248 = vmatpush.msra.mxu0 %v8103
        %8249 = vmatpush.msra.mxu0 %v8102
        %8250 = vmatpush.msra.mxu0 %v8101
        %8251 = vmatpush.msra.mxu0 %v8100
        %8252 = vmatmul.f32.gmra.mxu0 %v8062
        %v8253 = vpop.f32.mrf.mxu0
        %v8254 = vadd.f32 %v8234, %v8253
        %8255 = vdwg.mxu0
        %8256 = vmatpush.msra.mxu0 %v8131
        %8257 = vmatpush.msra.mxu0 %v8130
        %8258 = vmatpush.msra.mxu0 %v8129
        %8259 = vmatpush.msra.mxu0 %v8128
        %8260 = vmatpush.msra.mxu0 %v8127
        %8261 = vmatpush.msra.mxu0 %v8126
        %8262 = vmatpush.msra.mxu0 %v8125
        %8263 = vmatpush.msra.mxu0 %v8124
        %8264 = vmatpush.msra.mxu0 %v8123
        %8265 = vmatpush.msra.mxu0 %v8122
        %8266 = vmatpush.msra.mxu0 %v8121
        %8267 = vmatpush.msra.mxu0 %v8120
        %8268 = vmatpush.msra.mxu0 %v8119
        %8269 = vmatpush.msra.mxu0 %v8118
        %8270 = vmatpush.msra.mxu0 %v8117
        %8271 = vmatpush.msra.mxu0 %v8116
        %8272 = vmatmul.f32.gmra.mxu0 %v8063
        %v8273 = vpop.f32.mrf.mxu0
        %v8274 = vadd.f32 %v8254, %v8273
        %8275 = vdwg.mxu0
        %8276 = vmatpush.msra.mxu0 %v8147
        %8277 = vmatpush.msra.mxu0 %v8146
        %8278 = vmatpush.msra.mxu0 %v8145
        %8279 = vmatpush.msra.mxu0 %v8144
        %8280 = vmatpush.msra.mxu0 %v8143
        %8281 = vmatpush.msra.mxu0 %v8142
        %8282 = vmatpush.msra.mxu0 %v8141
        %8283 = vmatpush.msra.mxu0 %v8140
        %8284 = vmatpush.msra.mxu0 %v8139
        %8285 = vmatpush.msra.mxu0 %v8138
        %8286 = vmatpush.msra.mxu0 %v8137
        %8287 = vmatpush.msra.mxu0 %v8136
        %8288 = vmatpush.msra.mxu0 %v8135
        %8289 = vmatpush.msra.mxu0 %v8134
        %8290 = vmatpush.msra.mxu0 %v8133
        %8291 = vmatpush.msra.mxu0 %v8132
        %8292 = vmatmul.f32.gmra.mxu0 %v8064
        %v8293 = vpop.f32.mrf.mxu0
        %v8294 = vadd.f32 %v8274, %v8293
        %8295 = vdwg.mxu0
        %8296 = vmatpush.msra.mxu0 %v8163
        %8297 = vmatpush.msra.mxu0 %v8162
        %8298 = vmatpush.msra.mxu0 %v8161
        %8299 = vmatpush.msra.mxu0 %v8160
        %8300 = vmatpush.msra.mxu0 %v8159
        %8301 = vmatpush.msra.mxu0 %v8158
        %8302 = vmatpush.msra.mxu0 %v8157
        %8303 = vmatpush.msra.mxu0 %v8156
        %8304 = vmatpush.msra.mxu0 %v8155
        %8305 = vmatpush.msra.mxu0 %v8154
        %8306 = vmatpush.msra.mxu0 %v8153
        %8307 = vmatpush.msra.mxu0 %v8152
        %8308 = vmatpush.msra.mxu0 %v8151
        %8309 = vmatpush.msra.mxu0 %v8150
        %8310 = vmatpush.msra.mxu0 %v8149
        %8311 = vmatpush.msra.mxu0 %v8148
        %8312 = vmatmul.f32.gmra.mxu0 %v8065
        %v8313 = vpop.f32.mrf.mxu0
        %v8314 = vadd.f32 %v8294, %v8313
        %8315 = vdwg.mxu0
        %8316 = vmatpush.msra.mxu0 %v8179
        %8317 = vmatpush.msra.mxu0 %v8178
        %8318 = vmatpush.msra.mxu0 %v8177
        %8319 = vmatpush.msra.mxu0 %v8176
        %8320 = vmatpush.msra.mxu0 %v8175
        %8321 = vmatpush.msra.mxu0 %v8174
        %8322 = vmatpush.msra.mxu0 %v8173
        %8323 = vmatpush.msra.mxu0 %v8172
        %8324 = vmatpush.msra.mxu0 %v8171
        %8325 = vmatpush.msra.mxu0 %v8170
        %8326 = vmatpush.msra.mxu0 %v8169
        %8327 = vmatpush.msra.mxu0 %v8168
        %8328 = vmatpush.msra.mxu0 %v8167
        %8329 = vmatpush.msra.mxu0 %v8166
        %8330 = vmatpush.msra.mxu0 %v8165
        %8331 = vmatpush.msra.mxu0 %v8164
        %8332 = vmatmul.f32.gmra.mxu0 %v8066
        %v8333 = vpop.f32.mrf.mxu0
        %v8334 = vadd.f32 %v8314, %v8333
        %8335 = vdwg.mxu0
        %8336 = vmatpush.msra.mxu0 %v8195
        %8337 = vmatpush.msra.mxu0 %v8194
        %8338 = vmatpush.msra.mxu0 %v8193
        %8339 = vmatpush.msra.mxu0 %v8192
        %8340 = vmatpush.msra.mxu0 %v8191
        %8341 = vmatpush.msra.mxu0 %v8190
        %8342 = vmatpush.msra.mxu0 %v8189
        %8343 = vmatpush.msra.mxu0 %v8188
        %8344 = vmatpush.msra.mxu0 %v8187
        %8345 = vmatpush.msra.mxu0 %v8186
        %8346 = vmatpush.msra.mxu0 %v8185
        %8347 = vmatpush.msra.mxu0 %v8184
        %8348 = vmatpush.msra.mxu0 %v8183
        %8349 = vmatpush.msra.mxu0 %v8182
        %8350 = vmatpush.msra.mxu0 %v8181
        %8351 = vmatpush.msra.mxu0 %v8180
        %8352 = vmatmul.f32.gmra.mxu0 %v8067
        %v8353 = vpop.f32.mrf.mxu0
        %v8354 = vadd.f32 %v8334, %v8353
        %8355 = vdwg.mxu0
        %vm8356 = vcmask 23552
        %8357 = vst.msk [vmem:[%s292] sm:$0xff] %vm8356, %v8354
        %p8358 = scmp.lt.s32.totalorder %s19, 1
        %s8359 = scalar_select %p8358, %s19, 1
        %s8360 = smul.addr %s8359, 8
        %s8361 = scalar_lea.vmem %s4, %s8360
        // Predicated region
        $region49: #{shapenet_forward.1} parent=35 // pred_check
          %p8362 = pneg %p136
        $region50: #{shapenet_forward.1} parent=35 // pred_check_branch
          %8364 = sbr.rel (%p8362) target = $region52
        $region51: #{shapenet_forward.1} parent=35 // pred_region
          _
        $region52: #{shapenet_forward.1} parent=35 // pred_fallthru
          _
      $region36: #{shapenet_forward.1} parent=5 // pred_fallthru
        _
      %p8365 = scmp.le.s32.totalorder 2, %s14
      // Predicated region
      $region53: #{shapenet_forward.1} parent=5 // pred_check
        %p8366 = pneg %p8365
      $region54: #{shapenet_forward.1} parent=5 // pred_check_branch
        %8368 = sbr.rel (%p8366) target = $region56
      $region55: #{shapenet_forward.1} parent=5 // pred_region
        %s8369 = ssub.s32 %s14, 2
        // Predicated region
        $region57: #{shapenet_forward.1} parent=55 // pred_check
          %p8370 = pneg %p142
        $region58: #{shapenet_forward.1} parent=55 // pred_check_branch
          %8372 = sbr.rel (%p8370) target = $region60
        $region59: #{shapenet_forward.1} parent=55 // pred_region
          %p8373 = scmp.lt.s32.totalorder %s20, 1
          %s8374 = scalar_select %p8373, %s20, 1
          %s8375 = smul.addr %s8374, 8
          %s8376 = scalar_lea.vmem %s4, %s8375
        $region60: #{shapenet_forward.1} parent=55 // pred_fallthru
          _
      $region56: #{shapenet_forward.1} parent=5 // pred_fallthru
        _
    $region6: #{shapenet_forward.1} parent=1 // loop_footer
      %s18 = sadd.s32 1, %s14
    $region7: #{shapenet_forward.1} parent=1 // loop_footer_branch
      %13 = sbr.rel target = $region3
    $region8: #{shapenet_forward.1} parent=1 // loop_exit
      _
    %8377 = vsyncpa [#allocation3], 1
    %s8378 = scalar_lea.sflag [#allocation3], 1
    %8379 = vsyncpa %s8378, 1
    %8380 = vsyncpa [#allocation5], 1
    %s8381 = scalar_lea.sflag [#allocation5], 1
    %8382 = vsyncpa %s8381, 1

</llo_original>
